<compile_context>
chip_gen: v5e
topology: v5e:2x2
jax: 0.10.0
libtpu: 0.0.40
codegen_flags: <defaults>
</compile_context>

<pallas_src>
import math

import jax
import jax.numpy as jnp
from jax import lax
from jax.experimental import pallas as pl
from jax.experimental.pallas import tpu as pltpu

# Small stand-in config (PyTorch module used 768/1024/6 layers/8 heads/512 vocab).
EMBED_DIM = 32     # BERT embedding dim (stand-in for 768)
HIDDEN_DIM = 64    # GPT-2 n_embd (stand-in for 1024), divisible by N_HEAD
N_LAYER = 6
N_HEAD = 8
VOCAB = 512
N_POS = 1024
LN_EPS = 1e-5

COMPUTE_DTYPE = jnp.bfloat16   # MXU-native input dtype; accumulation stays f32.


# ---------------------------- in-kernel helpers ----------------------------

def _ln_f32(x_f32, g_ref, b_ref):
    """LayerNorm with f32 statistics; g/b refs are (1, D)."""
    mu = jnp.mean(x_f32, axis=-1, keepdims=True)
    var = jnp.mean(jnp.square(x_f32 - mu), axis=-1, keepdims=True)
    y = (x_f32 - mu) * lax.rsqrt(var + LN_EPS)
    return y * g_ref[...].astype(jnp.float32) + b_ref[...].astype(jnp.float32)


def _gelu_new(x_f32):
    # HF "gelu_new": 0.5*x*(1+tanh(sqrt(2/pi)*(x+0.044715*x^3)))  (EUP tanh, f32)
    return 0.5 * x_f32 * (1.0 + jnp.tanh(
        0.7978845608028654 * (x_f32 + 0.044715 * x_f32 * x_f32 * x_f32)))


# ---------------------------- Pallas kernels ----------------------------

def _embed_kernel(text_ref, event_ref, pw_ref, pb_ref, wpe_ref, o_ref):
    """projection(text) ++ event, plus position embeddings, fused."""
    t = text_ref[0].astype(COMPUTE_DTYPE)                        # (Tt, E)
    proj = jnp.dot(t, pw_ref[...], preferred_element_type=jnp.float32)
    proj = proj + pb_ref[...].astype(jnp.float32)                # (Tt, H)
    wpe = wpe_ref[...].astype(jnp.float32)                       # (T, H)
    Tt = proj.shape[0]
    x_text = proj + wpe[:Tt]
    x_event = event_ref[0].astype(jnp.float32) + wpe[Tt:]
    o_ref[0] = jnp.concatenate([x_text, x_event], axis=0).astype(o_ref.dtype)


def embed_pallas(text_embedding, event_sequence, proj_w, proj_b, wpe_t):
    B, Tt, E = text_embedding.shape
    _, Te, H = event_sequence.shape
    T = Tt + Te
    return pl.pallas_call(
        _embed_kernel,
        out_shape=jax.ShapeDtypeStruct((B, T, H), COMPUTE_DTYPE),
        grid_spec=pltpu.PrefetchScalarGridSpec(
            num_scalar_prefetch=0,
            grid=(B,),
            in_specs=[pl.BlockSpec((1, Tt, E), lambda b: (b, 0, 0)),
                      pl.BlockSpec((1, Te, H), lambda b: (b, 0, 0)),
                      pl.BlockSpec((E, H), lambda b: (0, 0)),
                      pl.BlockSpec((1, H), lambda b: (0, 0)),
                      pl.BlockSpec((T, H), lambda b: (0, 0))],
            out_specs=pl.BlockSpec((1, T, H), lambda b: (b, 0, 0))),
        compiler_params=pltpu.CompilerParams(dimension_semantics=("parallel",)),
    )(text_embedding, event_sequence, proj_w, proj_b, wpe_t)


def _block_kernel(x_ref,
                  ln1_g_ref, ln1_b_ref, attn_w_ref, attn_b_ref,
                  attn_pw_ref, attn_pb_ref,
                  ln2_g_ref, ln2_b_ref, fc_w_ref, fc_b_ref,
                  mlp_pw_ref, mlp_pb_ref,
                  o_ref):
    """One full GPT-2 block on a (T, H) slab; activations never leave VMEM."""
    x = x_ref[0]                                   # (T, H) bf16
    x_f32 = x.astype(jnp.float32)
    T, H = x.shape
    Dh = H // N_HEAD

    # ---- attention ----
    h_ln = _ln_f32(x_f32, ln1_g_ref, ln1_b_ref).astype(COMPUTE_DTYPE)
    qkv = jnp.dot(h_ln, attn_w_ref[...], preferred_element_type=jnp.float32)
    qkv = qkv + attn_b_ref[...].astype(jnp.float32)               # (T, 3H) f32

    # Fold 1/sqrt(Dh) into q (smaller tensor than the (T,T) scores).
    q_all = qkv[:, 0:H] * jnp.float32(1.0 / math.sqrt(Dh))
    k_all = qkv[:, H:2 * H]
    v_all = qkv[:, 2 * H:3 * H]

    row = lax.broadcasted_iota(jnp.int32, (T, T), 0)
    col = lax.broadcasted_iota(jnp.int32, (T, T), 1)
    causal = col <= row

    # TODO(synk): for real sizes (T~1024) switch to a flash-style streaming softmax
    # so the (T, T) score buffer does not live in VMEM (matters most on v7x's 64 MiB).
    head_outs = []
    for h_idx in range(N_HEAD):
        lo, hi = h_idx * Dh, (h_idx + 1) * Dh
        q = q_all[:, lo:hi]                        # (T, Dh)
        k = k_all[:, lo:hi]
        v = v_all[:, lo:hi]
        s = lax.dot_general(q, k, (((1,), (1,)), ((), ())),
                            preferred_element_type=jnp.float32)   # (T, T)
        s = jnp.where(causal, s, jnp.float32(-1e30))
        s = s - jnp.max(s, axis=-1, keepdims=True)
        p = jnp.exp(s)
        p = p * pl.reciprocal(jnp.sum(p, axis=-1, keepdims=True), approx=True)
        head_outs.append(jnp.dot(p, v, preferred_element_type=jnp.float32))
    attn = jnp.concatenate(head_outs, axis=-1).astype(COMPUTE_DTYPE)  # (T, H)

    a = jnp.dot(attn, attn_pw_ref[...], preferred_element_type=jnp.float32)
    a = a + attn_pb_ref[...].astype(jnp.float32)
    x1 = x_f32 + a                                 # residual add, fused in-kernel

    # ---- MLP ----
    h2 = _ln_f32(x1, ln2_g_ref, ln2_b_ref).astype(COMPUTE_DTYPE)
    f = jnp.dot(h2, fc_w_ref[...], preferred_element_type=jnp.float32)
    f = _gelu_new(f + fc_b_ref[...].astype(jnp.float32))          # f32 activation
    m = jnp.dot(f.astype(COMPUTE_DTYPE), mlp_pw_ref[...],
                preferred_element_type=jnp.float32)
    m = m + mlp_pb_ref[...].astype(jnp.float32)

    o_ref[0] = (x1 + m).astype(o_ref.dtype)        # second residual, fused


def gpt2_block_pallas(x, p):
    B, T, H = x.shape
    # TODO(synk): at the real config (H=1024, FC=4096) the full-weight blocks must be
    # N/K-tiled to fit v7x's 64 MiB VMEM; at these stand-in dims full blocks are tiny.
    wspec = lambda shape: pl.BlockSpec(shape, lambda b: (0, 0))
    return pl.pallas_call(
        _block_kernel,
        out_shape=jax.ShapeDtypeStruct((B, T, H), x.dtype),
        grid_spec=pltpu.PrefetchScalarGridSpec(
            num_scalar_prefetch=0,
            grid=(B,),
            in_specs=[pl.BlockSpec((1, T, H), lambda b: (b, 0, 0)),
                      wspec((1, H)), wspec((1, H)),
                      wspec((H, 3 * H)), wspec((1, 3 * H)),
                      wspec((H, H)), wspec((1, H)),
                      wspec((1, H)), wspec((1, H)),
                      wspec((H, 4 * H)), wspec((1, 4 * H)),
                      wspec((4 * H, H)), wspec((1, H))],
            out_specs=pl.BlockSpec((1, T, H), lambda b: (b, 0, 0))),
        compiler_params=pltpu.CompilerParams(dimension_semantics=("parallel",)),
    )(x,
      p["ln1_g"], p["ln1_b"], p["attn_w"], p["attn_b"],
      p["attn_proj_w"], p["attn_proj_b"],
      p["ln2_g"], p["ln2_b"], p["fc_w"], p["fc_b"],
      p["mlp_proj_w"], p["mlp_proj_b"])


def _head_kernel(x_ref, g_ref, b_ref, w_ref, o_ref):
    """Final LayerNorm + tied lm_head (no bias), fused."""
    x = x_ref[...].astype(jnp.float32)             # (tm, H)
    h = _ln_f32(x, g_ref, b_ref).astype(COMPUTE_DTYPE)
    o_ref[...] = jnp.dot(h, w_ref[...],
                         preferred_element_type=jnp.float32).astype(o_ref.dtype)


def lm_head_pallas(x2, g, b, w):
    M, H = x2.shape
    _, V = w.shape
    # Biggest row tile that fits comfortably; pad M so the grid divides evenly.
    tm = M if M <= 512 else 256
    tm = max(8, ((tm + 7) // 8) * 8)
    Mp = ((M + tm - 1) // tm) * tm
    if Mp != M:
        x2 = jnp.pad(x2, ((0, Mp - M), (0, 0)))
    out = pl.pallas_call(
        _head_kernel,
        out_shape=jax.ShapeDtypeStruct((Mp, V), jnp.float32),
        grid_spec=pltpu.PrefetchScalarGridSpec(
            num_scalar_prefetch=0,
            grid=(Mp // tm,),
            in_specs=[pl.BlockSpec((tm, H), lambda i: (i, 0)),
                      pl.BlockSpec((1, H), lambda i: (0, 0)),
                      pl.BlockSpec((1, H), lambda i: (0, 0)),
                      pl.BlockSpec((H, V), lambda i: (0, 0))],
            out_specs=pl.BlockSpec((tm, V), lambda i: (i, 0))),
        compiler_params=pltpu.CompilerParams(dimension_semantics=("parallel",)),
    )(x2, g, b, w)
    return out[:M]


# ---------------------------- params & model glue ----------------------------

def init_params(key):
    def normal(k, shape, scale=0.02):
        return (scale * jax.random.normal(k, shape, jnp.float32)).astype(COMPUTE_DTYPE)

    def zeros(shape):
        return jnp.zeros(shape, COMPUTE_DTYPE)

    def ones(shape):
        return jnp.ones(shape, COMPUTE_DTYPE)

    keys = jax.random.split(key, 3 + N_LAYER)
    params = {
        "proj_w": normal(keys[0], (EMBED_DIM, HIDDEN_DIM)),       # nn.Linear(E, H)
        "proj_b": zeros((1, HIDDEN_DIM)),
        "wpe": normal(keys[1], (N_POS, HIDDEN_DIM)),              # position embeddings
        "ln_f_g": ones((1, HIDDEN_DIM)),
        "ln_f_b": zeros((1, HIDDEN_DIM)),
        "lm_w": normal(keys[2], (HIDDEN_DIM, VOCAB)),             # tied wte.T (no bias)
        "blocks": [],
    }
    for l in range(N_LAYER):
        lk = jax.random.split(keys[3 + l], 4)
        params["blocks"].append({
            "ln1_g": ones((1, HIDDEN_DIM)), "ln1_b": zeros((1, HIDDEN_DIM)),
            "attn_w": normal(lk[0], (HIDDEN_DIM, 3 * HIDDEN_DIM)),      # c_attn
            "attn_b": zeros((1, 3 * HIDDEN_DIM)),
            "attn_proj_w": normal(lk[1], (HIDDEN_DIM, HIDDEN_DIM)),     # c_proj
            "attn_proj_b": zeros((1, HIDDEN_DIM)),
            "ln2_g": ones((1, HIDDEN_DIM)), "ln2_b": zeros((1, HIDDEN_DIM)),
            "fc_w": normal(lk[2], (HIDDEN_DIM, 4 * HIDDEN_DIM)),        # mlp c_fc
            "fc_b": zeros((1, 4 * HIDDEN_DIM)),
            "mlp_proj_w": normal(lk[3], (4 * HIDDEN_DIM, HIDDEN_DIM)),  # mlp c_proj
            "mlp_proj_b": zeros((1, HIDDEN_DIM)),
        })
    return params


def amt_forward(params, text_embedding, event_sequence):
    """text_embedding: [B, T_text, EMBED_DIM]; event_sequence: [B, T_event, HIDDEN_DIM]."""
    B, Tt, E = text_embedding.shape
    _, Te, H = event_sequence.shape
    T = Tt + Te
    wpe_t = lax.slice(params["wpe"], (0, 0), (T, H))    # positions 0..T-1
    # projection + concat + wpe, fused
    x = embed_pallas(text_embedding, event_sequence,
                     params["proj_w"], params["proj_b"], wpe_t)
    # 6 x GPT-2 blocks, one fused kernel each
    for p in params["blocks"]:
        x = gpt2_block_pallas(x, p)
    # final LN + tied lm_head (no bias), fused
    logits = lm_head_pallas(x.reshape(B * T, H),
                            params["ln_f_g"], params["ln_f_b"], params["lm_w"])
    # GPT2LMHeadModel returns a ModelOutput; the tensor payload is the logits.
    return logits.reshape(B, T, VOCAB)


if __name__ == "__main__":
    key = jax.random.PRNGKey(0)
    kp, kt, ke = jax.random.split(key, 3)
    params = init_params(kp)

    B, T_text, T_event = 2, 8, 8
    text_embedding = jax.random.normal(kt, (B, T_text, EMBED_DIM), jnp.float32)
    event_sequence = jax.random.normal(ke, (B, T_event, HIDDEN_DIM), jnp.float32)

    fwd = jax.jit(amt_forward)
    logits = fwd(params, text_embedding, event_sequence)
    logits = jax.block_until_ready(logits)

    assert logits.shape == (B, T_text + T_event, VOCAB), logits.shape
    assert bool(jnp.all(jnp.isfinite(logits)))
    print("KERNEL_OK")
</pallas_src>

<mosaic_0001>
module attributes {stable_mosaic.version = 11 : i64} {
  func.func @_embed_kernel(%arg0: i32, %arg1: memref<1x8x32xf32, #tpu.memory_space<vmem>>, %arg2: memref<1x8x64xf32, #tpu.memory_space<vmem>>, %arg3: memref<32x64xbf16, #tpu.memory_space<vmem>>, %arg4: memref<1x64xbf16, #tpu.memory_space<vmem>>, %arg5: memref<16x64xbf16, #tpu.memory_space<vmem>>, %arg6: memref<1x16x64xbf16, #tpu.memory_space<vmem>>) attributes {dimension_semantics = [#tpu.dimension_semantics<parallel>], iteration_bounds = array<i64: 2>, scalar_prefetch = 0 : i64, scratch_operands = 0 : i64, tpu.core_type = #tpu.core_type<tc>, window_params = [{transform_indices = @transform_0, window_bounds = array<i64: 1, 8, 32>}, {transform_indices = @transform_1, window_bounds = array<i64: 1, 8, 64>}, {pipeline_mode = #tpu.pipeline_mode<synchronous>, transform_indices = @transform_2, window_bounds = array<i64: 32, 64>}, {pipeline_mode = #tpu.pipeline_mode<synchronous>, transform_indices = @transform_3, window_bounds = array<i64: 1, 64>}, {pipeline_mode = #tpu.pipeline_mode<synchronous>, transform_indices = @transform_4, window_bounds = array<i64: 16, 64>}, {transform_indices = @transform_5, window_bounds = array<i64: 1, 16, 64>}]} {
    %c0 = arith.constant 0 : index
    %c0_0 = arith.constant 0 : index
    %c0_1 = arith.constant 0 : index
    %0 = vector.load %arg1[%c0, %c0_0, %c0_1] : memref<1x8x32xf32, #tpu.memory_space<vmem>>, vector<1x8x32xf32>
    %1 = vector.shape_cast %0 : vector<1x8x32xf32> to vector<8x32xf32>
    %2 = arith.truncf %1 : vector<8x32xf32> to vector<8x32xbf16>
    %c0_2 = arith.constant 0 : index
    %c0_3 = arith.constant 0 : index
    %3 = vector.load %arg3[%c0_2, %c0_3] : memref<32x64xbf16, #tpu.memory_space<vmem>>, vector<32x64xbf16>
    %cst = arith.constant dense<0.000000e+00> : vector<8x64xf32>
    %4 = tpu.matmul %2, %3, %cst {dimension_numbers = #tpu.dot_dimension_numbers<[1], [0], [0], [1], [0, 0, 1, 1], [], []>} : vector<8x32xbf16>, vector<32x64xbf16>, vector<8x64xf32> -> vector<8x64xf32>
    %c0_4 = arith.constant 0 : index
    %c0_5 = arith.constant 0 : index
    %5 = vector.load %arg4[%c0_4, %c0_5] : memref<1x64xbf16, #tpu.memory_space<vmem>>, vector<1x64xbf16>
    %6 = arith.extf %5 : vector<1x64xbf16> to vector<1x64xf32>
    %7 = vector.broadcast %6 : vector<1x64xf32> to vector<8x64xf32>
    %8 = arith.addf %4, %7 : vector<8x64xf32>
    %c0_6 = arith.constant 0 : index
    %c0_7 = arith.constant 0 : index
    %9 = vector.load %arg5[%c0_6, %c0_7] : memref<16x64xbf16, #tpu.memory_space<vmem>>, vector<16x64xbf16>
    %10 = arith.extf %9 : vector<16x64xbf16> to vector<16x64xf32>
    %11 = vector.extract_strided_slice %10 {offsets = [0, 0], sizes = [8, 64], strides = [1, 1]} : vector<16x64xf32> to vector<8x64xf32>
    %12 = arith.addf %8, %11 : vector<8x64xf32>
    %c0_8 = arith.constant 0 : index
    %c0_9 = arith.constant 0 : index
    %c0_10 = arith.constant 0 : index
    %13 = vector.load %arg2[%c0_8, %c0_9, %c0_10] : memref<1x8x64xf32, #tpu.memory_space<vmem>>, vector<1x8x64xf32>
    %14 = vector.shape_cast %13 : vector<1x8x64xf32> to vector<8x64xf32>
    %15 = vector.extract_strided_slice %10 {offsets = [8, 0], sizes = [8, 64], strides = [1, 1]} : vector<16x64xf32> to vector<8x64xf32>
    %16 = arith.addf %14, %15 : vector<8x64xf32>
    %17 = tpu.concatenate %12, %16 in 0 : vector<8x64xf32>, vector<8x64xf32> -> vector<16x64xf32>
    %18 = arith.truncf %17 : vector<16x64xf32> to vector<16x64xbf16>
    %c0_11 = arith.constant 0 : index
    %c0_12 = arith.constant 0 : index
    %c0_13 = arith.constant 0 : index
    %19 = vector.load %arg6[%c0_11, %c0_12, %c0_13] : memref<1x16x64xbf16, #tpu.memory_space<vmem>>, vector<1x16x64xbf16>
    %20 = vector.shape_cast %19 : vector<1x16x64xbf16> to vector<16x64xbf16>
    %21 = vector.shape_cast %18 : vector<16x64xbf16> to vector<1x16x64xbf16>
    tpu.vector_store %arg6[%c0_11, %c0_12, %c0_13], %21 {strides = array<i32>} : memref<1x16x64xbf16, #tpu.memory_space<vmem>>, vector<1x16x64xbf16>,
    return
  }
  func.func @transform_0(%arg0: i32) -> (i32, i32, i32) {
    %c0_i32 = arith.constant 0 : i32
    %c0_i32_0 = arith.constant 0 : i32
    %c0_i32_1 = arith.constant 0 : i32
    return %arg0, %c0_i32, %c0_i32_0 : i32, i32, i32
  }
  func.func @transform_1(%arg0: i32) -> (i32, i32, i32) {
    %c0_i32 = arith.constant 0 : i32
    %c0_i32_0 = arith.constant 0 : i32
    %c0_i32_1 = arith.constant 0 : i32
    return %arg0, %c0_i32, %c0_i32_0 : i32, i32, i32
  }
  func.func @transform_2(%arg0: i32) -> (i32, i32) {
    %c0_i32 = arith.constant 0 : i32
    %c0_i32_0 = arith.constant 0 : i32
    %c0_i32_1 = arith.constant 0 : i32
    return %c0_i32, %c0_i32_0 : i32, i32
  }
  func.func @transform_3(%arg0: i32) -> (i32, i32) {
    %c0_i32 = arith.constant 0 : i32
    %c0_i32_0 = arith.constant 0 : i32
    %c0_i32_1 = arith.constant 0 : i32
    return %c0_i32, %c0_i32_0 : i32, i32
  }
  func.func @transform_4(%arg0: i32) -> (i32, i32) {
    %c0_i32 = arith.constant 0 : i32
    %c0_i32_0 = arith.constant 0 : i32
    %c0_i32_1 = arith.constant 0 : i32
    return %c0_i32, %c0_i32_0 : i32, i32
  }
  func.func @transform_5(%arg0: i32) -> (i32, i32, i32) {
    %c0_i32 = arith.constant 0 : i32
    %c0_i32_0 = arith.constant 0 : i32
    %c0_i32_1 = arith.constant 0 : i32
    return %arg0, %c0_i32, %c0_i32_0 : i32, i32, i32
  }
}

module attributes {stable_mosaic.version = 11 : i64} {
  func.func @_block_kernel(%arg0: i32, %arg1: memref<1x16x64xbf16, #tpu.memory_space<vmem>>, %arg2: memref<1x64xbf16, #tpu.memory_space<vmem>>, %arg3: memref<1x64xbf16, #tpu.memory_space<vmem>>, %arg4: memref<64x192xbf16, #tpu.memory_space<vmem>>, %arg5: memref<1x192xbf16, #tpu.memory_space<vmem>>, %arg6: memref<64x64xbf16, #tpu.memory_space<vmem>>, %arg7: memref<1x64xbf16, #tpu.memory_space<vmem>>, %arg8: memref<1x64xbf16, #tpu.memory_space<vmem>>, %arg9: memref<1x64xbf16, #tpu.memory_space<vmem>>, %arg10: memref<64x256xbf16, #tpu.memory_space<vmem>>, %arg11: memref<1x256xbf16, #tpu.memory_space<vmem>>, %arg12: memref<256x64xbf16, #tpu.memory_space<vmem>>, %arg13: memref<1x64xbf16, #tpu.memory_space<vmem>>, %arg14: memref<1x16x64xbf16, #tpu.memory_space<vmem>>) attributes {dimension_semantics = [#tpu.dimension_semantics<parallel>], iteration_bounds = array<i64: 2>, scalar_prefetch = 0 : i64, scratch_operands = 0 : i64, tpu.core_type = #tpu.core_type<tc>, window_params = [{transform_indices = @transform_0, window_bounds = array<i64: 1, 16, 64>}, {pipeline_mode = #tpu.pipeline_mode<synchronous>, transform_indices = @transform_1, window_bounds = array<i64: 1, 64>}, {pipeline_mode = #tpu.pipeline_mode<synchronous>, transform_indices = @transform_2, window_bounds = array<i64: 1, 64>}, {pipeline_mode = #tpu.pipeline_mode<synchronous>, transform_indices = @transform_3, window_bounds = array<i64: 64, 192>}, {pipeline_mode = #tpu.pipeline_mode<synchronous>, transform_indices = @transform_4, window_bounds = array<i64: 1, 192>}, {pipeline_mode = #tpu.pipeline_mode<synchronous>, transform_indices = @transform_5, window_bounds = array<i64: 64, 64>}, {pipeline_mode = #tpu.pipeline_mode<synchronous>, transform_indices = @transform_6, window_bounds = array<i64: 1, 64>}, {pipeline_mode = #tpu.pipeline_mode<synchronous>, transform_indices = @transform_7, window_bounds = array<i64: 1, 64>}, {pipeline_mode = #tpu.pipeline_mode<synchronous>, transform_indices = @transform_8, window_bounds = array<i64: 1, 64>}, {pipeline_mode = #tpu.pipeline_mode<synchronous>, transform_indices = @transform_9, window_bounds = array<i64: 64, 256>}, {pipeline_mode = #tpu.pipeline_mode<synchronous>, transform_indices = @transform_10, window_bounds = array<i64: 1, 256>}, {pipeline_mode = #tpu.pipeline_mode<synchronous>, transform_indices = @transform_11, window_bounds = array<i64: 256, 64>}, {pipeline_mode = #tpu.pipeline_mode<synchronous>, transform_indices = @transform_12, window_bounds = array<i64: 1, 64>}, {transform_indices = @transform_13, window_bounds = array<i64: 1, 16, 64>}]} {
    %c0 = arith.constant 0 : index
    %c0_0 = arith.constant 0 : index
    %c0_1 = arith.constant 0 : index
    %0 = vector.load %arg1[%c0, %c0_0, %c0_1] : memref<1x16x64xbf16, #tpu.memory_space<vmem>>, vector<1x16x64xbf16>
    %1 = vector.shape_cast %0 : vector<1x16x64xbf16> to vector<16x64xbf16>
    %2 = arith.extf %1 : vector<16x64xbf16> to vector<16x64xf32>
    %cst = arith.constant dense<0.000000e+00> : vector<16xf32>
    %3 = vector.multi_reduction <add>, %2, %cst [1] : vector<16x64xf32> to vector<16xf32>
    %4 = vector.shape_cast %3 : vector<16xf32> to vector<16x1xf32>
    %cst_2 = arith.constant 6.400000e+01 : f32
    %5 = vector.broadcast %cst_2 : f32 to vector<16x1xf32>
    %6 = arith.divf %4, %5 : vector<16x1xf32>
    %7 = vector.broadcast %6 : vector<16x1xf32> to vector<16x64xf32>
    %8 = arith.subf %2, %7 : vector<16x64xf32>
    %9 = arith.mulf %8, %8 : vector<16x64xf32>
    %cst_3 = arith.constant dense<0.000000e+00> : vector<16xf32>
    %10 = vector.multi_reduction <add>, %9, %cst_3 [1] : vector<16x64xf32> to vector<16xf32>
    %11 = vector.shape_cast %10 : vector<16xf32> to vector<16x1xf32>
    %cst_4 = arith.constant 6.400000e+01 : f32
    %12 = vector.broadcast %cst_4 : f32 to vector<16x1xf32>
    %13 = arith.divf %11, %12 : vector<16x1xf32>
    %14 = vector.broadcast %6 : vector<16x1xf32> to vector<16x64xf32>
    %15 = arith.subf %2, %14 : vector<16x64xf32>
    %cst_5 = arith.constant 9.99999974E-6 : f32
    %16 = vector.broadcast %cst_5 : f32 to vector<16x1xf32>
    %17 = arith.addf %13, %16 : vector<16x1xf32>
    %18 = math.rsqrt %17 : vector<16x1xf32>
    %19 = vector.broadcast %18 : vector<16x1xf32> to vector<16x64xf32>
    %20 = arith.mulf %15, %19 : vector<16x64xf32>
    %c0_6 = arith.constant 0 : index
    %c0_7 = arith.constant 0 : index
    %21 = vector.load %arg2[%c0_6, %c0_7] : memref<1x64xbf16, #tpu.memory_space<vmem>>, vector<1x64xbf16>
    %22 = arith.extf %21 : vector<1x64xbf16> to vector<1x64xf32>
    %23 = vector.broadcast %22 : vector<1x64xf32> to vector<16x64xf32>
    %24 = arith.mulf %20, %23 : vector<16x64xf32>
    %c0_8 = arith.constant 0 : index
    %c0_9 = arith.constant 0 : index
    %25 = vector.load %arg3[%c0_8, %c0_9] : memref<1x64xbf16, #tpu.memory_space<vmem>>, vector<1x64xbf16>
    %26 = arith.extf %25 : vector<1x64xbf16> to vector<1x64xf32>
    %27 = vector.broadcast %26 : vector<1x64xf32> to vector<16x64xf32>
    %28 = arith.addf %24, %27 : vector<16x64xf32>
    %29 = arith.truncf %28 : vector<16x64xf32> to vector<16x64xbf16>
    %c0_10 = arith.constant 0 : index
    %c0_11 = arith.constant 0 : index
    %30 = vector.load %arg4[%c0_10, %c0_11] : memref<64x192xbf16, #tpu.memory_space<vmem>>, vector<64x192xbf16>
    %cst_12 = arith.constant dense<0.000000e+00> : vector<16x192xf32>
    %31 = tpu.matmul %29, %30, %cst_12 {dimension_numbers = #tpu.dot_dimension_numbers<[1], [0], [0], [1], [0, 0, 1, 1], [], []>} : vector<16x64xbf16>, vector<64x192xbf16>, vector<16x192xf32> -> vector<16x192xf32>
    %c0_13 = arith.constant 0 : index
    %c0_14 = arith.constant 0 : index
    %32 = vector.load %arg5[%c0_13, %c0_14] : memref<1x192xbf16, #tpu.memory_space<vmem>>, vector<1x192xbf16>
    %33 = arith.extf %32 : vector<1x192xbf16> to vector<1x192xf32>
    %34 = vector.broadcast %33 : vector<1x192xf32> to vector<16x192xf32>
    %35 = arith.addf %31, %34 : vector<16x192xf32>
    %36 = vector.extract_strided_slice %35 {offsets = [0, 0], sizes = [16, 64], strides = [1, 1]} : vector<16x192xf32> to vector<16x64xf32>
    %cst_15 = arith.constant 0.353553385 : f32
    %37 = vector.broadcast %cst_15 : f32 to vector<16x64xf32>
    %38 = arith.mulf %36, %37 : vector<16x64xf32>
    %39 = vector.extract_strided_slice %35 {offsets = [0, 64], sizes = [16, 64], strides = [1, 1]} : vector<16x192xf32> to vector<16x64xf32>
    %40 = vector.extract_strided_slice %35 {offsets = [0, 128], sizes = [16, 64], strides = [1, 1]} : vector<16x192xf32> to vector<16x64xf32>
    %41 = tpu.iota {dimensions = array<i32: 0>} : vector<16x16xi32>
    %42 = tpu.iota {dimensions = array<i32: 1>} : vector<16x16xi32>
    %43 = arith.cmpi sle, %42, %41 : vector<16x16xi32>
    %44 = vector.extract_strided_slice %38 {offsets = [0, 0], sizes = [16, 8], strides = [1, 1]} : vector<16x64xf32> to vector<16x8xf32>
    %45 = vector.extract_strided_slice %39 {offsets = [0, 0], sizes = [16, 8], strides = [1, 1]} : vector<16x64xf32> to vector<16x8xf32>
    %46 = vector.extract_strided_slice %40 {offsets = [0, 0], sizes = [16, 8], strides = [1, 1]} : vector<16x64xf32> to vector<16x8xf32>
    %cst_16 = arith.constant dense<0.000000e+00> : vector<16x16xf32>
    %47 = tpu.matmul %44, %45, %cst_16 {dimension_numbers = #tpu.dot_dimension_numbers<[1], [1], [0], [0], [0, 0, 1, 0], [], []>} : vector<16x8xf32>, vector<16x8xf32>, vector<16x16xf32> -> vector<16x16xf32>
    %cst_17 = arith.constant -1.000000e+30 : f32
    %48 = vector.broadcast %cst_17 : f32 to vector<16x16xf32>
    %49 = arith.select %43, %47, %48 : vector<16x16xi1>, vector<16x16xf32>
    %cst_18 = arith.constant dense<0xFF800000> : vector<16xf32>
    %50 = vector.multi_reduction <maximumf>, %49, %cst_18 [1] : vector<16x16xf32> to vector<16xf32>
    %51 = vector.shape_cast %50 : vector<16xf32> to vector<16x1xf32>
    %52 = vector.broadcast %51 : vector<16x1xf32> to vector<16x16xf32>
    %53 = arith.subf %49, %52 : vector<16x16xf32>
    %54 = math.exp %53 : vector<16x16xf32>
    %cst_19 = arith.constant dense<0.000000e+00> : vector<16xf32>
    %55 = vector.multi_reduction <add>, %54, %cst_19 [1] : vector<16x16xf32> to vector<16xf32>
    %56 = vector.shape_cast %55 : vector<16xf32> to vector<16x1xf32>
    %57 = tpu.reciprocal %56 {approx = true} : vector<16x1xf32> -> vector<16x1xf32>
    %58 = vector.broadcast %57 : vector<16x1xf32> to vector<16x16xf32>
    %59 = arith.mulf %54, %58 : vector<16x16xf32>
    %cst_20 = arith.constant dense<0.000000e+00> : vector<16x8xf32>
    %60 = tpu.matmul %59, %46, %cst_20 {dimension_numbers = #tpu.dot_dimension_numbers<[1], [0], [0], [1], [0, 0, 1, 1], [], []>} : vector<16x16xf32>, vector<16x8xf32>, vector<16x8xf32> -> vector<16x8xf32>
    %61 = vector.extract_strided_slice %38 {offsets = [0, 8], sizes = [16, 8], strides = [1, 1]} : vector<16x64xf32> to vector<16x8xf32>
    %62 = vector.extract_strided_slice %39 {offsets = [0, 8], sizes = [16, 8], strides = [1, 1]} : vector<16x64xf32> to vector<16x8xf32>
    %63 = vector.extract_strided_slice %40 {offsets = [0, 8], sizes = [16, 8], strides = [1, 1]} : vector<16x64xf32> to vector<16x8xf32>
    %cst_21 = arith.constant dense<0.000000e+00> : vector<16x16xf32>
    %64 = tpu.matmul %61, %62, %cst_21 {dimension_numbers = #tpu.dot_dimension_numbers<[1], [1], [0], [0], [0, 0, 1, 0], [], []>} : vector<16x8xf32>, vector<16x8xf32>, vector<16x16xf32> -> vector<16x16xf32>
    %cst_22 = arith.constant -1.000000e+30 : f32
    %65 = vector.broadcast %cst_22 : f32 to vector<16x16xf32>
    %66 = arith.select %43, %64, %65 : vector<16x16xi1>, vector<16x16xf32>
    %cst_23 = arith.constant dense<0xFF800000> : vector<16xf32>
    %67 = vector.multi_reduction <maximumf>, %66, %cst_23 [1] : vector<16x16xf32> to vector<16xf32>
    %68 = vector.shape_cast %67 : vector<16xf32> to vector<16x1xf32>
    %69 = vector.broadcast %68 : vector<16x1xf32> to vector<16x16xf32>
    %70 = arith.subf %66, %69 : vector<16x16xf32>
    %71 = math.exp %70 : vector<16x16xf32>
    %cst_24 = arith.constant dense<0.000000e+00> : vector<16xf32>
    %72 = vector.multi_reduction <add>, %71, %cst_24 [1] : vector<16x16xf32> to vector<16xf32>
    %73 = vector.shape_cast %72 : vector<16xf32> to vector<16x1xf32>
    %74 = tpu.reciprocal %73 {approx = true} : vector<16x1xf32> -> vector<16x1xf32>
    %75 = vector.broadcast %74 : vector<16x1xf32> to vector<16x16xf32>
    %76 = arith.mulf %71, %75 : vector<16x16xf32>
    %cst_25 = arith.constant dense<0.000000e+00> : vector<16x8xf32>
    %77 = tpu.matmul %76, %63, %cst_25 {dimension_numbers = #tpu.dot_dimension_numbers<[1], [0], [0], [1], [0, 0, 1, 1], [], []>} : vector<16x16xf32>, vector<16x8xf32>, vector<16x8xf32> -> vector<16x8xf32>
    %78 = vector.extract_strided_slice %38 {offsets = [0, 16], sizes = [16, 8], strides = [1, 1]} : vector<16x64xf32> to vector<16x8xf32>
    %79 = vector.extract_strided_slice %39 {offsets = [0, 16], sizes = [16, 8], strides = [1, 1]} : vector<16x64xf32> to vector<16x8xf32>
    %80 = vector.extract_strided_slice %40 {offsets = [0, 16], sizes = [16, 8], strides = [1, 1]} : vector<16x64xf32> to vector<16x8xf32>
    %cst_26 = arith.constant dense<0.000000e+00> : vector<16x16xf32>
    %81 = tpu.matmul %78, %79, %cst_26 {dimension_numbers = #tpu.dot_dimension_numbers<[1], [1], [0], [0], [0, 0, 1, 0], [], []>} : vector<16x8xf32>, vector<16x8xf32>, vector<16x16xf32> -> vector<16x16xf32>
    %cst_27 = arith.constant -1.000000e+30 : f32
    %82 = vector.broadcast %cst_27 : f32 to vector<16x16xf32>
    %83 = arith.select %43, %81, %82 : vector<16x16xi1>, vector<16x16xf32>
    %cst_28 = arith.constant dense<0xFF800000> : vector<16xf32>
    %84 = vector.multi_reduction <maximumf>, %83, %cst_28 [1] : vector<16x16xf32> to vector<16xf32>
    %85 = vector.shape_cast %84 : vector<16xf32> to vector<16x1xf32>
    %86 = vector.broadcast %85 : vector<16x1xf32> to vector<16x16xf32>
    %87 = arith.subf %83, %86 : vector<16x16xf32>
    %88 = math.exp %87 : vector<16x16xf32>
    %cst_29 = arith.constant dense<0.000000e+00> : vector<16xf32>
    %89 = vector.multi_reduction <add>, %88, %cst_29 [1] : vector<16x16xf32> to vector<16xf32>
    %90 = vector.shape_cast %89 : vector<16xf32> to vector<16x1xf32>
    %91 = tpu.reciprocal %90 {approx = true} : vector<16x1xf32> -> vector<16x1xf32>
    %92 = vector.broadcast %91 : vector<16x1xf32> to vector<16x16xf32>
    %93 = arith.mulf %88, %92 : vector<16x16xf32>
    %cst_30 = arith.constant dense<0.000000e+00> : vector<16x8xf32>
    %94 = tpu.matmul %93, %80, %cst_30 {dimension_numbers = #tpu.dot_dimension_numbers<[1], [0], [0], [1], [0, 0, 1, 1], [], []>} : vector<16x16xf32>, vector<16x8xf32>, vector<16x8xf32> -> vector<16x8xf32>
    %95 = vector.extract_strided_slice %38 {offsets = [0, 24], sizes = [16, 8], strides = [1, 1]} : vector<16x64xf32> to vector<16x8xf32>
    %96 = vector.extract_strided_slice %39 {offsets = [0, 24], sizes = [16, 8], strides = [1, 1]} : vector<16x64xf32> to vector<16x8xf32>
    %97 = vector.extract_strided_slice %40 {offsets = [0, 24], sizes = [16, 8], strides = [1, 1]} : vector<16x64xf32> to vector<16x8xf32>
    %cst_31 = arith.constant dense<0.000000e+00> : vector<16x16xf32>
    %98 = tpu.matmul %95, %96, %cst_31 {dimension_numbers = #tpu.dot_dimension_numbers<[1], [1], [0], [0], [0, 0, 1, 0], [], []>} : vector<16x8xf32>, vector<16x8xf32>, vector<16x16xf32> -> vector<16x16xf32>
    %cst_32 = arith.constant -1.000000e+30 : f32
    %99 = vector.broadcast %cst_32 : f32 to vector<16x16xf32>
    %100 = arith.select %43, %98, %99 : vector<16x16xi1>, vector<16x16xf32>
    %cst_33 = arith.constant dense<0xFF800000> : vector<16xf32>
    %101 = vector.multi_reduction <maximumf>, %100, %cst_33 [1] : vector<16x16xf32> to vector<16xf32>
    %102 = vector.shape_cast %101 : vector<16xf32> to vector<16x1xf32>
    %103 = vector.broadcast %102 : vector<16x1xf32> to vector<16x16xf32>
    %104 = arith.subf %100, %103 : vector<16x16xf32>
    %105 = math.exp %104 : vector<16x16xf32>
    %cst_34 = arith.constant dense<0.000000e+00> : vector<16xf32>
    %106 = vector.multi_reduction <add>, %105, %cst_34 [1] : vector<16x16xf32> to vector<16xf32>
    %107 = vector.shape_cast %106 : vector<16xf32> to vector<16x1xf32>
    %108 = tpu.reciprocal %107 {approx = true} : vector<16x1xf32> -> vector<16x1xf32>
    %109 = vector.broadcast %108 : vector<16x1xf32> to vector<16x16xf32>
    %110 = arith.mulf %105, %109 : vector<16x16xf32>
    %cst_35 = arith.constant dense<0.000000e+00> : vector<16x8xf32>
    %111 = tpu.matmul %110, %97, %cst_35 {dimension_numbers = #tpu.dot_dimension_numbers<[1], [0], [0], [1], [0, 0, 1, 1], [], []>} : vector<16x16xf32>, vector<16x8xf32>, vector<16x8xf32> -> vector<16x8xf32>
    %112 = vector.extract_strided_slice %38 {offsets = [0, 32], sizes = [16, 8], strides = [1, 1]} : vector<16x64xf32> to vector<16x8xf32>
    %113 = vector.extract_strided_slice %39 {offsets = [0, 32], sizes = [16, 8], strides = [1, 1]} : vector<16x64xf32> to vector<16x8xf32>
    %114 = vector.extract_strided_slice %40 {offsets = [0, 32], sizes = [16, 8], strides = [1, 1]} : vector<16x64xf32> to vector<16x8xf32>
    %cst_36 = arith.constant dense<0.000000e+00> : vector<16x16xf32>
    %115 = tpu.matmul %112, %113, %cst_36 {dimension_numbers = #tpu.dot_dimension_numbers<[1], [1], [0], [0], [0, 0, 1, 0], [], []>} : vector<16x8xf32>, vector<16x8xf32>, vector<16x16xf32> -> vector<16x16xf32>
    %cst_37 = arith.constant -1.000000e+30 : f32
    %116 = vector.broadcast %cst_37 : f32 to vector<16x16xf32>
    %117 = arith.select %43, %115, %116 : vector<16x16xi1>, vector<16x16xf32>
    %cst_38 = arith.constant dense<0xFF800000> : vector<16xf32>
    %118 = vector.multi_reduction <maximumf>, %117, %cst_38 [1] : vector<16x16xf32> to vector<16xf32>
    %119 = vector.shape_cast %118 : vector<16xf32> to vector<16x1xf32>
    %120 = vector.broadcast %119 : vector<16x1xf32> to vector<16x16xf32>
    %121 = arith.subf %117, %120 : vector<16x16xf32>
    %122 = math.exp %121 : vector<16x16xf32>
    %cst_39 = arith.constant dense<0.000000e+00> : vector<16xf32>
    %123 = vector.multi_reduction <add>, %122, %cst_39 [1] : vector<16x16xf32> to vector<16xf32>
    %124 = vector.shape_cast %123 : vector<16xf32> to vector<16x1xf32>
    %125 = tpu.reciprocal %124 {approx = true} : vector<16x1xf32> -> vector<16x1xf32>
    %126 = vector.broadcast %125 : vector<16x1xf32> to vector<16x16xf32>
    %127 = arith.mulf %122, %126 : vector<16x16xf32>
    %cst_40 = arith.constant dense<0.000000e+00> : vector<16x8xf32>
    %128 = tpu.matmul %127, %114, %cst_40 {dimension_numbers = #tpu.dot_dimension_numbers<[1], [0], [0], [1], [0, 0, 1, 1], [], []>} : vector<16x16xf32>, vector<16x8xf32>, vector<16x8xf32> -> vector<16x8xf32>
    %129 = vector.extract_strided_slice %38 {offsets = [0, 40], sizes = [16, 8], strides = [1, 1]} : vector<16x64xf32> to vector<16x8xf32>
    %130 = vector.extract_strided_slice %39 {offsets = [0, 40], sizes = [16, 8], strides = [1, 1]} : vector<16x64xf32> to vector<16x8xf32>
    %131 = vector.extract_strided_slice %40 {offsets = [0, 40], sizes = [16, 8], strides = [1, 1]} : vector<16x64xf32> to vector<16x8xf32>
    %cst_41 = arith.constant dense<0.000000e+00> : vector<16x16xf32>
    %132 = tpu.matmul %129, %130, %cst_41 {dimension_numbers = #tpu.dot_dimension_numbers<[1], [1], [0], [0], [0, 0, 1, 0], [], []>} : vector<16x8xf32>, vector<16x8xf32>, vector<16x16xf32> -> vector<16x16xf32>
    %cst_42 = arith.constant -1.000000e+30 : f32
    %133 = vector.broadcast %cst_42 : f32 to vector<16x16xf32>
    %134 = arith.select %43, %132, %133 : vector<16x16xi1>, vector<16x16xf32>
    %cst_43 = arith.constant dense<0xFF800000> : vector<16xf32>
    %135 = vector.multi_reduction <maximumf>, %134, %cst_43 [1] : vector<16x16xf32> to vector<16xf32>
    %136 = vector.shape_cast %135 : vector<16xf32> to vector<16x1xf32>
    %137 = vector.broadcast %136 : vector<16x1xf32> to vector<16x16xf32>
    %138 = arith.subf %134, %137 : vector<16x16xf32>
    %139 = math.exp %138 : vector<16x16xf32>
    %cst_44 = arith.constant dense<0.000000e+00> : vector<16xf32>
    %140 = vector.multi_reduction <add>, %139, %cst_44 [1] : vector<16x16xf32> to vector<16xf32>
    %141 = vector.shape_cast %140 : vector<16xf32> to vector<16x1xf32>
    %142 = tpu.reciprocal %141 {approx = true} : vector<16x1xf32> -> vector<16x1xf32>
    %143 = vector.broadcast %142 : vector<16x1xf32> to vector<16x16xf32>
    %144 = arith.mulf %139, %143 : vector<16x16xf32>
    %cst_45 = arith.constant dense<0.000000e+00> : vector<16x8xf32>
    %145 = tpu.matmul %144, %131, %cst_45 {dimension_numbers = #tpu.dot_dimension_numbers<[1], [0], [0], [1], [0, 0, 1, 1], [], []>} : vector<16x16xf32>, vector<16x8xf32>, vector<16x8xf32> -> vector<16x8xf32>
    %146 = vector.extract_strided_slice %38 {offsets = [0, 48], sizes = [16, 8], strides = [1, 1]} : vector<16x64xf32> to vector<16x8xf32>
    %147 = vector.extract_strided_slice %39 {offsets = [0, 48], sizes = [16, 8], strides = [1, 1]} : vector<16x64xf32> to vector<16x8xf32>
    %148 = vector.extract_strided_slice %40 {offsets = [0, 48], sizes = [16, 8], strides = [1, 1]} : vector<16x64xf32> to vector<16x8xf32>
    %cst_46 = arith.constant dense<0.000000e+00> : vector<16x16xf32>
    %149 = tpu.matmul %146, %147, %cst_46 {dimension_numbers = #tpu.dot_dimension_numbers<[1], [1], [0], [0], [0, 0, 1, 0], [], []>} : vector<16x8xf32>, vector<16x8xf32>, vector<16x16xf32> -> vector<16x16xf32>
    %cst_47 = arith.constant -1.000000e+30 : f32
    %150 = vector.broadcast %cst_47 : f32 to vector<16x16xf32>
    %151 = arith.select %43, %149, %150 : vector<16x16xi1>, vector<16x16xf32>
    %cst_48 = arith.constant dense<0xFF800000> : vector<16xf32>
    %152 = vector.multi_reduction <maximumf>, %151, %cst_48 [1] : vector<16x16xf32> to vector<16xf32>
    %153 = vector.shape_cast %152 : vector<16xf32> to vector<16x1xf32>
    %154 = vector.broadcast %153 : vector<16x1xf32> to vector<16x16xf32>
    %155 = arith.subf %151, %154 : vector<16x16xf32>
    %156 = math.exp %155 : vector<16x16xf32>
    %cst_49 = arith.constant dense<0.000000e+00> : vector<16xf32>
    %157 = vector.multi_reduction <add>, %156, %cst_49 [1] : vector<16x16xf32> to vector<16xf32>
    %158 = vector.shape_cast %157 : vector<16xf32> to vector<16x1xf32>
    %159 = tpu.reciprocal %158 {approx = true} : vector<16x1xf32> -> vector<16x1xf32>
    %160 = vector.broadcast %159 : vector<16x1xf32> to vector<16x16xf32>
    %161 = arith.mulf %156, %160 : vector<16x16xf32>
    %cst_50 = arith.constant dense<0.000000e+00> : vector<16x8xf32>
    %162 = tpu.matmul %161, %148, %cst_50 {dimension_numbers = #tpu.dot_dimension_numbers<[1], [0], [0], [1], [0, 0, 1, 1], [], []>} : vector<16x16xf32>, vector<16x8xf32>, vector<16x8xf32> -> vector<16x8xf32>
    %163 = vector.extract_strided_slice %38 {offsets = [0, 56], sizes = [16, 8], strides = [1, 1]} : vector<16x64xf32> to vector<16x8xf32>
    %164 = vector.extract_strided_slice %39 {offsets = [0, 56], sizes = [16, 8], strides = [1, 1]} : vector<16x64xf32> to vector<16x8xf32>
    %165 = vector.extract_strided_slice %40 {offsets = [0, 56], sizes = [16, 8], strides = [1, 1]} : vector<16x64xf32> to vector<16x8xf32>
    %cst_51 = arith.constant dense<0.000000e+00> : vector<16x16xf32>
    %166 = tpu.matmul %163, %164, %cst_51 {dimension_numbers = #tpu.dot_dimension_numbers<[1], [1], [0], [0], [0, 0, 1, 0], [], []>} : vector<16x8xf32>, vector<16x8xf32>, vector<16x16xf32> -> vector<16x16xf32>
    %cst_52 = arith.constant -1.000000e+30 : f32
    %167 = vector.broadcast %cst_52 : f32 to vector<16x16xf32>
    %168 = arith.select %43, %166, %167 : vector<16x16xi1>, vector<16x16xf32>
    %cst_53 = arith.constant dense<0xFF800000> : vector<16xf32>
    %169 = vector.multi_reduction <maximumf>, %168, %cst_53 [1] : vector<16x16xf32> to vector<16xf32>
    %170 = vector.shape_cast %169 : vector<16xf32> to vector<16x1xf32>
    %171 = vector.broadcast %170 : vector<16x1xf32> to vector<16x16xf32>
    %172 = arith.subf %168, %171 : vector<16x16xf32>
    %173 = math.exp %172 : vector<16x16xf32>
    %cst_54 = arith.constant dense<0.000000e+00> : vector<16xf32>
    %174 = vector.multi_reduction <add>, %173, %cst_54 [1] : vector<16x16xf32> to vector<16xf32>
    %175 = vector.shape_cast %174 : vector<16xf32> to vector<16x1xf32>
    %176 = tpu.reciprocal %175 {approx = true} : vector<16x1xf32> -> vector<16x1xf32>
    %177 = vector.broadcast %176 : vector<16x1xf32> to vector<16x16xf32>
    %178 = arith.mulf %173, %177 : vector<16x16xf32>
    %cst_55 = arith.constant dense<0.000000e+00> : vector<16x8xf32>
    %179 = tpu.matmul %178, %165, %cst_55 {dimension_numbers = #tpu.dot_dimension_numbers<[1], [0], [0], [1], [0, 0, 1, 1], [], []>} : vector<16x16xf32>, vector<16x8xf32>, vector<16x8xf32> -> vector<16x8xf32>
    %180 = tpu.concatenate %60, %77, %94, %111, %128, %145, %162, %179 in 1 : vector<16x8xf32>, vector<16x8xf32>, vector<16x8xf32>, vector<16x8xf32>, vector<16x8xf32>, vector<16x8xf32>, vector<16x8xf32>, vector<16x8xf32> -> vector<16x64xf32>
    %181 = arith.truncf %180 : vector<16x64xf32> to vector<16x64xbf16>
    %c0_56 = arith.constant 0 : index
    %c0_57 = arith.constant 0 : index
    %182 = vector.load %arg6[%c0_56, %c0_57] : memref<64x64xbf16, #tpu.memory_space<vmem>>, vector<64x64xbf16>
    %cst_58 = arith.constant dense<0.000000e+00> : vector<16x64xf32>
    %183 = tpu.matmul %181, %182, %cst_58 {dimension_numbers = #tpu.dot_dimension_numbers<[1], [0], [0], [1], [0, 0, 1, 1], [], []>} : vector<16x64xbf16>, vector<64x64xbf16>, vector<16x64xf32> -> vector<16x64xf32>
    %c0_59 = arith.constant 0 : index
    %c0_60 = arith.constant 0 : index
    %184 = vector.load %arg7[%c0_59, %c0_60] : memref<1x64xbf16, #tpu.memory_space<vmem>>, vector<1x64xbf16>
    %185 = arith.extf %184 : vector<1x64xbf16> to vector<1x64xf32>
    %186 = vector.broadcast %185 : vector<1x64xf32> to vector<16x64xf32>
    %187 = arith.addf %183, %186 : vector<16x64xf32>
    %188 = arith.addf %2, %187 : vector<16x64xf32>
    %cst_61 = arith.constant dense<0.000000e+00> : vector<16xf32>
    %189 = vector.multi_reduction <add>, %188, %cst_61 [1] : vector<16x64xf32> to vector<16xf32>
    %190 = vector.shape_cast %189 : vector<16xf32> to vector<16x1xf32>
    %cst_62 = arith.constant 6.400000e+01 : f32
    %191 = vector.broadcast %cst_62 : f32 to vector<16x1xf32>
    %192 = arith.divf %190, %191 : vector<16x1xf32>
    %193 = vector.broadcast %192 : vector<16x1xf32> to vector<16x64xf32>
    %194 = arith.subf %188, %193 : vector<16x64xf32>
    %195 = arith.mulf %194, %194 : vector<16x64xf32>
    %cst_63 = arith.constant dense<0.000000e+00> : vector<16xf32>
    %196 = vector.multi_reduction <add>, %195, %cst_63 [1] : vector<16x64xf32> to vector<16xf32>
    %197 = vector.shape_cast %196 : vector<16xf32> to vector<16x1xf32>
    %cst_64 = arith.constant 6.400000e+01 : f32
    %198 = vector.broadcast %cst_64 : f32 to vector<16x1xf32>
    %199 = arith.divf %197, %198 : vector<16x1xf32>
    %200 = vector.broadcast %192 : vector<16x1xf32> to vector<16x64xf32>
    %201 = arith.subf %188, %200 : vector<16x64xf32>
    %cst_65 = arith.constant 9.99999974E-6 : f32
    %202 = vector.broadcast %cst_65 : f32 to vector<16x1xf32>
    %203 = arith.addf %199, %202 : vector<16x1xf32>
    %204 = math.rsqrt %203 : vector<16x1xf32>
    %205 = vector.broadcast %204 : vector<16x1xf32> to vector<16x64xf32>
    %206 = arith.mulf %201, %205 : vector<16x64xf32>
    %c0_66 = arith.constant 0 : index
    %c0_67 = arith.constant 0 : index
    %207 = vector.load %arg8[%c0_66, %c0_67] : memref<1x64xbf16, #tpu.memory_space<vmem>>, vector<1x64xbf16>
    %208 = arith.extf %207 : vector<1x64xbf16> to vector<1x64xf32>
    %209 = vector.broadcast %208 : vector<1x64xf32> to vector<16x64xf32>
    %210 = arith.mulf %206, %209 : vector<16x64xf32>
    %c0_68 = arith.constant 0 : index
    %c0_69 = arith.constant 0 : index
    %211 = vector.load %arg9[%c0_68, %c0_69] : memref<1x64xbf16, #tpu.memory_space<vmem>>, vector<1x64xbf16>
    %212 = arith.extf %211 : vector<1x64xbf16> to vector<1x64xf32>
    %213 = vector.broadcast %212 : vector<1x64xf32> to vector<16x64xf32>
    %214 = arith.addf %210, %213 : vector<16x64xf32>
    %215 = arith.truncf %214 : vector<16x64xf32> to vector<16x64xbf16>
    %c0_70 = arith.constant 0 : index
    %c0_71 = arith.constant 0 : index
    %216 = vector.load %arg10[%c0_70, %c0_71] : memref<64x256xbf16, #tpu.memory_space<vmem>>, vector<64x256xbf16>
    %cst_72 = arith.constant dense<0.000000e+00> : vector<16x256xf32>
    %217 = tpu.matmul %215, %216, %cst_72 {dimension_numbers = #tpu.dot_dimension_numbers<[1], [0], [0], [1], [0, 0, 1, 1], [], []>} : vector<16x64xbf16>, vector<64x256xbf16>, vector<16x256xf32> -> vector<16x256xf32>
    %c0_73 = arith.constant 0 : index
    %c0_74 = arith.constant 0 : index
    %218 = vector.load %arg11[%c0_73, %c0_74] : memref<1x256xbf16, #tpu.memory_space<vmem>>, vector<1x256xbf16>
    %219 = arith.extf %218 : vector<1x256xbf16> to vector<1x256xf32>
    %220 = vector.broadcast %219 : vector<1x256xf32> to vector<16x256xf32>
    %221 = arith.addf %217, %220 : vector<16x256xf32>
    %cst_75 = arith.constant 5.000000e-01 : f32
    %222 = vector.broadcast %cst_75 : f32 to vector<16x256xf32>
    %223 = arith.mulf %222, %221 : vector<16x256xf32>
    %cst_76 = arith.constant 4.471500e-02 : f32
    %224 = vector.broadcast %cst_76 : f32 to vector<16x256xf32>
    %225 = arith.mulf %224, %221 : vector<16x256xf32>
    %226 = arith.mulf %225, %221 : vector<16x256xf32>
    %227 = arith.mulf %226, %221 : vector<16x256xf32>
    %228 = arith.addf %221, %227 : vector<16x256xf32>
    %cst_77 = arith.constant 0.797884583 : f32
    %229 = vector.broadcast %cst_77 : f32 to vector<16x256xf32>
    %230 = arith.mulf %229, %228 : vector<16x256xf32>
    %231 = math.tanh %230 : vector<16x256xf32>
    %cst_78 = arith.constant 1.000000e+00 : f32
    %232 = vector.broadcast %cst_78 : f32 to vector<16x256xf32>
    %233 = arith.addf %232, %231 : vector<16x256xf32>
    %234 = arith.mulf %223, %233 : vector<16x256xf32>
    %235 = arith.truncf %234 : vector<16x256xf32> to vector<16x256xbf16>
    %c0_79 = arith.constant 0 : index
    %c0_80 = arith.constant 0 : index
    %236 = vector.load %arg12[%c0_79, %c0_80] : memref<256x64xbf16, #tpu.memory_space<vmem>>, vector<256x64xbf16>
    %cst_81 = arith.constant dense<0.000000e+00> : vector<16x64xf32>
    %237 = tpu.matmul %235, %236, %cst_81 {dimension_numbers = #tpu.dot_dimension_numbers<[1], [0], [0], [1], [0, 0, 1, 1], [], []>} : vector<16x256xbf16>, vector<256x64xbf16>, vector<16x64xf32> -> vector<16x64xf32>
    %c0_82 = arith.constant 0 : index
    %c0_83 = arith.constant 0 : index
    %238 = vector.load %arg13[%c0_82, %c0_83] : memref<1x64xbf16, #tpu.memory_space<vmem>>, vector<1x64xbf16>
    %239 = arith.extf %238 : vector<1x64xbf16> to vector<1x64xf32>
    %240 = vector.broadcast %239 : vector<1x64xf32> to vector<16x64xf32>
    %241 = arith.addf %237, %240 : vector<16x64xf32>
    %242 = arith.addf %188, %241 : vector<16x64xf32>
    %243 = arith.truncf %242 : vector<16x64xf32> to vector<16x64xbf16>
    %c0_84 = arith.constant 0 : index
    %c0_85 = arith.constant 0 : index
    %c0_86 = arith.constant 0 : index
    %244 = vector.load %arg14[%c0_84, %c0_85, %c0_86] : memref<1x16x64xbf16, #tpu.memory_space<vmem>>, vector<1x16x64xbf16>
    %245 = vector.shape_cast %244 : vector<1x16x64xbf16> to vector<16x64xbf16>
    %246 = vector.shape_cast %243 : vector<16x64xbf16> to vector<1x16x64xbf16>
    tpu.vector_store %arg14[%c0_84, %c0_85, %c0_86], %246 {strides = array<i32>} : memref<1x16x64xbf16, #tpu.memory_space<vmem>>, vector<1x16x64xbf16>,
    return
  }
  func.func @transform_0(%arg0: i32) -> (i32, i32, i32) {
    %c0_i32 = arith.constant 0 : i32
    %c0_i32_0 = arith.constant 0 : i32
    %c0_i32_1 = arith.constant 0 : i32
    return %arg0, %c0_i32, %c0_i32_0 : i32, i32, i32
  }
  func.func @transform_1(%arg0: i32) -> (i32, i32) {
    %c0_i32 = arith.constant 0 : i32
    %c0_i32_0 = arith.constant 0 : i32
    %c0_i32_1 = arith.constant 0 : i32
    return %c0_i32, %c0_i32_0 : i32, i32
  }
  func.func @transform_2(%arg0: i32) -> (i32, i32) {
    %c0_i32 = arith.constant 0 : i32
    %c0_i32_0 = arith.constant 0 : i32
    %c0_i32_1 = arith.constant 0 : i32
    return %c0_i32, %c0_i32_0 : i32, i32
  }
  func.func @transform_3(%arg0: i32) -> (i32, i32) {
    %c0_i32 = arith.constant 0 : i32
    %c0_i32_0 = arith.constant 0 : i32
    %c0_i32_1 = arith.constant 0 : i32
    return %c0_i32, %c0_i32_0 : i32, i32
  }
  func.func @transform_4(%arg0: i32) -> (i32, i32) {
    %c0_i32 = arith.constant 0 : i32
    %c0_i32_0 = arith.constant 0 : i32
    %c0_i32_1 = arith.constant 0 : i32
    return %c0_i32, %c0_i32_0 : i32, i32
  }
  func.func @transform_5(%arg0: i32) -> (i32, i32) {
    %c0_i32 = arith.constant 0 : i32
    %c0_i32_0 = arith.constant 0 : i32
    %c0_i32_1 = arith.constant 0 : i32
    return %c0_i32, %c0_i32_0 : i32, i32
  }
  func.func @transform_6(%arg0: i32) -> (i32, i32) {
    %c0_i32 = arith.constant 0 : i32
    %c0_i32_0 = arith.constant 0 : i32
    %c0_i32_1 = arith.constant 0 : i32
    return %c0_i32, %c0_i32_0 : i32, i32
  }
  func.func @transform_7(%arg0: i32) -> (i32, i32) {
    %c0_i32 = arith.constant 0 : i32
    %c0_i32_0 = arith.constant 0 : i32
    %c0_i32_1 = arith.constant 0 : i32
    return %c0_i32, %c0_i32_0 : i32, i32
  }
  func.func @transform_8(%arg0: i32) -> (i32, i32) {
    %c0_i32 = arith.constant 0 : i32
    %c0_i32_0 = arith.constant 0 : i32
    %c0_i32_1 = arith.constant 0 : i32
    return %c0_i32, %c0_i32_0 : i32, i32
  }
  func.func @transform_9(%arg0: i32) -> (i32, i32) {
    %c0_i32 = arith.constant 0 : i32
    %c0_i32_0 = arith.constant 0 : i32
    %c0_i32_1 = arith.constant 0 : i32
    return %c0_i32, %c0_i32_0 : i32, i32
  }
  func.func @transform_10(%arg0: i32) -> (i32, i32) {
    %c0_i32 = arith.constant 0 : i32
    %c0_i32_0 = arith.constant 0 : i32
    %c0_i32_1 = arith.constant 0 : i32
    return %c0_i32, %c0_i32_0 : i32, i32
  }
  func.func @transform_11(%arg0: i32) -> (i32, i32) {
    %c0_i32 = arith.constant 0 : i32
    %c0_i32_0 = arith.constant 0 : i32
    %c0_i32_1 = arith.constant 0 : i32
    return %c0_i32, %c0_i32_0 : i32, i32
  }
  func.func @transform_12(%arg0: i32) -> (i32, i32) {
    %c0_i32 = arith.constant 0 : i32
    %c0_i32_0 = arith.constant 0 : i32
    %c0_i32_1 = arith.constant 0 : i32
    return %c0_i32, %c0_i32_0 : i32, i32
  }
  func.func @transform_13(%arg0: i32) -> (i32, i32, i32) {
    %c0_i32 = arith.constant 0 : i32
    %c0_i32_0 = arith.constant 0 : i32
    %c0_i32_1 = arith.constant 0 : i32
    return %arg0, %c0_i32, %c0_i32_0 : i32, i32, i32
  }
}

module attributes {stable_mosaic.version = 11 : i64} {
  func.func @_block_kernel(%arg0: i32, %arg1: memref<1x16x64xbf16, #tpu.memory_space<vmem>>, %arg2: memref<1x64xbf16, #tpu.memory_space<vmem>>, %arg3: memref<1x64xbf16, #tpu.memory_space<vmem>>, %arg4: memref<64x192xbf16, #tpu.memory_space<vmem>>, %arg5: memref<1x192xbf16, #tpu.memory_space<vmem>>, %arg6: memref<64x64xbf16, #tpu.memory_space<vmem>>, %arg7: memref<1x64xbf16, #tpu.memory_space<vmem>>, %arg8: memref<1x64xbf16, #tpu.memory_space<vmem>>, %arg9: memref<1x64xbf16, #tpu.memory_space<vmem>>, %arg10: memref<64x256xbf16, #tpu.memory_space<vmem>>, %arg11: memref<1x256xbf16, #tpu.memory_space<vmem>>, %arg12: memref<256x64xbf16, #tpu.memory_space<vmem>>, %arg13: memref<1x64xbf16, #tpu.memory_space<vmem>>, %arg14: memref<1x16x64xbf16, #tpu.memory_space<vmem>>) attributes {dimension_semantics = [#tpu.dimension_semantics<parallel>], iteration_bounds = array<i64: 2>, scalar_prefetch = 0 : i64, scratch_operands = 0 : i64, tpu.core_type = #tpu.core_type<tc>, window_params = [{transform_indices = @transform_0, window_bounds = array<i64: 1, 16, 64>}, {pipeline_mode = #tpu.pipeline_mode<synchronous>, transform_indices = @transform_1, window_bounds = array<i64: 1, 64>}, {pipeline_mode = #tpu.pipeline_mode<synchronous>, transform_indices = @transform_2, window_bounds = array<i64: 1, 64>}, {pipeline_mode = #tpu.pipeline_mode<synchronous>, transform_indices = @transform_3, window_bounds = array<i64: 64, 192>}, {pipeline_mode = #tpu.pipeline_mode<synchronous>, transform_indices = @transform_4, window_bounds = array<i64: 1, 192>}, {pipeline_mode = #tpu.pipeline_mode<synchronous>, transform_indices = @transform_5, window_bounds = array<i64: 64, 64>}, {pipeline_mode = #tpu.pipeline_mode<synchronous>, transform_indices = @transform_6, window_bounds = array<i64: 1, 64>}, {pipeline_mode = #tpu.pipeline_mode<synchronous>, transform_indices = @transform_7, window_bounds = array<i64: 1, 64>}, {pipeline_mode = #tpu.pipeline_mode<synchronous>, transform_indices = @transform_8, window_bounds = array<i64: 1, 64>}, {pipeline_mode = #tpu.pipeline_mode<synchronous>, transform_indices = @transform_9, window_bounds = array<i64: 64, 256>}, {pipeline_mode = #tpu.pipeline_mode<synchronous>, transform_indices = @transform_10, window_bounds = array<i64: 1, 256>}, {pipeline_mode = #tpu.pipeline_mode<synchronous>, transform_indices = @transform_11, window_bounds = array<i64: 256, 64>}, {pipeline_mode = #tpu.pipeline_mode<synchronous>, transform_indices = @transform_12, window_bounds = array<i64: 1, 64>}, {transform_indices = @transform_13, window_bounds = array<i64: 1, 16, 64>}]} {
    %c0 = arith.constant 0 : index
    %c0_0 = arith.constant 0 : index
    %c0_1 = arith.constant 0 : index
    %0 = vector.load %arg1[%c0, %c0_0, %c0_1] : memref<1x16x64xbf16, #tpu.memory_space<vmem>>, vector<1x16x64xbf16>
    %1 = vector.shape_cast %0 : vector<1x16x64xbf16> to vector<16x64xbf16>
    %2 = arith.extf %1 : vector<16x64xbf16> to vector<16x64xf32>
    %cst = arith.constant dense<0.000000e+00> : vector<16xf32>
    %3 = vector.multi_reduction <add>, %2, %cst [1] : vector<16x64xf32> to vector<16xf32>
    %4 = vector.shape_cast %3 : vector<16xf32> to vector<16x1xf32>
    %cst_2 = arith.constant 6.400000e+01 : f32
    %5 = vector.broadcast %cst_2 : f32 to vector<16x1xf32>
    %6 = arith.divf %4, %5 : vector<16x1xf32>
    %7 = vector.broadcast %6 : vector<16x1xf32> to vector<16x64xf32>
    %8 = arith.subf %2, %7 : vector<16x64xf32>
    %9 = arith.mulf %8, %8 : vector<16x64xf32>
    %cst_3 = arith.constant dense<0.000000e+00> : vector<16xf32>
    %10 = vector.multi_reduction <add>, %9, %cst_3 [1] : vector<16x64xf32> to vector<16xf32>
    %11 = vector.shape_cast %10 : vector<16xf32> to vector<16x1xf32>
    %cst_4 = arith.constant 6.400000e+01 : f32
    %12 = vector.broadcast %cst_4 : f32 to vector<16x1xf32>
    %13 = arith.divf %11, %12 : vector<16x1xf32>
    %14 = vector.broadcast %6 : vector<16x1xf32> to vector<16x64xf32>
    %15 = arith.subf %2, %14 : vector<16x64xf32>
    %cst_5 = arith.constant 9.99999974E-6 : f32
    %16 = vector.broadcast %cst_5 : f32 to vector<16x1xf32>
    %17 = arith.addf %13, %16 : vector<16x1xf32>
    %18 = math.rsqrt %17 : vector<16x1xf32>
    %19 = vector.broadcast %18 : vector<16x1xf32> to vector<16x64xf32>
    %20 = arith.mulf %15, %19 : vector<16x64xf32>
    %c0_6 = arith.constant 0 : index
    %c0_7 = arith.constant 0 : index
    %21 = vector.load %arg2[%c0_6, %c0_7] : memref<1x64xbf16, #tpu.memory_space<vmem>>, vector<1x64xbf16>
    %22 = arith.extf %21 : vector<1x64xbf16> to vector<1x64xf32>
    %23 = vector.broadcast %22 : vector<1x64xf32> to vector<16x64xf32>
    %24 = arith.mulf %20, %23 : vector<16x64xf32>
    %c0_8 = arith.constant 0 : index
    %c0_9 = arith.constant 0 : index
    %25 = vector.load %arg3[%c0_8, %c0_9] : memref<1x64xbf16, #tpu.memory_space<vmem>>, vector<1x64xbf16>
    %26 = arith.extf %25 : vector<1x64xbf16> to vector<1x64xf32>
    %27 = vector.broadcast %26 : vector<1x64xf32> to vector<16x64xf32>
    %28 = arith.addf %24, %27 : vector<16x64xf32>
    %29 = arith.truncf %28 : vector<16x64xf32> to vector<16x64xbf16>
    %c0_10 = arith.constant 0 : index
    %c0_11 = arith.constant 0 : index
    %30 = vector.load %arg4[%c0_10, %c0_11] : memref<64x192xbf16, #tpu.memory_space<vmem>>, vector<64x192xbf16>
    %cst_12 = arith.constant dense<0.000000e+00> : vector<16x192xf32>
    %31 = tpu.matmul %29, %30, %cst_12 {dimension_numbers = #tpu.dot_dimension_numbers<[1], [0], [0], [1], [0, 0, 1, 1], [], []>} : vector<16x64xbf16>, vector<64x192xbf16>, vector<16x192xf32> -> vector<16x192xf32>
    %c0_13 = arith.constant 0 : index
    %c0_14 = arith.constant 0 : index
    %32 = vector.load %arg5[%c0_13, %c0_14] : memref<1x192xbf16, #tpu.memory_space<vmem>>, vector<1x192xbf16>
    %33 = arith.extf %32 : vector<1x192xbf16> to vector<1x192xf32>
    %34 = vector.broadcast %33 : vector<1x192xf32> to vector<16x192xf32>
    %35 = arith.addf %31, %34 : vector<16x192xf32>
    %36 = vector.extract_strided_slice %35 {offsets = [0, 0], sizes = [16, 64], strides = [1, 1]} : vector<16x192xf32> to vector<16x64xf32>
    %cst_15 = arith.constant 0.353553385 : f32
    %37 = vector.broadcast %cst_15 : f32 to vector<16x64xf32>
    %38 = arith.mulf %36, %37 : vector<16x64xf32>
    %39 = vector.extract_strided_slice %35 {offsets = [0, 64], sizes = [16, 64], strides = [1, 1]} : vector<16x192xf32> to vector<16x64xf32>
    %40 = vector.extract_strided_slice %35 {offsets = [0, 128], sizes = [16, 64], strides = [1, 1]} : vector<16x192xf32> to vector<16x64xf32>
    %41 = tpu.iota {dimensions = array<i32: 0>} : vector<16x16xi32>
    %42 = tpu.iota {dimensions = array<i32: 1>} : vector<16x16xi32>
    %43 = arith.cmpi sle, %42, %41 : vector<16x16xi32>
    %44 = vector.extract_strided_slice %38 {offsets = [0, 0], sizes = [16, 8], strides = [1, 1]} : vector<16x64xf32> to vector<16x8xf32>
    %45 = vector.extract_strided_slice %39 {offsets = [0, 0], sizes = [16, 8], strides = [1, 1]} : vector<16x64xf32> to vector<16x8xf32>
    %46 = vector.extract_strided_slice %40 {offsets = [0, 0], sizes = [16, 8], strides = [1, 1]} : vector<16x64xf32> to vector<16x8xf32>
    %cst_16 = arith.constant dense<0.000000e+00> : vector<16x16xf32>
    %47 = tpu.matmul %44, %45, %cst_16 {dimension_numbers = #tpu.dot_dimension_numbers<[1], [1], [0], [0], [0, 0, 1, 0], [], []>} : vector<16x8xf32>, vector<16x8xf32>, vector<16x16xf32> -> vector<16x16xf32>
    %cst_17 = arith.constant -1.000000e+30 : f32
    %48 = vector.broadcast %cst_17 : f32 to vector<16x16xf32>
    %49 = arith.select %43, %47, %48 : vector<16x16xi1>, vector<16x16xf32>
    %cst_18 = arith.constant dense<0xFF800000> : vector<16xf32>
    %50 = vector.multi_reduction <maximumf>, %49, %cst_18 [1] : vector<16x16xf32> to vector<16xf32>
    %51 = vector.shape_cast %50 : vector<16xf32> to vector<16x1xf32>
    %52 = vector.broadcast %51 : vector<16x1xf32> to vector<16x16xf32>
    %53 = arith.subf %49, %52 : vector<16x16xf32>
    %54 = math.exp %53 : vector<16x16xf32>
    %cst_19 = arith.constant dense<0.000000e+00> : vector<16xf32>
    %55 = vector.multi_reduction <add>, %54, %cst_19 [1] : vector<16x16xf32> to vector<16xf32>
    %56 = vector.shape_cast %55 : vector<16xf32> to vector<16x1xf32>
    %57 = tpu.reciprocal %56 {approx = true} : vector<16x1xf32> -> vector<16x1xf32>
    %58 = vector.broadcast %57 : vector<16x1xf32> to vector<16x16xf32>
    %59 = arith.mulf %54, %58 : vector<16x16xf32>
    %cst_20 = arith.constant dense<0.000000e+00> : vector<16x8xf32>
    %60 = tpu.matmul %59, %46, %cst_20 {dimension_numbers = #tpu.dot_dimension_numbers<[1], [0], [0], [1], [0, 0, 1, 1], [], []>} : vector<16x16xf32>, vector<16x8xf32>, vector<16x8xf32> -> vector<16x8xf32>
    %61 = vector.extract_strided_slice %38 {offsets = [0, 8], sizes = [16, 8], strides = [1, 1]} : vector<16x64xf32> to vector<16x8xf32>
    %62 = vector.extract_strided_slice %39 {offsets = [0, 8], sizes = [16, 8], strides = [1, 1]} : vector<16x64xf32> to vector<16x8xf32>
    %63 = vector.extract_strided_slice %40 {offsets = [0, 8], sizes = [16, 8], strides = [1, 1]} : vector<16x64xf32> to vector<16x8xf32>
    %cst_21 = arith.constant dense<0.000000e+00> : vector<16x16xf32>
    %64 = tpu.matmul %61, %62, %cst_21 {dimension_numbers = #tpu.dot_dimension_numbers<[1], [1], [0], [0], [0, 0, 1, 0], [], []>} : vector<16x8xf32>, vector<16x8xf32>, vector<16x16xf32> -> vector<16x16xf32>
    %cst_22 = arith.constant -1.000000e+30 : f32
    %65 = vector.broadcast %cst_22 : f32 to vector<16x16xf32>
    %66 = arith.select %43, %64, %65 : vector<16x16xi1>, vector<16x16xf32>
    %cst_23 = arith.constant dense<0xFF800000> : vector<16xf32>
    %67 = vector.multi_reduction <maximumf>, %66, %cst_23 [1] : vector<16x16xf32> to vector<16xf32>
    %68 = vector.shape_cast %67 : vector<16xf32> to vector<16x1xf32>
    %69 = vector.broadcast %68 : vector<16x1xf32> to vector<16x16xf32>
    %70 = arith.subf %66, %69 : vector<16x16xf32>
    %71 = math.exp %70 : vector<16x16xf32>
    %cst_24 = arith.constant dense<0.000000e+00> : vector<16xf32>
    %72 = vector.multi_reduction <add>, %71, %cst_24 [1] : vector<16x16xf32> to vector<16xf32>
    %73 = vector.shape_cast %72 : vector<16xf32> to vector<16x1xf32>
    %74 = tpu.reciprocal %73 {approx = true} : vector<16x1xf32> -> vector<16x1xf32>
    %75 = vector.broadcast %74 : vector<16x1xf32> to vector<16x16xf32>
    %76 = arith.mulf %71, %75 : vector<16x16xf32>
    %cst_25 = arith.constant dense<0.000000e+00> : vector<16x8xf32>
    %77 = tpu.matmul %76, %63, %cst_25 {dimension_numbers = #tpu.dot_dimension_numbers<[1], [0], [0], [1], [0, 0, 1, 1], [], []>} : vector<16x16xf32>, vector<16x8xf32>, vector<16x8xf32> -> vector<16x8xf32>
    %78 = vector.extract_strided_slice %38 {offsets = [0, 16], sizes = [16, 8], strides = [1, 1]} : vector<16x64xf32> to vector<16x8xf32>
    %79 = vector.extract_strided_slice %39 {offsets = [0, 16], sizes = [16, 8], strides = [1, 1]} : vector<16x64xf32> to vector<16x8xf32>
    %80 = vector.extract_strided_slice %40 {offsets = [0, 16], sizes = [16, 8], strides = [1, 1]} : vector<16x64xf32> to vector<16x8xf32>
    %cst_26 = arith.constant dense<0.000000e+00> : vector<16x16xf32>
    %81 = tpu.matmul %78, %79, %cst_26 {dimension_numbers = #tpu.dot_dimension_numbers<[1], [1], [0], [0], [0, 0, 1, 0], [], []>} : vector<16x8xf32>, vector<16x8xf32>, vector<16x16xf32> -> vector<16x16xf32>
    %cst_27 = arith.constant -1.000000e+30 : f32
    %82 = vector.broadcast %cst_27 : f32 to vector<16x16xf32>
    %83 = arith.select %43, %81, %82 : vector<16x16xi1>, vector<16x16xf32>
    %cst_28 = arith.constant dense<0xFF800000> : vector<16xf32>
    %84 = vector.multi_reduction <maximumf>, %83, %cst_28 [1] : vector<16x16xf32> to vector<16xf32>
    %85 = vector.shape_cast %84 : vector<16xf32> to vector<16x1xf32>
    %86 = vector.broadcast %85 : vector<16x1xf32> to vector<16x16xf32>
    %87 = arith.subf %83, %86 : vector<16x16xf32>
    %88 = math.exp %87 : vector<16x16xf32>
    %cst_29 = arith.constant dense<0.000000e+00> : vector<16xf32>
    %89 = vector.multi_reduction <add>, %88, %cst_29 [1] : vector<16x16xf32> to vector<16xf32>
    %90 = vector.shape_cast %89 : vector<16xf32> to vector<16x1xf32>
    %91 = tpu.reciprocal %90 {approx = true} : vector<16x1xf32> -> vector<16x1xf32>
    %92 = vector.broadcast %91 : vector<16x1xf32> to vector<16x16xf32>
    %93 = arith.mulf %88, %92 : vector<16x16xf32>
    %cst_30 = arith.constant dense<0.000000e+00> : vector<16x8xf32>
    %94 = tpu.matmul %93, %80, %cst_30 {dimension_numbers = #tpu.dot_dimension_numbers<[1], [0], [0], [1], [0, 0, 1, 1], [], []>} : vector<16x16xf32>, vector<16x8xf32>, vector<16x8xf32> -> vector<16x8xf32>
    %95 = vector.extract_strided_slice %38 {offsets = [0, 24], sizes = [16, 8], strides = [1, 1]} : vector<16x64xf32> to vector<16x8xf32>
    %96 = vector.extract_strided_slice %39 {offsets = [0, 24], sizes = [16, 8], strides = [1, 1]} : vector<16x64xf32> to vector<16x8xf32>
    %97 = vector.extract_strided_slice %40 {offsets = [0, 24], sizes = [16, 8], strides = [1, 1]} : vector<16x64xf32> to vector<16x8xf32>
    %cst_31 = arith.constant dense<0.000000e+00> : vector<16x16xf32>
    %98 = tpu.matmul %95, %96, %cst_31 {dimension_numbers = #tpu.dot_dimension_numbers<[1], [1], [0], [0], [0, 0, 1, 0], [], []>} : vector<16x8xf32>, vector<16x8xf32>, vector<16x16xf32> -> vector<16x16xf32>
    %cst_32 = arith.constant -1.000000e+30 : f32
    %99 = vector.broadcast %cst_32 : f32 to vector<16x16xf32>
    %100 = arith.select %43, %98, %99 : vector<16x16xi1>, vector<16x16xf32>
    %cst_33 = arith.constant dense<0xFF800000> : vector<16xf32>
    %101 = vector.multi_reduction <maximumf>, %100, %cst_33 [1] : vector<16x16xf32> to vector<16xf32>
    %102 = vector.shape_cast %101 : vector<16xf32> to vector<16x1xf32>
    %103 = vector.broadcast %102 : vector<16x1xf32> to vector<16x16xf32>
    %104 = arith.subf %100, %103 : vector<16x16xf32>
    %105 = math.exp %104 : vector<16x16xf32>
    %cst_34 = arith.constant dense<0.000000e+00> : vector<16xf32>
    %106 = vector.multi_reduction <add>, %105, %cst_34 [1] : vector<16x16xf32> to vector<16xf32>
    %107 = vector.shape_cast %106 : vector<16xf32> to vector<16x1xf32>
    %108 = tpu.reciprocal %107 {approx = true} : vector<16x1xf32> -> vector<16x1xf32>
    %109 = vector.broadcast %108 : vector<16x1xf32> to vector<16x16xf32>
    %110 = arith.mulf %105, %109 : vector<16x16xf32>
    %cst_35 = arith.constant dense<0.000000e+00> : vector<16x8xf32>
    %111 = tpu.matmul %110, %97, %cst_35 {dimension_numbers = #tpu.dot_dimension_numbers<[1], [0], [0], [1], [0, 0, 1, 1], [], []>} : vector<16x16xf32>, vector<16x8xf32>, vector<16x8xf32> -> vector<16x8xf32>
    %112 = vector.extract_strided_slice %38 {offsets = [0, 32], sizes = [16, 8], strides = [1, 1]} : vector<16x64xf32> to vector<16x8xf32>
    %113 = vector.extract_strided_slice %39 {offsets = [0, 32], sizes = [16, 8], strides = [1, 1]} : vector<16x64xf32> to vector<16x8xf32>
    %114 = vector.extract_strided_slice %40 {offsets = [0, 32], sizes = [16, 8], strides = [1, 1]} : vector<16x64xf32> to vector<16x8xf32>
    %cst_36 = arith.constant dense<0.000000e+00> : vector<16x16xf32>
    %115 = tpu.matmul %112, %113, %cst_36 {dimension_numbers = #tpu.dot_dimension_numbers<[1], [1], [0], [0], [0, 0, 1, 0], [], []>} : vector<16x8xf32>, vector<16x8xf32>, vector<16x16xf32> -> vector<16x16xf32>
    %cst_37 = arith.constant -1.000000e+30 : f32
    %116 = vector.broadcast %cst_37 : f32 to vector<16x16xf32>
    %117 = arith.select %43, %115, %116 : vector<16x16xi1>, vector<16x16xf32>
    %cst_38 = arith.constant dense<0xFF800000> : vector<16xf32>
    %118 = vector.multi_reduction <maximumf>, %117, %cst_38 [1] : vector<16x16xf32> to vector<16xf32>
    %119 = vector.shape_cast %118 : vector<16xf32> to vector<16x1xf32>
    %120 = vector.broadcast %119 : vector<16x1xf32> to vector<16x16xf32>
    %121 = arith.subf %117, %120 : vector<16x16xf32>
    %122 = math.exp %121 : vector<16x16xf32>
    %cst_39 = arith.constant dense<0.000000e+00> : vector<16xf32>
    %123 = vector.multi_reduction <add>, %122, %cst_39 [1] : vector<16x16xf32> to vector<16xf32>
    %124 = vector.shape_cast %123 : vector<16xf32> to vector<16x1xf32>
    %125 = tpu.reciprocal %124 {approx = true} : vector<16x1xf32> -> vector<16x1xf32>
    %126 = vector.broadcast %125 : vector<16x1xf32> to vector<16x16xf32>
    %127 = arith.mulf %122, %126 : vector<16x16xf32>
    %cst_40 = arith.constant dense<0.000000e+00> : vector<16x8xf32>
    %128 = tpu.matmul %127, %114, %cst_40 {dimension_numbers = #tpu.dot_dimension_numbers<[1], [0], [0], [1], [0, 0, 1, 1], [], []>} : vector<16x16xf32>, vector<16x8xf32>, vector<16x8xf32> -> vector<16x8xf32>
    %129 = vector.extract_strided_slice %38 {offsets = [0, 40], sizes = [16, 8], strides = [1, 1]} : vector<16x64xf32> to vector<16x8xf32>
    %130 = vector.extract_strided_slice %39 {offsets = [0, 40], sizes = [16, 8], strides = [1, 1]} : vector<16x64xf32> to vector<16x8xf32>
    %131 = vector.extract_strided_slice %40 {offsets = [0, 40], sizes = [16, 8], strides = [1, 1]} : vector<16x64xf32> to vector<16x8xf32>
    %cst_41 = arith.constant dense<0.000000e+00> : vector<16x16xf32>
    %132 = tpu.matmul %129, %130, %cst_41 {dimension_numbers = #tpu.dot_dimension_numbers<[1], [1], [0], [0], [0, 0, 1, 0], [], []>} : vector<16x8xf32>, vector<16x8xf32>, vector<16x16xf32> -> vector<16x16xf32>
    %cst_42 = arith.constant -1.000000e+30 : f32
    %133 = vector.broadcast %cst_42 : f32 to vector<16x16xf32>
    %134 = arith.select %43, %132, %133 : vector<16x16xi1>, vector<16x16xf32>
    %cst_43 = arith.constant dense<0xFF800000> : vector<16xf32>
    %135 = vector.multi_reduction <maximumf>, %134, %cst_43 [1] : vector<16x16xf32> to vector<16xf32>
    %136 = vector.shape_cast %135 : vector<16xf32> to vector<16x1xf32>
    %137 = vector.broadcast %136 : vector<16x1xf32> to vector<16x16xf32>
    %138 = arith.subf %134, %137 : vector<16x16xf32>
    %139 = math.exp %138 : vector<16x16xf32>
    %cst_44 = arith.constant dense<0.000000e+00> : vector<16xf32>
    %140 = vector.multi_reduction <add>, %139, %cst_44 [1] : vector<16x16xf32> to vector<16xf32>
    %141 = vector.shape_cast %140 : vector<16xf32> to vector<16x1xf32>
    %142 = tpu.reciprocal %141 {approx = true} : vector<16x1xf32> -> vector<16x1xf32>
    %143 = vector.broadcast %142 : vector<16x1xf32> to vector<16x16xf32>
    %144 = arith.mulf %139, %143 : vector<16x16xf32>
    %cst_45 = arith.constant dense<0.000000e+00> : vector<16x8xf32>
    %145 = tpu.matmul %144, %131, %cst_45 {dimension_numbers = #tpu.dot_dimension_numbers<[1], [0], [0], [1], [0, 0, 1, 1], [], []>} : vector<16x16xf32>, vector<16x8xf32>, vector<16x8xf32> -> vector<16x8xf32>
    %146 = vector.extract_strided_slice %38 {offsets = [0, 48], sizes = [16, 8], strides = [1, 1]} : vector<16x64xf32> to vector<16x8xf32>
    %147 = vector.extract_strided_slice %39 {offsets = [0, 48], sizes = [16, 8], strides = [1, 1]} : vector<16x64xf32> to vector<16x8xf32>
    %148 = vector.extract_strided_slice %40 {offsets = [0, 48], sizes = [16, 8], strides = [1, 1]} : vector<16x64xf32> to vector<16x8xf32>
    %cst_46 = arith.constant dense<0.000000e+00> : vector<16x16xf32>
    %149 = tpu.matmul %146, %147, %cst_46 {dimension_numbers = #tpu.dot_dimension_numbers<[1], [1], [0], [0], [0, 0, 1, 0], [], []>} : vector<16x8xf32>, vector<16x8xf32>, vector<16x16xf32> -> vector<16x16xf32>
    %cst_47 = arith.constant -1.000000e+30 : f32
    %150 = vector.broadcast %cst_47 : f32 to vector<16x16xf32>
    %151 = arith.select %43, %149, %150 : vector<16x16xi1>, vector<16x16xf32>
    %cst_48 = arith.constant dense<0xFF800000> : vector<16xf32>
    %152 = vector.multi_reduction <maximumf>, %151, %cst_48 [1] : vector<16x16xf32> to vector<16xf32>
    %153 = vector.shape_cast %152 : vector<16xf32> to vector<16x1xf32>
    %154 = vector.broadcast %153 : vector<16x1xf32> to vector<16x16xf32>
    %155 = arith.subf %151, %154 : vector<16x16xf32>
    %156 = math.exp %155 : vector<16x16xf32>
    %cst_49 = arith.constant dense<0.000000e+00> : vector<16xf32>
    %157 = vector.multi_reduction <add>, %156, %cst_49 [1] : vector<16x16xf32> to vector<16xf32>
    %158 = vector.shape_cast %157 : vector<16xf32> to vector<16x1xf32>
    %159 = tpu.reciprocal %158 {approx = true} : vector<16x1xf32> -> vector<16x1xf32>
    %160 = vector.broadcast %159 : vector<16x1xf32> to vector<16x16xf32>
    %161 = arith.mulf %156, %160 : vector<16x16xf32>
    %cst_50 = arith.constant dense<0.000000e+00> : vector<16x8xf32>
    %162 = tpu.matmul %161, %148, %cst_50 {dimension_numbers = #tpu.dot_dimension_numbers<[1], [0], [0], [1], [0, 0, 1, 1], [], []>} : vector<16x16xf32>, vector<16x8xf32>, vector<16x8xf32> -> vector<16x8xf32>
    %163 = vector.extract_strided_slice %38 {offsets = [0, 56], sizes = [16, 8], strides = [1, 1]} : vector<16x64xf32> to vector<16x8xf32>
    %164 = vector.extract_strided_slice %39 {offsets = [0, 56], sizes = [16, 8], strides = [1, 1]} : vector<16x64xf32> to vector<16x8xf32>
    %165 = vector.extract_strided_slice %40 {offsets = [0, 56], sizes = [16, 8], strides = [1, 1]} : vector<16x64xf32> to vector<16x8xf32>
    %cst_51 = arith.constant dense<0.000000e+00> : vector<16x16xf32>
    %166 = tpu.matmul %163, %164, %cst_51 {dimension_numbers = #tpu.dot_dimension_numbers<[1], [1], [0], [0], [0, 0, 1, 0], [], []>} : vector<16x8xf32>, vector<16x8xf32>, vector<16x16xf32> -> vector<16x16xf32>
    %cst_52 = arith.constant -1.000000e+30 : f32
    %167 = vector.broadcast %cst_52 : f32 to vector<16x16xf32>
    %168 = arith.select %43, %166, %167 : vector<16x16xi1>, vector<16x16xf32>
    %cst_53 = arith.constant dense<0xFF800000> : vector<16xf32>
    %169 = vector.multi_reduction <maximumf>, %168, %cst_53 [1] : vector<16x16xf32> to vector<16xf32>
    %170 = vector.shape_cast %169 : vector<16xf32> to vector<16x1xf32>
    %171 = vector.broadcast %170 : vector<16x1xf32> to vector<16x16xf32>
    %172 = arith.subf %168, %171 : vector<16x16xf32>
    %173 = math.exp %172 : vector<16x16xf32>
    %cst_54 = arith.constant dense<0.000000e+00> : vector<16xf32>
    %174 = vector.multi_reduction <add>, %173, %cst_54 [1] : vector<16x16xf32> to vector<16xf32>
    %175 = vector.shape_cast %174 : vector<16xf32> to vector<16x1xf32>
    %176 = tpu.reciprocal %175 {approx = true} : vector<16x1xf32> -> vector<16x1xf32>
    %177 = vector.broadcast %176 : vector<16x1xf32> to vector<16x16xf32>
    %178 = arith.mulf %173, %177 : vector<16x16xf32>
    %cst_55 = arith.constant dense<0.000000e+00> : vector<16x8xf32>
    %179 = tpu.matmul %178, %165, %cst_55 {dimension_numbers = #tpu.dot_dimension_numbers<[1], [0], [0], [1], [0, 0, 1, 1], [], []>} : vector<16x16xf32>, vector<16x8xf32>, vector<16x8xf32> -> vector<16x8xf32>
    %180 = tpu.concatenate %60, %77, %94, %111, %128, %145, %162, %179 in 1 : vector<16x8xf32>, vector<16x8xf32>, vector<16x8xf32>, vector<16x8xf32>, vector<16x8xf32>, vector<16x8xf32>, vector<16x8xf32>, vector<16x8xf32> -> vector<16x64xf32>
    %181 = arith.truncf %180 : vector<16x64xf32> to vector<16x64xbf16>
    %c0_56 = arith.constant 0 : index
    %c0_57 = arith.constant 0 : index
    %182 = vector.load %arg6[%c0_56, %c0_57] : memref<64x64xbf16, #tpu.memory_space<vmem>>, vector<64x64xbf16>
    %cst_58 = arith.constant dense<0.000000e+00> : vector<16x64xf32>
    %183 = tpu.matmul %181, %182, %cst_58 {dimension_numbers = #tpu.dot_dimension_numbers<[1], [0], [0], [1], [0, 0, 1, 1], [], []>} : vector<16x64xbf16>, vector<64x64xbf16>, vector<16x64xf32> -> vector<16x64xf32>
    %c0_59 = arith.constant 0 : index
    %c0_60 = arith.constant 0 : index
    %184 = vector.load %arg7[%c0_59, %c0_60] : memref<1x64xbf16, #tpu.memory_space<vmem>>, vector<1x64xbf16>
    %185 = arith.extf %184 : vector<1x64xbf16> to vector<1x64xf32>
    %186 = vector.broadcast %185 : vector<1x64xf32> to vector<16x64xf32>
    %187 = arith.addf %183, %186 : vector<16x64xf32>
    %188 = arith.addf %2, %187 : vector<16x64xf32>
    %cst_61 = arith.constant dense<0.000000e+00> : vector<16xf32>
    %189 = vector.multi_reduction <add>, %188, %cst_61 [1] : vector<16x64xf32> to vector<16xf32>
    %190 = vector.shape_cast %189 : vector<16xf32> to vector<16x1xf32>
    %cst_62 = arith.constant 6.400000e+01 : f32
    %191 = vector.broadcast %cst_62 : f32 to vector<16x1xf32>
    %192 = arith.divf %190, %191 : vector<16x1xf32>
    %193 = vector.broadcast %192 : vector<16x1xf32> to vector<16x64xf32>
    %194 = arith.subf %188, %193 : vector<16x64xf32>
    %195 = arith.mulf %194, %194 : vector<16x64xf32>
    %cst_63 = arith.constant dense<0.000000e+00> : vector<16xf32>
    %196 = vector.multi_reduction <add>, %195, %cst_63 [1] : vector<16x64xf32> to vector<16xf32>
    %197 = vector.shape_cast %196 : vector<16xf32> to vector<16x1xf32>
    %cst_64 = arith.constant 6.400000e+01 : f32
    %198 = vector.broadcast %cst_64 : f32 to vector<16x1xf32>
    %199 = arith.divf %197, %198 : vector<16x1xf32>
    %200 = vector.broadcast %192 : vector<16x1xf32> to vector<16x64xf32>
    %201 = arith.subf %188, %200 : vector<16x64xf32>
    %cst_65 = arith.constant 9.99999974E-6 : f32
    %202 = vector.broadcast %cst_65 : f32 to vector<16x1xf32>
    %203 = arith.addf %199, %202 : vector<16x1xf32>
    %204 = math.rsqrt %203 : vector<16x1xf32>
    %205 = vector.broadcast %204 : vector<16x1xf32> to vector<16x64xf32>
    %206 = arith.mulf %201, %205 : vector<16x64xf32>
    %c0_66 = arith.constant 0 : index
    %c0_67 = arith.constant 0 : index
    %207 = vector.load %arg8[%c0_66, %c0_67] : memref<1x64xbf16, #tpu.memory_space<vmem>>, vector<1x64xbf16>
    %208 = arith.extf %207 : vector<1x64xbf16> to vector<1x64xf32>
    %209 = vector.broadcast %208 : vector<1x64xf32> to vector<16x64xf32>
    %210 = arith.mulf %206, %209 : vector<16x64xf32>
    %c0_68 = arith.constant 0 : index
    %c0_69 = arith.constant 0 : index
    %211 = vector.load %arg9[%c0_68, %c0_69] : memref<1x64xbf16, #tpu.memory_space<vmem>>, vector<1x64xbf16>
    %212 = arith.extf %211 : vector<1x64xbf16> to vector<1x64xf32>
    %213 = vector.broadcast %212 : vector<1x64xf32> to vector<16x64xf32>
    %214 = arith.addf %210, %213 : vector<16x64xf32>
    %215 = arith.truncf %214 : vector<16x64xf32> to vector<16x64xbf16>
    %c0_70 = arith.constant 0 : index
    %c0_71 = arith.constant 0 : index
    %216 = vector.load %arg10[%c0_70, %c0_71] : memref<64x256xbf16, #tpu.memory_space<vmem>>, vector<64x256xbf16>
    %cst_72 = arith.constant dense<0.000000e+00> : vector<16x256xf32>
    %217 = tpu.matmul %215, %216, %cst_72 {dimension_numbers = #tpu.dot_dimension_numbers<[1], [0], [0], [1], [0, 0, 1, 1], [], []>} : vector<16x64xbf16>, vector<64x256xbf16>, vector<16x256xf32> -> vector<16x256xf32>
    %c0_73 = arith.constant 0 : index
    %c0_74 = arith.constant 0 : index
    %218 = vector.load %arg11[%c0_73, %c0_74] : memref<1x256xbf16, #tpu.memory_space<vmem>>, vector<1x256xbf16>
    %219 = arith.extf %218 : vector<1x256xbf16> to vector<1x256xf32>
    %220 = vector.broadcast %219 : vector<1x256xf32> to vector<16x256xf32>
    %221 = arith.addf %217, %220 : vector<16x256xf32>
    %cst_75 = arith.constant 5.000000e-01 : f32
    %222 = vector.broadcast %cst_75 : f32 to vector<16x256xf32>
    %223 = arith.mulf %222, %221 : vector<16x256xf32>
    %cst_76 = arith.constant 4.471500e-02 : f32
    %224 = vector.broadcast %cst_76 : f32 to vector<16x256xf32>
    %225 = arith.mulf %224, %221 : vector<16x256xf32>
    %226 = arith.mulf %225, %221 : vector<16x256xf32>
    %227 = arith.mulf %226, %221 : vector<16x256xf32>
    %228 = arith.addf %221, %227 : vector<16x256xf32>
    %cst_77 = arith.constant 0.797884583 : f32
    %229 = vector.broadcast %cst_77 : f32 to vector<16x256xf32>
    %230 = arith.mulf %229, %228 : vector<16x256xf32>
    %231 = math.tanh %230 : vector<16x256xf32>
    %cst_78 = arith.constant 1.000000e+00 : f32
    %232 = vector.broadcast %cst_78 : f32 to vector<16x256xf32>
    %233 = arith.addf %232, %231 : vector<16x256xf32>
    %234 = arith.mulf %223, %233 : vector<16x256xf32>
    %235 = arith.truncf %234 : vector<16x256xf32> to vector<16x256xbf16>
    %c0_79 = arith.constant 0 : index
    %c0_80 = arith.constant 0 : index
    %236 = vector.load %arg12[%c0_79, %c0_80] : memref<256x64xbf16, #tpu.memory_space<vmem>>, vector<256x64xbf16>
    %cst_81 = arith.constant dense<0.000000e+00> : vector<16x64xf32>
    %237 = tpu.matmul %235, %236, %cst_81 {dimension_numbers = #tpu.dot_dimension_numbers<[1], [0], [0], [1], [0, 0, 1, 1], [], []>} : vector<16x256xbf16>, vector<256x64xbf16>, vector<16x64xf32> -> vector<16x64xf32>
    %c0_82 = arith.constant 0 : index
    %c0_83 = arith.constant 0 : index
    %238 = vector.load %arg13[%c0_82, %c0_83] : memref<1x64xbf16, #tpu.memory_space<vmem>>, vector<1x64xbf16>
    %239 = arith.extf %238 : vector<1x64xbf16> to vector<1x64xf32>
    %240 = vector.broadcast %239 : vector<1x64xf32> to vector<16x64xf32>
    %241 = arith.addf %237, %240 : vector<16x64xf32>
    %242 = arith.addf %188, %241 : vector<16x64xf32>
    %243 = arith.truncf %242 : vector<16x64xf32> to vector<16x64xbf16>
    %c0_84 = arith.constant 0 : index
    %c0_85 = arith.constant 0 : index
    %c0_86 = arith.constant 0 : index
    %244 = vector.load %arg14[%c0_84, %c0_85, %c0_86] : memref<1x16x64xbf16, #tpu.memory_space<vmem>>, vector<1x16x64xbf16>
    %245 = vector.shape_cast %244 : vector<1x16x64xbf16> to vector<16x64xbf16>
    %246 = vector.shape_cast %243 : vector<16x64xbf16> to vector<1x16x64xbf16>
    tpu.vector_store %arg14[%c0_84, %c0_85, %c0_86], %246 {strides = array<i32>} : memref<1x16x64xbf16, #tpu.memory_space<vmem>>, vector<1x16x64xbf16>,
    return
  }
  func.func @transform_0(%arg0: i32) -> (i32, i32, i32) {
    %c0_i32 = arith.constant 0 : i32
    %c0_i32_0 = arith.constant 0 : i32
    %c0_i32_1 = arith.constant 0 : i32
    return %arg0, %c0_i32, %c0_i32_0 : i32, i32, i32
  }
  func.func @transform_1(%arg0: i32) -> (i32, i32) {
    %c0_i32 = arith.constant 0 : i32
    %c0_i32_0 = arith.constant 0 : i32
    %c0_i32_1 = arith.constant 0 : i32
    return %c0_i32, %c0_i32_0 : i32, i32
  }
  func.func @transform_2(%arg0: i32) -> (i32, i32) {
    %c0_i32 = arith.constant 0 : i32
    %c0_i32_0 = arith.constant 0 : i32
    %c0_i32_1 = arith.constant 0 : i32
    return %c0_i32, %c0_i32_0 : i32, i32
  }
  func.func @transform_3(%arg0: i32) -> (i32, i32) {
    %c0_i32 = arith.constant 0 : i32
    %c0_i32_0 = arith.constant 0 : i32
    %c0_i32_1 = arith.constant 0 : i32
    return %c0_i32, %c0_i32_0 : i32, i32
  }
  func.func @transform_4(%arg0: i32) -> (i32, i32) {
    %c0_i32 = arith.constant 0 : i32
    %c0_i32_0 = arith.constant 0 : i32
    %c0_i32_1 = arith.constant 0 : i32
    return %c0_i32, %c0_i32_0 : i32, i32
  }
  func.func @transform_5(%arg0: i32) -> (i32, i32) {
    %c0_i32 = arith.constant 0 : i32
    %c0_i32_0 = arith.constant 0 : i32
    %c0_i32_1 = arith.constant 0 : i32
    return %c0_i32, %c0_i32_0 : i32, i32
  }
  func.func @transform_6(%arg0: i32) -> (i32, i32) {
    %c0_i32 = arith.constant 0 : i32
    %c0_i32_0 = arith.constant 0 : i32
    %c0_i32_1 = arith.constant 0 : i32
    return %c0_i32, %c0_i32_0 : i32, i32
  }
  func.func @transform_7(%arg0: i32) -> (i32, i32) {
    %c0_i32 = arith.constant 0 : i32
    %c0_i32_0 = arith.constant 0 : i32
    %c0_i32_1 = arith.constant 0 : i32
    return %c0_i32, %c0_i32_0 : i32, i32
  }
  func.func @transform_8(%arg0: i32) -> (i32, i32) {
    %c0_i32 = arith.constant 0 : i32
    %c0_i32_0 = arith.constant 0 : i32
    %c0_i32_1 = arith.constant 0 : i32
    return %c0_i32, %c0_i32_0 : i32, i32
  }
  func.func @transform_9(%arg0: i32) -> (i32, i32) {
    %c0_i32 = arith.constant 0 : i32
    %c0_i32_0 = arith.constant 0 : i32
    %c0_i32_1 = arith.constant 0 : i32
    return %c0_i32, %c0_i32_0 : i32, i32
  }
  func.func @transform_10(%arg0: i32) -> (i32, i32) {
    %c0_i32 = arith.constant 0 : i32
    %c0_i32_0 = arith.constant 0 : i32
    %c0_i32_1 = arith.constant 0 : i32
    return %c0_i32, %c0_i32_0 : i32, i32
  }
  func.func @transform_11(%arg0: i32) -> (i32, i32) {
    %c0_i32 = arith.constant 0 : i32
    %c0_i32_0 = arith.constant 0 : i32
    %c0_i32_1 = arith.constant 0 : i32
    return %c0_i32, %c0_i32_0 : i32, i32
  }
  func.func @transform_12(%arg0: i32) -> (i32, i32) {
    %c0_i32 = arith.constant 0 : i32
    %c0_i32_0 = arith.constant 0 : i32
    %c0_i32_1 = arith.constant 0 : i32
    return %c0_i32, %c0_i32_0 : i32, i32
  }
  func.func @transform_13(%arg0: i32) -> (i32, i32, i32) {
    %c0_i32 = arith.constant 0 : i32
    %c0_i32_0 = arith.constant 0 : i32
    %c0_i32_1 = arith.constant 0 : i32
    return %arg0, %c0_i32, %c0_i32_0 : i32, i32, i32
  }
}

module attributes {stable_mosaic.version = 11 : i64} {
  func.func @_block_kernel(%arg0: i32, %arg1: memref<1x16x64xbf16, #tpu.memory_space<vmem>>, %arg2: memref<1x64xbf16, #tpu.memory_space<vmem>>, %arg3: memref<1x64xbf16, #tpu.memory_space<vmem>>, %arg4: memref<64x192xbf16, #tpu.memory_space<vmem>>, %arg5: memref<1x192xbf16, #tpu.memory_space<vmem>>, %arg6: memref<64x64xbf16, #tpu.memory_space<vmem>>, %arg7: memref<1x64xbf16, #tpu.memory_space<vmem>>, %arg8: memref<1x64xbf16, #tpu.memory_space<vmem>>, %arg9: memref<1x64xbf16, #tpu.memory_space<vmem>>, %arg10: memref<64x256xbf16, #tpu.memory_space<vmem>>, %arg11: memref<1x256xbf16, #tpu.memory_space<vmem>>, %arg12: memref<256x64xbf16, #tpu.memory_space<vmem>>, %arg13: memref<1x64xbf16, #tpu.memory_space<vmem>>, %arg14: memref<1x16x64xbf16, #tpu.memory_space<vmem>>) attributes {dimension_semantics = [#tpu.dimension_semantics<parallel>], iteration_bounds = array<i64: 2>, scalar_prefetch = 0 : i64, scratch_operands = 0 : i64, tpu.core_type = #tpu.core_type<tc>, window_params = [{transform_indices = @transform_0, window_bounds = array<i64: 1, 16, 64>}, {pipeline_mode = #tpu.pipeline_mode<synchronous>, transform_indices = @transform_1, window_bounds = array<i64: 1, 64>}, {pipeline_mode = #tpu.pipeline_mode<synchronous>, transform_indices = @transform_2, window_bounds = array<i64: 1, 64>}, {pipeline_mode = #tpu.pipeline_mode<synchronous>, transform_indices = @transform_3, window_bounds = array<i64: 64, 192>}, {pipeline_mode = #tpu.pipeline_mode<synchronous>, transform_indices = @transform_4, window_bounds = array<i64: 1, 192>}, {pipeline_mode = #tpu.pipeline_mode<synchronous>, transform_indices = @transform_5, window_bounds = array<i64: 64, 64>}, {pipeline_mode = #tpu.pipeline_mode<synchronous>, transform_indices = @transform_6, window_bounds = array<i64: 1, 64>}, {pipeline_mode = #tpu.pipeline_mode<synchronous>, transform_indices = @transform_7, window_bounds = array<i64: 1, 64>}, {pipeline_mode = #tpu.pipeline_mode<synchronous>, transform_indices = @transform_8, window_bounds = array<i64: 1, 64>}, {pipeline_mode = #tpu.pipeline_mode<synchronous>, transform_indices = @transform_9, window_bounds = array<i64: 64, 256>}, {pipeline_mode = #tpu.pipeline_mode<synchronous>, transform_indices = @transform_10, window_bounds = array<i64: 1, 256>}, {pipeline_mode = #tpu.pipeline_mode<synchronous>, transform_indices = @transform_11, window_bounds = array<i64: 256, 64>}, {pipeline_mode = #tpu.pipeline_mode<synchronous>, transform_indices = @transform_12, window_bounds = array<i64: 1, 64>}, {transform_indices = @transform_13, window_bounds = array<i64: 1, 16, 64>}]} {
    %c0 = arith.constant 0 : index
    %c0_0 = arith.constant 0 : index
    %c0_1 = arith.constant 0 : index
    %0 = vector.load %arg1[%c0, %c0_0, %c0_1] : memref<1x16x64xbf16, #tpu.memory_space<vmem>>, vector<1x16x64xbf16>
    %1 = vector.shape_cast %0 : vector<1x16x64xbf16> to vector<16x64xbf16>
    %2 = arith.extf %1 : vector<16x64xbf16> to vector<16x64xf32>
    %cst = arith.constant dense<0.000000e+00> : vector<16xf32>
    %3 = vector.multi_reduction <add>, %2, %cst [1] : vector<16x64xf32> to vector<16xf32>
    %4 = vector.shape_cast %3 : vector<16xf32> to vector<16x1xf32>
    %cst_2 = arith.constant 6.400000e+01 : f32
    %5 = vector.broadcast %cst_2 : f32 to vector<16x1xf32>
    %6 = arith.divf %4, %5 : vector<16x1xf32>
    %7 = vector.broadcast %6 : vector<16x1xf32> to vector<16x64xf32>
    %8 = arith.subf %2, %7 : vector<16x64xf32>
    %9 = arith.mulf %8, %8 : vector<16x64xf32>
    %cst_3 = arith.constant dense<0.000000e+00> : vector<16xf32>
    %10 = vector.multi_reduction <add>, %9, %cst_3 [1] : vector<16x64xf32> to vector<16xf32>
    %11 = vector.shape_cast %10 : vector<16xf32> to vector<16x1xf32>
    %cst_4 = arith.constant 6.400000e+01 : f32
    %12 = vector.broadcast %cst_4 : f32 to vector<16x1xf32>
    %13 = arith.divf %11, %12 : vector<16x1xf32>
    %14 = vector.broadcast %6 : vector<16x1xf32> to vector<16x64xf32>
    %15 = arith.subf %2, %14 : vector<16x64xf32>
    %cst_5 = arith.constant 9.99999974E-6 : f32
    %16 = vector.broadcast %cst_5 : f32 to vector<16x1xf32>
    %17 = arith.addf %13, %16 : vector<16x1xf32>
    %18 = math.rsqrt %17 : vector<16x1xf32>
    %19 = vector.broadcast %18 : vector<16x1xf32> to vector<16x64xf32>
    %20 = arith.mulf %15, %19 : vector<16x64xf32>
    %c0_6 = arith.constant 0 : index
    %c0_7 = arith.constant 0 : index
    %21 = vector.load %arg2[%c0_6, %c0_7] : memref<1x64xbf16, #tpu.memory_space<vmem>>, vector<1x64xbf16>
    %22 = arith.extf %21 : vector<1x64xbf16> to vector<1x64xf32>
    %23 = vector.broadcast %22 : vector<1x64xf32> to vector<16x64xf32>
    %24 = arith.mulf %20, %23 : vector<16x64xf32>
    %c0_8 = arith.constant 0 : index
    %c0_9 = arith.constant 0 : index
    %25 = vector.load %arg3[%c0_8, %c0_9] : memref<1x64xbf16, #tpu.memory_space<vmem>>, vector<1x64xbf16>
    %26 = arith.extf %25 : vector<1x64xbf16> to vector<1x64xf32>
    %27 = vector.broadcast %26 : vector<1x64xf32> to vector<16x64xf32>
    %28 = arith.addf %24, %27 : vector<16x64xf32>
    %29 = arith.truncf %28 : vector<16x64xf32> to vector<16x64xbf16>
    %c0_10 = arith.constant 0 : index
    %c0_11 = arith.constant 0 : index
    %30 = vector.load %arg4[%c0_10, %c0_11] : memref<64x192xbf16, #tpu.memory_space<vmem>>, vector<64x192xbf16>
    %cst_12 = arith.constant dense<0.000000e+00> : vector<16x192xf32>
    %31 = tpu.matmul %29, %30, %cst_12 {dimension_numbers = #tpu.dot_dimension_numbers<[1], [0], [0], [1], [0, 0, 1, 1], [], []>} : vector<16x64xbf16>, vector<64x192xbf16>, vector<16x192xf32> -> vector<16x192xf32>
    %c0_13 = arith.constant 0 : index
    %c0_14 = arith.constant 0 : index
    %32 = vector.load %arg5[%c0_13, %c0_14] : memref<1x192xbf16, #tpu.memory_space<vmem>>, vector<1x192xbf16>
    %33 = arith.extf %32 : vector<1x192xbf16> to vector<1x192xf32>
    %34 = vector.broadcast %33 : vector<1x192xf32> to vector<16x192xf32>
    %35 = arith.addf %31, %34 : vector<16x192xf32>
    %36 = vector.extract_strided_slice %35 {offsets = [0, 0], sizes = [16, 64], strides = [1, 1]} : vector<16x192xf32> to vector<16x64xf32>
    %cst_15 = arith.constant 0.353553385 : f32
    %37 = vector.broadcast %cst_15 : f32 to vector<16x64xf32>
    %38 = arith.mulf %36, %37 : vector<16x64xf32>
    %39 = vector.extract_strided_slice %35 {offsets = [0, 64], sizes = [16, 64], strides = [1, 1]} : vector<16x192xf32> to vector<16x64xf32>
    %40 = vector.extract_strided_slice %35 {offsets = [0, 128], sizes = [16, 64], strides = [1, 1]} : vector<16x192xf32> to vector<16x64xf32>
    %41 = tpu.iota {dimensions = array<i32: 0>} : vector<16x16xi32>
    %42 = tpu.iota {dimensions = array<i32: 1>} : vector<16x16xi32>
    %43 = arith.cmpi sle, %42, %41 : vector<16x16xi32>
    %44 = vector.extract_strided_slice %38 {offsets = [0, 0], sizes = [16, 8], strides = [1, 1]} : vector<16x64xf32> to vector<16x8xf32>
    %45 = vector.extract_strided_slice %39 {offsets = [0, 0], sizes = [16, 8], strides = [1, 1]} : vector<16x64xf32> to vector<16x8xf32>
    %46 = vector.extract_strided_slice %40 {offsets = [0, 0], sizes = [16, 8], strides = [1, 1]} : vector<16x64xf32> to vector<16x8xf32>
    %cst_16 = arith.constant dense<0.000000e+00> : vector<16x16xf32>
    %47 = tpu.matmul %44, %45, %cst_16 {dimension_numbers = #tpu.dot_dimension_numbers<[1], [1], [0], [0], [0, 0, 1, 0], [], []>} : vector<16x8xf32>, vector<16x8xf32>, vector<16x16xf32> -> vector<16x16xf32>
    %cst_17 = arith.constant -1.000000e+30 : f32
    %48 = vector.broadcast %cst_17 : f32 to vector<16x16xf32>
    %49 = arith.select %43, %47, %48 : vector<16x16xi1>, vector<16x16xf32>
    %cst_18 = arith.constant dense<0xFF800000> : vector<16xf32>
    %50 = vector.multi_reduction <maximumf>, %49, %cst_18 [1] : vector<16x16xf32> to vector<16xf32>
    %51 = vector.shape_cast %50 : vector<16xf32> to vector<16x1xf32>
    %52 = vector.broadcast %51 : vector<16x1xf32> to vector<16x16xf32>
    %53 = arith.subf %49, %52 : vector<16x16xf32>
    %54 = math.exp %53 : vector<16x16xf32>
    %cst_19 = arith.constant dense<0.000000e+00> : vector<16xf32>
    %55 = vector.multi_reduction <add>, %54, %cst_19 [1] : vector<16x16xf32> to vector<16xf32>
    %56 = vector.shape_cast %55 : vector<16xf32> to vector<16x1xf32>
    %57 = tpu.reciprocal %56 {approx = true} : vector<16x1xf32> -> vector<16x1xf32>
    %58 = vector.broadcast %57 : vector<16x1xf32> to vector<16x16xf32>
    %59 = arith.mulf %54, %58 : vector<16x16xf32>
    %cst_20 = arith.constant dense<0.000000e+00> : vector<16x8xf32>
    %60 = tpu.matmul %59, %46, %cst_20 {dimension_numbers = #tpu.dot_dimension_numbers<[1], [0], [0], [1], [0, 0, 1, 1], [], []>} : vector<16x16xf32>, vector<16x8xf32>, vector<16x8xf32> -> vector<16x8xf32>
    %61 = vector.extract_strided_slice %38 {offsets = [0, 8], sizes = [16, 8], strides = [1, 1]} : vector<16x64xf32> to vector<16x8xf32>
    %62 = vector.extract_strided_slice %39 {offsets = [0, 8], sizes = [16, 8], strides = [1, 1]} : vector<16x64xf32> to vector<16x8xf32>
    %63 = vector.extract_strided_slice %40 {offsets = [0, 8], sizes = [16, 8], strides = [1, 1]} : vector<16x64xf32> to vector<16x8xf32>
    %cst_21 = arith.constant dense<0.000000e+00> : vector<16x16xf32>
    %64 = tpu.matmul %61, %62, %cst_21 {dimension_numbers = #tpu.dot_dimension_numbers<[1], [1], [0], [0], [0, 0, 1, 0], [], []>} : vector<16x8xf32>, vector<16x8xf32>, vector<16x16xf32> -> vector<16x16xf32>
    %cst_22 = arith.constant -1.000000e+30 : f32
    %65 = vector.broadcast %cst_22 : f32 to vector<16x16xf32>
    %66 = arith.select %43, %64, %65 : vector<16x16xi1>, vector<16x16xf32>
    %cst_23 = arith.constant dense<0xFF800000> : vector<16xf32>
    %67 = vector.multi_reduction <maximumf>, %66, %cst_23 [1] : vector<16x16xf32> to vector<16xf32>
    %68 = vector.shape_cast %67 : vector<16xf32> to vector<16x1xf32>
    %69 = vector.broadcast %68 : vector<16x1xf32> to vector<16x16xf32>
    %70 = arith.subf %66, %69 : vector<16x16xf32>
    %71 = math.exp %70 : vector<16x16xf32>
    %cst_24 = arith.constant dense<0.000000e+00> : vector<16xf32>
    %72 = vector.multi_reduction <add>, %71, %cst_24 [1] : vector<16x16xf32> to vector<16xf32>
    %73 = vector.shape_cast %72 : vector<16xf32> to vector<16x1xf32>
    %74 = tpu.reciprocal %73 {approx = true} : vector<16x1xf32> -> vector<16x1xf32>
    %75 = vector.broadcast %74 : vector<16x1xf32> to vector<16x16xf32>
    %76 = arith.mulf %71, %75 : vector<16x16xf32>
    %cst_25 = arith.constant dense<0.000000e+00> : vector<16x8xf32>
    %77 = tpu.matmul %76, %63, %cst_25 {dimension_numbers = #tpu.dot_dimension_numbers<[1], [0], [0], [1], [0, 0, 1, 1], [], []>} : vector<16x16xf32>, vector<16x8xf32>, vector<16x8xf32> -> vector<16x8xf32>
    %78 = vector.extract_strided_slice %38 {offsets = [0, 16], sizes = [16, 8], strides = [1, 1]} : vector<16x64xf32> to vector<16x8xf32>
    %79 = vector.extract_strided_slice %39 {offsets = [0, 16], sizes = [16, 8], strides = [1, 1]} : vector<16x64xf32> to vector<16x8xf32>
    %80 = vector.extract_strided_slice %40 {offsets = [0, 16], sizes = [16, 8], strides = [1, 1]} : vector<16x64xf32> to vector<16x8xf32>
    %cst_26 = arith.constant dense<0.000000e+00> : vector<16x16xf32>
    %81 = tpu.matmul %78, %79, %cst_26 {dimension_numbers = #tpu.dot_dimension_numbers<[1], [1], [0], [0], [0, 0, 1, 0], [], []>} : vector<16x8xf32>, vector<16x8xf32>, vector<16x16xf32> -> vector<16x16xf32>
    %cst_27 = arith.constant -1.000000e+30 : f32
    %82 = vector.broadcast %cst_27 : f32 to vector<16x16xf32>
    %83 = arith.select %43, %81, %82 : vector<16x16xi1>, vector<16x16xf32>
    %cst_28 = arith.constant dense<0xFF800000> : vector<16xf32>
    %84 = vector.multi_reduction <maximumf>, %83, %cst_28 [1] : vector<16x16xf32> to vector<16xf32>
    %85 = vector.shape_cast %84 : vector<16xf32> to vector<16x1xf32>
    %86 = vector.broadcast %85 : vector<16x1xf32> to vector<16x16xf32>
    %87 = arith.subf %83, %86 : vector<16x16xf32>
    %88 = math.exp %87 : vector<16x16xf32>
    %cst_29 = arith.constant dense<0.000000e+00> : vector<16xf32>
    %89 = vector.multi_reduction <add>, %88, %cst_29 [1] : vector<16x16xf32> to vector<16xf32>
    %90 = vector.shape_cast %89 : vector<16xf32> to vector<16x1xf32>
    %91 = tpu.reciprocal %90 {approx = true} : vector<16x1xf32> -> vector<16x1xf32>
    %92 = vector.broadcast %91 : vector<16x1xf32> to vector<16x16xf32>
    %93 = arith.mulf %88, %92 : vector<16x16xf32>
    %cst_30 = arith.constant dense<0.000000e+00> : vector<16x8xf32>
    %94 = tpu.matmul %93, %80, %cst_30 {dimension_numbers = #tpu.dot_dimension_numbers<[1], [0], [0], [1], [0, 0, 1, 1], [], []>} : vector<16x16xf32>, vector<16x8xf32>, vector<16x8xf32> -> vector<16x8xf32>
    %95 = vector.extract_strided_slice %38 {offsets = [0, 24], sizes = [16, 8], strides = [1, 1]} : vector<16x64xf32> to vector<16x8xf32>
    %96 = vector.extract_strided_slice %39 {offsets = [0, 24], sizes = [16, 8], strides = [1, 1]} : vector<16x64xf32> to vector<16x8xf32>
    %97 = vector.extract_strided_slice %40 {offsets = [0, 24], sizes = [16, 8], strides = [1, 1]} : vector<16x64xf32> to vector<16x8xf32>
    %cst_31 = arith.constant dense<0.000000e+00> : vector<16x16xf32>
    %98 = tpu.matmul %95, %96, %cst_31 {dimension_numbers = #tpu.dot_dimension_numbers<[1], [1], [0], [0], [0, 0, 1, 0], [], []>} : vector<16x8xf32>, vector<16x8xf32>, vector<16x16xf32> -> vector<16x16xf32>
    %cst_32 = arith.constant -1.000000e+30 : f32
    %99 = vector.broadcast %cst_32 : f32 to vector<16x16xf32>
    %100 = arith.select %43, %98, %99 : vector<16x16xi1>, vector<16x16xf32>
    %cst_33 = arith.constant dense<0xFF800000> : vector<16xf32>
    %101 = vector.multi_reduction <maximumf>, %100, %cst_33 [1] : vector<16x16xf32> to vector<16xf32>
    %102 = vector.shape_cast %101 : vector<16xf32> to vector<16x1xf32>
    %103 = vector.broadcast %102 : vector<16x1xf32> to vector<16x16xf32>
    %104 = arith.subf %100, %103 : vector<16x16xf32>
    %105 = math.exp %104 : vector<16x16xf32>
    %cst_34 = arith.constant dense<0.000000e+00> : vector<16xf32>
    %106 = vector.multi_reduction <add>, %105, %cst_34 [1] : vector<16x16xf32> to vector<16xf32>
    %107 = vector.shape_cast %106 : vector<16xf32> to vector<16x1xf32>
    %108 = tpu.reciprocal %107 {approx = true} : vector<16x1xf32> -> vector<16x1xf32>
    %109 = vector.broadcast %108 : vector<16x1xf32> to vector<16x16xf32>
    %110 = arith.mulf %105, %109 : vector<16x16xf32>
    %cst_35 = arith.constant dense<0.000000e+00> : vector<16x8xf32>
    %111 = tpu.matmul %110, %97, %cst_35 {dimension_numbers = #tpu.dot_dimension_numbers<[1], [0], [0], [1], [0, 0, 1, 1], [], []>} : vector<16x16xf32>, vector<16x8xf32>, vector<16x8xf32> -> vector<16x8xf32>
    %112 = vector.extract_strided_slice %38 {offsets = [0, 32], sizes = [16, 8], strides = [1, 1]} : vector<16x64xf32> to vector<16x8xf32>
    %113 = vector.extract_strided_slice %39 {offsets = [0, 32], sizes = [16, 8], strides = [1, 1]} : vector<16x64xf32> to vector<16x8xf32>
    %114 = vector.extract_strided_slice %40 {offsets = [0, 32], sizes = [16, 8], strides = [1, 1]} : vector<16x64xf32> to vector<16x8xf32>
    %cst_36 = arith.constant dense<0.000000e+00> : vector<16x16xf32>
    %115 = tpu.matmul %112, %113, %cst_36 {dimension_numbers = #tpu.dot_dimension_numbers<[1], [1], [0], [0], [0, 0, 1, 0], [], []>} : vector<16x8xf32>, vector<16x8xf32>, vector<16x16xf32> -> vector<16x16xf32>
    %cst_37 = arith.constant -1.000000e+30 : f32
    %116 = vector.broadcast %cst_37 : f32 to vector<16x16xf32>
    %117 = arith.select %43, %115, %116 : vector<16x16xi1>, vector<16x16xf32>
    %cst_38 = arith.constant dense<0xFF800000> : vector<16xf32>
    %118 = vector.multi_reduction <maximumf>, %117, %cst_38 [1] : vector<16x16xf32> to vector<16xf32>
    %119 = vector.shape_cast %118 : vector<16xf32> to vector<16x1xf32>
    %120 = vector.broadcast %119 : vector<16x1xf32> to vector<16x16xf32>
    %121 = arith.subf %117, %120 : vector<16x16xf32>
    %122 = math.exp %121 : vector<16x16xf32>
    %cst_39 = arith.constant dense<0.000000e+00> : vector<16xf32>
    %123 = vector.multi_reduction <add>, %122, %cst_39 [1] : vector<16x16xf32> to vector<16xf32>
    %124 = vector.shape_cast %123 : vector<16xf32> to vector<16x1xf32>
    %125 = tpu.reciprocal %124 {approx = true} : vector<16x1xf32> -> vector<16x1xf32>
    %126 = vector.broadcast %125 : vector<16x1xf32> to vector<16x16xf32>
    %127 = arith.mulf %122, %126 : vector<16x16xf32>
    %cst_40 = arith.constant dense<0.000000e+00> : vector<16x8xf32>
    %128 = tpu.matmul %127, %114, %cst_40 {dimension_numbers = #tpu.dot_dimension_numbers<[1], [0], [0], [1], [0, 0, 1, 1], [], []>} : vector<16x16xf32>, vector<16x8xf32>, vector<16x8xf32> -> vector<16x8xf32>
    %129 = vector.extract_strided_slice %38 {offsets = [0, 40], sizes = [16, 8], strides = [1, 1]} : vector<16x64xf32> to vector<16x8xf32>
    %130 = vector.extract_strided_slice %39 {offsets = [0, 40], sizes = [16, 8], strides = [1, 1]} : vector<16x64xf32> to vector<16x8xf32>
    %131 = vector.extract_strided_slice %40 {offsets = [0, 40], sizes = [16, 8], strides = [1, 1]} : vector<16x64xf32> to vector<16x8xf32>
    %cst_41 = arith.constant dense<0.000000e+00> : vector<16x16xf32>
    %132 = tpu.matmul %129, %130, %cst_41 {dimension_numbers = #tpu.dot_dimension_numbers<[1], [1], [0], [0], [0, 0, 1, 0], [], []>} : vector<16x8xf32>, vector<16x8xf32>, vector<16x16xf32> -> vector<16x16xf32>
    %cst_42 = arith.constant -1.000000e+30 : f32
    %133 = vector.broadcast %cst_42 : f32 to vector<16x16xf32>
    %134 = arith.select %43, %132, %133 : vector<16x16xi1>, vector<16x16xf32>
    %cst_43 = arith.constant dense<0xFF800000> : vector<16xf32>
    %135 = vector.multi_reduction <maximumf>, %134, %cst_43 [1] : vector<16x16xf32> to vector<16xf32>
    %136 = vector.shape_cast %135 : vector<16xf32> to vector<16x1xf32>
    %137 = vector.broadcast %136 : vector<16x1xf32> to vector<16x16xf32>
    %138 = arith.subf %134, %137 : vector<16x16xf32>
    %139 = math.exp %138 : vector<16x16xf32>
    %cst_44 = arith.constant dense<0.000000e+00> : vector<16xf32>
    %140 = vector.multi_reduction <add>, %139, %cst_44 [1] : vector<16x16xf32> to vector<16xf32>
    %141 = vector.shape_cast %140 : vector<16xf32> to vector<16x1xf32>
    %142 = tpu.reciprocal %141 {approx = true} : vector<16x1xf32> -> vector<16x1xf32>
    %143 = vector.broadcast %142 : vector<16x1xf32> to vector<16x16xf32>
    %144 = arith.mulf %139, %143 : vector<16x16xf32>
    %cst_45 = arith.constant dense<0.000000e+00> : vector<16x8xf32>
    %145 = tpu.matmul %144, %131, %cst_45 {dimension_numbers = #tpu.dot_dimension_numbers<[1], [0], [0], [1], [0, 0, 1, 1], [], []>} : vector<16x16xf32>, vector<16x8xf32>, vector<16x8xf32> -> vector<16x8xf32>
    %146 = vector.extract_strided_slice %38 {offsets = [0, 48], sizes = [16, 8], strides = [1, 1]} : vector<16x64xf32> to vector<16x8xf32>
    %147 = vector.extract_strided_slice %39 {offsets = [0, 48], sizes = [16, 8], strides = [1, 1]} : vector<16x64xf32> to vector<16x8xf32>
    %148 = vector.extract_strided_slice %40 {offsets = [0, 48], sizes = [16, 8], strides = [1, 1]} : vector<16x64xf32> to vector<16x8xf32>
    %cst_46 = arith.constant dense<0.000000e+00> : vector<16x16xf32>
    %149 = tpu.matmul %146, %147, %cst_46 {dimension_numbers = #tpu.dot_dimension_numbers<[1], [1], [0], [0], [0, 0, 1, 0], [], []>} : vector<16x8xf32>, vector<16x8xf32>, vector<16x16xf32> -> vector<16x16xf32>
    %cst_47 = arith.constant -1.000000e+30 : f32
    %150 = vector.broadcast %cst_47 : f32 to vector<16x16xf32>
    %151 = arith.select %43, %149, %150 : vector<16x16xi1>, vector<16x16xf32>
    %cst_48 = arith.constant dense<0xFF800000> : vector<16xf32>
    %152 = vector.multi_reduction <maximumf>, %151, %cst_48 [1] : vector<16x16xf32> to vector<16xf32>
    %153 = vector.shape_cast %152 : vector<16xf32> to vector<16x1xf32>
    %154 = vector.broadcast %153 : vector<16x1xf32> to vector<16x16xf32>
    %155 = arith.subf %151, %154 : vector<16x16xf32>
    %156 = math.exp %155 : vector<16x16xf32>
    %cst_49 = arith.constant dense<0.000000e+00> : vector<16xf32>
    %157 = vector.multi_reduction <add>, %156, %cst_49 [1] : vector<16x16xf32> to vector<16xf32>
    %158 = vector.shape_cast %157 : vector<16xf32> to vector<16x1xf32>
    %159 = tpu.reciprocal %158 {approx = true} : vector<16x1xf32> -> vector<16x1xf32>
    %160 = vector.broadcast %159 : vector<16x1xf32> to vector<16x16xf32>
    %161 = arith.mulf %156, %160 : vector<16x16xf32>
    %cst_50 = arith.constant dense<0.000000e+00> : vector<16x8xf32>
    %162 = tpu.matmul %161, %148, %cst_50 {dimension_numbers = #tpu.dot_dimension_numbers<[1], [0], [0], [1], [0, 0, 1, 1], [], []>} : vector<16x16xf32>, vector<16x8xf32>, vector<16x8xf32> -> vector<16x8xf32>
    %163 = vector.extract_strided_slice %38 {offsets = [0, 56], sizes = [16, 8], strides = [1, 1]} : vector<16x64xf32> to vector<16x8xf32>
    %164 = vector.extract_strided_slice %39 {offsets = [0, 56], sizes = [16, 8], strides = [1, 1]} : vector<16x64xf32> to vector<16x8xf32>
    %165 = vector.extract_strided_slice %40 {offsets = [0, 56], sizes = [16, 8], strides = [1, 1]} : vector<16x64xf32> to vector<16x8xf32>
    %cst_51 = arith.constant dense<0.000000e+00> : vector<16x16xf32>
    %166 = tpu.matmul %163, %164, %cst_51 {dimension_numbers = #tpu.dot_dimension_numbers<[1], [1], [0], [0], [0, 0, 1, 0], [], []>} : vector<16x8xf32>, vector<16x8xf32>, vector<16x16xf32> -> vector<16x16xf32>
    %cst_52 = arith.constant -1.000000e+30 : f32
    %167 = vector.broadcast %cst_52 : f32 to vector<16x16xf32>
    %168 = arith.select %43, %166, %167 : vector<16x16xi1>, vector<16x16xf32>
    %cst_53 = arith.constant dense<0xFF800000> : vector<16xf32>
    %169 = vector.multi_reduction <maximumf>, %168, %cst_53 [1] : vector<16x16xf32> to vector<16xf32>
    %170 = vector.shape_cast %169 : vector<16xf32> to vector<16x1xf32>
    %171 = vector.broadcast %170 : vector<16x1xf32> to vector<16x16xf32>
    %172 = arith.subf %168, %171 : vector<16x16xf32>
    %173 = math.exp %172 : vector<16x16xf32>
    %cst_54 = arith.constant dense<0.000000e+00> : vector<16xf32>
    %174 = vector.multi_reduction <add>, %173, %cst_54 [1] : vector<16x16xf32> to vector<16xf32>
    %175 = vector.shape_cast %174 : vector<16xf32> to vector<16x1xf32>
    %176 = tpu.reciprocal %175 {approx = true} : vector<16x1xf32> -> vector<16x1xf32>
    %177 = vector.broadcast %176 : vector<16x1xf32> to vector<16x16xf32>
    %178 = arith.mulf %173, %177 : vector<16x16xf32>
    %cst_55 = arith.constant dense<0.000000e+00> : vector<16x8xf32>
    %179 = tpu.matmul %178, %165, %cst_55 {dimension_numbers = #tpu.dot_dimension_numbers<[1], [0], [0], [1], [0, 0, 1, 1], [], []>} : vector<16x16xf32>, vector<16x8xf32>, vector<16x8xf32> -> vector<16x8xf32>
    %180 = tpu.concatenate %60, %77, %94, %111, %128, %145, %162, %179 in 1 : vector<16x8xf32>, vector<16x8xf32>, vector<16x8xf32>, vector<16x8xf32>, vector<16x8xf32>, vector<16x8xf32>, vector<16x8xf32>, vector<16x8xf32> -> vector<16x64xf32>
    %181 = arith.truncf %180 : vector<16x64xf32> to vector<16x64xbf16>
    %c0_56 = arith.constant 0 : index
    %c0_57 = arith.constant 0 : index
    %182 = vector.load %arg6[%c0_56, %c0_57] : memref<64x64xbf16, #tpu.memory_space<vmem>>, vector<64x64xbf16>
    %cst_58 = arith.constant dense<0.000000e+00> : vector<16x64xf32>
    %183 = tpu.matmul %181, %182, %cst_58 {dimension_numbers = #tpu.dot_dimension_numbers<[1], [0], [0], [1], [0, 0, 1, 1], [], []>} : vector<16x64xbf16>, vector<64x64xbf16>, vector<16x64xf32> -> vector<16x64xf32>
    %c0_59 = arith.constant 0 : index
    %c0_60 = arith.constant 0 : index
    %184 = vector.load %arg7[%c0_59, %c0_60] : memref<1x64xbf16, #tpu.memory_space<vmem>>, vector<1x64xbf16>
    %185 = arith.extf %184 : vector<1x64xbf16> to vector<1x64xf32>
    %186 = vector.broadcast %185 : vector<1x64xf32> to vector<16x64xf32>
    %187 = arith.addf %183, %186 : vector<16x64xf32>
    %188 = arith.addf %2, %187 : vector<16x64xf32>
    %cst_61 = arith.constant dense<0.000000e+00> : vector<16xf32>
    %189 = vector.multi_reduction <add>, %188, %cst_61 [1] : vector<16x64xf32> to vector<16xf32>
    %190 = vector.shape_cast %189 : vector<16xf32> to vector<16x1xf32>
    %cst_62 = arith.constant 6.400000e+01 : f32
    %191 = vector.broadcast %cst_62 : f32 to vector<16x1xf32>
    %192 = arith.divf %190, %191 : vector<16x1xf32>
    %193 = vector.broadcast %192 : vector<16x1xf32> to vector<16x64xf32>
    %194 = arith.subf %188, %193 : vector<16x64xf32>
    %195 = arith.mulf %194, %194 : vector<16x64xf32>
    %cst_63 = arith.constant dense<0.000000e+00> : vector<16xf32>
    %196 = vector.multi_reduction <add>, %195, %cst_63 [1] : vector<16x64xf32> to vector<16xf32>
    %197 = vector.shape_cast %196 : vector<16xf32> to vector<16x1xf32>
    %cst_64 = arith.constant 6.400000e+01 : f32
    %198 = vector.broadcast %cst_64 : f32 to vector<16x1xf32>
    %199 = arith.divf %197, %198 : vector<16x1xf32>
    %200 = vector.broadcast %192 : vector<16x1xf32> to vector<16x64xf32>
    %201 = arith.subf %188, %200 : vector<16x64xf32>
    %cst_65 = arith.constant 9.99999974E-6 : f32
    %202 = vector.broadcast %cst_65 : f32 to vector<16x1xf32>
    %203 = arith.addf %199, %202 : vector<16x1xf32>
    %204 = math.rsqrt %203 : vector<16x1xf32>
    %205 = vector.broadcast %204 : vector<16x1xf32> to vector<16x64xf32>
    %206 = arith.mulf %201, %205 : vector<16x64xf32>
    %c0_66 = arith.constant 0 : index
    %c0_67 = arith.constant 0 : index
    %207 = vector.load %arg8[%c0_66, %c0_67] : memref<1x64xbf16, #tpu.memory_space<vmem>>, vector<1x64xbf16>
    %208 = arith.extf %207 : vector<1x64xbf16> to vector<1x64xf32>
    %209 = vector.broadcast %208 : vector<1x64xf32> to vector<16x64xf32>
    %210 = arith.mulf %206, %209 : vector<16x64xf32>
    %c0_68 = arith.constant 0 : index
    %c0_69 = arith.constant 0 : index
    %211 = vector.load %arg9[%c0_68, %c0_69] : memref<1x64xbf16, #tpu.memory_space<vmem>>, vector<1x64xbf16>
    %212 = arith.extf %211 : vector<1x64xbf16> to vector<1x64xf32>
    %213 = vector.broadcast %212 : vector<1x64xf32> to vector<16x64xf32>
    %214 = arith.addf %210, %213 : vector<16x64xf32>
    %215 = arith.truncf %214 : vector<16x64xf32> to vector<16x64xbf16>
    %c0_70 = arith.constant 0 : index
    %c0_71 = arith.constant 0 : index
    %216 = vector.load %arg10[%c0_70, %c0_71] : memref<64x256xbf16, #tpu.memory_space<vmem>>, vector<64x256xbf16>
    %cst_72 = arith.constant dense<0.000000e+00> : vector<16x256xf32>
    %217 = tpu.matmul %215, %216, %cst_72 {dimension_numbers = #tpu.dot_dimension_numbers<[1], [0], [0], [1], [0, 0, 1, 1], [], []>} : vector<16x64xbf16>, vector<64x256xbf16>, vector<16x256xf32> -> vector<16x256xf32>
    %c0_73 = arith.constant 0 : index
    %c0_74 = arith.constant 0 : index
    %218 = vector.load %arg11[%c0_73, %c0_74] : memref<1x256xbf16, #tpu.memory_space<vmem>>, vector<1x256xbf16>
    %219 = arith.extf %218 : vector<1x256xbf16> to vector<1x256xf32>
    %220 = vector.broadcast %219 : vector<1x256xf32> to vector<16x256xf32>
    %221 = arith.addf %217, %220 : vector<16x256xf32>
    %cst_75 = arith.constant 5.000000e-01 : f32
    %222 = vector.broadcast %cst_75 : f32 to vector<16x256xf32>
    %223 = arith.mulf %222, %221 : vector<16x256xf32>
    %cst_76 = arith.constant 4.471500e-02 : f32
    %224 = vector.broadcast %cst_76 : f32 to vector<16x256xf32>
    %225 = arith.mulf %224, %221 : vector<16x256xf32>
    %226 = arith.mulf %225, %221 : vector<16x256xf32>
    %227 = arith.mulf %226, %221 : vector<16x256xf32>
    %228 = arith.addf %221, %227 : vector<16x256xf32>
    %cst_77 = arith.constant 0.797884583 : f32
    %229 = vector.broadcast %cst_77 : f32 to vector<16x256xf32>
    %230 = arith.mulf %229, %228 : vector<16x256xf32>
    %231 = math.tanh %230 : vector<16x256xf32>
    %cst_78 = arith.constant 1.000000e+00 : f32
    %232 = vector.broadcast %cst_78 : f32 to vector<16x256xf32>
    %233 = arith.addf %232, %231 : vector<16x256xf32>
    %234 = arith.mulf %223, %233 : vector<16x256xf32>
    %235 = arith.truncf %234 : vector<16x256xf32> to vector<16x256xbf16>
    %c0_79 = arith.constant 0 : index
    %c0_80 = arith.constant 0 : index
    %236 = vector.load %arg12[%c0_79, %c0_80] : memref<256x64xbf16, #tpu.memory_space<vmem>>, vector<256x64xbf16>
    %cst_81 = arith.constant dense<0.000000e+00> : vector<16x64xf32>
    %237 = tpu.matmul %235, %236, %cst_81 {dimension_numbers = #tpu.dot_dimension_numbers<[1], [0], [0], [1], [0, 0, 1, 1], [], []>} : vector<16x256xbf16>, vector<256x64xbf16>, vector<16x64xf32> -> vector<16x64xf32>
    %c0_82 = arith.constant 0 : index
    %c0_83 = arith.constant 0 : index
    %238 = vector.load %arg13[%c0_82, %c0_83] : memref<1x64xbf16, #tpu.memory_space<vmem>>, vector<1x64xbf16>
    %239 = arith.extf %238 : vector<1x64xbf16> to vector<1x64xf32>
    %240 = vector.broadcast %239 : vector<1x64xf32> to vector<16x64xf32>
    %241 = arith.addf %237, %240 : vector<16x64xf32>
    %242 = arith.addf %188, %241 : vector<16x64xf32>
    %243 = arith.truncf %242 : vector<16x64xf32> to vector<16x64xbf16>
    %c0_84 = arith.constant 0 : index
    %c0_85 = arith.constant 0 : index
    %c0_86 = arith.constant 0 : index
    %244 = vector.load %arg14[%c0_84, %c0_85, %c0_86] : memref<1x16x64xbf16, #tpu.memory_space<vmem>>, vector<1x16x64xbf16>
    %245 = vector.shape_cast %244 : vector<1x16x64xbf16> to vector<16x64xbf16>
    %246 = vector.shape_cast %243 : vector<16x64xbf16> to vector<1x16x64xbf16>
    tpu.vector_store %arg14[%c0_84, %c0_85, %c0_86], %246 {strides = array<i32>} : memref<1x16x64xbf16, #tpu.memory_space<vmem>>, vector<1x16x64xbf16>,
    return
  }
  func.func @transform_0(%arg0: i32) -> (i32, i32, i32) {
    %c0_i32 = arith.constant 0 : i32
    %c0_i32_0 = arith.constant 0 : i32
    %c0_i32_1 = arith.constant 0 : i32
    return %arg0, %c0_i32, %c0_i32_0 : i32, i32, i32
  }
  func.func @transform_1(%arg0: i32) -> (i32, i32) {
    %c0_i32 = arith.constant 0 : i32
    %c0_i32_0 = arith.constant 0 : i32
    %c0_i32_1 = arith.constant 0 : i32
    return %c0_i32, %c0_i32_0 : i32, i32
  }
  func.func @transform_2(%arg0: i32) -> (i32, i32) {
    %c0_i32 = arith.constant 0 : i32
    %c0_i32_0 = arith.constant 0 : i32
    %c0_i32_1 = arith.constant 0 : i32
    return %c0_i32, %c0_i32_0 : i32, i32
  }
  func.func @transform_3(%arg0: i32) -> (i32, i32) {
    %c0_i32 = arith.constant 0 : i32
    %c0_i32_0 = arith.constant 0 : i32
    %c0_i32_1 = arith.constant 0 : i32
    return %c0_i32, %c0_i32_0 : i32, i32
  }
  func.func @transform_4(%arg0: i32) -> (i32, i32) {
    %c0_i32 = arith.constant 0 : i32
    %c0_i32_0 = arith.constant 0 : i32
    %c0_i32_1 = arith.constant 0 : i32
    return %c0_i32, %c0_i32_0 : i32, i32
  }
  func.func @transform_5(%arg0: i32) -> (i32, i32) {
    %c0_i32 = arith.constant 0 : i32
    %c0_i32_0 = arith.constant 0 : i32
    %c0_i32_1 = arith.constant 0 : i32
    return %c0_i32, %c0_i32_0 : i32, i32
  }
  func.func @transform_6(%arg0: i32) -> (i32, i32) {
    %c0_i32 = arith.constant 0 : i32
    %c0_i32_0 = arith.constant 0 : i32
    %c0_i32_1 = arith.constant 0 : i32
    return %c0_i32, %c0_i32_0 : i32, i32
  }
  func.func @transform_7(%arg0: i32) -> (i32, i32) {
    %c0_i32 = arith.constant 0 : i32
    %c0_i32_0 = arith.constant 0 : i32
    %c0_i32_1 = arith.constant 0 : i32
    return %c0_i32, %c0_i32_0 : i32, i32
  }
  func.func @transform_8(%arg0: i32) -> (i32, i32) {
    %c0_i32 = arith.constant 0 : i32
    %c0_i32_0 = arith.constant 0 : i32
    %c0_i32_1 = arith.constant 0 : i32
    return %c0_i32, %c0_i32_0 : i32, i32
  }
  func.func @transform_9(%arg0: i32) -> (i32, i32) {
    %c0_i32 = arith.constant 0 : i32
    %c0_i32_0 = arith.constant 0 : i32
    %c0_i32_1 = arith.constant 0 : i32
    return %c0_i32, %c0_i32_0 : i32, i32
  }
  func.func @transform_10(%arg0: i32) -> (i32, i32) {
    %c0_i32 = arith.constant 0 : i32
    %c0_i32_0 = arith.constant 0 : i32
    %c0_i32_1 = arith.constant 0 : i32
    return %c0_i32, %c0_i32_0 : i32, i32
  }
  func.func @transform_11(%arg0: i32) -> (i32, i32) {
    %c0_i32 = arith.constant 0 : i32
    %c0_i32_0 = arith.constant 0 : i32
    %c0_i32_1 = arith.constant 0 : i32
    return %c0_i32, %c0_i32_0 : i32, i32
  }
  func.func @transform_12(%arg0: i32) -> (i32, i32) {
    %c0_i32 = arith.constant 0 : i32
    %c0_i32_0 = arith.constant 0 : i32
    %c0_i32_1 = arith.constant 0 : i32
    return %c0_i32, %c0_i32_0 : i32, i32
  }
  func.func @transform_13(%arg0: i32) -> (i32, i32, i32) {
    %c0_i32 = arith.constant 0 : i32
    %c0_i32_0 = arith.constant 0 : i32
    %c0_i32_1 = arith.constant 0 : i32
    return %arg0, %c0_i32, %c0_i32_0 : i32, i32, i32
  }
}

module attributes {stable_mosaic.version = 11 : i64} {
  func.func @_head_kernel(%arg0: i32, %arg1: memref<32x64xbf16, #tpu.memory_space<vmem>>, %arg2: memref<1x64xbf16, #tpu.memory_space<vmem>>, %arg3: memref<1x64xbf16, #tpu.memory_space<vmem>>, %arg4: memref<64x512xbf16, #tpu.memory_space<vmem>>, %arg5: memref<32x512xf32, #tpu.memory_space<vmem>>) attributes {dimension_semantics = [#tpu.dimension_semantics<parallel>], iteration_bounds = array<i64: 1>, scalar_prefetch = 0 : i64, scratch_operands = 0 : i64, tpu.core_type = #tpu.core_type<tc>, window_params = [{transform_indices = @transform_0, window_bounds = array<i64: 32, 64>}, {pipeline_mode = #tpu.pipeline_mode<synchronous>, transform_indices = @transform_1, window_bounds = array<i64: 1, 64>}, {pipeline_mode = #tpu.pipeline_mode<synchronous>, transform_indices = @transform_2, window_bounds = array<i64: 1, 64>}, {pipeline_mode = #tpu.pipeline_mode<synchronous>, transform_indices = @transform_3, window_bounds = array<i64: 64, 512>}, {transform_indices = @transform_4, window_bounds = array<i64: 32, 512>}]} {
    %c0 = arith.constant 0 : index
    %c0_0 = arith.constant 0 : index
    %0 = vector.load %arg1[%c0, %c0_0] : memref<32x64xbf16, #tpu.memory_space<vmem>>, vector<32x64xbf16>
    %1 = arith.extf %0 : vector<32x64xbf16> to vector<32x64xf32>
    %cst = arith.constant dense<0.000000e+00> : vector<32xf32>
    %2 = vector.multi_reduction <add>, %1, %cst [1] : vector<32x64xf32> to vector<32xf32>
    %3 = vector.shape_cast %2 : vector<32xf32> to vector<32x1xf32>
    %cst_1 = arith.constant 6.400000e+01 : f32
    %4 = vector.broadcast %cst_1 : f32 to vector<32x1xf32>
    %5 = arith.divf %3, %4 : vector<32x1xf32>
    %6 = vector.broadcast %5 : vector<32x1xf32> to vector<32x64xf32>
    %7 = arith.subf %1, %6 : vector<32x64xf32>
    %8 = arith.mulf %7, %7 : vector<32x64xf32>
    %cst_2 = arith.constant dense<0.000000e+00> : vector<32xf32>
    %9 = vector.multi_reduction <add>, %8, %cst_2 [1] : vector<32x64xf32> to vector<32xf32>
    %10 = vector.shape_cast %9 : vector<32xf32> to vector<32x1xf32>
    %cst_3 = arith.constant 6.400000e+01 : f32
    %11 = vector.broadcast %cst_3 : f32 to vector<32x1xf32>
    %12 = arith.divf %10, %11 : vector<32x1xf32>
    %13 = vector.broadcast %5 : vector<32x1xf32> to vector<32x64xf32>
    %14 = arith.subf %1, %13 : vector<32x64xf32>
    %cst_4 = arith.constant 9.99999974E-6 : f32
    %15 = vector.broadcast %cst_4 : f32 to vector<32x1xf32>
    %16 = arith.addf %12, %15 : vector<32x1xf32>
    %17 = math.rsqrt %16 : vector<32x1xf32>
    %18 = vector.broadcast %17 : vector<32x1xf32> to vector<32x64xf32>
    %19 = arith.mulf %14, %18 : vector<32x64xf32>
    %c0_5 = arith.constant 0 : index
    %c0_6 = arith.constant 0 : index
    %20 = vector.load %arg2[%c0_5, %c0_6] : memref<1x64xbf16, #tpu.memory_space<vmem>>, vector<1x64xbf16>
    %21 = arith.extf %20 : vector<1x64xbf16> to vector<1x64xf32>
    %22 = vector.broadcast %21 : vector<1x64xf32> to vector<32x64xf32>
    %23 = arith.mulf %19, %22 : vector<32x64xf32>
    %c0_7 = arith.constant 0 : index
    %c0_8 = arith.constant 0 : index
    %24 = vector.load %arg3[%c0_7, %c0_8] : memref<1x64xbf16, #tpu.memory_space<vmem>>, vector<1x64xbf16>
    %25 = arith.extf %24 : vector<1x64xbf16> to vector<1x64xf32>
    %26 = vector.broadcast %25 : vector<1x64xf32> to vector<32x64xf32>
    %27 = arith.addf %23, %26 : vector<32x64xf32>
    %28 = arith.truncf %27 : vector<32x64xf32> to vector<32x64xbf16>
    %c0_9 = arith.constant 0 : index
    %c0_10 = arith.constant 0 : index
    %29 = vector.load %arg4[%c0_9, %c0_10] : memref<64x512xbf16, #tpu.memory_space<vmem>>, vector<64x512xbf16>
    %cst_11 = arith.constant dense<0.000000e+00> : vector<32x512xf32>
    %30 = tpu.matmul %28, %29, %cst_11 {dimension_numbers = #tpu.dot_dimension_numbers<[1], [0], [0], [1], [0, 0, 1, 1], [], []>} : vector<32x64xbf16>, vector<64x512xbf16>, vector<32x512xf32> -> vector<32x512xf32>
    %c0_12 = arith.constant 0 : index
    %c0_13 = arith.constant 0 : index
    %31 = vector.load %arg5[%c0_12, %c0_13] : memref<32x512xf32, #tpu.memory_space<vmem>>, vector<32x512xf32>
    tpu.vector_store %arg5[%c0_12, %c0_13], %30 {strides = array<i32>} : memref<32x512xf32, #tpu.memory_space<vmem>>, vector<32x512xf32>,
    return
  }
  func.func @transform_0(%arg0: i32) -> (i32, i32) {
    %c0_i32 = arith.constant 0 : i32
    %c0_i32_0 = arith.constant 0 : i32
    return %arg0, %c0_i32 : i32, i32
  }
  func.func @transform_1(%arg0: i32) -> (i32, i32) {
    %c0_i32 = arith.constant 0 : i32
    %c0_i32_0 = arith.constant 0 : i32
    %c0_i32_1 = arith.constant 0 : i32
    return %c0_i32, %c0_i32_0 : i32, i32
  }
  func.func @transform_2(%arg0: i32) -> (i32, i32) {
    %c0_i32 = arith.constant 0 : i32
    %c0_i32_0 = arith.constant 0 : i32
    %c0_i32_1 = arith.constant 0 : i32
    return %c0_i32, %c0_i32_0 : i32, i32
  }
  func.func @transform_3(%arg0: i32) -> (i32, i32) {
    %c0_i32 = arith.constant 0 : i32
    %c0_i32_0 = arith.constant 0 : i32
    %c0_i32_1 = arith.constant 0 : i32
    return %c0_i32, %c0_i32_0 : i32, i32
  }
  func.func @transform_4(%arg0: i32) -> (i32, i32) {
    %c0_i32 = arith.constant 0 : i32
    %c0_i32_0 = arith.constant 0 : i32
    return %arg0, %c0_i32 : i32, i32
  }
}

</mosaic_0001>

<llo_original>
// kernel: amt_forward.8
$region0: #{amt_forward.8}
  #allocation0 [shape = 'u32[]', space=smem, size = 0x4, offset = 0x4, fixed_abs, tag = 'smem constant byte address 0x4 - core index']
  #allocation1 [shape = 'u32[72,128]{1,0:T(1,128)}', space=vmem, size = 0x9000, scoped, tag = 'internal scratch']
  %s0 = inlined_call_operand.vmem [shape: f32[2,8,32], index: 0, kind: input, shape index: {}]
  %s1 = inlined_call_operand.vmem [shape: f32[2,8,64], index: 1, kind: input, shape index: {}]
  %s2 = inlined_call_operand.vmem [shape: bf16[32,64], index: 2, kind: input, shape index: {}]
  %s3 = inlined_call_operand.hbm [shape: bf16[1,64], index: 3, kind: input, shape index: {}]
  %s4 = inlined_call_operand.vmem [shape: bf16[16,64], index: 4, kind: input, shape index: {}]
  %s5 = inlined_call_operand.vmem [shape: bf16[2,16,64], index: 5, kind: output, shape index: {}]
  %s6 = sld [smem:[#allocation0]]
  $region57: #{amt_forward.8} parent=0
    _
  %s8 = ssub.s32 1, %s6
  %s9 = scalar_select 0, %s8, %s6
  $region1: #{amt_forward.8} parent=0
    #allocation2 [shape = 'u8[512]{0}', space=vmem, size = 0x400, scoped, tag = 'input window, operand 3, single buffered']
    #allocation3 [shape = 's32[2]{0}', space=sflag, size = 0x8, scoped, tag = 'scoped memory for amt_forward.8']
    %10 = vsyncpa [#allocation3], 0
    loop: start=0, step=1, limit=4
    $region2: #{amt_forward.8} parent=1 // loop_pre_header
      _
    $region3: #{amt_forward.8} parent=1 // loop_header
      %s12 = sphi 0, %s16
      %p13 = scmp.ge.s32.totalorder %s12, 4
      %s22 = sphi 0, %s24
      %s25 = sphi 0, %s22
      %s26 = sphi 0, %s25
      %s42 = sphi 0, %s26
      %s48 = sphi 0, %s50
      %s51 = sphi 0, %s48
      %s52 = sphi 0, %s51
      %s68 = sphi 0, %s52
      %s72 = sphi 0, %s72
      %s74 = sphi 0, %s72
      %s75 = sphi 0, %s74
      %s89 = sphi 0, %s75
      %s93 = sphi 0, %s93
      %s95 = sphi 0, %s93
      %s96 = sphi 0, %s95
      %s110 = sphi 0, %s96
      %s114 = sphi 0, %s114
      %s116 = sphi 0, %s114
      %s117 = sphi 0, %s116
      %s131 = sphi 0, %s117
      %s137 = sphi 0, %s139
      %s140 = sphi 0, %s137
      %s141 = sphi 0, %s140
      %s157 = sphi 0, %s141
    $region4: #{amt_forward.8} parent=1 // loop_header_branch
      %15 = sbr.rel (%p13) target = $region8
    $region5: #{amt_forward.8} parent=1 // loop_body
      %s17 = ssub.s32 %s12, 1
      %s18 = ssub.s32 %s12, 2
      %s19 = sadd.s32 %s12, 1
      %s20 = ssub.s32 %s12, %s19
      %p21 = scmp.eq.s32.totalorder %s20, 0
      %s23 = sadd.s32 %s22, 1
      %s24 = scalar_select %p21, %s22, %s23
      %p27 = pneg %p21
      %p28 = scmp.eq.s32.totalorder %s12, 1
      %p29 = por %p27, %p28
      %p30 = scmp.ne.s32.totalorder %s22, %s25
      %p31 = scmp.eq.s32.totalorder %s12, 0
      %p32 = por %p30, %p31
      %p33 = scmp.ne.s32.totalorder %s22, %s25
      %p34 = scmp.eq.s32.totalorder %s17, 1
      %p35 = por %p33, %p34
      %p36 = scmp.ne.s32.totalorder %s25, %s26
      %p37 = scmp.eq.s32.totalorder %s17, 0
      %p38 = por %p36, %p37
      %p39 = scmp.ne.s32.totalorder %s25, %s26
      %p40 = scmp.eq.s32.totalorder %s18, 1
      %p41 = por %p39, %p40
      %p43 = scmp.ne.s32.totalorder %s26, %s42
      %p44 = scmp.eq.s32.totalorder %s18, 0
      %p45 = por %p43, %p44
      %s46 = ssub.s32 %s12, %s19
      %p47 = scmp.eq.s32.totalorder %s46, 0
      %s49 = sadd.s32 %s48, 1
      %s50 = scalar_select %p47, %s48, %s49
      %p53 = pneg %p47
      %p54 = scmp.eq.s32.totalorder %s12, 1
      %p55 = por %p53, %p54
      %p56 = scmp.ne.s32.totalorder %s48, %s51
      %p57 = scmp.eq.s32.totalorder %s12, 0
      %p58 = por %p56, %p57
      %p59 = scmp.ne.s32.totalorder %s48, %s51
      %p60 = scmp.eq.s32.totalorder %s17, 1
      %p61 = por %p59, %p60
      %p62 = scmp.ne.s32.totalorder %s51, %s52
      %p63 = scmp.eq.s32.totalorder %s17, 0
      %p64 = por %p62, %p63
      %p65 = scmp.ne.s32.totalorder %s51, %s52
      %p66 = scmp.eq.s32.totalorder %s18, 1
      %p67 = por %p65, %p66
      %p69 = scmp.ne.s32.totalorder %s52, %s68
      %p70 = scmp.eq.s32.totalorder %s18, 0
      %p71 = por %p69, %p70
      %s73 = sadd.s32 %s72, 1
      %p76 = scmp.eq.s32.totalorder %s12, 1
      %p77 = scmp.ne.s32.totalorder %s72, %s74
      %p78 = scmp.eq.s32.totalorder %s12, 0
      %p79 = por %p77, %p78
      %p80 = scmp.ne.s32.totalorder %s72, %s74
      %p81 = scmp.eq.s32.totalorder %s17, 1
      %p82 = por %p80, %p81
      %p83 = scmp.ne.s32.totalorder %s74, %s75
      %p84 = scmp.eq.s32.totalorder %s17, 0
      %p85 = por %p83, %p84
      %p86 = scmp.ne.s32.totalorder %s74, %s75
      %p87 = scmp.eq.s32.totalorder %s18, 1
      %p88 = por %p86, %p87
      %p90 = scmp.ne.s32.totalorder %s75, %s89
      %p91 = scmp.eq.s32.totalorder %s18, 0
      %p92 = por %p90, %p91
      %s94 = sadd.s32 %s93, 1
      %p97 = scmp.eq.s32.totalorder %s12, 1
      %p98 = scmp.ne.s32.totalorder %s93, %s95
      %p99 = scmp.eq.s32.totalorder %s12, 0
      %p100 = por %p98, %p99
      %p101 = scmp.ne.s32.totalorder %s93, %s95
      %p102 = scmp.eq.s32.totalorder %s17, 1
      %p103 = por %p101, %p102
      %p104 = scmp.ne.s32.totalorder %s95, %s96
      %p105 = scmp.eq.s32.totalorder %s17, 0
      %p106 = por %p104, %p105
      %p107 = scmp.ne.s32.totalorder %s95, %s96
      %p108 = scmp.eq.s32.totalorder %s18, 1
      %p109 = por %p107, %p108
      %p111 = scmp.ne.s32.totalorder %s96, %s110
      %p112 = scmp.eq.s32.totalorder %s18, 0
      %p113 = por %p111, %p112
      %s115 = sadd.s32 %s114, 1
      %p118 = scmp.eq.s32.totalorder %s12, 1
      %p119 = scmp.ne.s32.totalorder %s114, %s116
      %p120 = scmp.eq.s32.totalorder %s12, 0
      %p121 = por %p119, %p120
      %p122 = scmp.ne.s32.totalorder %s114, %s116
      %p123 = scmp.eq.s32.totalorder %s17, 1
      %p124 = por %p122, %p123
      %p125 = scmp.ne.s32.totalorder %s116, %s117
      %p126 = scmp.eq.s32.totalorder %s17, 0
      %p127 = por %p125, %p126
      %p128 = scmp.ne.s32.totalorder %s116, %s117
      %p129 = scmp.eq.s32.totalorder %s18, 1
      %p130 = por %p128, %p129
      %p132 = scmp.ne.s32.totalorder %s117, %s131
      %p133 = scmp.eq.s32.totalorder %s18, 0
      %p134 = por %p132, %p133
      %s135 = ssub.s32 %s12, %s19
      %p136 = scmp.eq.s32.totalorder %s135, 0
      %s138 = sadd.s32 %s137, 1
      %s139 = scalar_select %p136, %s137, %s138
      %p142 = pneg %p136
      %p143 = scmp.eq.s32.totalorder %s12, 1
      %p144 = por %p142, %p143
      %p145 = scmp.ne.s32.totalorder %s137, %s140
      %p146 = scmp.eq.s32.totalorder %s12, 0
      %p147 = por %p145, %p146
      %p148 = scmp.ne.s32.totalorder %s137, %s140
      %p149 = scmp.eq.s32.totalorder %s17, 1
      %p150 = por %p148, %p149
      %p151 = scmp.ne.s32.totalorder %s140, %s141
      %p152 = scmp.eq.s32.totalorder %s17, 0
      %p153 = por %p151, %p152
      %p154 = scmp.ne.s32.totalorder %s140, %s141
      %p155 = scmp.eq.s32.totalorder %s18, 1
      %p156 = por %p154, %p155
      %p158 = scmp.ne.s32.totalorder %s141, %s157
      %p159 = scmp.eq.s32.totalorder %s18, 0
      %p160 = por %p158, %p159
      %p161 = scmp.le.s32.totalorder 1, %s12
      %p162 = scmp.lt.s32.totalorder %s12, 3
      %p163 = pnand %p161, %p162
      %p164 = pneg %p163
      // Predicated region
      $region9: #{amt_forward.8} parent=5 // pred_check
        _
      $region10: #{amt_forward.8} parent=5 // pred_check_branch
        %166 = sbr.rel (%p163) target = $region12
      $region11: #{amt_forward.8} parent=5 // pred_region
        %s167 = ssub.s32 %s12, 1
        // Predicated region
        $region13: #{amt_forward.8} parent=11 // pred_check
          %p168 = pneg %p85
        $region14: #{amt_forward.8} parent=11 // pred_check_branch
          %170 = sbr.rel (%p168) target = $region16
        $region15: #{amt_forward.8} parent=11 // pred_region
          _
        $region16: #{amt_forward.8} parent=11 // pred_fallthru
          _
        // Predicated region
        $region17: #{amt_forward.8} parent=11 // pred_check
          %p171 = pneg %p106
        $region18: #{amt_forward.8} parent=11 // pred_check_branch
          %173 = sbr.rel (%p171) target = $region20
        $region19: #{amt_forward.8} parent=11 // pred_region
          %175 = vsyncadd [#allocation3], 0
          %s177 = sshll.u32 %s3, 4
          %s178 = int_to_ptr.hbm [resolvable:$true] %s177
          %s179 = sshll.u32 [#allocation2], 4
          %s180 = int_to_ptr.vmem [resolvable:$true] %s179
          %182 = dma.hbm_to_vmem [thread:$0]  %s178, 16, %s180, [#allocation3]
        $region20: #{amt_forward.8} parent=11 // pred_fallthru
          _
        // Predicated region
        $region21: #{amt_forward.8} parent=11 // pred_check
          %p183 = pneg %p127
        $region22: #{amt_forward.8} parent=11 // pred_check_branch
          %185 = sbr.rel (%p183) target = $region24
        $region23: #{amt_forward.8} parent=11 // pred_region
          _
        $region24: #{amt_forward.8} parent=11 // pred_fallthru
          _
      $region12: #{amt_forward.8} parent=5 // pred_fallthru
        _
      %p186 = scmp.lt.s32.totalorder %s12, 2
      // Predicated region
      $region25: #{amt_forward.8} parent=5 // pred_check
        %p187 = pneg %p186
      $region26: #{amt_forward.8} parent=5 // pred_check_branch
        %189 = sbr.rel (%p187) target = $region28
      $region27: #{amt_forward.8} parent=5 // pred_region
        // Predicated region
        $region29: #{amt_forward.8} parent=27 // pred_check
          %p190 = pneg %p32
        $region30: #{amt_forward.8} parent=27 // pred_check_branch
          %192 = sbr.rel (%p190) target = $region32
        $region31: #{amt_forward.8} parent=27 // pred_region
          %p193 = scmp.lt.s32.totalorder %s12, 1
          %s194 = scalar_select %p193, %s12, 1
          %s195 = smul.addr %s194, 8
          %s196 = scalar_lea.vmem %s0, %s195
        $region32: #{amt_forward.8} parent=27 // pred_fallthru
          _
        // Predicated region
        $region33: #{amt_forward.8} parent=27 // pred_check
          %p197 = pneg %p58
        $region34: #{amt_forward.8} parent=27 // pred_check_branch
          %199 = sbr.rel (%p197) target = $region36
        $region35: #{amt_forward.8} parent=27 // pred_region
          %p200 = scmp.lt.s32.totalorder %s12, 1
          %s201 = scalar_select %p200, %s12, 1
          %s202 = smul.addr %s201, 8
          %s203 = scalar_lea.vmem %s1, %s202
        $region36: #{amt_forward.8} parent=27 // pred_fallthru
          _
      $region28: #{amt_forward.8} parent=5 // pred_fallthru
        _
      %p204 = scmp.le.s32.totalorder 1, %s12
      %p205 = scmp.lt.s32.totalorder %s12, 3
      %p206 = pnand %p204, %p205
      %p207 = pneg %p206
      // Predicated region
      $region37: #{amt_forward.8} parent=5 // pred_check
        _
      $region38: #{amt_forward.8} parent=5 // pred_check_branch
        %209 = sbr.rel (%p206) target = $region40
      $region39: #{amt_forward.8} parent=5 // pred_region
        %s210 = ssub.s32 %s12, 1
        // Predicated region
        $region41: #{amt_forward.8} parent=39 // pred_check
          %p211 = pneg %p106
        $region42: #{amt_forward.8} parent=39 // pred_check_branch
          %213 = sbr.rel (%p211) target = $region44
        $region43: #{amt_forward.8} parent=39 // pred_region
          %215 = dma.done [#allocation3], 16
        $region44: #{amt_forward.8} parent=39 // pred_fallthru
          _
        %p216 = scmp.lt.s32.totalorder %s17, 1
        %s217 = scalar_select %p216, %s17, 1
        %s218 = smul.addr %s217, 8
        %s219 = scalar_lea.vmem %s0, %s218
        %p220 = pneg %p38
        %p221 = pneg %p35
        %p222 = scmp.lt.s32.totalorder %s17, 1
        %s223 = scalar_select %p222, %s17, 1
        %s224 = smul.addr %s223, 8
        %s225 = scalar_lea.vmem %s1, %s224
        %p226 = pneg %p64
        %p227 = pneg %p61
        %p228 = pneg %p85
        %p229 = pneg %p82
        %p230 = pneg %p106
        %p231 = pneg %p103
        %p232 = pneg %p127
        %p233 = pneg %p124
        %p234 = pneg %p153
        %p235 = pneg %p150
        %p236 = scmp.lt.s32.totalorder %s17, 1
        %s237 = scalar_select %p236, %s17, 1
        %s238 = smul.addr %s237, 2
        %s239 = smul.addr %s238, 4
        %s240 = scalar_lea.vmem %s5, %s239
        %p241 = scmp.lt.s32.totalorder %s17, 1
        %s242 = scalar_select %p241, %s17, 1
        %s243 = smul.addr %s242, 8
        %s244 = scalar_lea.vmem %s0, %s243
        %p245 = scmp.lt.s32.totalorder %s17, 1
        %s246 = scalar_select %p245, %s17, 1
        %s247 = smul.addr %s246, 8
        %s248 = scalar_lea.vmem %s1, %s247
        %p249 = scmp.lt.s32.totalorder %s17, 1
        %s250 = scalar_select %p249, %s17, 1
        %s251 = smul.addr %s250, 2
        %s252 = smul.addr %s251, 4
        %s253 = scalar_lea.vmem %s5, %s252
        %v255 = vld [vmem:[%s244] sm:$0xff]
        %v256 = vpack.c.bf16 %v255, %v255
        %v257 = vld [vmem:[%s2] sm:$0xf]
        %v258 = vld [vmem:[%s2 + $0x4] sm:$0xf]
        %v259 = vld [vmem:[%s2 + $0x8] sm:$0xf]
        %v260 = vld [vmem:[%s2 + $0xc] sm:$0xf]
        %v261 = vld [vmem:[#allocation2] sm:$0x1]
        %v262 = vunpack.c.l.bf16 %v261
        %v263 = vperm.slane %v262, 0
        %v268 = vunpack.c.l.b16 %v257
        %v269 = vunpack.c.l.b16 %v258
        %v270 = vunpack.c.l.b16 %v259
        %v271 = vunpack.c.l.b16 %v260
        %v272 = vpack.c.b16 %v269, %v268
        %v273 = vpack.c.b16 %v271, %v270
        %vm276 = vcmask 261120
        %v278 = vsel %vm276, %v256, 0
        %280 = vmatpush.bf16.msra.mxu0 0
        %281 = vmatpush.bf16.msra.mxu0 0
        %282 = vmatpush.bf16.msra.mxu0 0
        %283 = vmatpush.bf16.msra.mxu0 0
        %284 = vmatpush.bf16.msra.mxu0 0
        %285 = vmatpush.bf16.msra.mxu0 0
        %286 = vmatpush.bf16.msra.mxu0 %v273
        %287 = vmatpush.bf16.msra.mxu0 %v272
        %288 = vmatmul.bf16.gmra.mxu0 %v278
        %v289 = vpop.f32.mrf.mxu0
        %v290 = vadd.f32 %v263, %v289
        %v291 = vpop.f32.mrf.mxu0
        %292 = vdwg.mxu0
        %v293 = vld [vmem:[%s4] sm:$0xf]
        %v294 = vld [vmem:[%s4 + $0x4] sm:$0xf]
        %v295 = vunpack.c.l.bf16 %v293
        %v296 = vunpack.c.l.bf16 %v294
        %v297 = vadd.f32 %v290, %v295
        %v298 = vld [vmem:[%s248] sm:$0xff]
        %v299 = vadd.f32 %v298, %v296
        %v300 = vpack.c.bf16 %v297, %v297
        %v301 = vpack.c.bf16 %v299, %v299
        %vm302 = vcmask 519168
        %303 = vst.msk [vmem:[%s253] sm:$0xf] %vm302, %v300
        %304 = vst.msk [vmem:[%s253 + $0x4] sm:$0xf] %vm302, %v301
        %p305 = scmp.lt.s32.totalorder %s17, 1
        %s306 = scalar_select %p305, %s17, 1
        %s307 = smul.addr %s306, 2
        %s308 = smul.addr %s307, 4
        %s309 = scalar_lea.vmem %s5, %s308
        // Predicated region
        $region45: #{amt_forward.8} parent=39 // pred_check
          %p310 = pneg %p150
        $region46: #{amt_forward.8} parent=39 // pred_check_branch
          %312 = sbr.rel (%p310) target = $region48
        $region47: #{amt_forward.8} parent=39 // pred_region
          _
        $region48: #{amt_forward.8} parent=39 // pred_fallthru
          _
      $region40: #{amt_forward.8} parent=5 // pred_fallthru
        _
      %p313 = scmp.le.s32.totalorder 2, %s12
      // Predicated region
      $region49: #{amt_forward.8} parent=5 // pred_check
        %p314 = pneg %p313
      $region50: #{amt_forward.8} parent=5 // pred_check_branch
        %316 = sbr.rel (%p314) target = $region52
      $region51: #{amt_forward.8} parent=5 // pred_region
        %s317 = ssub.s32 %s12, 2
        // Predicated region
        $region53: #{amt_forward.8} parent=51 // pred_check
          %p318 = pneg %p156
        $region54: #{amt_forward.8} parent=51 // pred_check_branch
          %320 = sbr.rel (%p318) target = $region56
        $region55: #{amt_forward.8} parent=51 // pred_region
          %p321 = scmp.lt.s32.totalorder %s18, 1
          %s322 = scalar_select %p321, %s18, 1
          %s323 = smul.addr %s322, 2
          %s324 = smul.addr %s323, 4
          %s325 = scalar_lea.vmem %s5, %s324
        $region56: #{amt_forward.8} parent=51 // pred_fallthru
          _
      $region52: #{amt_forward.8} parent=5 // pred_fallthru
        _
    $region6: #{amt_forward.8} parent=1 // loop_footer
      %s16 = sadd.s32 1, %s12
    $region7: #{amt_forward.8} parent=1 // loop_footer_branch
      %11 = sbr.rel target = $region3
    $region8: #{amt_forward.8} parent=1 // loop_exit
      _
    %326 = vsyncpa [#allocation3], 1
    %s327 = scalar_lea.sflag [#allocation3], 1
    %328 = vsyncpa %s327, 1

// kernel: amt_forward.15
$region0: #{amt_forward.15}
  #allocation0 [shape = 'u32[]', space=smem, size = 0x4, offset = 0x4, fixed_abs, tag = 'smem constant byte address 0x4 - core index']
  #allocation1 [shape = 'u32[72,128]{1,0:T(1,128)}', space=vmem, size = 0x9000, scoped, tag = 'internal scratch']
  %s0 = inlined_call_operand.vmem [shape: bf16[32,64], index: 0, kind: input, shape index: {}]
  %s1 = inlined_call_operand.vmem [shape: bf16[1,64], index: 1, kind: input, shape index: {}]
  %s2 = inlined_call_operand.vmem [shape: bf16[1,64], index: 2, kind: input, shape index: {}]
  %s3 = inlined_call_operand.vmem [shape: bf16[64,512], index: 3, kind: input, shape index: {}]
  %s4 = inlined_call_operand.hbm [shape: f32[32,512], index: 4, kind: output, shape index: {}]
  %s5 = sld [smem:[#allocation0]]
  $region26: #{amt_forward.15} parent=0
    _
  %s7 = ssub.s32 1, %s5
  %s8 = scalar_select 0, %s7, %s5
  $region1: #{amt_forward.15} parent=0
    #allocation2 [shape = 'u8[65536]{0}', space=vmem, size = 0x10000, scoped, tag = 'output window, operand 0, single buffered']
    #allocation3 [shape = 's32[1]{0}', space=sflag, size = 0x4, scoped, tag = 'scoped memory for amt_forward.15']
    %9 = vsyncpa [#allocation3], 0
    // Predicated region
    $region2: #{amt_forward.15} parent=1 // pred_check
      _
    $region3: #{amt_forward.15} parent=1 // pred_check_branch
      %11 = sbr.rel (0) target = $region5
    $region4: #{amt_forward.15} parent=1 // pred_region
      _
    $region5: #{amt_forward.15} parent=1 // pred_fallthru
      _
    // Predicated region
    $region6: #{amt_forward.15} parent=1 // pred_check
      _
    $region7: #{amt_forward.15} parent=1 // pred_check_branch
      %13 = sbr.rel (0) target = $region9
    $region8: #{amt_forward.15} parent=1 // pred_region
      _
    $region9: #{amt_forward.15} parent=1 // pred_fallthru
      _
    // Predicated region
    $region10: #{amt_forward.15} parent=1 // pred_check
      _
    $region11: #{amt_forward.15} parent=1 // pred_check_branch
      %15 = sbr.rel (0) target = $region13
    $region12: #{amt_forward.15} parent=1 // pred_region
      _
    $region13: #{amt_forward.15} parent=1 // pred_fallthru
      _
    // Predicated region
    $region14: #{amt_forward.15} parent=1 // pred_check
      _
    $region15: #{amt_forward.15} parent=1 // pred_check_branch
      %17 = sbr.rel (0) target = $region17
    $region16: #{amt_forward.15} parent=1 // pred_region
      _
    $region17: #{amt_forward.15} parent=1 // pred_fallthru
      _
    %v19 = vld [vmem:[%s0] sm:$0xf]
    %v20 = vld [vmem:[%s0 + $0x4] sm:$0xf]
    %v21 = vld [vmem:[%s0 + $0x8] sm:$0xf]
    %v22 = vld [vmem:[%s0 + $0xc] sm:$0xf]
    %v23 = vunpack.c.l.bf16 %v19
    %v24 = vunpack.c.l.bf16 %v20
    %v25 = vunpack.c.l.bf16 %v21
    %v26 = vunpack.c.l.bf16 %v22
    %vm27 = vcmask 523264
    %v28 = vsel %vm27, %v23, 0.0
    %29 = vadd.xlane.f32.xlu0 %v28
    %v30 = vpop.xlane.xlu0 %29
    %v31 = vsel %vm27, %v24, 0.0
    %32 = vadd.xlane.f32.xlu0 %v31
    %v33 = vpop.xlane.xlu0 %32
    %v34 = vsel %vm27, %v25, 0.0
    %35 = vadd.xlane.f32.xlu0 %v34
    %v36 = vpop.xlane.xlu0 %35
    %v37 = vsel %vm27, %v26, 0.0
    %38 = vadd.xlane.f32.xlu0 %v37
    %v39 = vpop.xlane.xlu0 %38
    %v40 = vrcp.pop 64.0
    %v41 = vmul.f32 64.0, %v40
    %v42 = vsub.f32 1.0, %v41
    %v43 = vmul.f32 %v40, %v42
    %v44 = vadd.f32 %v40, %v43
    %vm45 = vweird.f32 %v40
    %v46 = vsel %vm45, %v40, %v44
    %v47 = vmul.f32 %v30, %v46
    %v48 = vmul.f32 %v33, %v46
    %v49 = vmul.f32 %v36, %v46
    %v50 = vmul.f32 %v39, %v46
    %v51 = vsub.f32 %v23, %v47
    %v52 = vsub.f32 %v24, %v48
    %v53 = vsub.f32 %v25, %v49
    %v54 = vsub.f32 %v26, %v50
    %v55 = vmul.f32 %v51, %v51
    %v56 = vmul.f32 %v52, %v52
    %v57 = vmul.f32 %v53, %v53
    %v58 = vmul.f32 %v54, %v54
    %v59 = vsel %vm27, %v55, 0.0
    %60 = vadd.xlane.f32.xlu0 %v59
    %v61 = vpop.xlane.xlu0 %60
    %v62 = vsel %vm27, %v56, 0.0
    %63 = vadd.xlane.f32.xlu0 %v62
    %v64 = vpop.xlane.xlu0 %63
    %v65 = vsel %vm27, %v57, 0.0
    %66 = vadd.xlane.f32.xlu0 %v65
    %v67 = vpop.xlane.xlu0 %66
    %v68 = vsel %vm27, %v58, 0.0
    %69 = vadd.xlane.f32.xlu0 %v68
    %v70 = vpop.xlane.xlu0 %69
    %v71 = vmul.f32 %v61, %v46
    %v72 = vmul.f32 %v64, %v46
    %v73 = vmul.f32 %v67, %v46
    %v74 = vmul.f32 %v70, %v46
    %v75 = vadd.f32 %v71, 1e-05
    %v76 = vadd.f32 %v72, 1e-05
    %v77 = vadd.f32 %v73, 1e-05
    %v78 = vadd.f32 %v74, 1e-05
    %v79 = vrsqrt.pop %v75
    %v80 = vmul.f32 %v79, %v75
    %v81 = vmul.f32 %v80, %v79
    %v82 = vmul.f32 0.5, %v81
    %v83 = vsub.f32 1.5, %v82
    %v84 = vmul.f32 %v79, %v83
    %vm85 = vweird.f32 %v75
    %vm86 = vweird.f32 %v79
    %vm87 = vmor %vm85, %vm86
    %v88 = vsel %vm87, %v79, %v84
    %v89 = vrsqrt.pop %v76
    %v90 = vmul.f32 %v89, %v76
    %v91 = vmul.f32 %v90, %v89
    %v92 = vmul.f32 0.5, %v91
    %v93 = vsub.f32 1.5, %v92
    %v94 = vmul.f32 %v89, %v93
    %vm95 = vweird.f32 %v76
    %vm96 = vweird.f32 %v89
    %vm97 = vmor %vm95, %vm96
    %v98 = vsel %vm97, %v89, %v94
    %v99 = vrsqrt.pop %v77
    %v100 = vmul.f32 %v99, %v77
    %v101 = vmul.f32 %v100, %v99
    %v102 = vmul.f32 0.5, %v101
    %v103 = vsub.f32 1.5, %v102
    %v104 = vmul.f32 %v99, %v103
    %vm105 = vweird.f32 %v77
    %vm106 = vweird.f32 %v99
    %vm107 = vmor %vm105, %vm106
    %v108 = vsel %vm107, %v99, %v104
    %v109 = vrsqrt.pop %v78
    %v110 = vmul.f32 %v109, %v78
    %v111 = vmul.f32 %v110, %v109
    %v112 = vmul.f32 0.5, %v111
    %v113 = vsub.f32 1.5, %v112
    %v114 = vmul.f32 %v109, %v113
    %vm115 = vweird.f32 %v78
    %vm116 = vweird.f32 %v109
    %vm117 = vmor %vm115, %vm116
    %v118 = vsel %vm117, %v109, %v114
    %v119 = vmul.f32 %v51, %v88
    %v120 = vmul.f32 %v52, %v98
    %v121 = vmul.f32 %v53, %v108
    %v122 = vmul.f32 %v54, %v118
    %v123 = vld [vmem:[%s1] sm:$0x1]
    %v124 = vunpack.c.l.bf16 %v123
    %v125 = vperm.slane %v124, 0
    %v126 = vmul.f32 %v119, %v125
    %v127 = vmul.f32 %v120, %v125
    %v128 = vmul.f32 %v121, %v125
    %v129 = vmul.f32 %v122, %v125
    %v130 = vld [vmem:[%s2] sm:$0x1]
    %v131 = vunpack.c.l.bf16 %v130
    %v132 = vperm.slane %v131, 0
    %v133 = vadd.f32 %v126, %v132
    %v134 = vadd.f32 %v127, %v132
    %v135 = vadd.f32 %v128, %v132
    %v136 = vadd.f32 %v129, %v132
    %v137 = vpack.c.bf16 %v134, %v133
    %v138 = vpack.c.bf16 %v136, %v135
    %v139 = vld [vmem:[%s3] sm:$0xff]
    %v140 = vld [vmem:[%s3 + $0x8] sm:$0xff]
    %v141 = vld [vmem:[%s3 + $0x10] sm:$0xff]
    %v142 = vld [vmem:[%s3 + $0x18] sm:$0xff]
    %v143 = vld [vmem:[%s3 + $0x20] sm:$0xff]
    %v144 = vld [vmem:[%s3 + $0x28] sm:$0xff]
    %v145 = vld [vmem:[%s3 + $0x30] sm:$0xff]
    %v146 = vld [vmem:[%s3 + $0x38] sm:$0xff]
    %v147 = vld [vmem:[%s3 + $0x40] sm:$0xff]
    %v148 = vld [vmem:[%s3 + $0x48] sm:$0xff]
    %v149 = vld [vmem:[%s3 + $0x50] sm:$0xff]
    %v150 = vld [vmem:[%s3 + $0x58] sm:$0xff]
    %v151 = vld [vmem:[%s3 + $0x60] sm:$0xff]
    %v152 = vld [vmem:[%s3 + $0x68] sm:$0xff]
    %v153 = vld [vmem:[%s3 + $0x70] sm:$0xff]
    %v154 = vld [vmem:[%s3 + $0x78] sm:$0xff]
    %v171 = vunpack.c.l.b16 %v139
    %v172 = vunpack.c.h.b16 %v139
    %v173 = vunpack.c.l.b16 %v140
    %v174 = vunpack.c.h.b16 %v140
    %v175 = vunpack.c.l.b16 %v141
    %v176 = vunpack.c.h.b16 %v141
    %v177 = vunpack.c.l.b16 %v142
    %v178 = vunpack.c.h.b16 %v142
    %v179 = vunpack.c.l.b16 %v143
    %v180 = vunpack.c.h.b16 %v143
    %v181 = vunpack.c.l.b16 %v144
    %v182 = vunpack.c.h.b16 %v144
    %v183 = vunpack.c.l.b16 %v145
    %v184 = vunpack.c.h.b16 %v145
    %v185 = vunpack.c.l.b16 %v146
    %v186 = vunpack.c.h.b16 %v146
    %v187 = vunpack.c.l.b16 %v147
    %v188 = vunpack.c.h.b16 %v147
    %v189 = vunpack.c.l.b16 %v148
    %v190 = vunpack.c.h.b16 %v148
    %v191 = vunpack.c.l.b16 %v149
    %v192 = vunpack.c.h.b16 %v149
    %v193 = vunpack.c.l.b16 %v150
    %v194 = vunpack.c.h.b16 %v150
    %v195 = vunpack.c.l.b16 %v151
    %v196 = vunpack.c.h.b16 %v151
    %v197 = vunpack.c.l.b16 %v152
    %v198 = vunpack.c.h.b16 %v152
    %v199 = vunpack.c.l.b16 %v153
    %v200 = vunpack.c.h.b16 %v153
    %v201 = vunpack.c.l.b16 %v154
    %v202 = vunpack.c.h.b16 %v154
    %v203 = vpack.c.b16 %v175, %v171
    %v204 = vpack.c.b16 %v176, %v172
    %v205 = vpack.c.b16 %v177, %v173
    %v206 = vpack.c.b16 %v178, %v174
    %v207 = vpack.c.b16 %v183, %v179
    %v208 = vpack.c.b16 %v184, %v180
    %v209 = vpack.c.b16 %v185, %v181
    %v210 = vpack.c.b16 %v186, %v182
    %v211 = vpack.c.b16 %v191, %v187
    %v212 = vpack.c.b16 %v192, %v188
    %v213 = vpack.c.b16 %v193, %v189
    %v214 = vpack.c.b16 %v194, %v190
    %v215 = vpack.c.b16 %v199, %v195
    %v216 = vpack.c.b16 %v200, %v196
    %v217 = vpack.c.b16 %v201, %v197
    %v218 = vpack.c.b16 %v202, %v198
    %v236 = vsel %vm27, %v137, 0
    %v239 = vsel %vm27, %v138, 0
    %241 = vmatpush.bf16.msra.mxu0 0
    %242 = vmatpush.bf16.msra.mxu0 0
    %243 = vmatpush.bf16.msra.mxu0 0
    %244 = vmatpush.bf16.msra.mxu0 0
    %245 = vmatpush.bf16.msra.mxu0 %v215
    %246 = vmatpush.bf16.msra.mxu0 %v211
    %247 = vmatpush.bf16.msra.mxu0 %v207
    %248 = vmatpush.bf16.msra.mxu0 %v203
    %249 = vmatmul.bf16.gmra.mxu0 %v236
    %v250 = vpop.f32.mrf.mxu0
    %v251 = vadd.f32 0.0, %v250
    %v252 = vpop.f32.mrf.mxu0
    %v253 = vadd.f32 0.0, %v252
    %254 = vmatmul.bf16.gmra.mxu0 %v239
    %v255 = vpop.f32.mrf.mxu0
    %v256 = vadd.f32 0.0, %v255
    %v257 = vpop.f32.mrf.mxu0
    %v258 = vadd.f32 0.0, %v257
    %259 = vdwg.mxu0
    %260 = vmatpush.bf16.msra.mxu0 0
    %261 = vmatpush.bf16.msra.mxu0 0
    %262 = vmatpush.bf16.msra.mxu0 0
    %263 = vmatpush.bf16.msra.mxu0 0
    %264 = vmatpush.bf16.msra.mxu0 %v216
    %265 = vmatpush.bf16.msra.mxu0 %v212
    %266 = vmatpush.bf16.msra.mxu0 %v208
    %267 = vmatpush.bf16.msra.mxu0 %v204
    %268 = vmatmul.bf16.gmra.mxu0 %v236
    %v269 = vpop.f32.mrf.mxu0
    %v270 = vadd.f32 0.0, %v269
    %v271 = vpop.f32.mrf.mxu0
    %v272 = vadd.f32 0.0, %v271
    %273 = vmatmul.bf16.gmra.mxu0 %v239
    %v274 = vpop.f32.mrf.mxu0
    %v275 = vadd.f32 0.0, %v274
    %v276 = vpop.f32.mrf.mxu0
    %v277 = vadd.f32 0.0, %v276
    %278 = vdwg.mxu0
    %279 = vmatpush.bf16.msra.mxu0 0
    %280 = vmatpush.bf16.msra.mxu0 0
    %281 = vmatpush.bf16.msra.mxu0 0
    %282 = vmatpush.bf16.msra.mxu0 0
    %283 = vmatpush.bf16.msra.mxu0 %v217
    %284 = vmatpush.bf16.msra.mxu0 %v213
    %285 = vmatpush.bf16.msra.mxu0 %v209
    %286 = vmatpush.bf16.msra.mxu0 %v205
    %287 = vmatmul.bf16.gmra.mxu0 %v236
    %v288 = vpop.f32.mrf.mxu0
    %v289 = vadd.f32 0.0, %v288
    %v290 = vpop.f32.mrf.mxu0
    %v291 = vadd.f32 0.0, %v290
    %292 = vmatmul.bf16.gmra.mxu0 %v239
    %v293 = vpop.f32.mrf.mxu0
    %v294 = vadd.f32 0.0, %v293
    %v295 = vpop.f32.mrf.mxu0
    %v296 = vadd.f32 0.0, %v295
    %297 = vdwg.mxu0
    %298 = vmatpush.bf16.msra.mxu0 0
    %299 = vmatpush.bf16.msra.mxu0 0
    %300 = vmatpush.bf16.msra.mxu0 0
    %301 = vmatpush.bf16.msra.mxu0 0
    %302 = vmatpush.bf16.msra.mxu0 %v218
    %303 = vmatpush.bf16.msra.mxu0 %v214
    %304 = vmatpush.bf16.msra.mxu0 %v210
    %305 = vmatpush.bf16.msra.mxu0 %v206
    %306 = vmatmul.bf16.gmra.mxu0 %v236
    %v307 = vpop.f32.mrf.mxu0
    %v308 = vadd.f32 0.0, %v307
    %v309 = vpop.f32.mrf.mxu0
    %v310 = vadd.f32 0.0, %v309
    %311 = vmatmul.bf16.gmra.mxu0 %v239
    %v312 = vpop.f32.mrf.mxu0
    %v313 = vadd.f32 0.0, %v312
    %v314 = vpop.f32.mrf.mxu0
    %v315 = vadd.f32 0.0, %v314
    %316 = vdwg.mxu0
    %317 = vst [vmem:[#allocation2] sm:$0xff] %v251
    %318 = vst [vmem:[#allocation2 + $0x8] sm:$0xff] %v270
    %319 = vst [vmem:[#allocation2 + $0x10] sm:$0xff] %v289
    %320 = vst [vmem:[#allocation2 + $0x18] sm:$0xff] %v308
    %321 = vst [vmem:[#allocation2 + $0x20] sm:$0xff] %v253
    %322 = vst [vmem:[#allocation2 + $0x28] sm:$0xff] %v272
    %323 = vst [vmem:[#allocation2 + $0x30] sm:$0xff] %v291
    %324 = vst [vmem:[#allocation2 + $0x38] sm:$0xff] %v310
    %325 = vst [vmem:[#allocation2 + $0x40] sm:$0xff] %v256
    %326 = vst [vmem:[#allocation2 + $0x48] sm:$0xff] %v275
    %327 = vst [vmem:[#allocation2 + $0x50] sm:$0xff] %v294
    %328 = vst [vmem:[#allocation2 + $0x58] sm:$0xff] %v313
    %329 = vst [vmem:[#allocation2 + $0x60] sm:$0xff] %v258
    %330 = vst [vmem:[#allocation2 + $0x68] sm:$0xff] %v277
    %331 = vst [vmem:[#allocation2 + $0x70] sm:$0xff] %v296
    %332 = vst [vmem:[#allocation2 + $0x78] sm:$0xff] %v315
    // Predicated region
    $region18: #{amt_forward.15} parent=1 // pred_check
      _
    $region19: #{amt_forward.15} parent=1 // pred_check_branch
      %334 = sbr.rel (0) target = $region21
    $region20: #{amt_forward.15} parent=1 // pred_region
      %336 = vsyncadd [#allocation3], 0
      %s337 = sshll.u32 [#allocation2], 4
      %s338 = int_to_ptr.vmem [resolvable:$true] %s337
      %s339 = sshll.u32 %s4, 4
      %s340 = int_to_ptr.hbm [resolvable:$true] %s339
      %345 = dma.vmem_to_hbm [thread:$0]  %s338, 2048, %s340, [#allocation3], 512, 512, 32
    $region21: #{amt_forward.15} parent=1 // pred_fallthru
      _
    // Predicated region
    $region22: #{amt_forward.15} parent=1 // pred_check
      _
    $region23: #{amt_forward.15} parent=1 // pred_check_branch
      %347 = sbr.rel (0) target = $region25
    $region24: #{amt_forward.15} parent=1 // pred_region
      %349 = dma.done [#allocation3], 2048
    $region25: #{amt_forward.15} parent=1 // pred_fallthru
      _
    %350 = vsyncpa [#allocation3], 1

// kernel: amt_forward.14
$region0: #{amt_forward.14}
  #allocation0 [shape = 'u32[]', space=smem, size = 0x4, offset = 0x4, fixed_abs, tag = 'smem constant byte address 0x4 - core index']
  #allocation1 [shape = 'u32[72,128]{1,0:T(1,128)}', space=vmem, size = 0x9000, scoped, tag = 'internal scratch']
  %s0 = inlined_call_operand.vmem [shape: bf16[2,16,64], index: 0, kind: input, shape index: {}]
  %s1 = inlined_call_operand.hbm [shape: bf16[1,64], index: 1, kind: input, shape index: {}]
  %s2 = inlined_call_operand.hbm [shape: bf16[1,64], index: 2, kind: input, shape index: {}]
  %s3 = inlined_call_operand.vmem [shape: bf16[64,192], index: 3, kind: input, shape index: {}]
  %s4 = inlined_call_operand.hbm [shape: bf16[1,192], index: 4, kind: input, shape index: {}]
  %s5 = inlined_call_operand.hbm [shape: bf16[64,64], index: 5, kind: input, shape index: {}]
  %s6 = inlined_call_operand.hbm [shape: bf16[1,64], index: 6, kind: input, shape index: {}]
  %s7 = inlined_call_operand.hbm [shape: bf16[1,64], index: 7, kind: input, shape index: {}]
  %s8 = inlined_call_operand.hbm [shape: bf16[1,64], index: 8, kind: input, shape index: {}]
  %s9 = inlined_call_operand.hbm [shape: bf16[64,256], index: 9, kind: input, shape index: {}]
  %s10 = inlined_call_operand.hbm [shape: bf16[1,256], index: 10, kind: input, shape index: {}]
  %s11 = inlined_call_operand.vmem [shape: bf16[256,64], index: 11, kind: input, shape index: {}]
  %s12 = inlined_call_operand.hbm [shape: bf16[1,64], index: 12, kind: input, shape index: {}]
  %s13 = inlined_call_operand.vmem [shape: bf16[2,16,64], index: 13, kind: output, shape index: {}]
  %s14 = sld [smem:[#allocation0]]
  $region125: #{amt_forward.14} parent=0
    _
  %s16 = ssub.s32 1, %s14
  %s17 = scalar_select 0, %s16, %s14
  $region1: #{amt_forward.14} parent=0
    #allocation2 [shape = 'u8[512]{0}', space=vmem, size = 0x400, scoped, tag = 'input window, operand 1, single buffered']
    #allocation3 [shape = 's32[2]{0}', space=sflag, size = 0x8, scoped, tag = 'scoped memory for amt_forward.14']
    #allocation4 [shape = 'u8[512]{0}', space=vmem, size = 0x400, scoped, tag = 'input window, operand 2, single buffered']
    #allocation5 [shape = 's32[1]{0}', space=sflag, size = 0x4, scoped, tag = 'scoped memory for amt_forward.14']
    #allocation6 [shape = 'u8[1024]{0}', space=vmem, size = 0x400, scoped, tag = 'input window, operand 4, single buffered']
    #allocation7 [shape = 'u8[16384]{0}', space=vmem, size = 0x4000, scoped, tag = 'input window, operand 5, single buffered']
    #allocation8 [shape = 's32[1]{0}', space=sflag, size = 0x4, scoped, tag = 'scoped memory for amt_forward.14']
    #allocation9 [shape = 'u8[512]{0}', space=vmem, size = 0x400, scoped, tag = 'input window, operand 6, single buffered']
    #allocation10 [shape = 'u8[512]{0}', space=vmem, size = 0x400, scoped, tag = 'input window, operand 7, single buffered']
    #allocation11 [shape = 's32[1]{0}', space=sflag, size = 0x4, scoped, tag = 'scoped memory for amt_forward.14']
    #allocation12 [shape = 'u8[512]{0}', space=vmem, size = 0x400, scoped, tag = 'input window, operand 8, single buffered']
    #allocation13 [shape = 'u8[32768]{0}', space=vmem, size = 0x8000, scoped, tag = 'input window, operand 9, single buffered']
    #allocation14 [shape = 's32[1]{0}', space=sflag, size = 0x4, scoped, tag = 'scoped memory for amt_forward.14']
    #allocation15 [shape = 'u8[1024]{0}', space=vmem, size = 0x400, scoped, tag = 'input window, operand 10, single buffered']
    #allocation16 [shape = 'u8[512]{0}', space=vmem, size = 0x400, scoped, tag = 'input window, operand 12, single buffered']
    #allocation17 [shape = 's32[1]{0}', space=sflag, size = 0x4, scoped, tag = 'scoped memory for amt_forward.14']
    %18 = vsyncpa [#allocation3], 0
    %19 = vsyncpa [#allocation5], 0
    %20 = vsyncpa [#allocation8], 0
    %21 = vsyncpa [#allocation11], 0
    %22 = vsyncpa [#allocation14], 0
    %23 = vsyncpa [#allocation17], 0
    loop: start=0, step=1, limit=4
    $region2: #{amt_forward.14} parent=1 // loop_pre_header
      _
    $region3: #{amt_forward.14} parent=1 // loop_header
      %s25 = sphi 0, %s29
      %p26 = scmp.ge.s32.totalorder %s25, 4
      %s35 = sphi 0, %s37
      %s38 = sphi 0, %s35
      %s39 = sphi 0, %s38
      %s55 = sphi 0, %s39
      %s59 = sphi 0, %s59
      %s61 = sphi 0, %s59
      %s62 = sphi 0, %s61
      %s76 = sphi 0, %s62
      %s80 = sphi 0, %s80
      %s82 = sphi 0, %s80
      %s83 = sphi 0, %s82
      %s97 = sphi 0, %s83
      %s101 = sphi 0, %s101
      %s103 = sphi 0, %s101
      %s104 = sphi 0, %s103
      %s118 = sphi 0, %s104
      %s122 = sphi 0, %s122
      %s124 = sphi 0, %s122
      %s125 = sphi 0, %s124
      %s139 = sphi 0, %s125
      %s143 = sphi 0, %s143
      %s145 = sphi 0, %s143
      %s146 = sphi 0, %s145
      %s160 = sphi 0, %s146
      %s164 = sphi 0, %s164
      %s166 = sphi 0, %s164
      %s167 = sphi 0, %s166
      %s181 = sphi 0, %s167
      %s185 = sphi 0, %s185
      %s187 = sphi 0, %s185
      %s188 = sphi 0, %s187
      %s202 = sphi 0, %s188
      %s206 = sphi 0, %s206
      %s208 = sphi 0, %s206
      %s209 = sphi 0, %s208
      %s223 = sphi 0, %s209
      %s227 = sphi 0, %s227
      %s229 = sphi 0, %s227
      %s230 = sphi 0, %s229
      %s244 = sphi 0, %s230
      %s248 = sphi 0, %s248
      %s250 = sphi 0, %s248
      %s251 = sphi 0, %s250
      %s265 = sphi 0, %s251
      %s269 = sphi 0, %s269
      %s271 = sphi 0, %s269
      %s272 = sphi 0, %s271
      %s286 = sphi 0, %s272
      %s290 = sphi 0, %s290
      %s292 = sphi 0, %s290
      %s293 = sphi 0, %s292
      %s307 = sphi 0, %s293
      %s313 = sphi 0, %s315
      %s316 = sphi 0, %s313
      %s317 = sphi 0, %s316
      %s333 = sphi 0, %s317
    $region4: #{amt_forward.14} parent=1 // loop_header_branch
      %28 = sbr.rel (%p26) target = $region8
    $region5: #{amt_forward.14} parent=1 // loop_body
      %s30 = ssub.s32 %s25, 1
      %s31 = ssub.s32 %s25, 2
      %s32 = sadd.s32 %s25, 1
      %s33 = ssub.s32 %s25, %s32
      %p34 = scmp.eq.s32.totalorder %s33, 0
      %s36 = sadd.s32 %s35, 1
      %s37 = scalar_select %p34, %s35, %s36
      %p40 = pneg %p34
      %p41 = scmp.eq.s32.totalorder %s25, 1
      %p42 = por %p40, %p41
      %p43 = scmp.ne.s32.totalorder %s35, %s38
      %p44 = scmp.eq.s32.totalorder %s25, 0
      %p45 = por %p43, %p44
      %p46 = scmp.ne.s32.totalorder %s35, %s38
      %p47 = scmp.eq.s32.totalorder %s30, 1
      %p48 = por %p46, %p47
      %p49 = scmp.ne.s32.totalorder %s38, %s39
      %p50 = scmp.eq.s32.totalorder %s30, 0
      %p51 = por %p49, %p50
      %p52 = scmp.ne.s32.totalorder %s38, %s39
      %p53 = scmp.eq.s32.totalorder %s31, 1
      %p54 = por %p52, %p53
      %p56 = scmp.ne.s32.totalorder %s39, %s55
      %p57 = scmp.eq.s32.totalorder %s31, 0
      %p58 = por %p56, %p57
      %s60 = sadd.s32 %s59, 1
      %p63 = scmp.eq.s32.totalorder %s25, 1
      %p64 = scmp.ne.s32.totalorder %s59, %s61
      %p65 = scmp.eq.s32.totalorder %s25, 0
      %p66 = por %p64, %p65
      %p67 = scmp.ne.s32.totalorder %s59, %s61
      %p68 = scmp.eq.s32.totalorder %s30, 1
      %p69 = por %p67, %p68
      %p70 = scmp.ne.s32.totalorder %s61, %s62
      %p71 = scmp.eq.s32.totalorder %s30, 0
      %p72 = por %p70, %p71
      %p73 = scmp.ne.s32.totalorder %s61, %s62
      %p74 = scmp.eq.s32.totalorder %s31, 1
      %p75 = por %p73, %p74
      %p77 = scmp.ne.s32.totalorder %s62, %s76
      %p78 = scmp.eq.s32.totalorder %s31, 0
      %p79 = por %p77, %p78
      %s81 = sadd.s32 %s80, 1
      %p84 = scmp.eq.s32.totalorder %s25, 1
      %p85 = scmp.ne.s32.totalorder %s80, %s82
      %p86 = scmp.eq.s32.totalorder %s25, 0
      %p87 = por %p85, %p86
      %p88 = scmp.ne.s32.totalorder %s80, %s82
      %p89 = scmp.eq.s32.totalorder %s30, 1
      %p90 = por %p88, %p89
      %p91 = scmp.ne.s32.totalorder %s82, %s83
      %p92 = scmp.eq.s32.totalorder %s30, 0
      %p93 = por %p91, %p92
      %p94 = scmp.ne.s32.totalorder %s82, %s83
      %p95 = scmp.eq.s32.totalorder %s31, 1
      %p96 = por %p94, %p95
      %p98 = scmp.ne.s32.totalorder %s83, %s97
      %p99 = scmp.eq.s32.totalorder %s31, 0
      %p100 = por %p98, %p99
      %s102 = sadd.s32 %s101, 1
      %p105 = scmp.eq.s32.totalorder %s25, 1
      %p106 = scmp.ne.s32.totalorder %s101, %s103
      %p107 = scmp.eq.s32.totalorder %s25, 0
      %p108 = por %p106, %p107
      %p109 = scmp.ne.s32.totalorder %s101, %s103
      %p110 = scmp.eq.s32.totalorder %s30, 1
      %p111 = por %p109, %p110
      %p112 = scmp.ne.s32.totalorder %s103, %s104
      %p113 = scmp.eq.s32.totalorder %s30, 0
      %p114 = por %p112, %p113
      %p115 = scmp.ne.s32.totalorder %s103, %s104
      %p116 = scmp.eq.s32.totalorder %s31, 1
      %p117 = por %p115, %p116
      %p119 = scmp.ne.s32.totalorder %s104, %s118
      %p120 = scmp.eq.s32.totalorder %s31, 0
      %p121 = por %p119, %p120
      %s123 = sadd.s32 %s122, 1
      %p126 = scmp.eq.s32.totalorder %s25, 1
      %p127 = scmp.ne.s32.totalorder %s122, %s124
      %p128 = scmp.eq.s32.totalorder %s25, 0
      %p129 = por %p127, %p128
      %p130 = scmp.ne.s32.totalorder %s122, %s124
      %p131 = scmp.eq.s32.totalorder %s30, 1
      %p132 = por %p130, %p131
      %p133 = scmp.ne.s32.totalorder %s124, %s125
      %p134 = scmp.eq.s32.totalorder %s30, 0
      %p135 = por %p133, %p134
      %p136 = scmp.ne.s32.totalorder %s124, %s125
      %p137 = scmp.eq.s32.totalorder %s31, 1
      %p138 = por %p136, %p137
      %p140 = scmp.ne.s32.totalorder %s125, %s139
      %p141 = scmp.eq.s32.totalorder %s31, 0
      %p142 = por %p140, %p141
      %s144 = sadd.s32 %s143, 1
      %p147 = scmp.eq.s32.totalorder %s25, 1
      %p148 = scmp.ne.s32.totalorder %s143, %s145
      %p149 = scmp.eq.s32.totalorder %s25, 0
      %p150 = por %p148, %p149
      %p151 = scmp.ne.s32.totalorder %s143, %s145
      %p152 = scmp.eq.s32.totalorder %s30, 1
      %p153 = por %p151, %p152
      %p154 = scmp.ne.s32.totalorder %s145, %s146
      %p155 = scmp.eq.s32.totalorder %s30, 0
      %p156 = por %p154, %p155
      %p157 = scmp.ne.s32.totalorder %s145, %s146
      %p158 = scmp.eq.s32.totalorder %s31, 1
      %p159 = por %p157, %p158
      %p161 = scmp.ne.s32.totalorder %s146, %s160
      %p162 = scmp.eq.s32.totalorder %s31, 0
      %p163 = por %p161, %p162
      %s165 = sadd.s32 %s164, 1
      %p168 = scmp.eq.s32.totalorder %s25, 1
      %p169 = scmp.ne.s32.totalorder %s164, %s166
      %p170 = scmp.eq.s32.totalorder %s25, 0
      %p171 = por %p169, %p170
      %p172 = scmp.ne.s32.totalorder %s164, %s166
      %p173 = scmp.eq.s32.totalorder %s30, 1
      %p174 = por %p172, %p173
      %p175 = scmp.ne.s32.totalorder %s166, %s167
      %p176 = scmp.eq.s32.totalorder %s30, 0
      %p177 = por %p175, %p176
      %p178 = scmp.ne.s32.totalorder %s166, %s167
      %p179 = scmp.eq.s32.totalorder %s31, 1
      %p180 = por %p178, %p179
      %p182 = scmp.ne.s32.totalorder %s167, %s181
      %p183 = scmp.eq.s32.totalorder %s31, 0
      %p184 = por %p182, %p183
      %s186 = sadd.s32 %s185, 1
      %p189 = scmp.eq.s32.totalorder %s25, 1
      %p190 = scmp.ne.s32.totalorder %s185, %s187
      %p191 = scmp.eq.s32.totalorder %s25, 0
      %p192 = por %p190, %p191
      %p193 = scmp.ne.s32.totalorder %s185, %s187
      %p194 = scmp.eq.s32.totalorder %s30, 1
      %p195 = por %p193, %p194
      %p196 = scmp.ne.s32.totalorder %s187, %s188
      %p197 = scmp.eq.s32.totalorder %s30, 0
      %p198 = por %p196, %p197
      %p199 = scmp.ne.s32.totalorder %s187, %s188
      %p200 = scmp.eq.s32.totalorder %s31, 1
      %p201 = por %p199, %p200
      %p203 = scmp.ne.s32.totalorder %s188, %s202
      %p204 = scmp.eq.s32.totalorder %s31, 0
      %p205 = por %p203, %p204
      %s207 = sadd.s32 %s206, 1
      %p210 = scmp.eq.s32.totalorder %s25, 1
      %p211 = scmp.ne.s32.totalorder %s206, %s208
      %p212 = scmp.eq.s32.totalorder %s25, 0
      %p213 = por %p211, %p212
      %p214 = scmp.ne.s32.totalorder %s206, %s208
      %p215 = scmp.eq.s32.totalorder %s30, 1
      %p216 = por %p214, %p215
      %p217 = scmp.ne.s32.totalorder %s208, %s209
      %p218 = scmp.eq.s32.totalorder %s30, 0
      %p219 = por %p217, %p218
      %p220 = scmp.ne.s32.totalorder %s208, %s209
      %p221 = scmp.eq.s32.totalorder %s31, 1
      %p222 = por %p220, %p221
      %p224 = scmp.ne.s32.totalorder %s209, %s223
      %p225 = scmp.eq.s32.totalorder %s31, 0
      %p226 = por %p224, %p225
      %s228 = sadd.s32 %s227, 1
      %p231 = scmp.eq.s32.totalorder %s25, 1
      %p232 = scmp.ne.s32.totalorder %s227, %s229
      %p233 = scmp.eq.s32.totalorder %s25, 0
      %p234 = por %p232, %p233
      %p235 = scmp.ne.s32.totalorder %s227, %s229
      %p236 = scmp.eq.s32.totalorder %s30, 1
      %p237 = por %p235, %p236
      %p238 = scmp.ne.s32.totalorder %s229, %s230
      %p239 = scmp.eq.s32.totalorder %s30, 0
      %p240 = por %p238, %p239
      %p241 = scmp.ne.s32.totalorder %s229, %s230
      %p242 = scmp.eq.s32.totalorder %s31, 1
      %p243 = por %p241, %p242
      %p245 = scmp.ne.s32.totalorder %s230, %s244
      %p246 = scmp.eq.s32.totalorder %s31, 0
      %p247 = por %p245, %p246
      %s249 = sadd.s32 %s248, 1
      %p252 = scmp.eq.s32.totalorder %s25, 1
      %p253 = scmp.ne.s32.totalorder %s248, %s250
      %p254 = scmp.eq.s32.totalorder %s25, 0
      %p255 = por %p253, %p254
      %p256 = scmp.ne.s32.totalorder %s248, %s250
      %p257 = scmp.eq.s32.totalorder %s30, 1
      %p258 = por %p256, %p257
      %p259 = scmp.ne.s32.totalorder %s250, %s251
      %p260 = scmp.eq.s32.totalorder %s30, 0
      %p261 = por %p259, %p260
      %p262 = scmp.ne.s32.totalorder %s250, %s251
      %p263 = scmp.eq.s32.totalorder %s31, 1
      %p264 = por %p262, %p263
      %p266 = scmp.ne.s32.totalorder %s251, %s265
      %p267 = scmp.eq.s32.totalorder %s31, 0
      %p268 = por %p266, %p267
      %s270 = sadd.s32 %s269, 1
      %p273 = scmp.eq.s32.totalorder %s25, 1
      %p274 = scmp.ne.s32.totalorder %s269, %s271
      %p275 = scmp.eq.s32.totalorder %s25, 0
      %p276 = por %p274, %p275
      %p277 = scmp.ne.s32.totalorder %s269, %s271
      %p278 = scmp.eq.s32.totalorder %s30, 1
      %p279 = por %p277, %p278
      %p280 = scmp.ne.s32.totalorder %s271, %s272
      %p281 = scmp.eq.s32.totalorder %s30, 0
      %p282 = por %p280, %p281
      %p283 = scmp.ne.s32.totalorder %s271, %s272
      %p284 = scmp.eq.s32.totalorder %s31, 1
      %p285 = por %p283, %p284
      %p287 = scmp.ne.s32.totalorder %s272, %s286
      %p288 = scmp.eq.s32.totalorder %s31, 0
      %p289 = por %p287, %p288
      %s291 = sadd.s32 %s290, 1
      %p294 = scmp.eq.s32.totalorder %s25, 1
      %p295 = scmp.ne.s32.totalorder %s290, %s292
      %p296 = scmp.eq.s32.totalorder %s25, 0
      %p297 = por %p295, %p296
      %p298 = scmp.ne.s32.totalorder %s290, %s292
      %p299 = scmp.eq.s32.totalorder %s30, 1
      %p300 = por %p298, %p299
      %p301 = scmp.ne.s32.totalorder %s292, %s293
      %p302 = scmp.eq.s32.totalorder %s30, 0
      %p303 = por %p301, %p302
      %p304 = scmp.ne.s32.totalorder %s292, %s293
      %p305 = scmp.eq.s32.totalorder %s31, 1
      %p306 = por %p304, %p305
      %p308 = scmp.ne.s32.totalorder %s293, %s307
      %p309 = scmp.eq.s32.totalorder %s31, 0
      %p310 = por %p308, %p309
      %s311 = ssub.s32 %s25, %s32
      %p312 = scmp.eq.s32.totalorder %s311, 0
      %s314 = sadd.s32 %s313, 1
      %s315 = scalar_select %p312, %s313, %s314
      %p318 = pneg %p312
      %p319 = scmp.eq.s32.totalorder %s25, 1
      %p320 = por %p318, %p319
      %p321 = scmp.ne.s32.totalorder %s313, %s316
      %p322 = scmp.eq.s32.totalorder %s25, 0
      %p323 = por %p321, %p322
      %p324 = scmp.ne.s32.totalorder %s313, %s316
      %p325 = scmp.eq.s32.totalorder %s30, 1
      %p326 = por %p324, %p325
      %p327 = scmp.ne.s32.totalorder %s316, %s317
      %p328 = scmp.eq.s32.totalorder %s30, 0
      %p329 = por %p327, %p328
      %p330 = scmp.ne.s32.totalorder %s316, %s317
      %p331 = scmp.eq.s32.totalorder %s31, 1
      %p332 = por %p330, %p331
      %p334 = scmp.ne.s32.totalorder %s317, %s333
      %p335 = scmp.eq.s32.totalorder %s31, 0
      %p336 = por %p334, %p335
      %p337 = scmp.le.s32.totalorder 1, %s25
      %p338 = scmp.lt.s32.totalorder %s25, 3
      %p339 = pnand %p337, %p338
      %p340 = pneg %p339
      // Predicated region
      $region9: #{amt_forward.14} parent=5 // pred_check
        _
      $region10: #{amt_forward.14} parent=5 // pred_check_branch
        %342 = sbr.rel (%p339) target = $region12
      $region11: #{amt_forward.14} parent=5 // pred_region
        %s343 = ssub.s32 %s25, 1
        // Predicated region
        $region13: #{amt_forward.14} parent=11 // pred_check
          %p344 = pneg %p72
        $region14: #{amt_forward.14} parent=11 // pred_check_branch
          %346 = sbr.rel (%p344) target = $region16
        $region15: #{amt_forward.14} parent=11 // pred_region
          %348 = vsyncadd [#allocation3], 0
          %s350 = sshll.u32 %s1, 4
          %s351 = int_to_ptr.hbm [resolvable:$true] %s350
          %s352 = sshll.u32 [#allocation2], 4
          %s353 = int_to_ptr.vmem [resolvable:$true] %s352
          %355 = dma.hbm_to_vmem [thread:$0]  %s351, 16, %s353, [#allocation3]
        $region16: #{amt_forward.14} parent=11 // pred_fallthru
          _
        // Predicated region
        $region17: #{amt_forward.14} parent=11 // pred_check
          %p356 = pneg %p93
        $region18: #{amt_forward.14} parent=11 // pred_check_branch
          %358 = sbr.rel (%p356) target = $region20
        $region19: #{amt_forward.14} parent=11 // pred_region
          %360 = vsyncadd [#allocation5], 0
          %s362 = sshll.u32 %s2, 4
          %s363 = int_to_ptr.hbm [resolvable:$true] %s362
          %s364 = sshll.u32 [#allocation4], 4
          %s365 = int_to_ptr.vmem [resolvable:$true] %s364
          %367 = dma.hbm_to_vmem [thread:$0]  %s363, 16, %s365, [#allocation5]
        $region20: #{amt_forward.14} parent=11 // pred_fallthru
          _
        // Predicated region
        $region21: #{amt_forward.14} parent=11 // pred_check
          %p368 = pneg %p114
        $region22: #{amt_forward.14} parent=11 // pred_check_branch
          %370 = sbr.rel (%p368) target = $region24
        $region23: #{amt_forward.14} parent=11 // pred_region
          _
        $region24: #{amt_forward.14} parent=11 // pred_fallthru
          _
        // Predicated region
        $region25: #{amt_forward.14} parent=11 // pred_check
          %p371 = pneg %p135
        $region26: #{amt_forward.14} parent=11 // pred_check_branch
          %373 = sbr.rel (%p371) target = $region28
        $region27: #{amt_forward.14} parent=11 // pred_region
          %375 = vsyncadd [#allocation5], 0
          %s377 = sshll.u32 %s4, 4
          %s378 = int_to_ptr.hbm [resolvable:$true] %s377
          %s379 = sshll.u32 [#allocation6], 4
          %s380 = int_to_ptr.vmem [resolvable:$true] %s379
          %382 = dma.hbm_to_vmem [thread:$0]  %s378, 32, %s380, [#allocation5]
        $region28: #{amt_forward.14} parent=11 // pred_fallthru
          _
        // Predicated region
        $region29: #{amt_forward.14} parent=11 // pred_check
          %p383 = pneg %p156
        $region30: #{amt_forward.14} parent=11 // pred_check_branch
          %385 = sbr.rel (%p383) target = $region32
        $region31: #{amt_forward.14} parent=11 // pred_region
          %387 = vsyncadd [#allocation8], 0
          %s388 = sshll.u32 %s5, 4
          %s389 = int_to_ptr.hbm [resolvable:$true] %s388
          %s390 = sshll.u32 [#allocation7], 4
          %s391 = int_to_ptr.vmem [resolvable:$true] %s390
          %396 = dma.hbm_to_vmem [thread:$0]  %s389, 512, %s391, [#allocation8], 64, 64, 4
        $region32: #{amt_forward.14} parent=11 // pred_fallthru
          _
        // Predicated region
        $region33: #{amt_forward.14} parent=11 // pred_check
          %p397 = pneg %p177
        $region34: #{amt_forward.14} parent=11 // pred_check_branch
          %399 = sbr.rel (%p397) target = $region36
        $region35: #{amt_forward.14} parent=11 // pred_region
          %401 = vsyncadd [#allocation8], 0
          %s403 = sshll.u32 %s6, 4
          %s404 = int_to_ptr.hbm [resolvable:$true] %s403
          %s405 = sshll.u32 [#allocation9], 4
          %s406 = int_to_ptr.vmem [resolvable:$true] %s405
          %408 = dma.hbm_to_vmem [thread:$0]  %s404, 16, %s406, [#allocation8]
        $region36: #{amt_forward.14} parent=11 // pred_fallthru
          _
        // Predicated region
        $region37: #{amt_forward.14} parent=11 // pred_check
          %p409 = pneg %p198
        $region38: #{amt_forward.14} parent=11 // pred_check_branch
          %411 = sbr.rel (%p409) target = $region40
        $region39: #{amt_forward.14} parent=11 // pred_region
          %413 = vsyncadd [#allocation11], 0
          %s415 = sshll.u32 %s7, 4
          %s416 = int_to_ptr.hbm [resolvable:$true] %s415
          %s417 = sshll.u32 [#allocation10], 4
          %s418 = int_to_ptr.vmem [resolvable:$true] %s417
          %420 = dma.hbm_to_vmem [thread:$0]  %s416, 16, %s418, [#allocation11]
        $region40: #{amt_forward.14} parent=11 // pred_fallthru
          _
        // Predicated region
        $region41: #{amt_forward.14} parent=11 // pred_check
          %p421 = pneg %p219
        $region42: #{amt_forward.14} parent=11 // pred_check_branch
          %423 = sbr.rel (%p421) target = $region44
        $region43: #{amt_forward.14} parent=11 // pred_region
          %425 = vsyncadd [#allocation11], 0
          %s427 = sshll.u32 %s8, 4
          %s428 = int_to_ptr.hbm [resolvable:$true] %s427
          %s429 = sshll.u32 [#allocation12], 4
          %s430 = int_to_ptr.vmem [resolvable:$true] %s429
          %432 = dma.hbm_to_vmem [thread:$0]  %s428, 16, %s430, [#allocation11]
        $region44: #{amt_forward.14} parent=11 // pred_fallthru
          _
        // Predicated region
        $region45: #{amt_forward.14} parent=11 // pred_check
          %p433 = pneg %p240
        $region46: #{amt_forward.14} parent=11 // pred_check_branch
          %435 = sbr.rel (%p433) target = $region48
        $region47: #{amt_forward.14} parent=11 // pred_region
          %437 = vsyncadd [#allocation14], 0
          %s438 = sshll.u32 %s9, 4
          %s439 = int_to_ptr.hbm [resolvable:$true] %s438
          %s440 = sshll.u32 [#allocation13], 4
          %s441 = int_to_ptr.vmem [resolvable:$true] %s440
          %446 = dma.hbm_to_vmem [thread:$0]  %s439, 1024, %s441, [#allocation14], 128, 128, 8
        $region48: #{amt_forward.14} parent=11 // pred_fallthru
          _
        // Predicated region
        $region49: #{amt_forward.14} parent=11 // pred_check
          %p447 = pneg %p261
        $region50: #{amt_forward.14} parent=11 // pred_check_branch
          %449 = sbr.rel (%p447) target = $region52
        $region51: #{amt_forward.14} parent=11 // pred_region
          %451 = vsyncadd [#allocation14], 0
          %s453 = sshll.u32 %s10, 4
          %s454 = int_to_ptr.hbm [resolvable:$true] %s453
          %s455 = sshll.u32 [#allocation15], 4
          %s456 = int_to_ptr.vmem [resolvable:$true] %s455
          %458 = dma.hbm_to_vmem [thread:$0]  %s454, 32, %s456, [#allocation14]
        $region52: #{amt_forward.14} parent=11 // pred_fallthru
          _
        // Predicated region
        $region53: #{amt_forward.14} parent=11 // pred_check
          %p459 = pneg %p282
        $region54: #{amt_forward.14} parent=11 // pred_check_branch
          %461 = sbr.rel (%p459) target = $region56
        $region55: #{amt_forward.14} parent=11 // pred_region
          _
        $region56: #{amt_forward.14} parent=11 // pred_fallthru
          _
        // Predicated region
        $region57: #{amt_forward.14} parent=11 // pred_check
          %p462 = pneg %p303
        $region58: #{amt_forward.14} parent=11 // pred_check_branch
          %464 = sbr.rel (%p462) target = $region60
        $region59: #{amt_forward.14} parent=11 // pred_region
          %466 = vsyncadd [#allocation17], 0
          %s468 = sshll.u32 %s12, 4
          %s469 = int_to_ptr.hbm [resolvable:$true] %s468
          %s470 = sshll.u32 [#allocation16], 4
          %s471 = int_to_ptr.vmem [resolvable:$true] %s470
          %473 = dma.hbm_to_vmem [thread:$0]  %s469, 16, %s471, [#allocation17]
        $region60: #{amt_forward.14} parent=11 // pred_fallthru
          _
      $region12: #{amt_forward.14} parent=5 // pred_fallthru
        _
      %p474 = scmp.lt.s32.totalorder %s25, 2
      // Predicated region
      $region61: #{amt_forward.14} parent=5 // pred_check
        %p475 = pneg %p474
      $region62: #{amt_forward.14} parent=5 // pred_check_branch
        %477 = sbr.rel (%p475) target = $region64
      $region63: #{amt_forward.14} parent=5 // pred_region
        // Predicated region
        $region65: #{amt_forward.14} parent=63 // pred_check
          %p478 = pneg %p45
        $region66: #{amt_forward.14} parent=63 // pred_check_branch
          %480 = sbr.rel (%p478) target = $region68
        $region67: #{amt_forward.14} parent=63 // pred_region
          %p481 = scmp.lt.s32.totalorder %s25, 1
          %s482 = scalar_select %p481, %s25, 1
          %s483 = smul.addr %s482, 2
          %s484 = smul.addr %s483, 4
          %s485 = scalar_lea.vmem %s0, %s484
        $region68: #{amt_forward.14} parent=63 // pred_fallthru
          _
      $region64: #{amt_forward.14} parent=5 // pred_fallthru
        _
      %p486 = scmp.le.s32.totalorder 1, %s25
      %p487 = scmp.lt.s32.totalorder %s25, 3
      %p488 = pnand %p486, %p487
      %p489 = pneg %p488
      // Predicated region
      $region69: #{amt_forward.14} parent=5 // pred_check
        _
      $region70: #{amt_forward.14} parent=5 // pred_check_branch
        %491 = sbr.rel (%p488) target = $region72
      $region71: #{amt_forward.14} parent=5 // pred_region
        %s492 = ssub.s32 %s25, 1
        // Predicated region
        $region73: #{amt_forward.14} parent=71 // pred_check
          %p493 = pneg %p72
        $region74: #{amt_forward.14} parent=71 // pred_check_branch
          %495 = sbr.rel (%p493) target = $region76
        $region75: #{amt_forward.14} parent=71 // pred_region
          %497 = dma.done [#allocation3], 16
        $region76: #{amt_forward.14} parent=71 // pred_fallthru
          _
        // Predicated region
        $region77: #{amt_forward.14} parent=71 // pred_check
          %p498 = pneg %p93
        $region78: #{amt_forward.14} parent=71 // pred_check_branch
          %500 = sbr.rel (%p498) target = $region80
        $region79: #{amt_forward.14} parent=71 // pred_region
          %502 = dma.done [#allocation5], 16
        $region80: #{amt_forward.14} parent=71 // pred_fallthru
          _
        // Predicated region
        $region81: #{amt_forward.14} parent=71 // pred_check
          %p503 = pneg %p135
        $region82: #{amt_forward.14} parent=71 // pred_check_branch
          %505 = sbr.rel (%p503) target = $region84
        $region83: #{amt_forward.14} parent=71 // pred_region
          %507 = dma.done [#allocation5], 32
        $region84: #{amt_forward.14} parent=71 // pred_fallthru
          _
        // Predicated region
        $region85: #{amt_forward.14} parent=71 // pred_check
          %p508 = pneg %p156
        $region86: #{amt_forward.14} parent=71 // pred_check_branch
          %510 = sbr.rel (%p508) target = $region88
        $region87: #{amt_forward.14} parent=71 // pred_region
          %512 = dma.done [#allocation8], 512
        $region88: #{amt_forward.14} parent=71 // pred_fallthru
          _
        // Predicated region
        $region89: #{amt_forward.14} parent=71 // pred_check
          %p513 = pneg %p177
        $region90: #{amt_forward.14} parent=71 // pred_check_branch
          %515 = sbr.rel (%p513) target = $region92
        $region91: #{amt_forward.14} parent=71 // pred_region
          %517 = dma.done [#allocation8], 16
        $region92: #{amt_forward.14} parent=71 // pred_fallthru
          _
        // Predicated region
        $region93: #{amt_forward.14} parent=71 // pred_check
          %p518 = pneg %p198
        $region94: #{amt_forward.14} parent=71 // pred_check_branch
          %520 = sbr.rel (%p518) target = $region96
        $region95: #{amt_forward.14} parent=71 // pred_region
          %522 = dma.done [#allocation11], 16
        $region96: #{amt_forward.14} parent=71 // pred_fallthru
          _
        // Predicated region
        $region97: #{amt_forward.14} parent=71 // pred_check
          %p523 = pneg %p219
        $region98: #{amt_forward.14} parent=71 // pred_check_branch
          %525 = sbr.rel (%p523) target = $region100
        $region99: #{amt_forward.14} parent=71 // pred_region
          %527 = dma.done [#allocation11], 16
        $region100: #{amt_forward.14} parent=71 // pred_fallthru
          _
        // Predicated region
        $region101: #{amt_forward.14} parent=71 // pred_check
          %p528 = pneg %p240
        $region102: #{amt_forward.14} parent=71 // pred_check_branch
          %530 = sbr.rel (%p528) target = $region104
        $region103: #{amt_forward.14} parent=71 // pred_region
          %532 = dma.done [#allocation14], 1024
        $region104: #{amt_forward.14} parent=71 // pred_fallthru
          _
        // Predicated region
        $region105: #{amt_forward.14} parent=71 // pred_check
          %p533 = pneg %p261
        $region106: #{amt_forward.14} parent=71 // pred_check_branch
          %535 = sbr.rel (%p533) target = $region108
        $region107: #{amt_forward.14} parent=71 // pred_region
          %537 = dma.done [#allocation14], 32
        $region108: #{amt_forward.14} parent=71 // pred_fallthru
          _
        // Predicated region
        $region109: #{amt_forward.14} parent=71 // pred_check
          %p538 = pneg %p303
        $region110: #{amt_forward.14} parent=71 // pred_check_branch
          %540 = sbr.rel (%p538) target = $region112
        $region111: #{amt_forward.14} parent=71 // pred_region
          %542 = dma.done [#allocation17], 16
        $region112: #{amt_forward.14} parent=71 // pred_fallthru
          _
        %p543 = scmp.lt.s32.totalorder %s30, 1
        %s544 = scalar_select %p543, %s30, 1
        %s545 = smul.addr %s544, 2
        %s546 = smul.addr %s545, 4
        %s547 = scalar_lea.vmem %s0, %s546
        %p548 = pneg %p51
        %p549 = pneg %p48
        %p550 = pneg %p72
        %p551 = pneg %p69
        %p552 = pneg %p93
        %p553 = pneg %p90
        %p554 = pneg %p114
        %p555 = pneg %p111
        %p556 = pneg %p135
        %p557 = pneg %p132
        %p558 = pneg %p156
        %p559 = pneg %p153
        %p560 = pneg %p177
        %p561 = pneg %p174
        %p562 = pneg %p198
        %p563 = pneg %p195
        %p564 = pneg %p219
        %p565 = pneg %p216
        %p566 = pneg %p240
        %p567 = pneg %p237
        %p568 = pneg %p261
        %p569 = pneg %p258
        %p570 = pneg %p282
        %p571 = pneg %p279
        %p572 = pneg %p303
        %p573 = pneg %p300
        %p574 = pneg %p329
        %p575 = pneg %p326
        %p576 = scmp.lt.s32.totalorder %s30, 1
        %s577 = scalar_select %p576, %s30, 1
        %s578 = smul.addr %s577, 2
        %s579 = smul.addr %s578, 4
        %s580 = scalar_lea.vmem %s13, %s579
        %p581 = scmp.lt.s32.totalorder %s30, 1
        %s582 = scalar_select %p581, %s30, 1
        %s583 = smul.addr %s582, 2
        %s584 = smul.addr %s583, 4
        %s585 = scalar_lea.vmem %s0, %s584
        %p586 = scmp.lt.s32.totalorder %s30, 1
        %s587 = scalar_select %p586, %s30, 1
        %s588 = smul.addr %s587, 2
        %s589 = smul.addr %s588, 4
        %s590 = scalar_lea.vmem %s13, %s589
        %v592 = vld [vmem:[%s585] sm:$0xf]
        %v593 = vld [vmem:[%s585 + $0x4] sm:$0xf]
        %v594 = vunpack.c.l.bf16 %v592
        %v595 = vunpack.c.l.bf16 %v593
        %vm596 = vcmask 523264
        %v597 = vsel %vm596, %v594, 0.0
        %598 = vadd.xlane.f32.xlu0 %v597
        %v599 = vpop.xlane.xlu0 %598
        %v600 = vsel %vm596, %v595, 0.0
        %601 = vadd.xlane.f32.xlu0 %v600
        %v602 = vpop.xlane.xlu0 %601
        %v603 = vrcp.pop 64.0
        %v604 = vmul.f32 64.0, %v603
        %v605 = vsub.f32 1.0, %v604
        %v606 = vmul.f32 %v603, %v605
        %v607 = vadd.f32 %v603, %v606
        %vm608 = vweird.f32 %v603
        %v609 = vsel %vm608, %v603, %v607
        %v610 = vmul.f32 %v599, %v609
        %v611 = vmul.f32 %v602, %v609
        %v612 = vsub.f32 %v594, %v610
        %v613 = vsub.f32 %v595, %v611
        %v614 = vmul.f32 %v612, %v612
        %v615 = vmul.f32 %v613, %v613
        %v616 = vsel %vm596, %v614, 0.0
        %617 = vadd.xlane.f32.xlu0 %v616
        %v618 = vpop.xlane.xlu0 %617
        %v619 = vsel %vm596, %v615, 0.0
        %620 = vadd.xlane.f32.xlu0 %v619
        %v621 = vpop.xlane.xlu0 %620
        %v622 = vmul.f32 %v618, %v609
        %v623 = vmul.f32 %v621, %v609
        %v624 = vadd.f32 %v622, 1e-05
        %v625 = vadd.f32 %v623, 1e-05
        %v626 = vrsqrt.pop %v624
        %v627 = vmul.f32 %v626, %v624
        %v628 = vmul.f32 %v627, %v626
        %v629 = vmul.f32 0.5, %v628
        %v630 = vsub.f32 1.5, %v629
        %v631 = vmul.f32 %v626, %v630
        %vm632 = vweird.f32 %v624
        %vm633 = vweird.f32 %v626
        %vm634 = vmor %vm632, %vm633
        %v635 = vsel %vm634, %v626, %v631
        %v636 = vrsqrt.pop %v625
        %v637 = vmul.f32 %v636, %v625
        %v638 = vmul.f32 %v637, %v636
        %v639 = vmul.f32 0.5, %v638
        %v640 = vsub.f32 1.5, %v639
        %v641 = vmul.f32 %v636, %v640
        %vm642 = vweird.f32 %v625
        %vm643 = vweird.f32 %v636
        %vm644 = vmor %vm642, %vm643
        %v645 = vsel %vm644, %v636, %v641
        %v646 = vmul.f32 %v612, %v635
        %v647 = vmul.f32 %v613, %v645
        %v648 = vld [vmem:[#allocation2] sm:$0x1]
        %v649 = vunpack.c.l.bf16 %v648
        %v650 = vperm.slane %v649, 0
        %v651 = vmul.f32 %v646, %v650
        %v652 = vmul.f32 %v647, %v650
        %v653 = vld [vmem:[#allocation4] sm:$0x1]
        %v654 = vunpack.c.l.bf16 %v653
        %v655 = vperm.slane %v654, 0
        %v656 = vadd.f32 %v651, %v655
        %v657 = vadd.f32 %v652, %v655
        %v658 = vpack.c.bf16 %v657, %v656
        %v659 = vld [vmem:[%s3] sm:$0xff]
        %v660 = vld [vmem:[%s3 + $0x8] sm:$0xff]
        %v661 = vld [vmem:[%s3 + $0x10] sm:$0xff]
        %v662 = vld [vmem:[%s3 + $0x18] sm:$0xff]
        %v663 = vld [vmem:[%s3 + $0x20] sm:$0xff]
        %v664 = vld [vmem:[%s3 + $0x28] sm:$0xff]
        %v665 = vld [vmem:[%s3 + $0x30] sm:$0xff]
        %v666 = vld [vmem:[%s3 + $0x38] sm:$0xff]
        %v667 = vld [vmem:[#allocation6] sm:$0x3]
        %v668 = vunpack.c.l.bf16 %v667
        %v670 = vperm.slane %v668, 0
        %v671 = vperm.slane %v668, 2
        %v674 = vperm.slane %v670, 0
        %v675 = vperm.slane %v671, 0
        %v684 = vunpack.c.l.b16 %v659
        %v685 = vunpack.c.h.b16 %v659
        %v686 = vunpack.c.l.b16 %v660
        %v687 = vunpack.c.h.b16 %v660
        %v688 = vunpack.c.l.b16 %v661
        %v689 = vunpack.c.h.b16 %v661
        %v690 = vunpack.c.l.b16 %v662
        %v691 = vunpack.c.h.b16 %v662
        %v692 = vunpack.c.l.b16 %v663
        %v693 = vunpack.c.h.b16 %v663
        %v694 = vunpack.c.l.b16 %v664
        %v695 = vunpack.c.h.b16 %v664
        %v696 = vunpack.c.l.b16 %v665
        %v697 = vunpack.c.h.b16 %v665
        %v698 = vunpack.c.l.b16 %v666
        %v699 = vunpack.c.h.b16 %v666
        %v700 = vpack.c.b16 %v686, %v684
        %v701 = vpack.c.b16 %v687, %v685
        %v702 = vpack.c.b16 %v690, %v688
        %v703 = vpack.c.b16 %v691, %v689
        %v704 = vpack.c.b16 %v694, %v692
        %v705 = vpack.c.b16 %v695, %v693
        %v706 = vpack.c.b16 %v698, %v696
        %v707 = vpack.c.b16 %v699, %v697
        %v717 = vsel %vm596, %v658, 0
        %719 = vmatpush.bf16.msra.mxu0 0
        %720 = vmatpush.bf16.msra.mxu0 0
        %721 = vmatpush.bf16.msra.mxu0 0
        %722 = vmatpush.bf16.msra.mxu0 0
        %723 = vmatpush.bf16.msra.mxu0 %v706
        %724 = vmatpush.bf16.msra.mxu0 %v704
        %725 = vmatpush.bf16.msra.mxu0 %v702
        %726 = vmatpush.bf16.msra.mxu0 %v700
        %727 = vmatmul.bf16.gmra.mxu0 %v717
        %v728 = vpop.f32.mrf.mxu0
        %v729 = vadd.f32 %v674, %v728
        %v730 = vpop.f32.mrf.mxu0
        %v731 = vadd.f32 %v674, %v730
        %732 = vdwg.mxu0
        %733 = vmatpush.bf16.msra.mxu0 0
        %734 = vmatpush.bf16.msra.mxu0 0
        %735 = vmatpush.bf16.msra.mxu0 0
        %736 = vmatpush.bf16.msra.mxu0 0
        %737 = vmatpush.bf16.msra.mxu0 %v707
        %738 = vmatpush.bf16.msra.mxu0 %v705
        %739 = vmatpush.bf16.msra.mxu0 %v703
        %740 = vmatpush.bf16.msra.mxu0 %v701
        %741 = vmatmul.bf16.gmra.mxu0 %v717
        %v742 = vpop.f32.mrf.mxu0
        %v743 = vadd.f32 %v675, %v742
        %v744 = vpop.f32.mrf.mxu0
        %v745 = vadd.f32 %v675, %v744
        %746 = vdwg.mxu0
        %v747 = vmul.f32 %v729, 0.35355338
        %v748 = vmul.f32 %v731, 0.35355338
        %v749 = vlaneseq
        %v750 = vshrl.u32 %v749, 7
        %v751 = vadd.s32 %v750, 8
        %v752 = vlaneseq
        %v753 = vand.u32 %v752, 127
        %vm754 = vcmp.le.s32.totalorder %v753, %v750
        %vm755 = vcmp.le.s32.totalorder %v753, %v751
        %758 = vrot.lane.b32.xlu0 %v729, 64
        %v759 = vpop.permute.xlu0 %758
        %760 = vrot.lane.b32.xlu0 %v731, 64
        %v761 = vpop.permute.xlu0 %760
        %vm762 = vcmask 64512
        %v764 = vsel %vm762, %v747, 0
        %v767 = vsel %vm762, %v748, 0
        %v769 = vsel %vm762, %v759, 0
        %v771 = vsel %vm762, %v761, 0
        %773 = vmatpush.xpose.msra.mxu0 0.0
        %774 = vmatpush.xpose.msra.mxu0 0.0
        %775 = vmatpush.xpose.msra.mxu0 0.0
        %776 = vmatpush.xpose.msra.mxu0 0.0
        %777 = vmatpush.xpose.msra.mxu0 0.0
        %778 = vmatpush.xpose.msra.mxu0 0.0
        %779 = vmatpush.xpose.msra.mxu0 0.0
        %780 = vmatpush.xpose.msra.mxu0 0.0
        %781 = vmatpush.xpose.msra.mxu0 0.0
        %782 = vmatpush.xpose.msra.mxu0 0.0
        %783 = vmatpush.xpose.msra.mxu0 0.0
        %784 = vmatpush.xpose.msra.mxu0 0.0
        %785 = vmatpush.xpose.msra.mxu0 0.0
        %786 = vmatpush.xpose.msra.mxu0 0.0
        %787 = vmatpush.xpose.msra.mxu0 %v771
        %788 = vmatpush.xpose.msra.mxu0 %v769
        %789 = vmatmul.f32.gmra.mxu0 %v764
        %v790 = vpop.f32.mrf.mxu0
        %v791 = vadd.f32 0.0, %v790
        %792 = vmatmul.f32.gmra.mxu0 %v767
        %v793 = vpop.f32.mrf.mxu0
        %v794 = vadd.f32 0.0, %v793
        %795 = vdwg.mxu0
        %v796 = vsel %vm754, %v791, -1e+30
        %v797 = vsel %vm755, %v794, -1e+30
        %vm798 = vcmask 130048
        %v799 = vsel %vm798, %v796, -inf
        %800 = vmax.xlane.f32.xlu0 %v799
        %v801 = vpop.xlane.xlu0 %800
        %v802 = vsel %vm798, %v797, -inf
        %803 = vmax.xlane.f32.xlu0 %v802
        %v804 = vpop.xlane.xlu0 %803
        %v805 = vsub.f32 %v796, %v801
        %v806 = vsub.f32 %v797, %v804
        %v807 = vmul.f32 %v805, 1.442695
        %v808 = vpow.pop %v807
        %v809 = vmul.f32 %v806, 1.442695
        %v810 = vpow.pop %v809
        %v811 = vsel %vm798, %v808, 0.0
        %812 = vadd.xlane.f32.xlu0 %v811
        %v813 = vpop.xlane.xlu0 %812
        %v814 = vsel %vm798, %v810, 0.0
        %815 = vadd.xlane.f32.xlu0 %v814
        %v816 = vpop.xlane.xlu0 %815
        %v817 = vrcp.pop %v813
        %v818 = vrcp.pop %v816
        %v819 = vmul.f32 %v808, %v817
        %v820 = vmul.f32 %v810, %v818
        %v822 = vsel %vm798, %v819, 0
        %v825 = vsel %vm798, %v820, 0
        %827 = vmatpush.msra.mxu0 0.0
        %828 = vmatpush.msra.mxu0 0.0
        %829 = vmatpush.msra.mxu0 0.0
        %830 = vmatpush.msra.mxu0 0.0
        %831 = vmatpush.msra.mxu0 0.0
        %832 = vmatpush.msra.mxu0 0.0
        %833 = vmatpush.msra.mxu0 0.0
        %834 = vmatpush.msra.mxu0 0.0
        %835 = vmatpush.msra.mxu0 0.0
        %836 = vmatpush.msra.mxu0 0.0
        %837 = vmatpush.msra.mxu0 0.0
        %838 = vmatpush.msra.mxu0 0.0
        %839 = vmatpush.msra.mxu0 0.0
        %840 = vmatpush.msra.mxu0 0.0
        %841 = vmatpush.msra.mxu0 %v745
        %842 = vmatpush.msra.mxu0 %v743
        %843 = vmatmul.f32.gmra.mxu0 %v822
        %v844 = vpop.f32.mrf.mxu0
        %v845 = vadd.f32 0.0, %v844
        %846 = vmatmul.f32.gmra.mxu0 %v825
        %v847 = vpop.f32.mrf.mxu0
        %v848 = vadd.f32 0.0, %v847
        %849 = vdwg.mxu0
        %850 = vrot.lane.b32.xlu0 %v747, 120
        %v851 = vpop.permute.xlu0 %850
        %852 = vrot.lane.b32.xlu0 %v748, 120
        %v853 = vpop.permute.xlu0 %852
        %854 = vrot.lane.b32.xlu0 %v729, 56
        %v855 = vpop.permute.xlu0 %854
        %856 = vrot.lane.b32.xlu0 %v731, 56
        %v857 = vpop.permute.xlu0 %856
        %v858 = vsel %vm762, %v851, 0
        %v860 = vsel %vm762, %v853, 0
        %v862 = vsel %vm762, %v855, 0
        %v864 = vsel %vm762, %v857, 0
        %866 = vmatpush.xpose.msra.mxu0 0.0
        %867 = vmatpush.xpose.msra.mxu0 0.0
        %868 = vmatpush.xpose.msra.mxu0 0.0
        %869 = vmatpush.xpose.msra.mxu0 0.0
        %870 = vmatpush.xpose.msra.mxu0 0.0
        %871 = vmatpush.xpose.msra.mxu0 0.0
        %872 = vmatpush.xpose.msra.mxu0 0.0
        %873 = vmatpush.xpose.msra.mxu0 0.0
        %874 = vmatpush.xpose.msra.mxu0 0.0
        %875 = vmatpush.xpose.msra.mxu0 0.0
        %876 = vmatpush.xpose.msra.mxu0 0.0
        %877 = vmatpush.xpose.msra.mxu0 0.0
        %878 = vmatpush.xpose.msra.mxu0 0.0
        %879 = vmatpush.xpose.msra.mxu0 0.0
        %880 = vmatpush.xpose.msra.mxu0 %v864
        %881 = vmatpush.xpose.msra.mxu0 %v862
        %882 = vmatmul.f32.gmra.mxu0 %v858
        %v883 = vpop.f32.mrf.mxu0
        %v884 = vadd.f32 0.0, %v883
        %885 = vmatmul.f32.gmra.mxu0 %v860
        %v886 = vpop.f32.mrf.mxu0
        %v887 = vadd.f32 0.0, %v886
        %888 = vdwg.mxu0
        %v889 = vsel %vm754, %v884, -1e+30
        %v890 = vsel %vm755, %v887, -1e+30
        %v891 = vsel %vm798, %v889, -inf
        %892 = vmax.xlane.f32.xlu0 %v891
        %v893 = vpop.xlane.xlu0 %892
        %v894 = vsel %vm798, %v890, -inf
        %895 = vmax.xlane.f32.xlu0 %v894
        %v896 = vpop.xlane.xlu0 %895
        %v897 = vsub.f32 %v889, %v893
        %v898 = vsub.f32 %v890, %v896
        %v899 = vmul.f32 %v897, 1.442695
        %v900 = vpow.pop %v899
        %v901 = vmul.f32 %v898, 1.442695
        %v902 = vpow.pop %v901
        %v903 = vsel %vm798, %v900, 0.0
        %904 = vadd.xlane.f32.xlu0 %v903
        %v905 = vpop.xlane.xlu0 %904
        %v906 = vsel %vm798, %v902, 0.0
        %907 = vadd.xlane.f32.xlu0 %v906
        %v908 = vpop.xlane.xlu0 %907
        %v909 = vrcp.pop %v905
        %v910 = vrcp.pop %v908
        %v911 = vmul.f32 %v900, %v909
        %v912 = vmul.f32 %v902, %v910
        %915 = vrot.lane.b32.xlu0 %v743, 120
        %v916 = vpop.permute.xlu0 %915
        %917 = vrot.lane.b32.xlu0 %v745, 120
        %v918 = vpop.permute.xlu0 %917
        %v922 = vsel %vm798, %v911, 0
        %v925 = vsel %vm798, %v912, 0
        %927 = vmatpush.msra.mxu0 0.0
        %928 = vmatpush.msra.mxu0 0.0
        %929 = vmatpush.msra.mxu0 0.0
        %930 = vmatpush.msra.mxu0 0.0
        %931 = vmatpush.msra.mxu0 0.0
        %932 = vmatpush.msra.mxu0 0.0
        %933 = vmatpush.msra.mxu0 0.0
        %934 = vmatpush.msra.mxu0 0.0
        %935 = vmatpush.msra.mxu0 0.0
        %936 = vmatpush.msra.mxu0 0.0
        %937 = vmatpush.msra.mxu0 0.0
        %938 = vmatpush.msra.mxu0 0.0
        %939 = vmatpush.msra.mxu0 0.0
        %940 = vmatpush.msra.mxu0 0.0
        %941 = vmatpush.msra.mxu0 %v918
        %942 = vmatpush.msra.mxu0 %v916
        %943 = vmatmul.f32.gmra.mxu0 %v922
        %v944 = vpop.f32.mrf.mxu0
        %v945 = vadd.f32 0.0, %v944
        %946 = vmatmul.f32.gmra.mxu0 %v925
        %v947 = vpop.f32.mrf.mxu0
        %v948 = vadd.f32 0.0, %v947
        %949 = vdwg.mxu0
        %950 = vrot.lane.b32.xlu0 %v747, 112
        %v951 = vpop.permute.xlu0 %950
        %952 = vrot.lane.b32.xlu0 %v748, 112
        %v953 = vpop.permute.xlu0 %952
        %954 = vrot.lane.b32.xlu0 %v729, 48
        %v955 = vpop.permute.xlu0 %954
        %956 = vrot.lane.b32.xlu0 %v731, 48
        %v957 = vpop.permute.xlu0 %956
        %v958 = vsel %vm762, %v951, 0
        %v960 = vsel %vm762, %v953, 0
        %v962 = vsel %vm762, %v955, 0
        %v964 = vsel %vm762, %v957, 0
        %966 = vmatpush.xpose.msra.mxu0 0.0
        %967 = vmatpush.xpose.msra.mxu0 0.0
        %968 = vmatpush.xpose.msra.mxu0 0.0
        %969 = vmatpush.xpose.msra.mxu0 0.0
        %970 = vmatpush.xpose.msra.mxu0 0.0
        %971 = vmatpush.xpose.msra.mxu0 0.0
        %972 = vmatpush.xpose.msra.mxu0 0.0
        %973 = vmatpush.xpose.msra.mxu0 0.0
        %974 = vmatpush.xpose.msra.mxu0 0.0
        %975 = vmatpush.xpose.msra.mxu0 0.0
        %976 = vmatpush.xpose.msra.mxu0 0.0
        %977 = vmatpush.xpose.msra.mxu0 0.0
        %978 = vmatpush.xpose.msra.mxu0 0.0
        %979 = vmatpush.xpose.msra.mxu0 0.0
        %980 = vmatpush.xpose.msra.mxu0 %v964
        %981 = vmatpush.xpose.msra.mxu0 %v962
        %982 = vmatmul.f32.gmra.mxu0 %v958
        %v983 = vpop.f32.mrf.mxu0
        %v984 = vadd.f32 0.0, %v983
        %985 = vmatmul.f32.gmra.mxu0 %v960
        %v986 = vpop.f32.mrf.mxu0
        %v987 = vadd.f32 0.0, %v986
        %988 = vdwg.mxu0
        %v989 = vsel %vm754, %v984, -1e+30
        %v990 = vsel %vm755, %v987, -1e+30
        %v991 = vsel %vm798, %v989, -inf
        %992 = vmax.xlane.f32.xlu0 %v991
        %v993 = vpop.xlane.xlu0 %992
        %v994 = vsel %vm798, %v990, -inf
        %995 = vmax.xlane.f32.xlu0 %v994
        %v996 = vpop.xlane.xlu0 %995
        %v997 = vsub.f32 %v989, %v993
        %v998 = vsub.f32 %v990, %v996
        %v999 = vmul.f32 %v997, 1.442695
        %v1000 = vpow.pop %v999
        %v1001 = vmul.f32 %v998, 1.442695
        %v1002 = vpow.pop %v1001
        %v1003 = vsel %vm798, %v1000, 0.0
        %1004 = vadd.xlane.f32.xlu0 %v1003
        %v1005 = vpop.xlane.xlu0 %1004
        %v1006 = vsel %vm798, %v1002, 0.0
        %1007 = vadd.xlane.f32.xlu0 %v1006
        %v1008 = vpop.xlane.xlu0 %1007
        %v1009 = vrcp.pop %v1005
        %v1010 = vrcp.pop %v1008
        %v1011 = vmul.f32 %v1000, %v1009
        %v1012 = vmul.f32 %v1002, %v1010
        %1013 = vrot.lane.b32.xlu0 %v743, 112
        %v1014 = vpop.permute.xlu0 %1013
        %1015 = vrot.lane.b32.xlu0 %v745, 112
        %v1016 = vpop.permute.xlu0 %1015
        %v1020 = vsel %vm798, %v1011, 0
        %v1023 = vsel %vm798, %v1012, 0
        %1025 = vmatpush.msra.mxu0 0.0
        %1026 = vmatpush.msra.mxu0 0.0
        %1027 = vmatpush.msra.mxu0 0.0
        %1028 = vmatpush.msra.mxu0 0.0
        %1029 = vmatpush.msra.mxu0 0.0
        %1030 = vmatpush.msra.mxu0 0.0
        %1031 = vmatpush.msra.mxu0 0.0
        %1032 = vmatpush.msra.mxu0 0.0
        %1033 = vmatpush.msra.mxu0 0.0
        %1034 = vmatpush.msra.mxu0 0.0
        %1035 = vmatpush.msra.mxu0 0.0
        %1036 = vmatpush.msra.mxu0 0.0
        %1037 = vmatpush.msra.mxu0 0.0
        %1038 = vmatpush.msra.mxu0 0.0
        %1039 = vmatpush.msra.mxu0 %v1016
        %1040 = vmatpush.msra.mxu0 %v1014
        %1041 = vmatmul.f32.gmra.mxu0 %v1020
        %v1042 = vpop.f32.mrf.mxu0
        %v1043 = vadd.f32 0.0, %v1042
        %1044 = vmatmul.f32.gmra.mxu0 %v1023
        %v1045 = vpop.f32.mrf.mxu0
        %v1046 = vadd.f32 0.0, %v1045
        %1047 = vdwg.mxu0
        %1048 = vrot.lane.b32.xlu0 %v747, 104
        %v1049 = vpop.permute.xlu0 %1048
        %1050 = vrot.lane.b32.xlu0 %v748, 104
        %v1051 = vpop.permute.xlu0 %1050
        %1052 = vrot.lane.b32.xlu0 %v729, 40
        %v1053 = vpop.permute.xlu0 %1052
        %1054 = vrot.lane.b32.xlu0 %v731, 40
        %v1055 = vpop.permute.xlu0 %1054
        %v1056 = vsel %vm762, %v1049, 0
        %v1058 = vsel %vm762, %v1051, 0
        %v1060 = vsel %vm762, %v1053, 0
        %v1062 = vsel %vm762, %v1055, 0
        %1064 = vmatpush.xpose.msra.mxu0 0.0
        %1065 = vmatpush.xpose.msra.mxu0 0.0
        %1066 = vmatpush.xpose.msra.mxu0 0.0
        %1067 = vmatpush.xpose.msra.mxu0 0.0
        %1068 = vmatpush.xpose.msra.mxu0 0.0
        %1069 = vmatpush.xpose.msra.mxu0 0.0
        %1070 = vmatpush.xpose.msra.mxu0 0.0
        %1071 = vmatpush.xpose.msra.mxu0 0.0
        %1072 = vmatpush.xpose.msra.mxu0 0.0
        %1073 = vmatpush.xpose.msra.mxu0 0.0
        %1074 = vmatpush.xpose.msra.mxu0 0.0
        %1075 = vmatpush.xpose.msra.mxu0 0.0
        %1076 = vmatpush.xpose.msra.mxu0 0.0
        %1077 = vmatpush.xpose.msra.mxu0 0.0
        %1078 = vmatpush.xpose.msra.mxu0 %v1062
        %1079 = vmatpush.xpose.msra.mxu0 %v1060
        %1080 = vmatmul.f32.gmra.mxu0 %v1056
        %v1081 = vpop.f32.mrf.mxu0
        %v1082 = vadd.f32 0.0, %v1081
        %1083 = vmatmul.f32.gmra.mxu0 %v1058
        %v1084 = vpop.f32.mrf.mxu0
        %v1085 = vadd.f32 0.0, %v1084
        %1086 = vdwg.mxu0
        %v1087 = vsel %vm754, %v1082, -1e+30
        %v1088 = vsel %vm755, %v1085, -1e+30
        %v1089 = vsel %vm798, %v1087, -inf
        %1090 = vmax.xlane.f32.xlu0 %v1089
        %v1091 = vpop.xlane.xlu0 %1090
        %v1092 = vsel %vm798, %v1088, -inf
        %1093 = vmax.xlane.f32.xlu0 %v1092
        %v1094 = vpop.xlane.xlu0 %1093
        %v1095 = vsub.f32 %v1087, %v1091
        %v1096 = vsub.f32 %v1088, %v1094
        %v1097 = vmul.f32 %v1095, 1.442695
        %v1098 = vpow.pop %v1097
        %v1099 = vmul.f32 %v1096, 1.442695
        %v1100 = vpow.pop %v1099
        %v1101 = vsel %vm798, %v1098, 0.0
        %1102 = vadd.xlane.f32.xlu0 %v1101
        %v1103 = vpop.xlane.xlu0 %1102
        %v1104 = vsel %vm798, %v1100, 0.0
        %1105 = vadd.xlane.f32.xlu0 %v1104
        %v1106 = vpop.xlane.xlu0 %1105
        %v1107 = vrcp.pop %v1103
        %v1108 = vrcp.pop %v1106
        %v1109 = vmul.f32 %v1098, %v1107
        %v1110 = vmul.f32 %v1100, %v1108
        %1111 = vrot.lane.b32.xlu0 %v743, 104
        %v1112 = vpop.permute.xlu0 %1111
        %1113 = vrot.lane.b32.xlu0 %v745, 104
        %v1114 = vpop.permute.xlu0 %1113
        %v1118 = vsel %vm798, %v1109, 0
        %v1121 = vsel %vm798, %v1110, 0
        %1123 = vmatpush.msra.mxu0 0.0
        %1124 = vmatpush.msra.mxu0 0.0
        %1125 = vmatpush.msra.mxu0 0.0
        %1126 = vmatpush.msra.mxu0 0.0
        %1127 = vmatpush.msra.mxu0 0.0
        %1128 = vmatpush.msra.mxu0 0.0
        %1129 = vmatpush.msra.mxu0 0.0
        %1130 = vmatpush.msra.mxu0 0.0
        %1131 = vmatpush.msra.mxu0 0.0
        %1132 = vmatpush.msra.mxu0 0.0
        %1133 = vmatpush.msra.mxu0 0.0
        %1134 = vmatpush.msra.mxu0 0.0
        %1135 = vmatpush.msra.mxu0 0.0
        %1136 = vmatpush.msra.mxu0 0.0
        %1137 = vmatpush.msra.mxu0 %v1114
        %1138 = vmatpush.msra.mxu0 %v1112
        %1139 = vmatmul.f32.gmra.mxu0 %v1118
        %v1140 = vpop.f32.mrf.mxu0
        %v1141 = vadd.f32 0.0, %v1140
        %1142 = vmatmul.f32.gmra.mxu0 %v1121
        %v1143 = vpop.f32.mrf.mxu0
        %v1144 = vadd.f32 0.0, %v1143
        %1145 = vdwg.mxu0
        %1146 = vrot.lane.b32.xlu0 %v747, 96
        %v1147 = vpop.permute.xlu0 %1146
        %1148 = vrot.lane.b32.xlu0 %v748, 96
        %v1149 = vpop.permute.xlu0 %1148
        %1150 = vrot.lane.b32.xlu0 %v729, 32
        %v1151 = vpop.permute.xlu0 %1150
        %1152 = vrot.lane.b32.xlu0 %v731, 32
        %v1153 = vpop.permute.xlu0 %1152
        %v1154 = vsel %vm762, %v1147, 0
        %v1156 = vsel %vm762, %v1149, 0
        %v1158 = vsel %vm762, %v1151, 0
        %v1160 = vsel %vm762, %v1153, 0
        %1162 = vmatpush.xpose.msra.mxu0 0.0
        %1163 = vmatpush.xpose.msra.mxu0 0.0
        %1164 = vmatpush.xpose.msra.mxu0 0.0
        %1165 = vmatpush.xpose.msra.mxu0 0.0
        %1166 = vmatpush.xpose.msra.mxu0 0.0
        %1167 = vmatpush.xpose.msra.mxu0 0.0
        %1168 = vmatpush.xpose.msra.mxu0 0.0
        %1169 = vmatpush.xpose.msra.mxu0 0.0
        %1170 = vmatpush.xpose.msra.mxu0 0.0
        %1171 = vmatpush.xpose.msra.mxu0 0.0
        %1172 = vmatpush.xpose.msra.mxu0 0.0
        %1173 = vmatpush.xpose.msra.mxu0 0.0
        %1174 = vmatpush.xpose.msra.mxu0 0.0
        %1175 = vmatpush.xpose.msra.mxu0 0.0
        %1176 = vmatpush.xpose.msra.mxu0 %v1160
        %1177 = vmatpush.xpose.msra.mxu0 %v1158
        %1178 = vmatmul.f32.gmra.mxu0 %v1154
        %v1179 = vpop.f32.mrf.mxu0
        %v1180 = vadd.f32 0.0, %v1179
        %1181 = vmatmul.f32.gmra.mxu0 %v1156
        %v1182 = vpop.f32.mrf.mxu0
        %v1183 = vadd.f32 0.0, %v1182
        %1184 = vdwg.mxu0
        %v1185 = vsel %vm754, %v1180, -1e+30
        %v1186 = vsel %vm755, %v1183, -1e+30
        %v1187 = vsel %vm798, %v1185, -inf
        %1188 = vmax.xlane.f32.xlu0 %v1187
        %v1189 = vpop.xlane.xlu0 %1188
        %v1190 = vsel %vm798, %v1186, -inf
        %1191 = vmax.xlane.f32.xlu0 %v1190
        %v1192 = vpop.xlane.xlu0 %1191
        %v1193 = vsub.f32 %v1185, %v1189
        %v1194 = vsub.f32 %v1186, %v1192
        %v1195 = vmul.f32 %v1193, 1.442695
        %v1196 = vpow.pop %v1195
        %v1197 = vmul.f32 %v1194, 1.442695
        %v1198 = vpow.pop %v1197
        %v1199 = vsel %vm798, %v1196, 0.0
        %1200 = vadd.xlane.f32.xlu0 %v1199
        %v1201 = vpop.xlane.xlu0 %1200
        %v1202 = vsel %vm798, %v1198, 0.0
        %1203 = vadd.xlane.f32.xlu0 %v1202
        %v1204 = vpop.xlane.xlu0 %1203
        %v1205 = vrcp.pop %v1201
        %v1206 = vrcp.pop %v1204
        %v1207 = vmul.f32 %v1196, %v1205
        %v1208 = vmul.f32 %v1198, %v1206
        %1209 = vrot.lane.b32.xlu0 %v743, 96
        %v1210 = vpop.permute.xlu0 %1209
        %1211 = vrot.lane.b32.xlu0 %v745, 96
        %v1212 = vpop.permute.xlu0 %1211
        %v1216 = vsel %vm798, %v1207, 0
        %v1219 = vsel %vm798, %v1208, 0
        %1221 = vmatpush.msra.mxu0 0.0
        %1222 = vmatpush.msra.mxu0 0.0
        %1223 = vmatpush.msra.mxu0 0.0
        %1224 = vmatpush.msra.mxu0 0.0
        %1225 = vmatpush.msra.mxu0 0.0
        %1226 = vmatpush.msra.mxu0 0.0
        %1227 = vmatpush.msra.mxu0 0.0
        %1228 = vmatpush.msra.mxu0 0.0
        %1229 = vmatpush.msra.mxu0 0.0
        %1230 = vmatpush.msra.mxu0 0.0
        %1231 = vmatpush.msra.mxu0 0.0
        %1232 = vmatpush.msra.mxu0 0.0
        %1233 = vmatpush.msra.mxu0 0.0
        %1234 = vmatpush.msra.mxu0 0.0
        %1235 = vmatpush.msra.mxu0 %v1212
        %1236 = vmatpush.msra.mxu0 %v1210
        %1237 = vmatmul.f32.gmra.mxu0 %v1216
        %v1238 = vpop.f32.mrf.mxu0
        %v1239 = vadd.f32 0.0, %v1238
        %1240 = vmatmul.f32.gmra.mxu0 %v1219
        %v1241 = vpop.f32.mrf.mxu0
        %v1242 = vadd.f32 0.0, %v1241
        %1243 = vdwg.mxu0
        %1244 = vrot.lane.b32.xlu0 %v747, 88
        %v1245 = vpop.permute.xlu0 %1244
        %1246 = vrot.lane.b32.xlu0 %v748, 88
        %v1247 = vpop.permute.xlu0 %1246
        %1248 = vrot.lane.b32.xlu0 %v729, 24
        %v1249 = vpop.permute.xlu0 %1248
        %1250 = vrot.lane.b32.xlu0 %v731, 24
        %v1251 = vpop.permute.xlu0 %1250
        %v1252 = vsel %vm762, %v1245, 0
        %v1254 = vsel %vm762, %v1247, 0
        %v1256 = vsel %vm762, %v1249, 0
        %v1258 = vsel %vm762, %v1251, 0
        %1260 = vmatpush.xpose.msra.mxu0 0.0
        %1261 = vmatpush.xpose.msra.mxu0 0.0
        %1262 = vmatpush.xpose.msra.mxu0 0.0
        %1263 = vmatpush.xpose.msra.mxu0 0.0
        %1264 = vmatpush.xpose.msra.mxu0 0.0
        %1265 = vmatpush.xpose.msra.mxu0 0.0
        %1266 = vmatpush.xpose.msra.mxu0 0.0
        %1267 = vmatpush.xpose.msra.mxu0 0.0
        %1268 = vmatpush.xpose.msra.mxu0 0.0
        %1269 = vmatpush.xpose.msra.mxu0 0.0
        %1270 = vmatpush.xpose.msra.mxu0 0.0
        %1271 = vmatpush.xpose.msra.mxu0 0.0
        %1272 = vmatpush.xpose.msra.mxu0 0.0
        %1273 = vmatpush.xpose.msra.mxu0 0.0
        %1274 = vmatpush.xpose.msra.mxu0 %v1258
        %1275 = vmatpush.xpose.msra.mxu0 %v1256
        %1276 = vmatmul.f32.gmra.mxu0 %v1252
        %v1277 = vpop.f32.mrf.mxu0
        %v1278 = vadd.f32 0.0, %v1277
        %1279 = vmatmul.f32.gmra.mxu0 %v1254
        %v1280 = vpop.f32.mrf.mxu0
        %v1281 = vadd.f32 0.0, %v1280
        %1282 = vdwg.mxu0
        %v1283 = vsel %vm754, %v1278, -1e+30
        %v1284 = vsel %vm755, %v1281, -1e+30
        %v1285 = vsel %vm798, %v1283, -inf
        %1286 = vmax.xlane.f32.xlu0 %v1285
        %v1287 = vpop.xlane.xlu0 %1286
        %v1288 = vsel %vm798, %v1284, -inf
        %1289 = vmax.xlane.f32.xlu0 %v1288
        %v1290 = vpop.xlane.xlu0 %1289
        %v1291 = vsub.f32 %v1283, %v1287
        %v1292 = vsub.f32 %v1284, %v1290
        %v1293 = vmul.f32 %v1291, 1.442695
        %v1294 = vpow.pop %v1293
        %v1295 = vmul.f32 %v1292, 1.442695
        %v1296 = vpow.pop %v1295
        %v1297 = vsel %vm798, %v1294, 0.0
        %1298 = vadd.xlane.f32.xlu0 %v1297
        %v1299 = vpop.xlane.xlu0 %1298
        %v1300 = vsel %vm798, %v1296, 0.0
        %1301 = vadd.xlane.f32.xlu0 %v1300
        %v1302 = vpop.xlane.xlu0 %1301
        %v1303 = vrcp.pop %v1299
        %v1304 = vrcp.pop %v1302
        %v1305 = vmul.f32 %v1294, %v1303
        %v1306 = vmul.f32 %v1296, %v1304
        %1307 = vrot.lane.b32.xlu0 %v743, 88
        %v1308 = vpop.permute.xlu0 %1307
        %1309 = vrot.lane.b32.xlu0 %v745, 88
        %v1310 = vpop.permute.xlu0 %1309
        %v1314 = vsel %vm798, %v1305, 0
        %v1317 = vsel %vm798, %v1306, 0
        %1319 = vmatpush.msra.mxu0 0.0
        %1320 = vmatpush.msra.mxu0 0.0
        %1321 = vmatpush.msra.mxu0 0.0
        %1322 = vmatpush.msra.mxu0 0.0
        %1323 = vmatpush.msra.mxu0 0.0
        %1324 = vmatpush.msra.mxu0 0.0
        %1325 = vmatpush.msra.mxu0 0.0
        %1326 = vmatpush.msra.mxu0 0.0
        %1327 = vmatpush.msra.mxu0 0.0
        %1328 = vmatpush.msra.mxu0 0.0
        %1329 = vmatpush.msra.mxu0 0.0
        %1330 = vmatpush.msra.mxu0 0.0
        %1331 = vmatpush.msra.mxu0 0.0
        %1332 = vmatpush.msra.mxu0 0.0
        %1333 = vmatpush.msra.mxu0 %v1310
        %1334 = vmatpush.msra.mxu0 %v1308
        %1335 = vmatmul.f32.gmra.mxu0 %v1314
        %v1336 = vpop.f32.mrf.mxu0
        %v1337 = vadd.f32 0.0, %v1336
        %1338 = vmatmul.f32.gmra.mxu0 %v1317
        %v1339 = vpop.f32.mrf.mxu0
        %v1340 = vadd.f32 0.0, %v1339
        %1341 = vdwg.mxu0
        %1342 = vrot.lane.b32.xlu0 %v747, 80
        %v1343 = vpop.permute.xlu0 %1342
        %1344 = vrot.lane.b32.xlu0 %v748, 80
        %v1345 = vpop.permute.xlu0 %1344
        %1346 = vrot.lane.b32.xlu0 %v729, 16
        %v1347 = vpop.permute.xlu0 %1346
        %1348 = vrot.lane.b32.xlu0 %v731, 16
        %v1349 = vpop.permute.xlu0 %1348
        %v1350 = vsel %vm762, %v1343, 0
        %v1352 = vsel %vm762, %v1345, 0
        %v1354 = vsel %vm762, %v1347, 0
        %v1356 = vsel %vm762, %v1349, 0
        %1358 = vmatpush.xpose.msra.mxu0 0.0
        %1359 = vmatpush.xpose.msra.mxu0 0.0
        %1360 = vmatpush.xpose.msra.mxu0 0.0
        %1361 = vmatpush.xpose.msra.mxu0 0.0
        %1362 = vmatpush.xpose.msra.mxu0 0.0
        %1363 = vmatpush.xpose.msra.mxu0 0.0
        %1364 = vmatpush.xpose.msra.mxu0 0.0
        %1365 = vmatpush.xpose.msra.mxu0 0.0
        %1366 = vmatpush.xpose.msra.mxu0 0.0
        %1367 = vmatpush.xpose.msra.mxu0 0.0
        %1368 = vmatpush.xpose.msra.mxu0 0.0
        %1369 = vmatpush.xpose.msra.mxu0 0.0
        %1370 = vmatpush.xpose.msra.mxu0 0.0
        %1371 = vmatpush.xpose.msra.mxu0 0.0
        %1372 = vmatpush.xpose.msra.mxu0 %v1356
        %1373 = vmatpush.xpose.msra.mxu0 %v1354
        %1374 = vmatmul.f32.gmra.mxu0 %v1350
        %v1375 = vpop.f32.mrf.mxu0
        %v1376 = vadd.f32 0.0, %v1375
        %1377 = vmatmul.f32.gmra.mxu0 %v1352
        %v1378 = vpop.f32.mrf.mxu0
        %v1379 = vadd.f32 0.0, %v1378
        %1380 = vdwg.mxu0
        %v1381 = vsel %vm754, %v1376, -1e+30
        %v1382 = vsel %vm755, %v1379, -1e+30
        %v1383 = vsel %vm798, %v1381, -inf
        %1384 = vmax.xlane.f32.xlu0 %v1383
        %v1385 = vpop.xlane.xlu0 %1384
        %v1386 = vsel %vm798, %v1382, -inf
        %1387 = vmax.xlane.f32.xlu0 %v1386
        %v1388 = vpop.xlane.xlu0 %1387
        %v1389 = vsub.f32 %v1381, %v1385
        %v1390 = vsub.f32 %v1382, %v1388
        %v1391 = vmul.f32 %v1389, 1.442695
        %v1392 = vpow.pop %v1391
        %v1393 = vmul.f32 %v1390, 1.442695
        %v1394 = vpow.pop %v1393
        %v1395 = vsel %vm798, %v1392, 0.0
        %1396 = vadd.xlane.f32.xlu0 %v1395
        %v1397 = vpop.xlane.xlu0 %1396
        %v1398 = vsel %vm798, %v1394, 0.0
        %1399 = vadd.xlane.f32.xlu0 %v1398
        %v1400 = vpop.xlane.xlu0 %1399
        %v1401 = vrcp.pop %v1397
        %v1402 = vrcp.pop %v1400
        %v1403 = vmul.f32 %v1392, %v1401
        %v1404 = vmul.f32 %v1394, %v1402
        %1405 = vrot.lane.b32.xlu0 %v743, 80
        %v1406 = vpop.permute.xlu0 %1405
        %1407 = vrot.lane.b32.xlu0 %v745, 80
        %v1408 = vpop.permute.xlu0 %1407
        %v1412 = vsel %vm798, %v1403, 0
        %v1415 = vsel %vm798, %v1404, 0
        %1417 = vmatpush.msra.mxu0 0.0
        %1418 = vmatpush.msra.mxu0 0.0
        %1419 = vmatpush.msra.mxu0 0.0
        %1420 = vmatpush.msra.mxu0 0.0
        %1421 = vmatpush.msra.mxu0 0.0
        %1422 = vmatpush.msra.mxu0 0.0
        %1423 = vmatpush.msra.mxu0 0.0
        %1424 = vmatpush.msra.mxu0 0.0
        %1425 = vmatpush.msra.mxu0 0.0
        %1426 = vmatpush.msra.mxu0 0.0
        %1427 = vmatpush.msra.mxu0 0.0
        %1428 = vmatpush.msra.mxu0 0.0
        %1429 = vmatpush.msra.mxu0 0.0
        %1430 = vmatpush.msra.mxu0 0.0
        %1431 = vmatpush.msra.mxu0 %v1408
        %1432 = vmatpush.msra.mxu0 %v1406
        %1433 = vmatmul.f32.gmra.mxu0 %v1412
        %v1434 = vpop.f32.mrf.mxu0
        %v1435 = vadd.f32 0.0, %v1434
        %1436 = vmatmul.f32.gmra.mxu0 %v1415
        %v1437 = vpop.f32.mrf.mxu0
        %v1438 = vadd.f32 0.0, %v1437
        %1439 = vdwg.mxu0
        %1440 = vrot.lane.b32.xlu0 %v747, 72
        %v1441 = vpop.permute.xlu0 %1440
        %1442 = vrot.lane.b32.xlu0 %v748, 72
        %v1443 = vpop.permute.xlu0 %1442
        %1444 = vrot.lane.b32.xlu0 %v729, 8
        %v1445 = vpop.permute.xlu0 %1444
        %1446 = vrot.lane.b32.xlu0 %v731, 8
        %v1447 = vpop.permute.xlu0 %1446
        %v1448 = vsel %vm762, %v1441, 0
        %v1450 = vsel %vm762, %v1443, 0
        %v1452 = vsel %vm762, %v1445, 0
        %v1454 = vsel %vm762, %v1447, 0
        %1456 = vmatpush.xpose.msra.mxu0 0.0
        %1457 = vmatpush.xpose.msra.mxu0 0.0
        %1458 = vmatpush.xpose.msra.mxu0 0.0
        %1459 = vmatpush.xpose.msra.mxu0 0.0
        %1460 = vmatpush.xpose.msra.mxu0 0.0
        %1461 = vmatpush.xpose.msra.mxu0 0.0
        %1462 = vmatpush.xpose.msra.mxu0 0.0
        %1463 = vmatpush.xpose.msra.mxu0 0.0
        %1464 = vmatpush.xpose.msra.mxu0 0.0
        %1465 = vmatpush.xpose.msra.mxu0 0.0
        %1466 = vmatpush.xpose.msra.mxu0 0.0
        %1467 = vmatpush.xpose.msra.mxu0 0.0
        %1468 = vmatpush.xpose.msra.mxu0 0.0
        %1469 = vmatpush.xpose.msra.mxu0 0.0
        %1470 = vmatpush.xpose.msra.mxu0 %v1454
        %1471 = vmatpush.xpose.msra.mxu0 %v1452
        %1472 = vmatmul.f32.gmra.mxu0 %v1448
        %v1473 = vpop.f32.mrf.mxu0
        %v1474 = vadd.f32 0.0, %v1473
        %1475 = vmatmul.f32.gmra.mxu0 %v1450
        %v1476 = vpop.f32.mrf.mxu0
        %v1477 = vadd.f32 0.0, %v1476
        %1478 = vdwg.mxu0
        %v1479 = vsel %vm754, %v1474, -1e+30
        %v1480 = vsel %vm755, %v1477, -1e+30
        %v1481 = vsel %vm798, %v1479, -inf
        %1482 = vmax.xlane.f32.xlu0 %v1481
        %v1483 = vpop.xlane.xlu0 %1482
        %v1484 = vsel %vm798, %v1480, -inf
        %1485 = vmax.xlane.f32.xlu0 %v1484
        %v1486 = vpop.xlane.xlu0 %1485
        %v1487 = vsub.f32 %v1479, %v1483
        %v1488 = vsub.f32 %v1480, %v1486
        %v1489 = vmul.f32 %v1487, 1.442695
        %v1490 = vpow.pop %v1489
        %v1491 = vmul.f32 %v1488, 1.442695
        %v1492 = vpow.pop %v1491
        %v1493 = vsel %vm798, %v1490, 0.0
        %1494 = vadd.xlane.f32.xlu0 %v1493
        %v1495 = vpop.xlane.xlu0 %1494
        %v1496 = vsel %vm798, %v1492, 0.0
        %1497 = vadd.xlane.f32.xlu0 %v1496
        %v1498 = vpop.xlane.xlu0 %1497
        %v1499 = vrcp.pop %v1495
        %v1500 = vrcp.pop %v1498
        %v1501 = vmul.f32 %v1490, %v1499
        %v1502 = vmul.f32 %v1492, %v1500
        %1503 = vrot.lane.b32.xlu0 %v743, 72
        %v1504 = vpop.permute.xlu0 %1503
        %1505 = vrot.lane.b32.xlu0 %v745, 72
        %v1506 = vpop.permute.xlu0 %1505
        %v1510 = vsel %vm798, %v1501, 0
        %v1513 = vsel %vm798, %v1502, 0
        %1515 = vmatpush.msra.mxu0 0.0
        %1516 = vmatpush.msra.mxu0 0.0
        %1517 = vmatpush.msra.mxu0 0.0
        %1518 = vmatpush.msra.mxu0 0.0
        %1519 = vmatpush.msra.mxu0 0.0
        %1520 = vmatpush.msra.mxu0 0.0
        %1521 = vmatpush.msra.mxu0 0.0
        %1522 = vmatpush.msra.mxu0 0.0
        %1523 = vmatpush.msra.mxu0 0.0
        %1524 = vmatpush.msra.mxu0 0.0
        %1525 = vmatpush.msra.mxu0 0.0
        %1526 = vmatpush.msra.mxu0 0.0
        %1527 = vmatpush.msra.mxu0 0.0
        %1528 = vmatpush.msra.mxu0 0.0
        %1529 = vmatpush.msra.mxu0 %v1506
        %1530 = vmatpush.msra.mxu0 %v1504
        %1531 = vmatmul.f32.gmra.mxu0 %v1510
        %v1532 = vpop.f32.mrf.mxu0
        %v1533 = vadd.f32 0.0, %v1532
        %1534 = vmatmul.f32.gmra.mxu0 %v1513
        %v1535 = vpop.f32.mrf.mxu0
        %v1536 = vadd.f32 0.0, %v1535
        %1537 = vdwg.mxu0
        %1540 = vrot.lane.b32.xlu0 %v945, 8
        %v1541 = vpop.permute.xlu0 %1540
        %1542 = vrot.lane.b32.xlu0 %v948, 8
        %v1543 = vpop.permute.xlu0 %1542
        %1548 = vrot.lane.b32.xlu0 %v1043, 16
        %v1549 = vpop.permute.xlu0 %1548
        %1550 = vrot.lane.b32.xlu0 %v1046, 16
        %v1551 = vpop.permute.xlu0 %1550
        %1556 = vrot.lane.b32.xlu0 %v1141, 24
        %v1557 = vpop.permute.xlu0 %1556
        %1558 = vrot.lane.b32.xlu0 %v1144, 24
        %v1559 = vpop.permute.xlu0 %1558
        %1564 = vrot.lane.b32.xlu0 %v1239, 32
        %v1565 = vpop.permute.xlu0 %1564
        %1566 = vrot.lane.b32.xlu0 %v1242, 32
        %v1567 = vpop.permute.xlu0 %1566
        %1572 = vrot.lane.b32.xlu0 %v1337, 40
        %v1573 = vpop.permute.xlu0 %1572
        %1574 = vrot.lane.b32.xlu0 %v1340, 40
        %v1575 = vpop.permute.xlu0 %1574
        %1580 = vrot.lane.b32.xlu0 %v1435, 48
        %v1581 = vpop.permute.xlu0 %1580
        %1582 = vrot.lane.b32.xlu0 %v1438, 48
        %v1583 = vpop.permute.xlu0 %1582
        %1588 = vrot.lane.b32.xlu0 %v1533, 56
        %v1589 = vpop.permute.xlu0 %1588
        %1590 = vrot.lane.b32.xlu0 %v1536, 56
        %v1591 = vpop.permute.xlu0 %1590
        %v1594 = vsel %vm762, %v845, %v1541
        %v1595 = vsel %vm762, %v848, %v1543
        %v1596 = vsel %vm798, %v1594, %v1549
        %v1597 = vsel %vm798, %v1595, %v1551
        %vm1598 = vcmask 195584
        %v1599 = vsel %vm1598, %v1596, %v1557
        %v1600 = vsel %vm1598, %v1597, %v1559
        %vm1601 = vcmask 261120
        %v1602 = vsel %vm1601, %v1599, %v1565
        %v1603 = vsel %vm1601, %v1600, %v1567
        %vm1604 = vcmask 326656
        %v1605 = vsel %vm1604, %v1602, %v1573
        %v1606 = vsel %vm1604, %v1603, %v1575
        %vm1607 = vcmask 392192
        %v1608 = vsel %vm1607, %v1605, %v1581
        %v1609 = vsel %vm1607, %v1606, %v1583
        %vm1610 = vcmask 457728
        %v1611 = vsel %vm1610, %v1608, %v1589
        %v1612 = vsel %vm1610, %v1609, %v1591
        %v1613 = vpack.c.bf16 %v1612, %v1611
        %v1614 = vld [vmem:[#allocation7] sm:$0xf]
        %v1615 = vld [vmem:[#allocation7 + $0x4] sm:$0xf]
        %v1616 = vld [vmem:[#allocation7 + $0x8] sm:$0xf]
        %v1617 = vld [vmem:[#allocation7 + $0xc] sm:$0xf]
        %v1618 = vld [vmem:[#allocation7 + $0x10] sm:$0xf]
        %v1619 = vld [vmem:[#allocation7 + $0x14] sm:$0xf]
        %v1620 = vld [vmem:[#allocation7 + $0x18] sm:$0xf]
        %v1621 = vld [vmem:[#allocation7 + $0x1c] sm:$0xf]
        %v1622 = vld [vmem:[#allocation9] sm:$0x1]
        %v1623 = vunpack.c.l.bf16 %v1622
        %v1624 = vperm.slane %v1623, 0
        %v1633 = vunpack.c.l.b16 %v1614
        %v1634 = vunpack.c.l.b16 %v1615
        %v1635 = vunpack.c.l.b16 %v1616
        %v1636 = vunpack.c.l.b16 %v1617
        %v1637 = vunpack.c.l.b16 %v1618
        %v1638 = vunpack.c.l.b16 %v1619
        %v1639 = vunpack.c.l.b16 %v1620
        %v1640 = vunpack.c.l.b16 %v1621
        %v1641 = vpack.c.b16 %v1634, %v1633
        %v1642 = vpack.c.b16 %v1636, %v1635
        %v1643 = vpack.c.b16 %v1638, %v1637
        %v1644 = vpack.c.b16 %v1640, %v1639
        %v1650 = vsel %vm596, %v1613, 0
        %1652 = vmatpush.bf16.msra.mxu0 0
        %1653 = vmatpush.bf16.msra.mxu0 0
        %1654 = vmatpush.bf16.msra.mxu0 0
        %1655 = vmatpush.bf16.msra.mxu0 0
        %1656 = vmatpush.bf16.msra.mxu0 %v1644
        %1657 = vmatpush.bf16.msra.mxu0 %v1643
        %1658 = vmatpush.bf16.msra.mxu0 %v1642
        %1659 = vmatpush.bf16.msra.mxu0 %v1641
        %1660 = vmatmul.bf16.gmra.mxu0 %v1650
        %v1661 = vpop.f32.mrf.mxu0
        %v1662 = vadd.f32 %v1624, %v1661
        %v1663 = vpop.f32.mrf.mxu0
        %v1664 = vadd.f32 %v1624, %v1663
        %1665 = vdwg.mxu0
        %v1666 = vadd.f32 %v594, %v1662
        %v1667 = vadd.f32 %v595, %v1664
        %v1668 = vsel %vm596, %v1666, 0.0
        %1669 = vadd.xlane.f32.xlu0 %v1668
        %v1670 = vpop.xlane.xlu0 %1669
        %v1671 = vsel %vm596, %v1667, 0.0
        %1672 = vadd.xlane.f32.xlu0 %v1671
        %v1673 = vpop.xlane.xlu0 %1672
        %v1674 = vmul.f32 %v1670, %v609
        %v1675 = vmul.f32 %v1673, %v609
        %v1676 = vsub.f32 %v1666, %v1674
        %v1677 = vsub.f32 %v1667, %v1675
        %v1678 = vmul.f32 %v1676, %v1676
        %v1679 = vmul.f32 %v1677, %v1677
        %v1680 = vsel %vm596, %v1678, 0.0
        %1681 = vadd.xlane.f32.xlu0 %v1680
        %v1682 = vpop.xlane.xlu0 %1681
        %v1683 = vsel %vm596, %v1679, 0.0
        %1684 = vadd.xlane.f32.xlu0 %v1683
        %v1685 = vpop.xlane.xlu0 %1684
        %v1686 = vmul.f32 %v1682, %v609
        %v1687 = vmul.f32 %v1685, %v609
        %v1688 = vadd.f32 %v1686, 1e-05
        %v1689 = vadd.f32 %v1687, 1e-05
        %v1690 = vrsqrt.pop %v1688
        %v1691 = vmul.f32 %v1690, %v1688
        %v1692 = vmul.f32 %v1691, %v1690
        %v1693 = vmul.f32 0.5, %v1692
        %v1694 = vsub.f32 1.5, %v1693
        %v1695 = vmul.f32 %v1690, %v1694
        %vm1696 = vweird.f32 %v1688
        %vm1697 = vweird.f32 %v1690
        %vm1698 = vmor %vm1696, %vm1697
        %v1699 = vsel %vm1698, %v1690, %v1695
        %v1700 = vrsqrt.pop %v1689
        %v1701 = vmul.f32 %v1700, %v1689
        %v1702 = vmul.f32 %v1701, %v1700
        %v1703 = vmul.f32 0.5, %v1702
        %v1704 = vsub.f32 1.5, %v1703
        %v1705 = vmul.f32 %v1700, %v1704
        %vm1706 = vweird.f32 %v1689
        %vm1707 = vweird.f32 %v1700
        %vm1708 = vmor %vm1706, %vm1707
        %v1709 = vsel %vm1708, %v1700, %v1705
        %v1710 = vmul.f32 %v1676, %v1699
        %v1711 = vmul.f32 %v1677, %v1709
        %v1712 = vld [vmem:[#allocation10] sm:$0x1]
        %v1713 = vunpack.c.l.bf16 %v1712
        %v1714 = vperm.slane %v1713, 0
        %v1715 = vmul.f32 %v1710, %v1714
        %v1716 = vmul.f32 %v1711, %v1714
        %v1717 = vld [vmem:[#allocation12] sm:$0x1]
        %v1718 = vunpack.c.l.bf16 %v1717
        %v1719 = vperm.slane %v1718, 0
        %v1720 = vadd.f32 %v1715, %v1719
        %v1721 = vadd.f32 %v1716, %v1719
        %v1722 = vpack.c.bf16 %v1721, %v1720
        %v1723 = vld [vmem:[#allocation13] sm:$0xff]
        %v1724 = vld [vmem:[#allocation13 + $0x8] sm:$0xff]
        %v1725 = vld [vmem:[#allocation13 + $0x10] sm:$0xff]
        %v1726 = vld [vmem:[#allocation13 + $0x18] sm:$0xff]
        %v1727 = vld [vmem:[#allocation13 + $0x20] sm:$0xff]
        %v1728 = vld [vmem:[#allocation13 + $0x28] sm:$0xff]
        %v1729 = vld [vmem:[#allocation13 + $0x30] sm:$0xff]
        %v1730 = vld [vmem:[#allocation13 + $0x38] sm:$0xff]
        %v1731 = vld [vmem:[#allocation15] sm:$0x3]
        %v1732 = vunpack.c.l.bf16 %v1731
        %v1734 = vperm.slane %v1732, 0
        %v1735 = vperm.slane %v1732, 2
        %v1738 = vperm.slane %v1734, 0
        %v1739 = vperm.slane %v1735, 0
        %v1748 = vunpack.c.l.b16 %v1723
        %v1749 = vunpack.c.h.b16 %v1723
        %v1750 = vunpack.c.l.b16 %v1724
        %v1751 = vunpack.c.h.b16 %v1724
        %v1752 = vunpack.c.l.b16 %v1725
        %v1753 = vunpack.c.h.b16 %v1725
        %v1754 = vunpack.c.l.b16 %v1726
        %v1755 = vunpack.c.h.b16 %v1726
        %v1756 = vunpack.c.l.b16 %v1727
        %v1757 = vunpack.c.h.b16 %v1727
        %v1758 = vunpack.c.l.b16 %v1728
        %v1759 = vunpack.c.h.b16 %v1728
        %v1760 = vunpack.c.l.b16 %v1729
        %v1761 = vunpack.c.h.b16 %v1729
        %v1762 = vunpack.c.l.b16 %v1730
        %v1763 = vunpack.c.h.b16 %v1730
        %v1764 = vpack.c.b16 %v1750, %v1748
        %v1765 = vpack.c.b16 %v1751, %v1749
        %v1766 = vpack.c.b16 %v1754, %v1752
        %v1767 = vpack.c.b16 %v1755, %v1753
        %v1768 = vpack.c.b16 %v1758, %v1756
        %v1769 = vpack.c.b16 %v1759, %v1757
        %v1770 = vpack.c.b16 %v1762, %v1760
        %v1771 = vpack.c.b16 %v1763, %v1761
        %v1781 = vsel %vm596, %v1722, 0
        %1783 = vmatpush.bf16.msra.mxu0 0
        %1784 = vmatpush.bf16.msra.mxu0 0
        %1785 = vmatpush.bf16.msra.mxu0 0
        %1786 = vmatpush.bf16.msra.mxu0 0
        %1787 = vmatpush.bf16.msra.mxu0 %v1770
        %1788 = vmatpush.bf16.msra.mxu0 %v1768
        %1789 = vmatpush.bf16.msra.mxu0 %v1766
        %1790 = vmatpush.bf16.msra.mxu0 %v1764
        %1791 = vmatmul.bf16.gmra.mxu0 %v1781
        %v1792 = vpop.f32.mrf.mxu0
        %v1793 = vadd.f32 %v1738, %v1792
        %v1794 = vpop.f32.mrf.mxu0
        %v1795 = vadd.f32 %v1738, %v1794
        %1796 = vdwg.mxu0
        %1797 = vmatpush.bf16.msra.mxu0 0
        %1798 = vmatpush.bf16.msra.mxu0 0
        %1799 = vmatpush.bf16.msra.mxu0 0
        %1800 = vmatpush.bf16.msra.mxu0 0
        %1801 = vmatpush.bf16.msra.mxu0 %v1771
        %1802 = vmatpush.bf16.msra.mxu0 %v1769
        %1803 = vmatpush.bf16.msra.mxu0 %v1767
        %1804 = vmatpush.bf16.msra.mxu0 %v1765
        %1805 = vmatmul.bf16.gmra.mxu0 %v1781
        %v1806 = vpop.f32.mrf.mxu0
        %v1807 = vadd.f32 %v1739, %v1806
        %v1808 = vpop.f32.mrf.mxu0
        %v1809 = vadd.f32 %v1739, %v1808
        %1810 = vdwg.mxu0
        %v1811 = vmul.f32 %v1793, 0.5
        %v1812 = vmul.f32 %v1807, 0.5
        %v1813 = vmul.f32 %v1795, 0.5
        %v1814 = vmul.f32 %v1809, 0.5
        %v1815 = vmul.f32 %v1793, 0.044715
        %v1816 = vmul.f32 %v1807, 0.044715
        %v1817 = vmul.f32 %v1795, 0.044715
        %v1818 = vmul.f32 %v1809, 0.044715
        %v1819 = vmul.f32 %v1815, %v1793
        %v1820 = vmul.f32 %v1816, %v1807
        %v1821 = vmul.f32 %v1817, %v1795
        %v1822 = vmul.f32 %v1818, %v1809
        %v1823 = vmul.f32 %v1819, %v1793
        %v1824 = vmul.f32 %v1820, %v1807
        %v1825 = vmul.f32 %v1821, %v1795
        %v1826 = vmul.f32 %v1822, %v1809
        %v1827 = vadd.f32 %v1793, %v1823
        %v1828 = vadd.f32 %v1807, %v1824
        %v1829 = vadd.f32 %v1795, %v1825
        %v1830 = vadd.f32 %v1809, %v1826
        %v1831 = vmul.f32 %v1827, 0.7978846
        %v1832 = vmul.f32 %v1828, 0.7978846
        %v1833 = vmul.f32 %v1829, 0.7978846
        %v1834 = vmul.f32 %v1830, 0.7978846
        %v1835 = vtanh.pop %v1831
        %v1836 = vtanh.pop %v1832
        %v1837 = vtanh.pop %v1833
        %v1838 = vtanh.pop %v1834
        %v1839 = vadd.f32 %v1835, 1.0
        %v1840 = vadd.f32 %v1836, 1.0
        %v1841 = vadd.f32 %v1837, 1.0
        %v1842 = vadd.f32 %v1838, 1.0
        %v1843 = vmul.f32 %v1811, %v1839
        %v1844 = vmul.f32 %v1812, %v1840
        %v1845 = vmul.f32 %v1813, %v1841
        %v1846 = vmul.f32 %v1814, %v1842
        %v1847 = vpack.c.bf16 %v1845, %v1843
        %v1848 = vpack.c.bf16 %v1846, %v1844
        %v1849 = vld [vmem:[%s11] sm:$0xf]
        %v1850 = vld [vmem:[%s11 + $0x4] sm:$0xf]
        %v1851 = vld [vmem:[%s11 + $0x8] sm:$0xf]
        %v1852 = vld [vmem:[%s11 + $0xc] sm:$0xf]
        %v1853 = vld [vmem:[%s11 + $0x10] sm:$0xf]
        %v1854 = vld [vmem:[%s11 + $0x14] sm:$0xf]
        %v1855 = vld [vmem:[%s11 + $0x18] sm:$0xf]
        %v1856 = vld [vmem:[%s11 + $0x1c] sm:$0xf]
        %v1857 = vld [vmem:[%s11 + $0x20] sm:$0xf]
        %v1858 = vld [vmem:[%s11 + $0x24] sm:$0xf]
        %v1859 = vld [vmem:[%s11 + $0x28] sm:$0xf]
        %v1860 = vld [vmem:[%s11 + $0x2c] sm:$0xf]
        %v1861 = vld [vmem:[%s11 + $0x30] sm:$0xf]
        %v1862 = vld [vmem:[%s11 + $0x34] sm:$0xf]
        %v1863 = vld [vmem:[%s11 + $0x38] sm:$0xf]
        %v1864 = vld [vmem:[%s11 + $0x3c] sm:$0xf]
        %v1865 = vld [vmem:[%s11 + $0x40] sm:$0xf]
        %v1866 = vld [vmem:[%s11 + $0x44] sm:$0xf]
        %v1867 = vld [vmem:[%s11 + $0x48] sm:$0xf]
        %v1868 = vld [vmem:[%s11 + $0x4c] sm:$0xf]
        %v1869 = vld [vmem:[%s11 + $0x50] sm:$0xf]
        %v1870 = vld [vmem:[%s11 + $0x54] sm:$0xf]
        %v1871 = vld [vmem:[%s11 + $0x58] sm:$0xf]
        %v1872 = vld [vmem:[%s11 + $0x5c] sm:$0xf]
        %v1873 = vld [vmem:[%s11 + $0x60] sm:$0xf]
        %v1874 = vld [vmem:[%s11 + $0x64] sm:$0xf]
        %v1875 = vld [vmem:[%s11 + $0x68] sm:$0xf]
        %v1876 = vld [vmem:[%s11 + $0x6c] sm:$0xf]
        %v1877 = vld [vmem:[%s11 + $0x70] sm:$0xf]
        %v1878 = vld [vmem:[%s11 + $0x74] sm:$0xf]
        %v1879 = vld [vmem:[%s11 + $0x78] sm:$0xf]
        %v1880 = vld [vmem:[%s11 + $0x7c] sm:$0xf]
        %v1881 = vld [vmem:[#allocation16] sm:$0x1]
        %v1882 = vunpack.c.l.bf16 %v1881
        %v1883 = vperm.slane %v1882, 0
        %v1916 = vunpack.c.l.b16 %v1849
        %v1917 = vunpack.c.l.b16 %v1850
        %v1918 = vunpack.c.l.b16 %v1851
        %v1919 = vunpack.c.l.b16 %v1852
        %v1920 = vunpack.c.l.b16 %v1853
        %v1921 = vunpack.c.l.b16 %v1854
        %v1922 = vunpack.c.l.b16 %v1855
        %v1923 = vunpack.c.l.b16 %v1856
        %v1924 = vunpack.c.l.b16 %v1857
        %v1925 = vunpack.c.l.b16 %v1858
        %v1926 = vunpack.c.l.b16 %v1859
        %v1927 = vunpack.c.l.b16 %v1860
        %v1928 = vunpack.c.l.b16 %v1861
        %v1929 = vunpack.c.l.b16 %v1862
        %v1930 = vunpack.c.l.b16 %v1863
        %v1931 = vunpack.c.l.b16 %v1864
        %v1932 = vunpack.c.l.b16 %v1865
        %v1933 = vunpack.c.l.b16 %v1866
        %v1934 = vunpack.c.l.b16 %v1867
        %v1935 = vunpack.c.l.b16 %v1868
        %v1936 = vunpack.c.l.b16 %v1869
        %v1937 = vunpack.c.l.b16 %v1870
        %v1938 = vunpack.c.l.b16 %v1871
        %v1939 = vunpack.c.l.b16 %v1872
        %v1940 = vunpack.c.l.b16 %v1873
        %v1941 = vunpack.c.l.b16 %v1874
        %v1942 = vunpack.c.l.b16 %v1875
        %v1943 = vunpack.c.l.b16 %v1876
        %v1944 = vunpack.c.l.b16 %v1877
        %v1945 = vunpack.c.l.b16 %v1878
        %v1946 = vunpack.c.l.b16 %v1879
        %v1947 = vunpack.c.l.b16 %v1880
        %v1948 = vpack.c.b16 %v1917, %v1916
        %v1949 = vpack.c.b16 %v1919, %v1918
        %v1950 = vpack.c.b16 %v1921, %v1920
        %v1951 = vpack.c.b16 %v1923, %v1922
        %v1952 = vpack.c.b16 %v1925, %v1924
        %v1953 = vpack.c.b16 %v1927, %v1926
        %v1954 = vpack.c.b16 %v1929, %v1928
        %v1955 = vpack.c.b16 %v1931, %v1930
        %v1956 = vpack.c.b16 %v1933, %v1932
        %v1957 = vpack.c.b16 %v1935, %v1934
        %v1958 = vpack.c.b16 %v1937, %v1936
        %v1959 = vpack.c.b16 %v1939, %v1938
        %v1960 = vpack.c.b16 %v1941, %v1940
        %v1961 = vpack.c.b16 %v1943, %v1942
        %v1962 = vpack.c.b16 %v1945, %v1944
        %v1963 = vpack.c.b16 %v1947, %v1946
        %1980 = vmatpush.bf16.msra.mxu0 %v1955
        %1981 = vmatpush.bf16.msra.mxu0 %v1954
        %1982 = vmatpush.bf16.msra.mxu0 %v1953
        %1983 = vmatpush.bf16.msra.mxu0 %v1952
        %1984 = vmatpush.bf16.msra.mxu0 %v1951
        %1985 = vmatpush.bf16.msra.mxu0 %v1950
        %1986 = vmatpush.bf16.msra.mxu0 %v1949
        %1987 = vmatpush.bf16.msra.mxu0 %v1948
        %1988 = vmatmul.bf16.gmra.mxu0 %v1847
        %v1989 = vpop.f32.mrf.mxu0
        %v1990 = vadd.f32 %v1883, %v1989
        %v1991 = vpop.f32.mrf.mxu0
        %v1992 = vadd.f32 %v1883, %v1991
        %1993 = vdwg.mxu0
        %1994 = vmatpush.bf16.msra.mxu0 %v1963
        %1995 = vmatpush.bf16.msra.mxu0 %v1962
        %1996 = vmatpush.bf16.msra.mxu0 %v1961
        %1997 = vmatpush.bf16.msra.mxu0 %v1960
        %1998 = vmatpush.bf16.msra.mxu0 %v1959
        %1999 = vmatpush.bf16.msra.mxu0 %v1958
        %2000 = vmatpush.bf16.msra.mxu0 %v1957
        %2001 = vmatpush.bf16.msra.mxu0 %v1956
        %2002 = vmatmul.bf16.gmra.mxu0 %v1848
        %v2003 = vpop.f32.mrf.mxu0
        %v2004 = vadd.f32 %v1990, %v2003
        %v2005 = vpop.f32.mrf.mxu0
        %v2006 = vadd.f32 %v1992, %v2005
        %2007 = vdwg.mxu0
        %v2008 = vadd.f32 %v1666, %v2004
        %v2009 = vadd.f32 %v1667, %v2006
        %v2010 = vpack.c.bf16 %v2008, %v2008
        %v2011 = vpack.c.bf16 %v2009, %v2009
        %vm2012 = vcmask 519168
        %2013 = vst.msk [vmem:[%s590] sm:$0xf] %vm2012, %v2010
        %2014 = vst.msk [vmem:[%s590 + $0x4] sm:$0xf] %vm2012, %v2011
        %p2015 = scmp.lt.s32.totalorder %s30, 1
        %s2016 = scalar_select %p2015, %s30, 1
        %s2017 = smul.addr %s2016, 2
        %s2018 = smul.addr %s2017, 4
        %s2019 = scalar_lea.vmem %s13, %s2018
        // Predicated region
        $region113: #{amt_forward.14} parent=71 // pred_check
          %p2020 = pneg %p326
        $region114: #{amt_forward.14} parent=71 // pred_check_branch
          %2022 = sbr.rel (%p2020) target = $region116
        $region115: #{amt_forward.14} parent=71 // pred_region
          _
        $region116: #{amt_forward.14} parent=71 // pred_fallthru
          _
      $region72: #{amt_forward.14} parent=5 // pred_fallthru
        _
      %p2023 = scmp.le.s32.totalorder 2, %s25
      // Predicated region
      $region117: #{amt_forward.14} parent=5 // pred_check
        %p2024 = pneg %p2023
      $region118: #{amt_forward.14} parent=5 // pred_check_branch
        %2026 = sbr.rel (%p2024) target = $region120
      $region119: #{amt_forward.14} parent=5 // pred_region
        %s2027 = ssub.s32 %s25, 2
        // Predicated region
        $region121: #{amt_forward.14} parent=119 // pred_check
          %p2028 = pneg %p332
        $region122: #{amt_forward.14} parent=119 // pred_check_branch
          %2030 = sbr.rel (%p2028) target = $region124
        $region123: #{amt_forward.14} parent=119 // pred_region
          %p2031 = scmp.lt.s32.totalorder %s31, 1
          %s2032 = scalar_select %p2031, %s31, 1
          %s2033 = smul.addr %s2032, 2
          %s2034 = smul.addr %s2033, 4
          %s2035 = scalar_lea.vmem %s13, %s2034
        $region124: #{amt_forward.14} parent=119 // pred_fallthru
          _
      $region120: #{amt_forward.14} parent=5 // pred_fallthru
        _
    $region6: #{amt_forward.14} parent=1 // loop_footer
      %s29 = sadd.s32 1, %s25
    $region7: #{amt_forward.14} parent=1 // loop_footer_branch
      %24 = sbr.rel target = $region3
    $region8: #{amt_forward.14} parent=1 // loop_exit
      _
    %2036 = vsyncpa [#allocation3], 1
    %s2037 = scalar_lea.sflag [#allocation3], 1
    %2038 = vsyncpa %s2037, 1
    %2039 = vsyncpa [#allocation5], 1
    %2040 = vsyncpa [#allocation8], 1
    %2041 = vsyncpa [#allocation11], 1
    %2042 = vsyncpa [#allocation14], 1
    %2043 = vsyncpa [#allocation17], 1

// kernel: amt_forward.11
$region0: #{amt_forward.11}
  #allocation0 [shape = 'u32[]', space=smem, size = 0x4, offset = 0x4, fixed_abs, tag = 'smem constant byte address 0x4 - core index']
  #allocation1 [shape = 'u32[72,128]{1,0:T(1,128)}', space=vmem, size = 0x9000, scoped, tag = 'internal scratch']
  %s0 = inlined_call_operand.vmem [shape: bf16[2,16,64], index: 0, kind: input, shape index: {}]
  %s1 = inlined_call_operand.hbm [shape: bf16[1,64], index: 1, kind: input, shape index: {}]
  %s2 = inlined_call_operand.hbm [shape: bf16[1,64], index: 2, kind: input, shape index: {}]
  %s3 = inlined_call_operand.vmem [shape: bf16[64,192], index: 3, kind: input, shape index: {}]
  %s4 = inlined_call_operand.hbm [shape: bf16[1,192], index: 4, kind: input, shape index: {}]
  %s5 = inlined_call_operand.vmem [shape: bf16[64,64], index: 5, kind: input, shape index: {}]
  %s6 = inlined_call_operand.hbm [shape: bf16[1,64], index: 6, kind: input, shape index: {}]
  %s7 = inlined_call_operand.hbm [shape: bf16[1,64], index: 7, kind: input, shape index: {}]
  %s8 = inlined_call_operand.hbm [shape: bf16[1,64], index: 8, kind: input, shape index: {}]
  %s9 = inlined_call_operand.vmem [shape: bf16[64,256], index: 9, kind: input, shape index: {}]
  %s10 = inlined_call_operand.hbm [shape: bf16[1,256], index: 10, kind: input, shape index: {}]
  %s11 = inlined_call_operand.vmem [shape: bf16[256,64], index: 11, kind: input, shape index: {}]
  %s12 = inlined_call_operand.hbm [shape: bf16[1,64], index: 12, kind: input, shape index: {}]
  %s13 = inlined_call_operand.vmem [shape: bf16[2,16,64], index: 13, kind: output, shape index: {}]
  %s14 = sld [smem:[#allocation0]]
  $region117: #{amt_forward.11} parent=0
    _
  %s16 = ssub.s32 1, %s14
  %s17 = scalar_select 0, %s16, %s14
  $region1: #{amt_forward.11} parent=0
    #allocation2 [shape = 'u8[512]{0}', space=vmem, size = 0x400, scoped, tag = 'input window, operand 1, single buffered']
    #allocation3 [shape = 's32[2]{0}', space=sflag, size = 0x8, scoped, tag = 'scoped memory for amt_forward.11']
    #allocation4 [shape = 'u8[512]{0}', space=vmem, size = 0x400, scoped, tag = 'input window, operand 2, single buffered']
    #allocation5 [shape = 's32[1]{0}', space=sflag, size = 0x4, scoped, tag = 'scoped memory for amt_forward.11']
    #allocation6 [shape = 'u8[1024]{0}', space=vmem, size = 0x400, scoped, tag = 'input window, operand 4, single buffered']
    #allocation7 [shape = 'u8[512]{0}', space=vmem, size = 0x400, scoped, tag = 'input window, operand 6, single buffered']
    #allocation8 [shape = 's32[1]{0}', space=sflag, size = 0x4, scoped, tag = 'scoped memory for amt_forward.11']
    #allocation9 [shape = 'u8[512]{0}', space=vmem, size = 0x400, scoped, tag = 'input window, operand 7, single buffered']
    #allocation10 [shape = 'u8[512]{0}', space=vmem, size = 0x400, scoped, tag = 'input window, operand 8, single buffered']
    #allocation11 [shape = 's32[1]{0}', space=sflag, size = 0x4, scoped, tag = 'scoped memory for amt_forward.11']
    #allocation12 [shape = 'u8[1024]{0}', space=vmem, size = 0x400, scoped, tag = 'input window, operand 10, single buffered']
    #allocation13 [shape = 'u8[512]{0}', space=vmem, size = 0x400, scoped, tag = 'input window, operand 12, single buffered']
    #allocation14 [shape = 's32[1]{0}', space=sflag, size = 0x4, scoped, tag = 'scoped memory for amt_forward.11']
    %18 = vsyncpa [#allocation3], 0
    %19 = vsyncpa [#allocation5], 0
    %20 = vsyncpa [#allocation8], 0
    %21 = vsyncpa [#allocation11], 0
    %22 = vsyncpa [#allocation14], 0
    loop: start=0, step=1, limit=4
    $region2: #{amt_forward.11} parent=1 // loop_pre_header
      _
    $region3: #{amt_forward.11} parent=1 // loop_header
      %s24 = sphi 0, %s28
      %p25 = scmp.ge.s32.totalorder %s24, 4
      %s34 = sphi 0, %s36
      %s37 = sphi 0, %s34
      %s38 = sphi 0, %s37
      %s54 = sphi 0, %s38
      %s58 = sphi 0, %s58
      %s60 = sphi 0, %s58
      %s61 = sphi 0, %s60
      %s75 = sphi 0, %s61
      %s79 = sphi 0, %s79
      %s81 = sphi 0, %s79
      %s82 = sphi 0, %s81
      %s96 = sphi 0, %s82
      %s100 = sphi 0, %s100
      %s102 = sphi 0, %s100
      %s103 = sphi 0, %s102
      %s117 = sphi 0, %s103
      %s121 = sphi 0, %s121
      %s123 = sphi 0, %s121
      %s124 = sphi 0, %s123
      %s138 = sphi 0, %s124
      %s142 = sphi 0, %s142
      %s144 = sphi 0, %s142
      %s145 = sphi 0, %s144
      %s159 = sphi 0, %s145
      %s163 = sphi 0, %s163
      %s165 = sphi 0, %s163
      %s166 = sphi 0, %s165
      %s180 = sphi 0, %s166
      %s184 = sphi 0, %s184
      %s186 = sphi 0, %s184
      %s187 = sphi 0, %s186
      %s201 = sphi 0, %s187
      %s205 = sphi 0, %s205
      %s207 = sphi 0, %s205
      %s208 = sphi 0, %s207
      %s222 = sphi 0, %s208
      %s226 = sphi 0, %s226
      %s228 = sphi 0, %s226
      %s229 = sphi 0, %s228
      %s243 = sphi 0, %s229
      %s247 = sphi 0, %s247
      %s249 = sphi 0, %s247
      %s250 = sphi 0, %s249
      %s264 = sphi 0, %s250
      %s268 = sphi 0, %s268
      %s270 = sphi 0, %s268
      %s271 = sphi 0, %s270
      %s285 = sphi 0, %s271
      %s289 = sphi 0, %s289
      %s291 = sphi 0, %s289
      %s292 = sphi 0, %s291
      %s306 = sphi 0, %s292
      %s312 = sphi 0, %s314
      %s315 = sphi 0, %s312
      %s316 = sphi 0, %s315
      %s332 = sphi 0, %s316
    $region4: #{amt_forward.11} parent=1 // loop_header_branch
      %27 = sbr.rel (%p25) target = $region8
    $region5: #{amt_forward.11} parent=1 // loop_body
      %s29 = ssub.s32 %s24, 1
      %s30 = ssub.s32 %s24, 2
      %s31 = sadd.s32 %s24, 1
      %s32 = ssub.s32 %s24, %s31
      %p33 = scmp.eq.s32.totalorder %s32, 0
      %s35 = sadd.s32 %s34, 1
      %s36 = scalar_select %p33, %s34, %s35
      %p39 = pneg %p33
      %p40 = scmp.eq.s32.totalorder %s24, 1
      %p41 = por %p39, %p40
      %p42 = scmp.ne.s32.totalorder %s34, %s37
      %p43 = scmp.eq.s32.totalorder %s24, 0
      %p44 = por %p42, %p43
      %p45 = scmp.ne.s32.totalorder %s34, %s37
      %p46 = scmp.eq.s32.totalorder %s29, 1
      %p47 = por %p45, %p46
      %p48 = scmp.ne.s32.totalorder %s37, %s38
      %p49 = scmp.eq.s32.totalorder %s29, 0
      %p50 = por %p48, %p49
      %p51 = scmp.ne.s32.totalorder %s37, %s38
      %p52 = scmp.eq.s32.totalorder %s30, 1
      %p53 = por %p51, %p52
      %p55 = scmp.ne.s32.totalorder %s38, %s54
      %p56 = scmp.eq.s32.totalorder %s30, 0
      %p57 = por %p55, %p56
      %s59 = sadd.s32 %s58, 1
      %p62 = scmp.eq.s32.totalorder %s24, 1
      %p63 = scmp.ne.s32.totalorder %s58, %s60
      %p64 = scmp.eq.s32.totalorder %s24, 0
      %p65 = por %p63, %p64
      %p66 = scmp.ne.s32.totalorder %s58, %s60
      %p67 = scmp.eq.s32.totalorder %s29, 1
      %p68 = por %p66, %p67
      %p69 = scmp.ne.s32.totalorder %s60, %s61
      %p70 = scmp.eq.s32.totalorder %s29, 0
      %p71 = por %p69, %p70
      %p72 = scmp.ne.s32.totalorder %s60, %s61
      %p73 = scmp.eq.s32.totalorder %s30, 1
      %p74 = por %p72, %p73
      %p76 = scmp.ne.s32.totalorder %s61, %s75
      %p77 = scmp.eq.s32.totalorder %s30, 0
      %p78 = por %p76, %p77
      %s80 = sadd.s32 %s79, 1
      %p83 = scmp.eq.s32.totalorder %s24, 1
      %p84 = scmp.ne.s32.totalorder %s79, %s81
      %p85 = scmp.eq.s32.totalorder %s24, 0
      %p86 = por %p84, %p85
      %p87 = scmp.ne.s32.totalorder %s79, %s81
      %p88 = scmp.eq.s32.totalorder %s29, 1
      %p89 = por %p87, %p88
      %p90 = scmp.ne.s32.totalorder %s81, %s82
      %p91 = scmp.eq.s32.totalorder %s29, 0
      %p92 = por %p90, %p91
      %p93 = scmp.ne.s32.totalorder %s81, %s82
      %p94 = scmp.eq.s32.totalorder %s30, 1
      %p95 = por %p93, %p94
      %p97 = scmp.ne.s32.totalorder %s82, %s96
      %p98 = scmp.eq.s32.totalorder %s30, 0
      %p99 = por %p97, %p98
      %s101 = sadd.s32 %s100, 1
      %p104 = scmp.eq.s32.totalorder %s24, 1
      %p105 = scmp.ne.s32.totalorder %s100, %s102
      %p106 = scmp.eq.s32.totalorder %s24, 0
      %p107 = por %p105, %p106
      %p108 = scmp.ne.s32.totalorder %s100, %s102
      %p109 = scmp.eq.s32.totalorder %s29, 1
      %p110 = por %p108, %p109
      %p111 = scmp.ne.s32.totalorder %s102, %s103
      %p112 = scmp.eq.s32.totalorder %s29, 0
      %p113 = por %p111, %p112
      %p114 = scmp.ne.s32.totalorder %s102, %s103
      %p115 = scmp.eq.s32.totalorder %s30, 1
      %p116 = por %p114, %p115
      %p118 = scmp.ne.s32.totalorder %s103, %s117
      %p119 = scmp.eq.s32.totalorder %s30, 0
      %p120 = por %p118, %p119
      %s122 = sadd.s32 %s121, 1
      %p125 = scmp.eq.s32.totalorder %s24, 1
      %p126 = scmp.ne.s32.totalorder %s121, %s123
      %p127 = scmp.eq.s32.totalorder %s24, 0
      %p128 = por %p126, %p127
      %p129 = scmp.ne.s32.totalorder %s121, %s123
      %p130 = scmp.eq.s32.totalorder %s29, 1
      %p131 = por %p129, %p130
      %p132 = scmp.ne.s32.totalorder %s123, %s124
      %p133 = scmp.eq.s32.totalorder %s29, 0
      %p134 = por %p132, %p133
      %p135 = scmp.ne.s32.totalorder %s123, %s124
      %p136 = scmp.eq.s32.totalorder %s30, 1
      %p137 = por %p135, %p136
      %p139 = scmp.ne.s32.totalorder %s124, %s138
      %p140 = scmp.eq.s32.totalorder %s30, 0
      %p141 = por %p139, %p140
      %s143 = sadd.s32 %s142, 1
      %p146 = scmp.eq.s32.totalorder %s24, 1
      %p147 = scmp.ne.s32.totalorder %s142, %s144
      %p148 = scmp.eq.s32.totalorder %s24, 0
      %p149 = por %p147, %p148
      %p150 = scmp.ne.s32.totalorder %s142, %s144
      %p151 = scmp.eq.s32.totalorder %s29, 1
      %p152 = por %p150, %p151
      %p153 = scmp.ne.s32.totalorder %s144, %s145
      %p154 = scmp.eq.s32.totalorder %s29, 0
      %p155 = por %p153, %p154
      %p156 = scmp.ne.s32.totalorder %s144, %s145
      %p157 = scmp.eq.s32.totalorder %s30, 1
      %p158 = por %p156, %p157
      %p160 = scmp.ne.s32.totalorder %s145, %s159
      %p161 = scmp.eq.s32.totalorder %s30, 0
      %p162 = por %p160, %p161
      %s164 = sadd.s32 %s163, 1
      %p167 = scmp.eq.s32.totalorder %s24, 1
      %p168 = scmp.ne.s32.totalorder %s163, %s165
      %p169 = scmp.eq.s32.totalorder %s24, 0
      %p170 = por %p168, %p169
      %p171 = scmp.ne.s32.totalorder %s163, %s165
      %p172 = scmp.eq.s32.totalorder %s29, 1
      %p173 = por %p171, %p172
      %p174 = scmp.ne.s32.totalorder %s165, %s166
      %p175 = scmp.eq.s32.totalorder %s29, 0
      %p176 = por %p174, %p175
      %p177 = scmp.ne.s32.totalorder %s165, %s166
      %p178 = scmp.eq.s32.totalorder %s30, 1
      %p179 = por %p177, %p178
      %p181 = scmp.ne.s32.totalorder %s166, %s180
      %p182 = scmp.eq.s32.totalorder %s30, 0
      %p183 = por %p181, %p182
      %s185 = sadd.s32 %s184, 1
      %p188 = scmp.eq.s32.totalorder %s24, 1
      %p189 = scmp.ne.s32.totalorder %s184, %s186
      %p190 = scmp.eq.s32.totalorder %s24, 0
      %p191 = por %p189, %p190
      %p192 = scmp.ne.s32.totalorder %s184, %s186
      %p193 = scmp.eq.s32.totalorder %s29, 1
      %p194 = por %p192, %p193
      %p195 = scmp.ne.s32.totalorder %s186, %s187
      %p196 = scmp.eq.s32.totalorder %s29, 0
      %p197 = por %p195, %p196
      %p198 = scmp.ne.s32.totalorder %s186, %s187
      %p199 = scmp.eq.s32.totalorder %s30, 1
      %p200 = por %p198, %p199
      %p202 = scmp.ne.s32.totalorder %s187, %s201
      %p203 = scmp.eq.s32.totalorder %s30, 0
      %p204 = por %p202, %p203
      %s206 = sadd.s32 %s205, 1
      %p209 = scmp.eq.s32.totalorder %s24, 1
      %p210 = scmp.ne.s32.totalorder %s205, %s207
      %p211 = scmp.eq.s32.totalorder %s24, 0
      %p212 = por %p210, %p211
      %p213 = scmp.ne.s32.totalorder %s205, %s207
      %p214 = scmp.eq.s32.totalorder %s29, 1
      %p215 = por %p213, %p214
      %p216 = scmp.ne.s32.totalorder %s207, %s208
      %p217 = scmp.eq.s32.totalorder %s29, 0
      %p218 = por %p216, %p217
      %p219 = scmp.ne.s32.totalorder %s207, %s208
      %p220 = scmp.eq.s32.totalorder %s30, 1
      %p221 = por %p219, %p220
      %p223 = scmp.ne.s32.totalorder %s208, %s222
      %p224 = scmp.eq.s32.totalorder %s30, 0
      %p225 = por %p223, %p224
      %s227 = sadd.s32 %s226, 1
      %p230 = scmp.eq.s32.totalorder %s24, 1
      %p231 = scmp.ne.s32.totalorder %s226, %s228
      %p232 = scmp.eq.s32.totalorder %s24, 0
      %p233 = por %p231, %p232
      %p234 = scmp.ne.s32.totalorder %s226, %s228
      %p235 = scmp.eq.s32.totalorder %s29, 1
      %p236 = por %p234, %p235
      %p237 = scmp.ne.s32.totalorder %s228, %s229
      %p238 = scmp.eq.s32.totalorder %s29, 0
      %p239 = por %p237, %p238
      %p240 = scmp.ne.s32.totalorder %s228, %s229
      %p241 = scmp.eq.s32.totalorder %s30, 1
      %p242 = por %p240, %p241
      %p244 = scmp.ne.s32.totalorder %s229, %s243
      %p245 = scmp.eq.s32.totalorder %s30, 0
      %p246 = por %p244, %p245
      %s248 = sadd.s32 %s247, 1
      %p251 = scmp.eq.s32.totalorder %s24, 1
      %p252 = scmp.ne.s32.totalorder %s247, %s249
      %p253 = scmp.eq.s32.totalorder %s24, 0
      %p254 = por %p252, %p253
      %p255 = scmp.ne.s32.totalorder %s247, %s249
      %p256 = scmp.eq.s32.totalorder %s29, 1
      %p257 = por %p255, %p256
      %p258 = scmp.ne.s32.totalorder %s249, %s250
      %p259 = scmp.eq.s32.totalorder %s29, 0
      %p260 = por %p258, %p259
      %p261 = scmp.ne.s32.totalorder %s249, %s250
      %p262 = scmp.eq.s32.totalorder %s30, 1
      %p263 = por %p261, %p262
      %p265 = scmp.ne.s32.totalorder %s250, %s264
      %p266 = scmp.eq.s32.totalorder %s30, 0
      %p267 = por %p265, %p266
      %s269 = sadd.s32 %s268, 1
      %p272 = scmp.eq.s32.totalorder %s24, 1
      %p273 = scmp.ne.s32.totalorder %s268, %s270
      %p274 = scmp.eq.s32.totalorder %s24, 0
      %p275 = por %p273, %p274
      %p276 = scmp.ne.s32.totalorder %s268, %s270
      %p277 = scmp.eq.s32.totalorder %s29, 1
      %p278 = por %p276, %p277
      %p279 = scmp.ne.s32.totalorder %s270, %s271
      %p280 = scmp.eq.s32.totalorder %s29, 0
      %p281 = por %p279, %p280
      %p282 = scmp.ne.s32.totalorder %s270, %s271
      %p283 = scmp.eq.s32.totalorder %s30, 1
      %p284 = por %p282, %p283
      %p286 = scmp.ne.s32.totalorder %s271, %s285
      %p287 = scmp.eq.s32.totalorder %s30, 0
      %p288 = por %p286, %p287
      %s290 = sadd.s32 %s289, 1
      %p293 = scmp.eq.s32.totalorder %s24, 1
      %p294 = scmp.ne.s32.totalorder %s289, %s291
      %p295 = scmp.eq.s32.totalorder %s24, 0
      %p296 = por %p294, %p295
      %p297 = scmp.ne.s32.totalorder %s289, %s291
      %p298 = scmp.eq.s32.totalorder %s29, 1
      %p299 = por %p297, %p298
      %p300 = scmp.ne.s32.totalorder %s291, %s292
      %p301 = scmp.eq.s32.totalorder %s29, 0
      %p302 = por %p300, %p301
      %p303 = scmp.ne.s32.totalorder %s291, %s292
      %p304 = scmp.eq.s32.totalorder %s30, 1
      %p305 = por %p303, %p304
      %p307 = scmp.ne.s32.totalorder %s292, %s306
      %p308 = scmp.eq.s32.totalorder %s30, 0
      %p309 = por %p307, %p308
      %s310 = ssub.s32 %s24, %s31
      %p311 = scmp.eq.s32.totalorder %s310, 0
      %s313 = sadd.s32 %s312, 1
      %s314 = scalar_select %p311, %s312, %s313
      %p317 = pneg %p311
      %p318 = scmp.eq.s32.totalorder %s24, 1
      %p319 = por %p317, %p318
      %p320 = scmp.ne.s32.totalorder %s312, %s315
      %p321 = scmp.eq.s32.totalorder %s24, 0
      %p322 = por %p320, %p321
      %p323 = scmp.ne.s32.totalorder %s312, %s315
      %p324 = scmp.eq.s32.totalorder %s29, 1
      %p325 = por %p323, %p324
      %p326 = scmp.ne.s32.totalorder %s315, %s316
      %p327 = scmp.eq.s32.totalorder %s29, 0
      %p328 = por %p326, %p327
      %p329 = scmp.ne.s32.totalorder %s315, %s316
      %p330 = scmp.eq.s32.totalorder %s30, 1
      %p331 = por %p329, %p330
      %p333 = scmp.ne.s32.totalorder %s316, %s332
      %p334 = scmp.eq.s32.totalorder %s30, 0
      %p335 = por %p333, %p334
      %p336 = scmp.le.s32.totalorder 1, %s24
      %p337 = scmp.lt.s32.totalorder %s24, 3
      %p338 = pnand %p336, %p337
      %p339 = pneg %p338
      // Predicated region
      $region9: #{amt_forward.11} parent=5 // pred_check
        _
      $region10: #{amt_forward.11} parent=5 // pred_check_branch
        %341 = sbr.rel (%p338) target = $region12
      $region11: #{amt_forward.11} parent=5 // pred_region
        %s342 = ssub.s32 %s24, 1
        // Predicated region
        $region13: #{amt_forward.11} parent=11 // pred_check
          %p343 = pneg %p71
        $region14: #{amt_forward.11} parent=11 // pred_check_branch
          %345 = sbr.rel (%p343) target = $region16
        $region15: #{amt_forward.11} parent=11 // pred_region
          %347 = vsyncadd [#allocation3], 0
          %s349 = sshll.u32 %s1, 4
          %s350 = int_to_ptr.hbm [resolvable:$true] %s349
          %s351 = sshll.u32 [#allocation2], 4
          %s352 = int_to_ptr.vmem [resolvable:$true] %s351
          %354 = dma.hbm_to_vmem [thread:$0]  %s350, 16, %s352, [#allocation3]
        $region16: #{amt_forward.11} parent=11 // pred_fallthru
          _
        // Predicated region
        $region17: #{amt_forward.11} parent=11 // pred_check
          %p355 = pneg %p92
        $region18: #{amt_forward.11} parent=11 // pred_check_branch
          %357 = sbr.rel (%p355) target = $region20
        $region19: #{amt_forward.11} parent=11 // pred_region
          %359 = vsyncadd [#allocation5], 0
          %s361 = sshll.u32 %s2, 4
          %s362 = int_to_ptr.hbm [resolvable:$true] %s361
          %s363 = sshll.u32 [#allocation4], 4
          %s364 = int_to_ptr.vmem [resolvable:$true] %s363
          %366 = dma.hbm_to_vmem [thread:$0]  %s362, 16, %s364, [#allocation5]
        $region20: #{amt_forward.11} parent=11 // pred_fallthru
          _
        // Predicated region
        $region21: #{amt_forward.11} parent=11 // pred_check
          %p367 = pneg %p113
        $region22: #{amt_forward.11} parent=11 // pred_check_branch
          %369 = sbr.rel (%p367) target = $region24
        $region23: #{amt_forward.11} parent=11 // pred_region
          _
        $region24: #{amt_forward.11} parent=11 // pred_fallthru
          _
        // Predicated region
        $region25: #{amt_forward.11} parent=11 // pred_check
          %p370 = pneg %p134
        $region26: #{amt_forward.11} parent=11 // pred_check_branch
          %372 = sbr.rel (%p370) target = $region28
        $region27: #{amt_forward.11} parent=11 // pred_region
          %374 = vsyncadd [#allocation5], 0
          %s376 = sshll.u32 %s4, 4
          %s377 = int_to_ptr.hbm [resolvable:$true] %s376
          %s378 = sshll.u32 [#allocation6], 4
          %s379 = int_to_ptr.vmem [resolvable:$true] %s378
          %381 = dma.hbm_to_vmem [thread:$0]  %s377, 32, %s379, [#allocation5]
        $region28: #{amt_forward.11} parent=11 // pred_fallthru
          _
        // Predicated region
        $region29: #{amt_forward.11} parent=11 // pred_check
          %p382 = pneg %p155
        $region30: #{amt_forward.11} parent=11 // pred_check_branch
          %384 = sbr.rel (%p382) target = $region32
        $region31: #{amt_forward.11} parent=11 // pred_region
          _
        $region32: #{amt_forward.11} parent=11 // pred_fallthru
          _
        // Predicated region
        $region33: #{amt_forward.11} parent=11 // pred_check
          %p385 = pneg %p176
        $region34: #{amt_forward.11} parent=11 // pred_check_branch
          %387 = sbr.rel (%p385) target = $region36
        $region35: #{amt_forward.11} parent=11 // pred_region
          %389 = vsyncadd [#allocation8], 0
          %s391 = sshll.u32 %s6, 4
          %s392 = int_to_ptr.hbm [resolvable:$true] %s391
          %s393 = sshll.u32 [#allocation7], 4
          %s394 = int_to_ptr.vmem [resolvable:$true] %s393
          %396 = dma.hbm_to_vmem [thread:$0]  %s392, 16, %s394, [#allocation8]
        $region36: #{amt_forward.11} parent=11 // pred_fallthru
          _
        // Predicated region
        $region37: #{amt_forward.11} parent=11 // pred_check
          %p397 = pneg %p197
        $region38: #{amt_forward.11} parent=11 // pred_check_branch
          %399 = sbr.rel (%p397) target = $region40
        $region39: #{amt_forward.11} parent=11 // pred_region
          %401 = vsyncadd [#allocation8], 0
          %s403 = sshll.u32 %s7, 4
          %s404 = int_to_ptr.hbm [resolvable:$true] %s403
          %s405 = sshll.u32 [#allocation9], 4
          %s406 = int_to_ptr.vmem [resolvable:$true] %s405
          %408 = dma.hbm_to_vmem [thread:$0]  %s404, 16, %s406, [#allocation8]
        $region40: #{amt_forward.11} parent=11 // pred_fallthru
          _
        // Predicated region
        $region41: #{amt_forward.11} parent=11 // pred_check
          %p409 = pneg %p218
        $region42: #{amt_forward.11} parent=11 // pred_check_branch
          %411 = sbr.rel (%p409) target = $region44
        $region43: #{amt_forward.11} parent=11 // pred_region
          %413 = vsyncadd [#allocation11], 0
          %s415 = sshll.u32 %s8, 4
          %s416 = int_to_ptr.hbm [resolvable:$true] %s415
          %s417 = sshll.u32 [#allocation10], 4
          %s418 = int_to_ptr.vmem [resolvable:$true] %s417
          %420 = dma.hbm_to_vmem [thread:$0]  %s416, 16, %s418, [#allocation11]
        $region44: #{amt_forward.11} parent=11 // pred_fallthru
          _
        // Predicated region
        $region45: #{amt_forward.11} parent=11 // pred_check
          %p421 = pneg %p239
        $region46: #{amt_forward.11} parent=11 // pred_check_branch
          %423 = sbr.rel (%p421) target = $region48
        $region47: #{amt_forward.11} parent=11 // pred_region
          _
        $region48: #{amt_forward.11} parent=11 // pred_fallthru
          _
        // Predicated region
        $region49: #{amt_forward.11} parent=11 // pred_check
          %p424 = pneg %p260
        $region50: #{amt_forward.11} parent=11 // pred_check_branch
          %426 = sbr.rel (%p424) target = $region52
        $region51: #{amt_forward.11} parent=11 // pred_region
          %428 = vsyncadd [#allocation11], 0
          %s430 = sshll.u32 %s10, 4
          %s431 = int_to_ptr.hbm [resolvable:$true] %s430
          %s432 = sshll.u32 [#allocation12], 4
          %s433 = int_to_ptr.vmem [resolvable:$true] %s432
          %435 = dma.hbm_to_vmem [thread:$0]  %s431, 32, %s433, [#allocation11]
        $region52: #{amt_forward.11} parent=11 // pred_fallthru
          _
        // Predicated region
        $region53: #{amt_forward.11} parent=11 // pred_check
          %p436 = pneg %p281
        $region54: #{amt_forward.11} parent=11 // pred_check_branch
          %438 = sbr.rel (%p436) target = $region56
        $region55: #{amt_forward.11} parent=11 // pred_region
          _
        $region56: #{amt_forward.11} parent=11 // pred_fallthru
          _
        // Predicated region
        $region57: #{amt_forward.11} parent=11 // pred_check
          %p439 = pneg %p302
        $region58: #{amt_forward.11} parent=11 // pred_check_branch
          %441 = sbr.rel (%p439) target = $region60
        $region59: #{amt_forward.11} parent=11 // pred_region
          %443 = vsyncadd [#allocation14], 0
          %s445 = sshll.u32 %s12, 4
          %s446 = int_to_ptr.hbm [resolvable:$true] %s445
          %s447 = sshll.u32 [#allocation13], 4
          %s448 = int_to_ptr.vmem [resolvable:$true] %s447
          %450 = dma.hbm_to_vmem [thread:$0]  %s446, 16, %s448, [#allocation14]
        $region60: #{amt_forward.11} parent=11 // pred_fallthru
          _
      $region12: #{amt_forward.11} parent=5 // pred_fallthru
        _
      %p451 = scmp.lt.s32.totalorder %s24, 2
      // Predicated region
      $region61: #{amt_forward.11} parent=5 // pred_check
        %p452 = pneg %p451
      $region62: #{amt_forward.11} parent=5 // pred_check_branch
        %454 = sbr.rel (%p452) target = $region64
      $region63: #{amt_forward.11} parent=5 // pred_region
        // Predicated region
        $region65: #{amt_forward.11} parent=63 // pred_check
          %p455 = pneg %p44
        $region66: #{amt_forward.11} parent=63 // pred_check_branch
          %457 = sbr.rel (%p455) target = $region68
        $region67: #{amt_forward.11} parent=63 // pred_region
          %p458 = scmp.lt.s32.totalorder %s24, 1
          %s459 = scalar_select %p458, %s24, 1
          %s460 = smul.addr %s459, 2
          %s461 = smul.addr %s460, 4
          %s462 = scalar_lea.vmem %s0, %s461
        $region68: #{amt_forward.11} parent=63 // pred_fallthru
          _
      $region64: #{amt_forward.11} parent=5 // pred_fallthru
        _
      %p463 = scmp.le.s32.totalorder 1, %s24
      %p464 = scmp.lt.s32.totalorder %s24, 3
      %p465 = pnand %p463, %p464
      %p466 = pneg %p465
      // Predicated region
      $region69: #{amt_forward.11} parent=5 // pred_check
        _
      $region70: #{amt_forward.11} parent=5 // pred_check_branch
        %468 = sbr.rel (%p465) target = $region72
      $region71: #{amt_forward.11} parent=5 // pred_region
        %s469 = ssub.s32 %s24, 1
        // Predicated region
        $region73: #{amt_forward.11} parent=71 // pred_check
          %p470 = pneg %p71
        $region74: #{amt_forward.11} parent=71 // pred_check_branch
          %472 = sbr.rel (%p470) target = $region76
        $region75: #{amt_forward.11} parent=71 // pred_region
          %474 = dma.done [#allocation3], 16
        $region76: #{amt_forward.11} parent=71 // pred_fallthru
          _
        // Predicated region
        $region77: #{amt_forward.11} parent=71 // pred_check
          %p475 = pneg %p92
        $region78: #{amt_forward.11} parent=71 // pred_check_branch
          %477 = sbr.rel (%p475) target = $region80
        $region79: #{amt_forward.11} parent=71 // pred_region
          %479 = dma.done [#allocation5], 16
        $region80: #{amt_forward.11} parent=71 // pred_fallthru
          _
        // Predicated region
        $region81: #{amt_forward.11} parent=71 // pred_check
          %p480 = pneg %p134
        $region82: #{amt_forward.11} parent=71 // pred_check_branch
          %482 = sbr.rel (%p480) target = $region84
        $region83: #{amt_forward.11} parent=71 // pred_region
          %484 = dma.done [#allocation5], 32
        $region84: #{amt_forward.11} parent=71 // pred_fallthru
          _
        // Predicated region
        $region85: #{amt_forward.11} parent=71 // pred_check
          %p485 = pneg %p176
        $region86: #{amt_forward.11} parent=71 // pred_check_branch
          %487 = sbr.rel (%p485) target = $region88
        $region87: #{amt_forward.11} parent=71 // pred_region
          %489 = dma.done [#allocation8], 16
        $region88: #{amt_forward.11} parent=71 // pred_fallthru
          _
        // Predicated region
        $region89: #{amt_forward.11} parent=71 // pred_check
          %p490 = pneg %p197
        $region90: #{amt_forward.11} parent=71 // pred_check_branch
          %492 = sbr.rel (%p490) target = $region92
        $region91: #{amt_forward.11} parent=71 // pred_region
          %494 = dma.done [#allocation8], 16
        $region92: #{amt_forward.11} parent=71 // pred_fallthru
          _
        // Predicated region
        $region93: #{amt_forward.11} parent=71 // pred_check
          %p495 = pneg %p218
        $region94: #{amt_forward.11} parent=71 // pred_check_branch
          %497 = sbr.rel (%p495) target = $region96
        $region95: #{amt_forward.11} parent=71 // pred_region
          %499 = dma.done [#allocation11], 16
        $region96: #{amt_forward.11} parent=71 // pred_fallthru
          _
        // Predicated region
        $region97: #{amt_forward.11} parent=71 // pred_check
          %p500 = pneg %p260
        $region98: #{amt_forward.11} parent=71 // pred_check_branch
          %502 = sbr.rel (%p500) target = $region100
        $region99: #{amt_forward.11} parent=71 // pred_region
          %504 = dma.done [#allocation11], 32
        $region100: #{amt_forward.11} parent=71 // pred_fallthru
          _
        // Predicated region
        $region101: #{amt_forward.11} parent=71 // pred_check
          %p505 = pneg %p302
        $region102: #{amt_forward.11} parent=71 // pred_check_branch
          %507 = sbr.rel (%p505) target = $region104
        $region103: #{amt_forward.11} parent=71 // pred_region
          %509 = dma.done [#allocation14], 16
        $region104: #{amt_forward.11} parent=71 // pred_fallthru
          _
        %p510 = scmp.lt.s32.totalorder %s29, 1
        %s511 = scalar_select %p510, %s29, 1
        %s512 = smul.addr %s511, 2
        %s513 = smul.addr %s512, 4
        %s514 = scalar_lea.vmem %s0, %s513
        %p515 = pneg %p50
        %p516 = pneg %p47
        %p517 = pneg %p71
        %p518 = pneg %p68
        %p519 = pneg %p92
        %p520 = pneg %p89
        %p521 = pneg %p113
        %p522 = pneg %p110
        %p523 = pneg %p134
        %p524 = pneg %p131
        %p525 = pneg %p155
        %p526 = pneg %p152
        %p527 = pneg %p176
        %p528 = pneg %p173
        %p529 = pneg %p197
        %p530 = pneg %p194
        %p531 = pneg %p218
        %p532 = pneg %p215
        %p533 = pneg %p239
        %p534 = pneg %p236
        %p535 = pneg %p260
        %p536 = pneg %p257
        %p537 = pneg %p281
        %p538 = pneg %p278
        %p539 = pneg %p302
        %p540 = pneg %p299
        %p541 = pneg %p328
        %p542 = pneg %p325
        %p543 = scmp.lt.s32.totalorder %s29, 1
        %s544 = scalar_select %p543, %s29, 1
        %s545 = smul.addr %s544, 2
        %s546 = smul.addr %s545, 4
        %s547 = scalar_lea.vmem %s13, %s546
        %p548 = scmp.lt.s32.totalorder %s29, 1
        %s549 = scalar_select %p548, %s29, 1
        %s550 = smul.addr %s549, 2
        %s551 = smul.addr %s550, 4
        %s552 = scalar_lea.vmem %s0, %s551
        %p553 = scmp.lt.s32.totalorder %s29, 1
        %s554 = scalar_select %p553, %s29, 1
        %s555 = smul.addr %s554, 2
        %s556 = smul.addr %s555, 4
        %s557 = scalar_lea.vmem %s13, %s556
        %v559 = vld [vmem:[%s552] sm:$0xf]
        %v560 = vld [vmem:[%s552 + $0x4] sm:$0xf]
        %v561 = vunpack.c.l.bf16 %v559
        %v562 = vunpack.c.l.bf16 %v560
        %vm563 = vcmask 523264
        %v564 = vsel %vm563, %v561, 0.0
        %565 = vadd.xlane.f32.xlu0 %v564
        %v566 = vpop.xlane.xlu0 %565
        %v567 = vsel %vm563, %v562, 0.0
        %568 = vadd.xlane.f32.xlu0 %v567
        %v569 = vpop.xlane.xlu0 %568
        %v570 = vrcp.pop 64.0
        %v571 = vmul.f32 64.0, %v570
        %v572 = vsub.f32 1.0, %v571
        %v573 = vmul.f32 %v570, %v572
        %v574 = vadd.f32 %v570, %v573
        %vm575 = vweird.f32 %v570
        %v576 = vsel %vm575, %v570, %v574
        %v577 = vmul.f32 %v566, %v576
        %v578 = vmul.f32 %v569, %v576
        %v579 = vsub.f32 %v561, %v577
        %v580 = vsub.f32 %v562, %v578
        %v581 = vmul.f32 %v579, %v579
        %v582 = vmul.f32 %v580, %v580
        %v583 = vsel %vm563, %v581, 0.0
        %584 = vadd.xlane.f32.xlu0 %v583
        %v585 = vpop.xlane.xlu0 %584
        %v586 = vsel %vm563, %v582, 0.0
        %587 = vadd.xlane.f32.xlu0 %v586
        %v588 = vpop.xlane.xlu0 %587
        %v589 = vmul.f32 %v585, %v576
        %v590 = vmul.f32 %v588, %v576
        %v591 = vadd.f32 %v589, 1e-05
        %v592 = vadd.f32 %v590, 1e-05
        %v593 = vrsqrt.pop %v591
        %v594 = vmul.f32 %v593, %v591
        %v595 = vmul.f32 %v594, %v593
        %v596 = vmul.f32 0.5, %v595
        %v597 = vsub.f32 1.5, %v596
        %v598 = vmul.f32 %v593, %v597
        %vm599 = vweird.f32 %v591
        %vm600 = vweird.f32 %v593
        %vm601 = vmor %vm599, %vm600
        %v602 = vsel %vm601, %v593, %v598
        %v603 = vrsqrt.pop %v592
        %v604 = vmul.f32 %v603, %v592
        %v605 = vmul.f32 %v604, %v603
        %v606 = vmul.f32 0.5, %v605
        %v607 = vsub.f32 1.5, %v606
        %v608 = vmul.f32 %v603, %v607
        %vm609 = vweird.f32 %v592
        %vm610 = vweird.f32 %v603
        %vm611 = vmor %vm609, %vm610
        %v612 = vsel %vm611, %v603, %v608
        %v613 = vmul.f32 %v579, %v602
        %v614 = vmul.f32 %v580, %v612
        %v615 = vld [vmem:[#allocation2] sm:$0x1]
        %v616 = vunpack.c.l.bf16 %v615
        %v617 = vperm.slane %v616, 0
        %v618 = vmul.f32 %v613, %v617
        %v619 = vmul.f32 %v614, %v617
        %v620 = vld [vmem:[#allocation4] sm:$0x1]
        %v621 = vunpack.c.l.bf16 %v620
        %v622 = vperm.slane %v621, 0
        %v623 = vadd.f32 %v618, %v622
        %v624 = vadd.f32 %v619, %v622
        %v625 = vpack.c.bf16 %v624, %v623
        %v626 = vld [vmem:[%s3] sm:$0xff]
        %v627 = vld [vmem:[%s3 + $0x8] sm:$0xff]
        %v628 = vld [vmem:[%s3 + $0x10] sm:$0xff]
        %v629 = vld [vmem:[%s3 + $0x18] sm:$0xff]
        %v630 = vld [vmem:[%s3 + $0x20] sm:$0xff]
        %v631 = vld [vmem:[%s3 + $0x28] sm:$0xff]
        %v632 = vld [vmem:[%s3 + $0x30] sm:$0xff]
        %v633 = vld [vmem:[%s3 + $0x38] sm:$0xff]
        %v634 = vld [vmem:[#allocation6] sm:$0x3]
        %v635 = vunpack.c.l.bf16 %v634
        %v637 = vperm.slane %v635, 0
        %v638 = vperm.slane %v635, 2
        %v641 = vperm.slane %v637, 0
        %v642 = vperm.slane %v638, 0
        %v651 = vunpack.c.l.b16 %v626
        %v652 = vunpack.c.h.b16 %v626
        %v653 = vunpack.c.l.b16 %v627
        %v654 = vunpack.c.h.b16 %v627
        %v655 = vunpack.c.l.b16 %v628
        %v656 = vunpack.c.h.b16 %v628
        %v657 = vunpack.c.l.b16 %v629
        %v658 = vunpack.c.h.b16 %v629
        %v659 = vunpack.c.l.b16 %v630
        %v660 = vunpack.c.h.b16 %v630
        %v661 = vunpack.c.l.b16 %v631
        %v662 = vunpack.c.h.b16 %v631
        %v663 = vunpack.c.l.b16 %v632
        %v664 = vunpack.c.h.b16 %v632
        %v665 = vunpack.c.l.b16 %v633
        %v666 = vunpack.c.h.b16 %v633
        %v667 = vpack.c.b16 %v653, %v651
        %v668 = vpack.c.b16 %v654, %v652
        %v669 = vpack.c.b16 %v657, %v655
        %v670 = vpack.c.b16 %v658, %v656
        %v671 = vpack.c.b16 %v661, %v659
        %v672 = vpack.c.b16 %v662, %v660
        %v673 = vpack.c.b16 %v665, %v663
        %v674 = vpack.c.b16 %v666, %v664
        %v684 = vsel %vm563, %v625, 0
        %686 = vmatpush.bf16.msra.mxu0 0
        %687 = vmatpush.bf16.msra.mxu0 0
        %688 = vmatpush.bf16.msra.mxu0 0
        %689 = vmatpush.bf16.msra.mxu0 0
        %690 = vmatpush.bf16.msra.mxu0 %v673
        %691 = vmatpush.bf16.msra.mxu0 %v671
        %692 = vmatpush.bf16.msra.mxu0 %v669
        %693 = vmatpush.bf16.msra.mxu0 %v667
        %694 = vmatmul.bf16.gmra.mxu0 %v684
        %v695 = vpop.f32.mrf.mxu0
        %v696 = vadd.f32 %v641, %v695
        %v697 = vpop.f32.mrf.mxu0
        %v698 = vadd.f32 %v641, %v697
        %699 = vdwg.mxu0
        %700 = vmatpush.bf16.msra.mxu0 0
        %701 = vmatpush.bf16.msra.mxu0 0
        %702 = vmatpush.bf16.msra.mxu0 0
        %703 = vmatpush.bf16.msra.mxu0 0
        %704 = vmatpush.bf16.msra.mxu0 %v674
        %705 = vmatpush.bf16.msra.mxu0 %v672
        %706 = vmatpush.bf16.msra.mxu0 %v670
        %707 = vmatpush.bf16.msra.mxu0 %v668
        %708 = vmatmul.bf16.gmra.mxu0 %v684
        %v709 = vpop.f32.mrf.mxu0
        %v710 = vadd.f32 %v642, %v709
        %v711 = vpop.f32.mrf.mxu0
        %v712 = vadd.f32 %v642, %v711
        %713 = vdwg.mxu0
        %v714 = vmul.f32 %v696, 0.35355338
        %v715 = vmul.f32 %v698, 0.35355338
        %v716 = vlaneseq
        %v717 = vshrl.u32 %v716, 7
        %v718 = vadd.s32 %v717, 8
        %v719 = vlaneseq
        %v720 = vand.u32 %v719, 127
        %vm721 = vcmp.le.s32.totalorder %v720, %v717
        %vm722 = vcmp.le.s32.totalorder %v720, %v718
        %725 = vrot.lane.b32.xlu0 %v696, 64
        %v726 = vpop.permute.xlu0 %725
        %727 = vrot.lane.b32.xlu0 %v698, 64
        %v728 = vpop.permute.xlu0 %727
        %vm729 = vcmask 64512
        %v731 = vsel %vm729, %v714, 0
        %v734 = vsel %vm729, %v715, 0
        %v736 = vsel %vm729, %v726, 0
        %v738 = vsel %vm729, %v728, 0
        %740 = vmatpush.xpose.msra.mxu0 0.0
        %741 = vmatpush.xpose.msra.mxu0 0.0
        %742 = vmatpush.xpose.msra.mxu0 0.0
        %743 = vmatpush.xpose.msra.mxu0 0.0
        %744 = vmatpush.xpose.msra.mxu0 0.0
        %745 = vmatpush.xpose.msra.mxu0 0.0
        %746 = vmatpush.xpose.msra.mxu0 0.0
        %747 = vmatpush.xpose.msra.mxu0 0.0
        %748 = vmatpush.xpose.msra.mxu0 0.0
        %749 = vmatpush.xpose.msra.mxu0 0.0
        %750 = vmatpush.xpose.msra.mxu0 0.0
        %751 = vmatpush.xpose.msra.mxu0 0.0
        %752 = vmatpush.xpose.msra.mxu0 0.0
        %753 = vmatpush.xpose.msra.mxu0 0.0
        %754 = vmatpush.xpose.msra.mxu0 %v738
        %755 = vmatpush.xpose.msra.mxu0 %v736
        %756 = vmatmul.f32.gmra.mxu0 %v731
        %v757 = vpop.f32.mrf.mxu0
        %v758 = vadd.f32 0.0, %v757
        %759 = vmatmul.f32.gmra.mxu0 %v734
        %v760 = vpop.f32.mrf.mxu0
        %v761 = vadd.f32 0.0, %v760
        %762 = vdwg.mxu0
        %v763 = vsel %vm721, %v758, -1e+30
        %v764 = vsel %vm722, %v761, -1e+30
        %vm765 = vcmask 130048
        %v766 = vsel %vm765, %v763, -inf
        %767 = vmax.xlane.f32.xlu0 %v766
        %v768 = vpop.xlane.xlu0 %767
        %v769 = vsel %vm765, %v764, -inf
        %770 = vmax.xlane.f32.xlu0 %v769
        %v771 = vpop.xlane.xlu0 %770
        %v772 = vsub.f32 %v763, %v768
        %v773 = vsub.f32 %v764, %v771
        %v774 = vmul.f32 %v772, 1.442695
        %v775 = vpow.pop %v774
        %v776 = vmul.f32 %v773, 1.442695
        %v777 = vpow.pop %v776
        %v778 = vsel %vm765, %v775, 0.0
        %779 = vadd.xlane.f32.xlu0 %v778
        %v780 = vpop.xlane.xlu0 %779
        %v781 = vsel %vm765, %v777, 0.0
        %782 = vadd.xlane.f32.xlu0 %v781
        %v783 = vpop.xlane.xlu0 %782
        %v784 = vrcp.pop %v780
        %v785 = vrcp.pop %v783
        %v786 = vmul.f32 %v775, %v784
        %v787 = vmul.f32 %v777, %v785
        %v789 = vsel %vm765, %v786, 0
        %v792 = vsel %vm765, %v787, 0
        %794 = vmatpush.msra.mxu0 0.0
        %795 = vmatpush.msra.mxu0 0.0
        %796 = vmatpush.msra.mxu0 0.0
        %797 = vmatpush.msra.mxu0 0.0
        %798 = vmatpush.msra.mxu0 0.0
        %799 = vmatpush.msra.mxu0 0.0
        %800 = vmatpush.msra.mxu0 0.0
        %801 = vmatpush.msra.mxu0 0.0
        %802 = vmatpush.msra.mxu0 0.0
        %803 = vmatpush.msra.mxu0 0.0
        %804 = vmatpush.msra.mxu0 0.0
        %805 = vmatpush.msra.mxu0 0.0
        %806 = vmatpush.msra.mxu0 0.0
        %807 = vmatpush.msra.mxu0 0.0
        %808 = vmatpush.msra.mxu0 %v712
        %809 = vmatpush.msra.mxu0 %v710
        %810 = vmatmul.f32.gmra.mxu0 %v789
        %v811 = vpop.f32.mrf.mxu0
        %v812 = vadd.f32 0.0, %v811
        %813 = vmatmul.f32.gmra.mxu0 %v792
        %v814 = vpop.f32.mrf.mxu0
        %v815 = vadd.f32 0.0, %v814
        %816 = vdwg.mxu0
        %817 = vrot.lane.b32.xlu0 %v714, 120
        %v818 = vpop.permute.xlu0 %817
        %819 = vrot.lane.b32.xlu0 %v715, 120
        %v820 = vpop.permute.xlu0 %819
        %821 = vrot.lane.b32.xlu0 %v696, 56
        %v822 = vpop.permute.xlu0 %821
        %823 = vrot.lane.b32.xlu0 %v698, 56
        %v824 = vpop.permute.xlu0 %823
        %v825 = vsel %vm729, %v818, 0
        %v827 = vsel %vm729, %v820, 0
        %v829 = vsel %vm729, %v822, 0
        %v831 = vsel %vm729, %v824, 0
        %833 = vmatpush.xpose.msra.mxu0 0.0
        %834 = vmatpush.xpose.msra.mxu0 0.0
        %835 = vmatpush.xpose.msra.mxu0 0.0
        %836 = vmatpush.xpose.msra.mxu0 0.0
        %837 = vmatpush.xpose.msra.mxu0 0.0
        %838 = vmatpush.xpose.msra.mxu0 0.0
        %839 = vmatpush.xpose.msra.mxu0 0.0
        %840 = vmatpush.xpose.msra.mxu0 0.0
        %841 = vmatpush.xpose.msra.mxu0 0.0
        %842 = vmatpush.xpose.msra.mxu0 0.0
        %843 = vmatpush.xpose.msra.mxu0 0.0
        %844 = vmatpush.xpose.msra.mxu0 0.0
        %845 = vmatpush.xpose.msra.mxu0 0.0
        %846 = vmatpush.xpose.msra.mxu0 0.0
        %847 = vmatpush.xpose.msra.mxu0 %v831
        %848 = vmatpush.xpose.msra.mxu0 %v829
        %849 = vmatmul.f32.gmra.mxu0 %v825
        %v850 = vpop.f32.mrf.mxu0
        %v851 = vadd.f32 0.0, %v850
        %852 = vmatmul.f32.gmra.mxu0 %v827
        %v853 = vpop.f32.mrf.mxu0
        %v854 = vadd.f32 0.0, %v853
        %855 = vdwg.mxu0
        %v856 = vsel %vm721, %v851, -1e+30
        %v857 = vsel %vm722, %v854, -1e+30
        %v858 = vsel %vm765, %v856, -inf
        %859 = vmax.xlane.f32.xlu0 %v858
        %v860 = vpop.xlane.xlu0 %859
        %v861 = vsel %vm765, %v857, -inf
        %862 = vmax.xlane.f32.xlu0 %v861
        %v863 = vpop.xlane.xlu0 %862
        %v864 = vsub.f32 %v856, %v860
        %v865 = vsub.f32 %v857, %v863
        %v866 = vmul.f32 %v864, 1.442695
        %v867 = vpow.pop %v866
        %v868 = vmul.f32 %v865, 1.442695
        %v869 = vpow.pop %v868
        %v870 = vsel %vm765, %v867, 0.0
        %871 = vadd.xlane.f32.xlu0 %v870
        %v872 = vpop.xlane.xlu0 %871
        %v873 = vsel %vm765, %v869, 0.0
        %874 = vadd.xlane.f32.xlu0 %v873
        %v875 = vpop.xlane.xlu0 %874
        %v876 = vrcp.pop %v872
        %v877 = vrcp.pop %v875
        %v878 = vmul.f32 %v867, %v876
        %v879 = vmul.f32 %v869, %v877
        %882 = vrot.lane.b32.xlu0 %v710, 120
        %v883 = vpop.permute.xlu0 %882
        %884 = vrot.lane.b32.xlu0 %v712, 120
        %v885 = vpop.permute.xlu0 %884
        %v889 = vsel %vm765, %v878, 0
        %v892 = vsel %vm765, %v879, 0
        %894 = vmatpush.msra.mxu0 0.0
        %895 = vmatpush.msra.mxu0 0.0
        %896 = vmatpush.msra.mxu0 0.0
        %897 = vmatpush.msra.mxu0 0.0
        %898 = vmatpush.msra.mxu0 0.0
        %899 = vmatpush.msra.mxu0 0.0
        %900 = vmatpush.msra.mxu0 0.0
        %901 = vmatpush.msra.mxu0 0.0
        %902 = vmatpush.msra.mxu0 0.0
        %903 = vmatpush.msra.mxu0 0.0
        %904 = vmatpush.msra.mxu0 0.0
        %905 = vmatpush.msra.mxu0 0.0
        %906 = vmatpush.msra.mxu0 0.0
        %907 = vmatpush.msra.mxu0 0.0
        %908 = vmatpush.msra.mxu0 %v885
        %909 = vmatpush.msra.mxu0 %v883
        %910 = vmatmul.f32.gmra.mxu0 %v889
        %v911 = vpop.f32.mrf.mxu0
        %v912 = vadd.f32 0.0, %v911
        %913 = vmatmul.f32.gmra.mxu0 %v892
        %v914 = vpop.f32.mrf.mxu0
        %v915 = vadd.f32 0.0, %v914
        %916 = vdwg.mxu0
        %917 = vrot.lane.b32.xlu0 %v714, 112
        %v918 = vpop.permute.xlu0 %917
        %919 = vrot.lane.b32.xlu0 %v715, 112
        %v920 = vpop.permute.xlu0 %919
        %921 = vrot.lane.b32.xlu0 %v696, 48
        %v922 = vpop.permute.xlu0 %921
        %923 = vrot.lane.b32.xlu0 %v698, 48
        %v924 = vpop.permute.xlu0 %923
        %v925 = vsel %vm729, %v918, 0
        %v927 = vsel %vm729, %v920, 0
        %v929 = vsel %vm729, %v922, 0
        %v931 = vsel %vm729, %v924, 0
        %933 = vmatpush.xpose.msra.mxu0 0.0
        %934 = vmatpush.xpose.msra.mxu0 0.0
        %935 = vmatpush.xpose.msra.mxu0 0.0
        %936 = vmatpush.xpose.msra.mxu0 0.0
        %937 = vmatpush.xpose.msra.mxu0 0.0
        %938 = vmatpush.xpose.msra.mxu0 0.0
        %939 = vmatpush.xpose.msra.mxu0 0.0
        %940 = vmatpush.xpose.msra.mxu0 0.0
        %941 = vmatpush.xpose.msra.mxu0 0.0
        %942 = vmatpush.xpose.msra.mxu0 0.0
        %943 = vmatpush.xpose.msra.mxu0 0.0
        %944 = vmatpush.xpose.msra.mxu0 0.0
        %945 = vmatpush.xpose.msra.mxu0 0.0
        %946 = vmatpush.xpose.msra.mxu0 0.0
        %947 = vmatpush.xpose.msra.mxu0 %v931
        %948 = vmatpush.xpose.msra.mxu0 %v929
        %949 = vmatmul.f32.gmra.mxu0 %v925
        %v950 = vpop.f32.mrf.mxu0
        %v951 = vadd.f32 0.0, %v950
        %952 = vmatmul.f32.gmra.mxu0 %v927
        %v953 = vpop.f32.mrf.mxu0
        %v954 = vadd.f32 0.0, %v953
        %955 = vdwg.mxu0
        %v956 = vsel %vm721, %v951, -1e+30
        %v957 = vsel %vm722, %v954, -1e+30
        %v958 = vsel %vm765, %v956, -inf
        %959 = vmax.xlane.f32.xlu0 %v958
        %v960 = vpop.xlane.xlu0 %959
        %v961 = vsel %vm765, %v957, -inf
        %962 = vmax.xlane.f32.xlu0 %v961
        %v963 = vpop.xlane.xlu0 %962
        %v964 = vsub.f32 %v956, %v960
        %v965 = vsub.f32 %v957, %v963
        %v966 = vmul.f32 %v964, 1.442695
        %v967 = vpow.pop %v966
        %v968 = vmul.f32 %v965, 1.442695
        %v969 = vpow.pop %v968
        %v970 = vsel %vm765, %v967, 0.0
        %971 = vadd.xlane.f32.xlu0 %v970
        %v972 = vpop.xlane.xlu0 %971
        %v973 = vsel %vm765, %v969, 0.0
        %974 = vadd.xlane.f32.xlu0 %v973
        %v975 = vpop.xlane.xlu0 %974
        %v976 = vrcp.pop %v972
        %v977 = vrcp.pop %v975
        %v978 = vmul.f32 %v967, %v976
        %v979 = vmul.f32 %v969, %v977
        %980 = vrot.lane.b32.xlu0 %v710, 112
        %v981 = vpop.permute.xlu0 %980
        %982 = vrot.lane.b32.xlu0 %v712, 112
        %v983 = vpop.permute.xlu0 %982
        %v987 = vsel %vm765, %v978, 0
        %v990 = vsel %vm765, %v979, 0
        %992 = vmatpush.msra.mxu0 0.0
        %993 = vmatpush.msra.mxu0 0.0
        %994 = vmatpush.msra.mxu0 0.0
        %995 = vmatpush.msra.mxu0 0.0
        %996 = vmatpush.msra.mxu0 0.0
        %997 = vmatpush.msra.mxu0 0.0
        %998 = vmatpush.msra.mxu0 0.0
        %999 = vmatpush.msra.mxu0 0.0
        %1000 = vmatpush.msra.mxu0 0.0
        %1001 = vmatpush.msra.mxu0 0.0
        %1002 = vmatpush.msra.mxu0 0.0
        %1003 = vmatpush.msra.mxu0 0.0
        %1004 = vmatpush.msra.mxu0 0.0
        %1005 = vmatpush.msra.mxu0 0.0
        %1006 = vmatpush.msra.mxu0 %v983
        %1007 = vmatpush.msra.mxu0 %v981
        %1008 = vmatmul.f32.gmra.mxu0 %v987
        %v1009 = vpop.f32.mrf.mxu0
        %v1010 = vadd.f32 0.0, %v1009
        %1011 = vmatmul.f32.gmra.mxu0 %v990
        %v1012 = vpop.f32.mrf.mxu0
        %v1013 = vadd.f32 0.0, %v1012
        %1014 = vdwg.mxu0
        %1015 = vrot.lane.b32.xlu0 %v714, 104
        %v1016 = vpop.permute.xlu0 %1015
        %1017 = vrot.lane.b32.xlu0 %v715, 104
        %v1018 = vpop.permute.xlu0 %1017
        %1019 = vrot.lane.b32.xlu0 %v696, 40
        %v1020 = vpop.permute.xlu0 %1019
        %1021 = vrot.lane.b32.xlu0 %v698, 40
        %v1022 = vpop.permute.xlu0 %1021
        %v1023 = vsel %vm729, %v1016, 0
        %v1025 = vsel %vm729, %v1018, 0
        %v1027 = vsel %vm729, %v1020, 0
        %v1029 = vsel %vm729, %v1022, 0
        %1031 = vmatpush.xpose.msra.mxu0 0.0
        %1032 = vmatpush.xpose.msra.mxu0 0.0
        %1033 = vmatpush.xpose.msra.mxu0 0.0
        %1034 = vmatpush.xpose.msra.mxu0 0.0
        %1035 = vmatpush.xpose.msra.mxu0 0.0
        %1036 = vmatpush.xpose.msra.mxu0 0.0
        %1037 = vmatpush.xpose.msra.mxu0 0.0
        %1038 = vmatpush.xpose.msra.mxu0 0.0
        %1039 = vmatpush.xpose.msra.mxu0 0.0
        %1040 = vmatpush.xpose.msra.mxu0 0.0
        %1041 = vmatpush.xpose.msra.mxu0 0.0
        %1042 = vmatpush.xpose.msra.mxu0 0.0
        %1043 = vmatpush.xpose.msra.mxu0 0.0
        %1044 = vmatpush.xpose.msra.mxu0 0.0
        %1045 = vmatpush.xpose.msra.mxu0 %v1029
        %1046 = vmatpush.xpose.msra.mxu0 %v1027
        %1047 = vmatmul.f32.gmra.mxu0 %v1023
        %v1048 = vpop.f32.mrf.mxu0
        %v1049 = vadd.f32 0.0, %v1048
        %1050 = vmatmul.f32.gmra.mxu0 %v1025
        %v1051 = vpop.f32.mrf.mxu0
        %v1052 = vadd.f32 0.0, %v1051
        %1053 = vdwg.mxu0
        %v1054 = vsel %vm721, %v1049, -1e+30
        %v1055 = vsel %vm722, %v1052, -1e+30
        %v1056 = vsel %vm765, %v1054, -inf
        %1057 = vmax.xlane.f32.xlu0 %v1056
        %v1058 = vpop.xlane.xlu0 %1057
        %v1059 = vsel %vm765, %v1055, -inf
        %1060 = vmax.xlane.f32.xlu0 %v1059
        %v1061 = vpop.xlane.xlu0 %1060
        %v1062 = vsub.f32 %v1054, %v1058
        %v1063 = vsub.f32 %v1055, %v1061
        %v1064 = vmul.f32 %v1062, 1.442695
        %v1065 = vpow.pop %v1064
        %v1066 = vmul.f32 %v1063, 1.442695
        %v1067 = vpow.pop %v1066
        %v1068 = vsel %vm765, %v1065, 0.0
        %1069 = vadd.xlane.f32.xlu0 %v1068
        %v1070 = vpop.xlane.xlu0 %1069
        %v1071 = vsel %vm765, %v1067, 0.0
        %1072 = vadd.xlane.f32.xlu0 %v1071
        %v1073 = vpop.xlane.xlu0 %1072
        %v1074 = vrcp.pop %v1070
        %v1075 = vrcp.pop %v1073
        %v1076 = vmul.f32 %v1065, %v1074
        %v1077 = vmul.f32 %v1067, %v1075
        %1078 = vrot.lane.b32.xlu0 %v710, 104
        %v1079 = vpop.permute.xlu0 %1078
        %1080 = vrot.lane.b32.xlu0 %v712, 104
        %v1081 = vpop.permute.xlu0 %1080
        %v1085 = vsel %vm765, %v1076, 0
        %v1088 = vsel %vm765, %v1077, 0
        %1090 = vmatpush.msra.mxu0 0.0
        %1091 = vmatpush.msra.mxu0 0.0
        %1092 = vmatpush.msra.mxu0 0.0
        %1093 = vmatpush.msra.mxu0 0.0
        %1094 = vmatpush.msra.mxu0 0.0
        %1095 = vmatpush.msra.mxu0 0.0
        %1096 = vmatpush.msra.mxu0 0.0
        %1097 = vmatpush.msra.mxu0 0.0
        %1098 = vmatpush.msra.mxu0 0.0
        %1099 = vmatpush.msra.mxu0 0.0
        %1100 = vmatpush.msra.mxu0 0.0
        %1101 = vmatpush.msra.mxu0 0.0
        %1102 = vmatpush.msra.mxu0 0.0
        %1103 = vmatpush.msra.mxu0 0.0
        %1104 = vmatpush.msra.mxu0 %v1081
        %1105 = vmatpush.msra.mxu0 %v1079
        %1106 = vmatmul.f32.gmra.mxu0 %v1085
        %v1107 = vpop.f32.mrf.mxu0
        %v1108 = vadd.f32 0.0, %v1107
        %1109 = vmatmul.f32.gmra.mxu0 %v1088
        %v1110 = vpop.f32.mrf.mxu0
        %v1111 = vadd.f32 0.0, %v1110
        %1112 = vdwg.mxu0
        %1113 = vrot.lane.b32.xlu0 %v714, 96
        %v1114 = vpop.permute.xlu0 %1113
        %1115 = vrot.lane.b32.xlu0 %v715, 96
        %v1116 = vpop.permute.xlu0 %1115
        %1117 = vrot.lane.b32.xlu0 %v696, 32
        %v1118 = vpop.permute.xlu0 %1117
        %1119 = vrot.lane.b32.xlu0 %v698, 32
        %v1120 = vpop.permute.xlu0 %1119
        %v1121 = vsel %vm729, %v1114, 0
        %v1123 = vsel %vm729, %v1116, 0
        %v1125 = vsel %vm729, %v1118, 0
        %v1127 = vsel %vm729, %v1120, 0
        %1129 = vmatpush.xpose.msra.mxu0 0.0
        %1130 = vmatpush.xpose.msra.mxu0 0.0
        %1131 = vmatpush.xpose.msra.mxu0 0.0
        %1132 = vmatpush.xpose.msra.mxu0 0.0
        %1133 = vmatpush.xpose.msra.mxu0 0.0
        %1134 = vmatpush.xpose.msra.mxu0 0.0
        %1135 = vmatpush.xpose.msra.mxu0 0.0
        %1136 = vmatpush.xpose.msra.mxu0 0.0
        %1137 = vmatpush.xpose.msra.mxu0 0.0
        %1138 = vmatpush.xpose.msra.mxu0 0.0
        %1139 = vmatpush.xpose.msra.mxu0 0.0
        %1140 = vmatpush.xpose.msra.mxu0 0.0
        %1141 = vmatpush.xpose.msra.mxu0 0.0
        %1142 = vmatpush.xpose.msra.mxu0 0.0
        %1143 = vmatpush.xpose.msra.mxu0 %v1127
        %1144 = vmatpush.xpose.msra.mxu0 %v1125
        %1145 = vmatmul.f32.gmra.mxu0 %v1121
        %v1146 = vpop.f32.mrf.mxu0
        %v1147 = vadd.f32 0.0, %v1146
        %1148 = vmatmul.f32.gmra.mxu0 %v1123
        %v1149 = vpop.f32.mrf.mxu0
        %v1150 = vadd.f32 0.0, %v1149
        %1151 = vdwg.mxu0
        %v1152 = vsel %vm721, %v1147, -1e+30
        %v1153 = vsel %vm722, %v1150, -1e+30
        %v1154 = vsel %vm765, %v1152, -inf
        %1155 = vmax.xlane.f32.xlu0 %v1154
        %v1156 = vpop.xlane.xlu0 %1155
        %v1157 = vsel %vm765, %v1153, -inf
        %1158 = vmax.xlane.f32.xlu0 %v1157
        %v1159 = vpop.xlane.xlu0 %1158
        %v1160 = vsub.f32 %v1152, %v1156
        %v1161 = vsub.f32 %v1153, %v1159
        %v1162 = vmul.f32 %v1160, 1.442695
        %v1163 = vpow.pop %v1162
        %v1164 = vmul.f32 %v1161, 1.442695
        %v1165 = vpow.pop %v1164
        %v1166 = vsel %vm765, %v1163, 0.0
        %1167 = vadd.xlane.f32.xlu0 %v1166
        %v1168 = vpop.xlane.xlu0 %1167
        %v1169 = vsel %vm765, %v1165, 0.0
        %1170 = vadd.xlane.f32.xlu0 %v1169
        %v1171 = vpop.xlane.xlu0 %1170
        %v1172 = vrcp.pop %v1168
        %v1173 = vrcp.pop %v1171
        %v1174 = vmul.f32 %v1163, %v1172
        %v1175 = vmul.f32 %v1165, %v1173
        %1176 = vrot.lane.b32.xlu0 %v710, 96
        %v1177 = vpop.permute.xlu0 %1176
        %1178 = vrot.lane.b32.xlu0 %v712, 96
        %v1179 = vpop.permute.xlu0 %1178
        %v1183 = vsel %vm765, %v1174, 0
        %v1186 = vsel %vm765, %v1175, 0
        %1188 = vmatpush.msra.mxu0 0.0
        %1189 = vmatpush.msra.mxu0 0.0
        %1190 = vmatpush.msra.mxu0 0.0
        %1191 = vmatpush.msra.mxu0 0.0
        %1192 = vmatpush.msra.mxu0 0.0
        %1193 = vmatpush.msra.mxu0 0.0
        %1194 = vmatpush.msra.mxu0 0.0
        %1195 = vmatpush.msra.mxu0 0.0
        %1196 = vmatpush.msra.mxu0 0.0
        %1197 = vmatpush.msra.mxu0 0.0
        %1198 = vmatpush.msra.mxu0 0.0
        %1199 = vmatpush.msra.mxu0 0.0
        %1200 = vmatpush.msra.mxu0 0.0
        %1201 = vmatpush.msra.mxu0 0.0
        %1202 = vmatpush.msra.mxu0 %v1179
        %1203 = vmatpush.msra.mxu0 %v1177
        %1204 = vmatmul.f32.gmra.mxu0 %v1183
        %v1205 = vpop.f32.mrf.mxu0
        %v1206 = vadd.f32 0.0, %v1205
        %1207 = vmatmul.f32.gmra.mxu0 %v1186
        %v1208 = vpop.f32.mrf.mxu0
        %v1209 = vadd.f32 0.0, %v1208
        %1210 = vdwg.mxu0
        %1211 = vrot.lane.b32.xlu0 %v714, 88
        %v1212 = vpop.permute.xlu0 %1211
        %1213 = vrot.lane.b32.xlu0 %v715, 88
        %v1214 = vpop.permute.xlu0 %1213
        %1215 = vrot.lane.b32.xlu0 %v696, 24
        %v1216 = vpop.permute.xlu0 %1215
        %1217 = vrot.lane.b32.xlu0 %v698, 24
        %v1218 = vpop.permute.xlu0 %1217
        %v1219 = vsel %vm729, %v1212, 0
        %v1221 = vsel %vm729, %v1214, 0
        %v1223 = vsel %vm729, %v1216, 0
        %v1225 = vsel %vm729, %v1218, 0
        %1227 = vmatpush.xpose.msra.mxu0 0.0
        %1228 = vmatpush.xpose.msra.mxu0 0.0
        %1229 = vmatpush.xpose.msra.mxu0 0.0
        %1230 = vmatpush.xpose.msra.mxu0 0.0
        %1231 = vmatpush.xpose.msra.mxu0 0.0
        %1232 = vmatpush.xpose.msra.mxu0 0.0
        %1233 = vmatpush.xpose.msra.mxu0 0.0
        %1234 = vmatpush.xpose.msra.mxu0 0.0
        %1235 = vmatpush.xpose.msra.mxu0 0.0
        %1236 = vmatpush.xpose.msra.mxu0 0.0
        %1237 = vmatpush.xpose.msra.mxu0 0.0
        %1238 = vmatpush.xpose.msra.mxu0 0.0
        %1239 = vmatpush.xpose.msra.mxu0 0.0
        %1240 = vmatpush.xpose.msra.mxu0 0.0
        %1241 = vmatpush.xpose.msra.mxu0 %v1225
        %1242 = vmatpush.xpose.msra.mxu0 %v1223
        %1243 = vmatmul.f32.gmra.mxu0 %v1219
        %v1244 = vpop.f32.mrf.mxu0
        %v1245 = vadd.f32 0.0, %v1244
        %1246 = vmatmul.f32.gmra.mxu0 %v1221
        %v1247 = vpop.f32.mrf.mxu0
        %v1248 = vadd.f32 0.0, %v1247
        %1249 = vdwg.mxu0
        %v1250 = vsel %vm721, %v1245, -1e+30
        %v1251 = vsel %vm722, %v1248, -1e+30
        %v1252 = vsel %vm765, %v1250, -inf
        %1253 = vmax.xlane.f32.xlu0 %v1252
        %v1254 = vpop.xlane.xlu0 %1253
        %v1255 = vsel %vm765, %v1251, -inf
        %1256 = vmax.xlane.f32.xlu0 %v1255
        %v1257 = vpop.xlane.xlu0 %1256
        %v1258 = vsub.f32 %v1250, %v1254
        %v1259 = vsub.f32 %v1251, %v1257
        %v1260 = vmul.f32 %v1258, 1.442695
        %v1261 = vpow.pop %v1260
        %v1262 = vmul.f32 %v1259, 1.442695
        %v1263 = vpow.pop %v1262
        %v1264 = vsel %vm765, %v1261, 0.0
        %1265 = vadd.xlane.f32.xlu0 %v1264
        %v1266 = vpop.xlane.xlu0 %1265
        %v1267 = vsel %vm765, %v1263, 0.0
        %1268 = vadd.xlane.f32.xlu0 %v1267
        %v1269 = vpop.xlane.xlu0 %1268
        %v1270 = vrcp.pop %v1266
        %v1271 = vrcp.pop %v1269
        %v1272 = vmul.f32 %v1261, %v1270
        %v1273 = vmul.f32 %v1263, %v1271
        %1274 = vrot.lane.b32.xlu0 %v710, 88
        %v1275 = vpop.permute.xlu0 %1274
        %1276 = vrot.lane.b32.xlu0 %v712, 88
        %v1277 = vpop.permute.xlu0 %1276
        %v1281 = vsel %vm765, %v1272, 0
        %v1284 = vsel %vm765, %v1273, 0
        %1286 = vmatpush.msra.mxu0 0.0
        %1287 = vmatpush.msra.mxu0 0.0
        %1288 = vmatpush.msra.mxu0 0.0
        %1289 = vmatpush.msra.mxu0 0.0
        %1290 = vmatpush.msra.mxu0 0.0
        %1291 = vmatpush.msra.mxu0 0.0
        %1292 = vmatpush.msra.mxu0 0.0
        %1293 = vmatpush.msra.mxu0 0.0
        %1294 = vmatpush.msra.mxu0 0.0
        %1295 = vmatpush.msra.mxu0 0.0
        %1296 = vmatpush.msra.mxu0 0.0
        %1297 = vmatpush.msra.mxu0 0.0
        %1298 = vmatpush.msra.mxu0 0.0
        %1299 = vmatpush.msra.mxu0 0.0
        %1300 = vmatpush.msra.mxu0 %v1277
        %1301 = vmatpush.msra.mxu0 %v1275
        %1302 = vmatmul.f32.gmra.mxu0 %v1281
        %v1303 = vpop.f32.mrf.mxu0
        %v1304 = vadd.f32 0.0, %v1303
        %1305 = vmatmul.f32.gmra.mxu0 %v1284
        %v1306 = vpop.f32.mrf.mxu0
        %v1307 = vadd.f32 0.0, %v1306
        %1308 = vdwg.mxu0
        %1309 = vrot.lane.b32.xlu0 %v714, 80
        %v1310 = vpop.permute.xlu0 %1309
        %1311 = vrot.lane.b32.xlu0 %v715, 80
        %v1312 = vpop.permute.xlu0 %1311
        %1313 = vrot.lane.b32.xlu0 %v696, 16
        %v1314 = vpop.permute.xlu0 %1313
        %1315 = vrot.lane.b32.xlu0 %v698, 16
        %v1316 = vpop.permute.xlu0 %1315
        %v1317 = vsel %vm729, %v1310, 0
        %v1319 = vsel %vm729, %v1312, 0
        %v1321 = vsel %vm729, %v1314, 0
        %v1323 = vsel %vm729, %v1316, 0
        %1325 = vmatpush.xpose.msra.mxu0 0.0
        %1326 = vmatpush.xpose.msra.mxu0 0.0
        %1327 = vmatpush.xpose.msra.mxu0 0.0
        %1328 = vmatpush.xpose.msra.mxu0 0.0
        %1329 = vmatpush.xpose.msra.mxu0 0.0
        %1330 = vmatpush.xpose.msra.mxu0 0.0
        %1331 = vmatpush.xpose.msra.mxu0 0.0
        %1332 = vmatpush.xpose.msra.mxu0 0.0
        %1333 = vmatpush.xpose.msra.mxu0 0.0
        %1334 = vmatpush.xpose.msra.mxu0 0.0
        %1335 = vmatpush.xpose.msra.mxu0 0.0
        %1336 = vmatpush.xpose.msra.mxu0 0.0
        %1337 = vmatpush.xpose.msra.mxu0 0.0
        %1338 = vmatpush.xpose.msra.mxu0 0.0
        %1339 = vmatpush.xpose.msra.mxu0 %v1323
        %1340 = vmatpush.xpose.msra.mxu0 %v1321
        %1341 = vmatmul.f32.gmra.mxu0 %v1317
        %v1342 = vpop.f32.mrf.mxu0
        %v1343 = vadd.f32 0.0, %v1342
        %1344 = vmatmul.f32.gmra.mxu0 %v1319
        %v1345 = vpop.f32.mrf.mxu0
        %v1346 = vadd.f32 0.0, %v1345
        %1347 = vdwg.mxu0
        %v1348 = vsel %vm721, %v1343, -1e+30
        %v1349 = vsel %vm722, %v1346, -1e+30
        %v1350 = vsel %vm765, %v1348, -inf
        %1351 = vmax.xlane.f32.xlu0 %v1350
        %v1352 = vpop.xlane.xlu0 %1351
        %v1353 = vsel %vm765, %v1349, -inf
        %1354 = vmax.xlane.f32.xlu0 %v1353
        %v1355 = vpop.xlane.xlu0 %1354
        %v1356 = vsub.f32 %v1348, %v1352
        %v1357 = vsub.f32 %v1349, %v1355
        %v1358 = vmul.f32 %v1356, 1.442695
        %v1359 = vpow.pop %v1358
        %v1360 = vmul.f32 %v1357, 1.442695
        %v1361 = vpow.pop %v1360
        %v1362 = vsel %vm765, %v1359, 0.0
        %1363 = vadd.xlane.f32.xlu0 %v1362
        %v1364 = vpop.xlane.xlu0 %1363
        %v1365 = vsel %vm765, %v1361, 0.0
        %1366 = vadd.xlane.f32.xlu0 %v1365
        %v1367 = vpop.xlane.xlu0 %1366
        %v1368 = vrcp.pop %v1364
        %v1369 = vrcp.pop %v1367
        %v1370 = vmul.f32 %v1359, %v1368
        %v1371 = vmul.f32 %v1361, %v1369
        %1372 = vrot.lane.b32.xlu0 %v710, 80
        %v1373 = vpop.permute.xlu0 %1372
        %1374 = vrot.lane.b32.xlu0 %v712, 80
        %v1375 = vpop.permute.xlu0 %1374
        %v1379 = vsel %vm765, %v1370, 0
        %v1382 = vsel %vm765, %v1371, 0
        %1384 = vmatpush.msra.mxu0 0.0
        %1385 = vmatpush.msra.mxu0 0.0
        %1386 = vmatpush.msra.mxu0 0.0
        %1387 = vmatpush.msra.mxu0 0.0
        %1388 = vmatpush.msra.mxu0 0.0
        %1389 = vmatpush.msra.mxu0 0.0
        %1390 = vmatpush.msra.mxu0 0.0
        %1391 = vmatpush.msra.mxu0 0.0
        %1392 = vmatpush.msra.mxu0 0.0
        %1393 = vmatpush.msra.mxu0 0.0
        %1394 = vmatpush.msra.mxu0 0.0
        %1395 = vmatpush.msra.mxu0 0.0
        %1396 = vmatpush.msra.mxu0 0.0
        %1397 = vmatpush.msra.mxu0 0.0
        %1398 = vmatpush.msra.mxu0 %v1375
        %1399 = vmatpush.msra.mxu0 %v1373
        %1400 = vmatmul.f32.gmra.mxu0 %v1379
        %v1401 = vpop.f32.mrf.mxu0
        %v1402 = vadd.f32 0.0, %v1401
        %1403 = vmatmul.f32.gmra.mxu0 %v1382
        %v1404 = vpop.f32.mrf.mxu0
        %v1405 = vadd.f32 0.0, %v1404
        %1406 = vdwg.mxu0
        %1407 = vrot.lane.b32.xlu0 %v714, 72
        %v1408 = vpop.permute.xlu0 %1407
        %1409 = vrot.lane.b32.xlu0 %v715, 72
        %v1410 = vpop.permute.xlu0 %1409
        %1411 = vrot.lane.b32.xlu0 %v696, 8
        %v1412 = vpop.permute.xlu0 %1411
        %1413 = vrot.lane.b32.xlu0 %v698, 8
        %v1414 = vpop.permute.xlu0 %1413
        %v1415 = vsel %vm729, %v1408, 0
        %v1417 = vsel %vm729, %v1410, 0
        %v1419 = vsel %vm729, %v1412, 0
        %v1421 = vsel %vm729, %v1414, 0
        %1423 = vmatpush.xpose.msra.mxu0 0.0
        %1424 = vmatpush.xpose.msra.mxu0 0.0
        %1425 = vmatpush.xpose.msra.mxu0 0.0
        %1426 = vmatpush.xpose.msra.mxu0 0.0
        %1427 = vmatpush.xpose.msra.mxu0 0.0
        %1428 = vmatpush.xpose.msra.mxu0 0.0
        %1429 = vmatpush.xpose.msra.mxu0 0.0
        %1430 = vmatpush.xpose.msra.mxu0 0.0
        %1431 = vmatpush.xpose.msra.mxu0 0.0
        %1432 = vmatpush.xpose.msra.mxu0 0.0
        %1433 = vmatpush.xpose.msra.mxu0 0.0
        %1434 = vmatpush.xpose.msra.mxu0 0.0
        %1435 = vmatpush.xpose.msra.mxu0 0.0
        %1436 = vmatpush.xpose.msra.mxu0 0.0
        %1437 = vmatpush.xpose.msra.mxu0 %v1421
        %1438 = vmatpush.xpose.msra.mxu0 %v1419
        %1439 = vmatmul.f32.gmra.mxu0 %v1415
        %v1440 = vpop.f32.mrf.mxu0
        %v1441 = vadd.f32 0.0, %v1440
        %1442 = vmatmul.f32.gmra.mxu0 %v1417
        %v1443 = vpop.f32.mrf.mxu0
        %v1444 = vadd.f32 0.0, %v1443
        %1445 = vdwg.mxu0
        %v1446 = vsel %vm721, %v1441, -1e+30
        %v1447 = vsel %vm722, %v1444, -1e+30
        %v1448 = vsel %vm765, %v1446, -inf
        %1449 = vmax.xlane.f32.xlu0 %v1448
        %v1450 = vpop.xlane.xlu0 %1449
        %v1451 = vsel %vm765, %v1447, -inf
        %1452 = vmax.xlane.f32.xlu0 %v1451
        %v1453 = vpop.xlane.xlu0 %1452
        %v1454 = vsub.f32 %v1446, %v1450
        %v1455 = vsub.f32 %v1447, %v1453
        %v1456 = vmul.f32 %v1454, 1.442695
        %v1457 = vpow.pop %v1456
        %v1458 = vmul.f32 %v1455, 1.442695
        %v1459 = vpow.pop %v1458
        %v1460 = vsel %vm765, %v1457, 0.0
        %1461 = vadd.xlane.f32.xlu0 %v1460
        %v1462 = vpop.xlane.xlu0 %1461
        %v1463 = vsel %vm765, %v1459, 0.0
        %1464 = vadd.xlane.f32.xlu0 %v1463
        %v1465 = vpop.xlane.xlu0 %1464
        %v1466 = vrcp.pop %v1462
        %v1467 = vrcp.pop %v1465
        %v1468 = vmul.f32 %v1457, %v1466
        %v1469 = vmul.f32 %v1459, %v1467
        %1470 = vrot.lane.b32.xlu0 %v710, 72
        %v1471 = vpop.permute.xlu0 %1470
        %1472 = vrot.lane.b32.xlu0 %v712, 72
        %v1473 = vpop.permute.xlu0 %1472
        %v1477 = vsel %vm765, %v1468, 0
        %v1480 = vsel %vm765, %v1469, 0
        %1482 = vmatpush.msra.mxu0 0.0
        %1483 = vmatpush.msra.mxu0 0.0
        %1484 = vmatpush.msra.mxu0 0.0
        %1485 = vmatpush.msra.mxu0 0.0
        %1486 = vmatpush.msra.mxu0 0.0
        %1487 = vmatpush.msra.mxu0 0.0
        %1488 = vmatpush.msra.mxu0 0.0
        %1489 = vmatpush.msra.mxu0 0.0
        %1490 = vmatpush.msra.mxu0 0.0
        %1491 = vmatpush.msra.mxu0 0.0
        %1492 = vmatpush.msra.mxu0 0.0
        %1493 = vmatpush.msra.mxu0 0.0
        %1494 = vmatpush.msra.mxu0 0.0
        %1495 = vmatpush.msra.mxu0 0.0
        %1496 = vmatpush.msra.mxu0 %v1473
        %1497 = vmatpush.msra.mxu0 %v1471
        %1498 = vmatmul.f32.gmra.mxu0 %v1477
        %v1499 = vpop.f32.mrf.mxu0
        %v1500 = vadd.f32 0.0, %v1499
        %1501 = vmatmul.f32.gmra.mxu0 %v1480
        %v1502 = vpop.f32.mrf.mxu0
        %v1503 = vadd.f32 0.0, %v1502
        %1504 = vdwg.mxu0
        %1507 = vrot.lane.b32.xlu0 %v912, 8
        %v1508 = vpop.permute.xlu0 %1507
        %1509 = vrot.lane.b32.xlu0 %v915, 8
        %v1510 = vpop.permute.xlu0 %1509
        %1515 = vrot.lane.b32.xlu0 %v1010, 16
        %v1516 = vpop.permute.xlu0 %1515
        %1517 = vrot.lane.b32.xlu0 %v1013, 16
        %v1518 = vpop.permute.xlu0 %1517
        %1523 = vrot.lane.b32.xlu0 %v1108, 24
        %v1524 = vpop.permute.xlu0 %1523
        %1525 = vrot.lane.b32.xlu0 %v1111, 24
        %v1526 = vpop.permute.xlu0 %1525
        %1531 = vrot.lane.b32.xlu0 %v1206, 32
        %v1532 = vpop.permute.xlu0 %1531
        %1533 = vrot.lane.b32.xlu0 %v1209, 32
        %v1534 = vpop.permute.xlu0 %1533
        %1539 = vrot.lane.b32.xlu0 %v1304, 40
        %v1540 = vpop.permute.xlu0 %1539
        %1541 = vrot.lane.b32.xlu0 %v1307, 40
        %v1542 = vpop.permute.xlu0 %1541
        %1547 = vrot.lane.b32.xlu0 %v1402, 48
        %v1548 = vpop.permute.xlu0 %1547
        %1549 = vrot.lane.b32.xlu0 %v1405, 48
        %v1550 = vpop.permute.xlu0 %1549
        %1555 = vrot.lane.b32.xlu0 %v1500, 56
        %v1556 = vpop.permute.xlu0 %1555
        %1557 = vrot.lane.b32.xlu0 %v1503, 56
        %v1558 = vpop.permute.xlu0 %1557
        %v1561 = vsel %vm729, %v812, %v1508
        %v1562 = vsel %vm729, %v815, %v1510
        %v1563 = vsel %vm765, %v1561, %v1516
        %v1564 = vsel %vm765, %v1562, %v1518
        %vm1565 = vcmask 195584
        %v1566 = vsel %vm1565, %v1563, %v1524
        %v1567 = vsel %vm1565, %v1564, %v1526
        %vm1568 = vcmask 261120
        %v1569 = vsel %vm1568, %v1566, %v1532
        %v1570 = vsel %vm1568, %v1567, %v1534
        %vm1571 = vcmask 326656
        %v1572 = vsel %vm1571, %v1569, %v1540
        %v1573 = vsel %vm1571, %v1570, %v1542
        %vm1574 = vcmask 392192
        %v1575 = vsel %vm1574, %v1572, %v1548
        %v1576 = vsel %vm1574, %v1573, %v1550
        %vm1577 = vcmask 457728
        %v1578 = vsel %vm1577, %v1575, %v1556
        %v1579 = vsel %vm1577, %v1576, %v1558
        %v1580 = vpack.c.bf16 %v1579, %v1578
        %v1581 = vld [vmem:[%s5] sm:$0xf]
        %v1582 = vld [vmem:[%s5 + $0x4] sm:$0xf]
        %v1583 = vld [vmem:[%s5 + $0x8] sm:$0xf]
        %v1584 = vld [vmem:[%s5 + $0xc] sm:$0xf]
        %v1585 = vld [vmem:[%s5 + $0x10] sm:$0xf]
        %v1586 = vld [vmem:[%s5 + $0x14] sm:$0xf]
        %v1587 = vld [vmem:[%s5 + $0x18] sm:$0xf]
        %v1588 = vld [vmem:[%s5 + $0x1c] sm:$0xf]
        %v1589 = vld [vmem:[#allocation7] sm:$0x1]
        %v1590 = vunpack.c.l.bf16 %v1589
        %v1591 = vperm.slane %v1590, 0
        %v1600 = vunpack.c.l.b16 %v1581
        %v1601 = vunpack.c.l.b16 %v1582
        %v1602 = vunpack.c.l.b16 %v1583
        %v1603 = vunpack.c.l.b16 %v1584
        %v1604 = vunpack.c.l.b16 %v1585
        %v1605 = vunpack.c.l.b16 %v1586
        %v1606 = vunpack.c.l.b16 %v1587
        %v1607 = vunpack.c.l.b16 %v1588
        %v1608 = vpack.c.b16 %v1601, %v1600
        %v1609 = vpack.c.b16 %v1603, %v1602
        %v1610 = vpack.c.b16 %v1605, %v1604
        %v1611 = vpack.c.b16 %v1607, %v1606
        %v1617 = vsel %vm563, %v1580, 0
        %1619 = vmatpush.bf16.msra.mxu0 0
        %1620 = vmatpush.bf16.msra.mxu0 0
        %1621 = vmatpush.bf16.msra.mxu0 0
        %1622 = vmatpush.bf16.msra.mxu0 0
        %1623 = vmatpush.bf16.msra.mxu0 %v1611
        %1624 = vmatpush.bf16.msra.mxu0 %v1610
        %1625 = vmatpush.bf16.msra.mxu0 %v1609
        %1626 = vmatpush.bf16.msra.mxu0 %v1608
        %1627 = vmatmul.bf16.gmra.mxu0 %v1617
        %v1628 = vpop.f32.mrf.mxu0
        %v1629 = vadd.f32 %v1591, %v1628
        %v1630 = vpop.f32.mrf.mxu0
        %v1631 = vadd.f32 %v1591, %v1630
        %1632 = vdwg.mxu0
        %v1633 = vadd.f32 %v561, %v1629
        %v1634 = vadd.f32 %v562, %v1631
        %v1635 = vsel %vm563, %v1633, 0.0
        %1636 = vadd.xlane.f32.xlu0 %v1635
        %v1637 = vpop.xlane.xlu0 %1636
        %v1638 = vsel %vm563, %v1634, 0.0
        %1639 = vadd.xlane.f32.xlu0 %v1638
        %v1640 = vpop.xlane.xlu0 %1639
        %v1641 = vmul.f32 %v1637, %v576
        %v1642 = vmul.f32 %v1640, %v576
        %v1643 = vsub.f32 %v1633, %v1641
        %v1644 = vsub.f32 %v1634, %v1642
        %v1645 = vmul.f32 %v1643, %v1643
        %v1646 = vmul.f32 %v1644, %v1644
        %v1647 = vsel %vm563, %v1645, 0.0
        %1648 = vadd.xlane.f32.xlu0 %v1647
        %v1649 = vpop.xlane.xlu0 %1648
        %v1650 = vsel %vm563, %v1646, 0.0
        %1651 = vadd.xlane.f32.xlu0 %v1650
        %v1652 = vpop.xlane.xlu0 %1651
        %v1653 = vmul.f32 %v1649, %v576
        %v1654 = vmul.f32 %v1652, %v576
        %v1655 = vadd.f32 %v1653, 1e-05
        %v1656 = vadd.f32 %v1654, 1e-05
        %v1657 = vrsqrt.pop %v1655
        %v1658 = vmul.f32 %v1657, %v1655
        %v1659 = vmul.f32 %v1658, %v1657
        %v1660 = vmul.f32 0.5, %v1659
        %v1661 = vsub.f32 1.5, %v1660
        %v1662 = vmul.f32 %v1657, %v1661
        %vm1663 = vweird.f32 %v1655
        %vm1664 = vweird.f32 %v1657
        %vm1665 = vmor %vm1663, %vm1664
        %v1666 = vsel %vm1665, %v1657, %v1662
        %v1667 = vrsqrt.pop %v1656
        %v1668 = vmul.f32 %v1667, %v1656
        %v1669 = vmul.f32 %v1668, %v1667
        %v1670 = vmul.f32 0.5, %v1669
        %v1671 = vsub.f32 1.5, %v1670
        %v1672 = vmul.f32 %v1667, %v1671
        %vm1673 = vweird.f32 %v1656
        %vm1674 = vweird.f32 %v1667
        %vm1675 = vmor %vm1673, %vm1674
        %v1676 = vsel %vm1675, %v1667, %v1672
        %v1677 = vmul.f32 %v1643, %v1666
        %v1678 = vmul.f32 %v1644, %v1676
        %v1679 = vld [vmem:[#allocation9] sm:$0x1]
        %v1680 = vunpack.c.l.bf16 %v1679
        %v1681 = vperm.slane %v1680, 0
        %v1682 = vmul.f32 %v1677, %v1681
        %v1683 = vmul.f32 %v1678, %v1681
        %v1684 = vld [vmem:[#allocation10] sm:$0x1]
        %v1685 = vunpack.c.l.bf16 %v1684
        %v1686 = vperm.slane %v1685, 0
        %v1687 = vadd.f32 %v1682, %v1686
        %v1688 = vadd.f32 %v1683, %v1686
        %v1689 = vpack.c.bf16 %v1688, %v1687
        %v1690 = vld [vmem:[%s9] sm:$0xff]
        %v1691 = vld [vmem:[%s9 + $0x8] sm:$0xff]
        %v1692 = vld [vmem:[%s9 + $0x10] sm:$0xff]
        %v1693 = vld [vmem:[%s9 + $0x18] sm:$0xff]
        %v1694 = vld [vmem:[%s9 + $0x20] sm:$0xff]
        %v1695 = vld [vmem:[%s9 + $0x28] sm:$0xff]
        %v1696 = vld [vmem:[%s9 + $0x30] sm:$0xff]
        %v1697 = vld [vmem:[%s9 + $0x38] sm:$0xff]
        %v1698 = vld [vmem:[#allocation12] sm:$0x3]
        %v1699 = vunpack.c.l.bf16 %v1698
        %v1701 = vperm.slane %v1699, 0
        %v1702 = vperm.slane %v1699, 2
        %v1705 = vperm.slane %v1701, 0
        %v1706 = vperm.slane %v1702, 0
        %v1715 = vunpack.c.l.b16 %v1690
        %v1716 = vunpack.c.h.b16 %v1690
        %v1717 = vunpack.c.l.b16 %v1691
        %v1718 = vunpack.c.h.b16 %v1691
        %v1719 = vunpack.c.l.b16 %v1692
        %v1720 = vunpack.c.h.b16 %v1692
        %v1721 = vunpack.c.l.b16 %v1693
        %v1722 = vunpack.c.h.b16 %v1693
        %v1723 = vunpack.c.l.b16 %v1694
        %v1724 = vunpack.c.h.b16 %v1694
        %v1725 = vunpack.c.l.b16 %v1695
        %v1726 = vunpack.c.h.b16 %v1695
        %v1727 = vunpack.c.l.b16 %v1696
        %v1728 = vunpack.c.h.b16 %v1696
        %v1729 = vunpack.c.l.b16 %v1697
        %v1730 = vunpack.c.h.b16 %v1697
        %v1731 = vpack.c.b16 %v1717, %v1715
        %v1732 = vpack.c.b16 %v1718, %v1716
        %v1733 = vpack.c.b16 %v1721, %v1719
        %v1734 = vpack.c.b16 %v1722, %v1720
        %v1735 = vpack.c.b16 %v1725, %v1723
        %v1736 = vpack.c.b16 %v1726, %v1724
        %v1737 = vpack.c.b16 %v1729, %v1727
        %v1738 = vpack.c.b16 %v1730, %v1728
        %v1748 = vsel %vm563, %v1689, 0
        %1750 = vmatpush.bf16.msra.mxu0 0
        %1751 = vmatpush.bf16.msra.mxu0 0
        %1752 = vmatpush.bf16.msra.mxu0 0
        %1753 = vmatpush.bf16.msra.mxu0 0
        %1754 = vmatpush.bf16.msra.mxu0 %v1737
        %1755 = vmatpush.bf16.msra.mxu0 %v1735
        %1756 = vmatpush.bf16.msra.mxu0 %v1733
        %1757 = vmatpush.bf16.msra.mxu0 %v1731
        %1758 = vmatmul.bf16.gmra.mxu0 %v1748
        %v1759 = vpop.f32.mrf.mxu0
        %v1760 = vadd.f32 %v1705, %v1759
        %v1761 = vpop.f32.mrf.mxu0
        %v1762 = vadd.f32 %v1705, %v1761
        %1763 = vdwg.mxu0
        %1764 = vmatpush.bf16.msra.mxu0 0
        %1765 = vmatpush.bf16.msra.mxu0 0
        %1766 = vmatpush.bf16.msra.mxu0 0
        %1767 = vmatpush.bf16.msra.mxu0 0
        %1768 = vmatpush.bf16.msra.mxu0 %v1738
        %1769 = vmatpush.bf16.msra.mxu0 %v1736
        %1770 = vmatpush.bf16.msra.mxu0 %v1734
        %1771 = vmatpush.bf16.msra.mxu0 %v1732
        %1772 = vmatmul.bf16.gmra.mxu0 %v1748
        %v1773 = vpop.f32.mrf.mxu0
        %v1774 = vadd.f32 %v1706, %v1773
        %v1775 = vpop.f32.mrf.mxu0
        %v1776 = vadd.f32 %v1706, %v1775
        %1777 = vdwg.mxu0
        %v1778 = vmul.f32 %v1760, 0.5
        %v1779 = vmul.f32 %v1774, 0.5
        %v1780 = vmul.f32 %v1762, 0.5
        %v1781 = vmul.f32 %v1776, 0.5
        %v1782 = vmul.f32 %v1760, 0.044715
        %v1783 = vmul.f32 %v1774, 0.044715
        %v1784 = vmul.f32 %v1762, 0.044715
        %v1785 = vmul.f32 %v1776, 0.044715
        %v1786 = vmul.f32 %v1782, %v1760
        %v1787 = vmul.f32 %v1783, %v1774
        %v1788 = vmul.f32 %v1784, %v1762
        %v1789 = vmul.f32 %v1785, %v1776
        %v1790 = vmul.f32 %v1786, %v1760
        %v1791 = vmul.f32 %v1787, %v1774
        %v1792 = vmul.f32 %v1788, %v1762
        %v1793 = vmul.f32 %v1789, %v1776
        %v1794 = vadd.f32 %v1760, %v1790
        %v1795 = vadd.f32 %v1774, %v1791
        %v1796 = vadd.f32 %v1762, %v1792
        %v1797 = vadd.f32 %v1776, %v1793
        %v1798 = vmul.f32 %v1794, 0.7978846
        %v1799 = vmul.f32 %v1795, 0.7978846
        %v1800 = vmul.f32 %v1796, 0.7978846
        %v1801 = vmul.f32 %v1797, 0.7978846
        %v1802 = vtanh.pop %v1798
        %v1803 = vtanh.pop %v1799
        %v1804 = vtanh.pop %v1800
        %v1805 = vtanh.pop %v1801
        %v1806 = vadd.f32 %v1802, 1.0
        %v1807 = vadd.f32 %v1803, 1.0
        %v1808 = vadd.f32 %v1804, 1.0
        %v1809 = vadd.f32 %v1805, 1.0
        %v1810 = vmul.f32 %v1778, %v1806
        %v1811 = vmul.f32 %v1779, %v1807
        %v1812 = vmul.f32 %v1780, %v1808
        %v1813 = vmul.f32 %v1781, %v1809
        %v1814 = vpack.c.bf16 %v1812, %v1810
        %v1815 = vpack.c.bf16 %v1813, %v1811
        %v1816 = vld [vmem:[%s11] sm:$0xf]
        %v1817 = vld [vmem:[%s11 + $0x4] sm:$0xf]
        %v1818 = vld [vmem:[%s11 + $0x8] sm:$0xf]
        %v1819 = vld [vmem:[%s11 + $0xc] sm:$0xf]
        %v1820 = vld [vmem:[%s11 + $0x10] sm:$0xf]
        %v1821 = vld [vmem:[%s11 + $0x14] sm:$0xf]
        %v1822 = vld [vmem:[%s11 + $0x18] sm:$0xf]
        %v1823 = vld [vmem:[%s11 + $0x1c] sm:$0xf]
        %v1824 = vld [vmem:[%s11 + $0x20] sm:$0xf]
        %v1825 = vld [vmem:[%s11 + $0x24] sm:$0xf]
        %v1826 = vld [vmem:[%s11 + $0x28] sm:$0xf]
        %v1827 = vld [vmem:[%s11 + $0x2c] sm:$0xf]
        %v1828 = vld [vmem:[%s11 + $0x30] sm:$0xf]
        %v1829 = vld [vmem:[%s11 + $0x34] sm:$0xf]
        %v1830 = vld [vmem:[%s11 + $0x38] sm:$0xf]
        %v1831 = vld [vmem:[%s11 + $0x3c] sm:$0xf]
        %v1832 = vld [vmem:[%s11 + $0x40] sm:$0xf]
        %v1833 = vld [vmem:[%s11 + $0x44] sm:$0xf]
        %v1834 = vld [vmem:[%s11 + $0x48] sm:$0xf]
        %v1835 = vld [vmem:[%s11 + $0x4c] sm:$0xf]
        %v1836 = vld [vmem:[%s11 + $0x50] sm:$0xf]
        %v1837 = vld [vmem:[%s11 + $0x54] sm:$0xf]
        %v1838 = vld [vmem:[%s11 + $0x58] sm:$0xf]
        %v1839 = vld [vmem:[%s11 + $0x5c] sm:$0xf]
        %v1840 = vld [vmem:[%s11 + $0x60] sm:$0xf]
        %v1841 = vld [vmem:[%s11 + $0x64] sm:$0xf]
        %v1842 = vld [vmem:[%s11 + $0x68] sm:$0xf]
        %v1843 = vld [vmem:[%s11 + $0x6c] sm:$0xf]
        %v1844 = vld [vmem:[%s11 + $0x70] sm:$0xf]
        %v1845 = vld [vmem:[%s11 + $0x74] sm:$0xf]
        %v1846 = vld [vmem:[%s11 + $0x78] sm:$0xf]
        %v1847 = vld [vmem:[%s11 + $0x7c] sm:$0xf]
        %v1848 = vld [vmem:[#allocation13] sm:$0x1]
        %v1849 = vunpack.c.l.bf16 %v1848
        %v1850 = vperm.slane %v1849, 0
        %v1883 = vunpack.c.l.b16 %v1816
        %v1884 = vunpack.c.l.b16 %v1817
        %v1885 = vunpack.c.l.b16 %v1818
        %v1886 = vunpack.c.l.b16 %v1819
        %v1887 = vunpack.c.l.b16 %v1820
        %v1888 = vunpack.c.l.b16 %v1821
        %v1889 = vunpack.c.l.b16 %v1822
        %v1890 = vunpack.c.l.b16 %v1823
        %v1891 = vunpack.c.l.b16 %v1824
        %v1892 = vunpack.c.l.b16 %v1825
        %v1893 = vunpack.c.l.b16 %v1826
        %v1894 = vunpack.c.l.b16 %v1827
        %v1895 = vunpack.c.l.b16 %v1828
        %v1896 = vunpack.c.l.b16 %v1829
        %v1897 = vunpack.c.l.b16 %v1830
        %v1898 = vunpack.c.l.b16 %v1831
        %v1899 = vunpack.c.l.b16 %v1832
        %v1900 = vunpack.c.l.b16 %v1833
        %v1901 = vunpack.c.l.b16 %v1834
        %v1902 = vunpack.c.l.b16 %v1835
        %v1903 = vunpack.c.l.b16 %v1836
        %v1904 = vunpack.c.l.b16 %v1837
        %v1905 = vunpack.c.l.b16 %v1838
        %v1906 = vunpack.c.l.b16 %v1839
        %v1907 = vunpack.c.l.b16 %v1840
        %v1908 = vunpack.c.l.b16 %v1841
        %v1909 = vunpack.c.l.b16 %v1842
        %v1910 = vunpack.c.l.b16 %v1843
        %v1911 = vunpack.c.l.b16 %v1844
        %v1912 = vunpack.c.l.b16 %v1845
        %v1913 = vunpack.c.l.b16 %v1846
        %v1914 = vunpack.c.l.b16 %v1847
        %v1915 = vpack.c.b16 %v1884, %v1883
        %v1916 = vpack.c.b16 %v1886, %v1885
        %v1917 = vpack.c.b16 %v1888, %v1887
        %v1918 = vpack.c.b16 %v1890, %v1889
        %v1919 = vpack.c.b16 %v1892, %v1891
        %v1920 = vpack.c.b16 %v1894, %v1893
        %v1921 = vpack.c.b16 %v1896, %v1895
        %v1922 = vpack.c.b16 %v1898, %v1897
        %v1923 = vpack.c.b16 %v1900, %v1899
        %v1924 = vpack.c.b16 %v1902, %v1901
        %v1925 = vpack.c.b16 %v1904, %v1903
        %v1926 = vpack.c.b16 %v1906, %v1905
        %v1927 = vpack.c.b16 %v1908, %v1907
        %v1928 = vpack.c.b16 %v1910, %v1909
        %v1929 = vpack.c.b16 %v1912, %v1911
        %v1930 = vpack.c.b16 %v1914, %v1913
        %1947 = vmatpush.bf16.msra.mxu0 %v1922
        %1948 = vmatpush.bf16.msra.mxu0 %v1921
        %1949 = vmatpush.bf16.msra.mxu0 %v1920
        %1950 = vmatpush.bf16.msra.mxu0 %v1919
        %1951 = vmatpush.bf16.msra.mxu0 %v1918
        %1952 = vmatpush.bf16.msra.mxu0 %v1917
        %1953 = vmatpush.bf16.msra.mxu0 %v1916
        %1954 = vmatpush.bf16.msra.mxu0 %v1915
        %1955 = vmatmul.bf16.gmra.mxu0 %v1814
        %v1956 = vpop.f32.mrf.mxu0
        %v1957 = vadd.f32 %v1850, %v1956
        %v1958 = vpop.f32.mrf.mxu0
        %v1959 = vadd.f32 %v1850, %v1958
        %1960 = vdwg.mxu0
        %1961 = vmatpush.bf16.msra.mxu0 %v1930
        %1962 = vmatpush.bf16.msra.mxu0 %v1929
        %1963 = vmatpush.bf16.msra.mxu0 %v1928
        %1964 = vmatpush.bf16.msra.mxu0 %v1927
        %1965 = vmatpush.bf16.msra.mxu0 %v1926
        %1966 = vmatpush.bf16.msra.mxu0 %v1925
        %1967 = vmatpush.bf16.msra.mxu0 %v1924
        %1968 = vmatpush.bf16.msra.mxu0 %v1923
        %1969 = vmatmul.bf16.gmra.mxu0 %v1815
        %v1970 = vpop.f32.mrf.mxu0
        %v1971 = vadd.f32 %v1957, %v1970
        %v1972 = vpop.f32.mrf.mxu0
        %v1973 = vadd.f32 %v1959, %v1972
        %1974 = vdwg.mxu0
        %v1975 = vadd.f32 %v1633, %v1971
        %v1976 = vadd.f32 %v1634, %v1973
        %v1977 = vpack.c.bf16 %v1975, %v1975
        %v1978 = vpack.c.bf16 %v1976, %v1976
        %vm1979 = vcmask 519168
        %1980 = vst.msk [vmem:[%s557] sm:$0xf] %vm1979, %v1977
        %1981 = vst.msk [vmem:[%s557 + $0x4] sm:$0xf] %vm1979, %v1978
        %p1982 = scmp.lt.s32.totalorder %s29, 1
        %s1983 = scalar_select %p1982, %s29, 1
        %s1984 = smul.addr %s1983, 2
        %s1985 = smul.addr %s1984, 4
        %s1986 = scalar_lea.vmem %s13, %s1985
        // Predicated region
        $region105: #{amt_forward.11} parent=71 // pred_check
          %p1987 = pneg %p325
        $region106: #{amt_forward.11} parent=71 // pred_check_branch
          %1989 = sbr.rel (%p1987) target = $region108
        $region107: #{amt_forward.11} parent=71 // pred_region
          _
        $region108: #{amt_forward.11} parent=71 // pred_fallthru
          _
      $region72: #{amt_forward.11} parent=5 // pred_fallthru
        _
      %p1990 = scmp.le.s32.totalorder 2, %s24
      // Predicated region
      $region109: #{amt_forward.11} parent=5 // pred_check
        %p1991 = pneg %p1990
      $region110: #{amt_forward.11} parent=5 // pred_check_branch
        %1993 = sbr.rel (%p1991) target = $region112
      $region111: #{amt_forward.11} parent=5 // pred_region
        %s1994 = ssub.s32 %s24, 2
        // Predicated region
        $region113: #{amt_forward.11} parent=111 // pred_check
          %p1995 = pneg %p331
        $region114: #{amt_forward.11} parent=111 // pred_check_branch
          %1997 = sbr.rel (%p1995) target = $region116
        $region115: #{amt_forward.11} parent=111 // pred_region
          %p1998 = scmp.lt.s32.totalorder %s30, 1
          %s1999 = scalar_select %p1998, %s30, 1
          %s2000 = smul.addr %s1999, 2
          %s2001 = smul.addr %s2000, 4
          %s2002 = scalar_lea.vmem %s13, %s2001
        $region116: #{amt_forward.11} parent=111 // pred_fallthru
          _
      $region112: #{amt_forward.11} parent=5 // pred_fallthru
        _
    $region6: #{amt_forward.11} parent=1 // loop_footer
      %s28 = sadd.s32 1, %s24
    $region7: #{amt_forward.11} parent=1 // loop_footer_branch
      %23 = sbr.rel target = $region3
    $region8: #{amt_forward.11} parent=1 // loop_exit
      _
    %2003 = vsyncpa [#allocation3], 1
    %s2004 = scalar_lea.sflag [#allocation3], 1
    %2005 = vsyncpa %s2004, 1
    %2006 = vsyncpa [#allocation5], 1
    %2007 = vsyncpa [#allocation8], 1
    %2008 = vsyncpa [#allocation11], 1
    %2009 = vsyncpa [#allocation14], 1

// kernel: amt_forward.9
$region0: #{amt_forward.9}
  #allocation0 [shape = 'u32[]', space=smem, size = 0x4, offset = 0x4, fixed_abs, tag = 'smem constant byte address 0x4 - core index']
  #allocation1 [shape = 'u32[72,128]{1,0:T(1,128)}', space=vmem, size = 0x9000, scoped, tag = 'internal scratch']
  %s0 = inlined_call_operand.vmem [shape: bf16[2,16,64], index: 0, kind: input, shape index: {}]
  %s1 = inlined_call_operand.hbm [shape: bf16[1,64], index: 1, kind: input, shape index: {}]
  %s2 = inlined_call_operand.hbm [shape: bf16[1,64], index: 2, kind: input, shape index: {}]
  %s3 = inlined_call_operand.vmem [shape: bf16[64,192], index: 3, kind: input, shape index: {}]
  %s4 = inlined_call_operand.hbm [shape: bf16[1,192], index: 4, kind: input, shape index: {}]
  %s5 = inlined_call_operand.hbm [shape: bf16[64,64], index: 5, kind: input, shape index: {}]
  %s6 = inlined_call_operand.hbm [shape: bf16[1,64], index: 6, kind: input, shape index: {}]
  %s7 = inlined_call_operand.hbm [shape: bf16[1,64], index: 7, kind: input, shape index: {}]
  %s8 = inlined_call_operand.hbm [shape: bf16[1,64], index: 8, kind: input, shape index: {}]
  %s9 = inlined_call_operand.vmem [shape: bf16[64,256], index: 9, kind: input, shape index: {}]
  %s10 = inlined_call_operand.hbm [shape: bf16[1,256], index: 10, kind: input, shape index: {}]
  %s11 = inlined_call_operand.vmem [shape: bf16[256,64], index: 11, kind: input, shape index: {}]
  %s12 = inlined_call_operand.hbm [shape: bf16[1,64], index: 12, kind: input, shape index: {}]
  %s13 = inlined_call_operand.vmem [shape: bf16[2,16,64], index: 13, kind: output, shape index: {}]
  %s14 = sld [smem:[#allocation0]]
  $region121: #{amt_forward.9} parent=0
    _
  %s16 = ssub.s32 1, %s14
  %s17 = scalar_select 0, %s16, %s14
  $region1: #{amt_forward.9} parent=0
    #allocation2 [shape = 'u8[512]{0}', space=vmem, size = 0x400, scoped, tag = 'input window, operand 1, single buffered']
    #allocation3 [shape = 's32[2]{0}', space=sflag, size = 0x8, scoped, tag = 'scoped memory for amt_forward.9']
    #allocation4 [shape = 'u8[512]{0}', space=vmem, size = 0x400, scoped, tag = 'input window, operand 2, single buffered']
    #allocation5 [shape = 's32[1]{0}', space=sflag, size = 0x4, scoped, tag = 'scoped memory for amt_forward.9']
    #allocation6 [shape = 'u8[1024]{0}', space=vmem, size = 0x400, scoped, tag = 'input window, operand 4, single buffered']
    #allocation7 [shape = 'u8[16384]{0}', space=vmem, size = 0x4000, scoped, tag = 'input window, operand 5, single buffered']
    #allocation8 [shape = 's32[1]{0}', space=sflag, size = 0x4, scoped, tag = 'scoped memory for amt_forward.9']
    #allocation9 [shape = 'u8[512]{0}', space=vmem, size = 0x400, scoped, tag = 'input window, operand 6, single buffered']
    #allocation10 [shape = 'u8[512]{0}', space=vmem, size = 0x400, scoped, tag = 'input window, operand 7, single buffered']
    #allocation11 [shape = 's32[1]{0}', space=sflag, size = 0x4, scoped, tag = 'scoped memory for amt_forward.9']
    #allocation12 [shape = 'u8[512]{0}', space=vmem, size = 0x400, scoped, tag = 'input window, operand 8, single buffered']
    #allocation13 [shape = 'u8[1024]{0}', space=vmem, size = 0x400, scoped, tag = 'input window, operand 10, single buffered']
    #allocation14 [shape = 's32[1]{0}', space=sflag, size = 0x4, scoped, tag = 'scoped memory for amt_forward.9']
    #allocation15 [shape = 'u8[512]{0}', space=vmem, size = 0x400, scoped, tag = 'input window, operand 12, single buffered']
    %18 = vsyncpa [#allocation3], 0
    %19 = vsyncpa [#allocation5], 0
    %20 = vsyncpa [#allocation8], 0
    %21 = vsyncpa [#allocation11], 0
    %22 = vsyncpa [#allocation14], 0
    loop: start=0, step=1, limit=4
    $region2: #{amt_forward.9} parent=1 // loop_pre_header
      _
    $region3: #{amt_forward.9} parent=1 // loop_header
      %s24 = sphi 0, %s28
      %p25 = scmp.ge.s32.totalorder %s24, 4
      %s34 = sphi 0, %s36
      %s37 = sphi 0, %s34
      %s38 = sphi 0, %s37
      %s54 = sphi 0, %s38
      %s58 = sphi 0, %s58
      %s60 = sphi 0, %s58
      %s61 = sphi 0, %s60
      %s75 = sphi 0, %s61
      %s79 = sphi 0, %s79
      %s81 = sphi 0, %s79
      %s82 = sphi 0, %s81
      %s96 = sphi 0, %s82
      %s100 = sphi 0, %s100
      %s102 = sphi 0, %s100
      %s103 = sphi 0, %s102
      %s117 = sphi 0, %s103
      %s121 = sphi 0, %s121
      %s123 = sphi 0, %s121
      %s124 = sphi 0, %s123
      %s138 = sphi 0, %s124
      %s142 = sphi 0, %s142
      %s144 = sphi 0, %s142
      %s145 = sphi 0, %s144
      %s159 = sphi 0, %s145
      %s163 = sphi 0, %s163
      %s165 = sphi 0, %s163
      %s166 = sphi 0, %s165
      %s180 = sphi 0, %s166
      %s184 = sphi 0, %s184
      %s186 = sphi 0, %s184
      %s187 = sphi 0, %s186
      %s201 = sphi 0, %s187
      %s205 = sphi 0, %s205
      %s207 = sphi 0, %s205
      %s208 = sphi 0, %s207
      %s222 = sphi 0, %s208
      %s226 = sphi 0, %s226
      %s228 = sphi 0, %s226
      %s229 = sphi 0, %s228
      %s243 = sphi 0, %s229
      %s247 = sphi 0, %s247
      %s249 = sphi 0, %s247
      %s250 = sphi 0, %s249
      %s264 = sphi 0, %s250
      %s268 = sphi 0, %s268
      %s270 = sphi 0, %s268
      %s271 = sphi 0, %s270
      %s285 = sphi 0, %s271
      %s289 = sphi 0, %s289
      %s291 = sphi 0, %s289
      %s292 = sphi 0, %s291
      %s306 = sphi 0, %s292
      %s312 = sphi 0, %s314
      %s315 = sphi 0, %s312
      %s316 = sphi 0, %s315
      %s332 = sphi 0, %s316
    $region4: #{amt_forward.9} parent=1 // loop_header_branch
      %27 = sbr.rel (%p25) target = $region8
    $region5: #{amt_forward.9} parent=1 // loop_body
      %s29 = ssub.s32 %s24, 1
      %s30 = ssub.s32 %s24, 2
      %s31 = sadd.s32 %s24, 1
      %s32 = ssub.s32 %s24, %s31
      %p33 = scmp.eq.s32.totalorder %s32, 0
      %s35 = sadd.s32 %s34, 1
      %s36 = scalar_select %p33, %s34, %s35
      %p39 = pneg %p33
      %p40 = scmp.eq.s32.totalorder %s24, 1
      %p41 = por %p39, %p40
      %p42 = scmp.ne.s32.totalorder %s34, %s37
      %p43 = scmp.eq.s32.totalorder %s24, 0
      %p44 = por %p42, %p43
      %p45 = scmp.ne.s32.totalorder %s34, %s37
      %p46 = scmp.eq.s32.totalorder %s29, 1
      %p47 = por %p45, %p46
      %p48 = scmp.ne.s32.totalorder %s37, %s38
      %p49 = scmp.eq.s32.totalorder %s29, 0
      %p50 = por %p48, %p49
      %p51 = scmp.ne.s32.totalorder %s37, %s38
      %p52 = scmp.eq.s32.totalorder %s30, 1
      %p53 = por %p51, %p52
      %p55 = scmp.ne.s32.totalorder %s38, %s54
      %p56 = scmp.eq.s32.totalorder %s30, 0
      %p57 = por %p55, %p56
      %s59 = sadd.s32 %s58, 1
      %p62 = scmp.eq.s32.totalorder %s24, 1
      %p63 = scmp.ne.s32.totalorder %s58, %s60
      %p64 = scmp.eq.s32.totalorder %s24, 0
      %p65 = por %p63, %p64
      %p66 = scmp.ne.s32.totalorder %s58, %s60
      %p67 = scmp.eq.s32.totalorder %s29, 1
      %p68 = por %p66, %p67
      %p69 = scmp.ne.s32.totalorder %s60, %s61
      %p70 = scmp.eq.s32.totalorder %s29, 0
      %p71 = por %p69, %p70
      %p72 = scmp.ne.s32.totalorder %s60, %s61
      %p73 = scmp.eq.s32.totalorder %s30, 1
      %p74 = por %p72, %p73
      %p76 = scmp.ne.s32.totalorder %s61, %s75
      %p77 = scmp.eq.s32.totalorder %s30, 0
      %p78 = por %p76, %p77
      %s80 = sadd.s32 %s79, 1
      %p83 = scmp.eq.s32.totalorder %s24, 1
      %p84 = scmp.ne.s32.totalorder %s79, %s81
      %p85 = scmp.eq.s32.totalorder %s24, 0
      %p86 = por %p84, %p85
      %p87 = scmp.ne.s32.totalorder %s79, %s81
      %p88 = scmp.eq.s32.totalorder %s29, 1
      %p89 = por %p87, %p88
      %p90 = scmp.ne.s32.totalorder %s81, %s82
      %p91 = scmp.eq.s32.totalorder %s29, 0
      %p92 = por %p90, %p91
      %p93 = scmp.ne.s32.totalorder %s81, %s82
      %p94 = scmp.eq.s32.totalorder %s30, 1
      %p95 = por %p93, %p94
      %p97 = scmp.ne.s32.totalorder %s82, %s96
      %p98 = scmp.eq.s32.totalorder %s30, 0
      %p99 = por %p97, %p98
      %s101 = sadd.s32 %s100, 1
      %p104 = scmp.eq.s32.totalorder %s24, 1
      %p105 = scmp.ne.s32.totalorder %s100, %s102
      %p106 = scmp.eq.s32.totalorder %s24, 0
      %p107 = por %p105, %p106
      %p108 = scmp.ne.s32.totalorder %s100, %s102
      %p109 = scmp.eq.s32.totalorder %s29, 1
      %p110 = por %p108, %p109
      %p111 = scmp.ne.s32.totalorder %s102, %s103
      %p112 = scmp.eq.s32.totalorder %s29, 0
      %p113 = por %p111, %p112
      %p114 = scmp.ne.s32.totalorder %s102, %s103
      %p115 = scmp.eq.s32.totalorder %s30, 1
      %p116 = por %p114, %p115
      %p118 = scmp.ne.s32.totalorder %s103, %s117
      %p119 = scmp.eq.s32.totalorder %s30, 0
      %p120 = por %p118, %p119
      %s122 = sadd.s32 %s121, 1
      %p125 = scmp.eq.s32.totalorder %s24, 1
      %p126 = scmp.ne.s32.totalorder %s121, %s123
      %p127 = scmp.eq.s32.totalorder %s24, 0
      %p128 = por %p126, %p127
      %p129 = scmp.ne.s32.totalorder %s121, %s123
      %p130 = scmp.eq.s32.totalorder %s29, 1
      %p131 = por %p129, %p130
      %p132 = scmp.ne.s32.totalorder %s123, %s124
      %p133 = scmp.eq.s32.totalorder %s29, 0
      %p134 = por %p132, %p133
      %p135 = scmp.ne.s32.totalorder %s123, %s124
      %p136 = scmp.eq.s32.totalorder %s30, 1
      %p137 = por %p135, %p136
      %p139 = scmp.ne.s32.totalorder %s124, %s138
      %p140 = scmp.eq.s32.totalorder %s30, 0
      %p141 = por %p139, %p140
      %s143 = sadd.s32 %s142, 1
      %p146 = scmp.eq.s32.totalorder %s24, 1
      %p147 = scmp.ne.s32.totalorder %s142, %s144
      %p148 = scmp.eq.s32.totalorder %s24, 0
      %p149 = por %p147, %p148
      %p150 = scmp.ne.s32.totalorder %s142, %s144
      %p151 = scmp.eq.s32.totalorder %s29, 1
      %p152 = por %p150, %p151
      %p153 = scmp.ne.s32.totalorder %s144, %s145
      %p154 = scmp.eq.s32.totalorder %s29, 0
      %p155 = por %p153, %p154
      %p156 = scmp.ne.s32.totalorder %s144, %s145
      %p157 = scmp.eq.s32.totalorder %s30, 1
      %p158 = por %p156, %p157
      %p160 = scmp.ne.s32.totalorder %s145, %s159
      %p161 = scmp.eq.s32.totalorder %s30, 0
      %p162 = por %p160, %p161
      %s164 = sadd.s32 %s163, 1
      %p167 = scmp.eq.s32.totalorder %s24, 1
      %p168 = scmp.ne.s32.totalorder %s163, %s165
      %p169 = scmp.eq.s32.totalorder %s24, 0
      %p170 = por %p168, %p169
      %p171 = scmp.ne.s32.totalorder %s163, %s165
      %p172 = scmp.eq.s32.totalorder %s29, 1
      %p173 = por %p171, %p172
      %p174 = scmp.ne.s32.totalorder %s165, %s166
      %p175 = scmp.eq.s32.totalorder %s29, 0
      %p176 = por %p174, %p175
      %p177 = scmp.ne.s32.totalorder %s165, %s166
      %p178 = scmp.eq.s32.totalorder %s30, 1
      %p179 = por %p177, %p178
      %p181 = scmp.ne.s32.totalorder %s166, %s180
      %p182 = scmp.eq.s32.totalorder %s30, 0
      %p183 = por %p181, %p182
      %s185 = sadd.s32 %s184, 1
      %p188 = scmp.eq.s32.totalorder %s24, 1
      %p189 = scmp.ne.s32.totalorder %s184, %s186
      %p190 = scmp.eq.s32.totalorder %s24, 0
      %p191 = por %p189, %p190
      %p192 = scmp.ne.s32.totalorder %s184, %s186
      %p193 = scmp.eq.s32.totalorder %s29, 1
      %p194 = por %p192, %p193
      %p195 = scmp.ne.s32.totalorder %s186, %s187
      %p196 = scmp.eq.s32.totalorder %s29, 0
      %p197 = por %p195, %p196
      %p198 = scmp.ne.s32.totalorder %s186, %s187
      %p199 = scmp.eq.s32.totalorder %s30, 1
      %p200 = por %p198, %p199
      %p202 = scmp.ne.s32.totalorder %s187, %s201
      %p203 = scmp.eq.s32.totalorder %s30, 0
      %p204 = por %p202, %p203
      %s206 = sadd.s32 %s205, 1
      %p209 = scmp.eq.s32.totalorder %s24, 1
      %p210 = scmp.ne.s32.totalorder %s205, %s207
      %p211 = scmp.eq.s32.totalorder %s24, 0
      %p212 = por %p210, %p211
      %p213 = scmp.ne.s32.totalorder %s205, %s207
      %p214 = scmp.eq.s32.totalorder %s29, 1
      %p215 = por %p213, %p214
      %p216 = scmp.ne.s32.totalorder %s207, %s208
      %p217 = scmp.eq.s32.totalorder %s29, 0
      %p218 = por %p216, %p217
      %p219 = scmp.ne.s32.totalorder %s207, %s208
      %p220 = scmp.eq.s32.totalorder %s30, 1
      %p221 = por %p219, %p220
      %p223 = scmp.ne.s32.totalorder %s208, %s222
      %p224 = scmp.eq.s32.totalorder %s30, 0
      %p225 = por %p223, %p224
      %s227 = sadd.s32 %s226, 1
      %p230 = scmp.eq.s32.totalorder %s24, 1
      %p231 = scmp.ne.s32.totalorder %s226, %s228
      %p232 = scmp.eq.s32.totalorder %s24, 0
      %p233 = por %p231, %p232
      %p234 = scmp.ne.s32.totalorder %s226, %s228
      %p235 = scmp.eq.s32.totalorder %s29, 1
      %p236 = por %p234, %p235
      %p237 = scmp.ne.s32.totalorder %s228, %s229
      %p238 = scmp.eq.s32.totalorder %s29, 0
      %p239 = por %p237, %p238
      %p240 = scmp.ne.s32.totalorder %s228, %s229
      %p241 = scmp.eq.s32.totalorder %s30, 1
      %p242 = por %p240, %p241
      %p244 = scmp.ne.s32.totalorder %s229, %s243
      %p245 = scmp.eq.s32.totalorder %s30, 0
      %p246 = por %p244, %p245
      %s248 = sadd.s32 %s247, 1
      %p251 = scmp.eq.s32.totalorder %s24, 1
      %p252 = scmp.ne.s32.totalorder %s247, %s249
      %p253 = scmp.eq.s32.totalorder %s24, 0
      %p254 = por %p252, %p253
      %p255 = scmp.ne.s32.totalorder %s247, %s249
      %p256 = scmp.eq.s32.totalorder %s29, 1
      %p257 = por %p255, %p256
      %p258 = scmp.ne.s32.totalorder %s249, %s250
      %p259 = scmp.eq.s32.totalorder %s29, 0
      %p260 = por %p258, %p259
      %p261 = scmp.ne.s32.totalorder %s249, %s250
      %p262 = scmp.eq.s32.totalorder %s30, 1
      %p263 = por %p261, %p262
      %p265 = scmp.ne.s32.totalorder %s250, %s264
      %p266 = scmp.eq.s32.totalorder %s30, 0
      %p267 = por %p265, %p266
      %s269 = sadd.s32 %s268, 1
      %p272 = scmp.eq.s32.totalorder %s24, 1
      %p273 = scmp.ne.s32.totalorder %s268, %s270
      %p274 = scmp.eq.s32.totalorder %s24, 0
      %p275 = por %p273, %p274
      %p276 = scmp.ne.s32.totalorder %s268, %s270
      %p277 = scmp.eq.s32.totalorder %s29, 1
      %p278 = por %p276, %p277
      %p279 = scmp.ne.s32.totalorder %s270, %s271
      %p280 = scmp.eq.s32.totalorder %s29, 0
      %p281 = por %p279, %p280
      %p282 = scmp.ne.s32.totalorder %s270, %s271
      %p283 = scmp.eq.s32.totalorder %s30, 1
      %p284 = por %p282, %p283
      %p286 = scmp.ne.s32.totalorder %s271, %s285
      %p287 = scmp.eq.s32.totalorder %s30, 0
      %p288 = por %p286, %p287
      %s290 = sadd.s32 %s289, 1
      %p293 = scmp.eq.s32.totalorder %s24, 1
      %p294 = scmp.ne.s32.totalorder %s289, %s291
      %p295 = scmp.eq.s32.totalorder %s24, 0
      %p296 = por %p294, %p295
      %p297 = scmp.ne.s32.totalorder %s289, %s291
      %p298 = scmp.eq.s32.totalorder %s29, 1
      %p299 = por %p297, %p298
      %p300 = scmp.ne.s32.totalorder %s291, %s292
      %p301 = scmp.eq.s32.totalorder %s29, 0
      %p302 = por %p300, %p301
      %p303 = scmp.ne.s32.totalorder %s291, %s292
      %p304 = scmp.eq.s32.totalorder %s30, 1
      %p305 = por %p303, %p304
      %p307 = scmp.ne.s32.totalorder %s292, %s306
      %p308 = scmp.eq.s32.totalorder %s30, 0
      %p309 = por %p307, %p308
      %s310 = ssub.s32 %s24, %s31
      %p311 = scmp.eq.s32.totalorder %s310, 0
      %s313 = sadd.s32 %s312, 1
      %s314 = scalar_select %p311, %s312, %s313
      %p317 = pneg %p311
      %p318 = scmp.eq.s32.totalorder %s24, 1
      %p319 = por %p317, %p318
      %p320 = scmp.ne.s32.totalorder %s312, %s315
      %p321 = scmp.eq.s32.totalorder %s24, 0
      %p322 = por %p320, %p321
      %p323 = scmp.ne.s32.totalorder %s312, %s315
      %p324 = scmp.eq.s32.totalorder %s29, 1
      %p325 = por %p323, %p324
      %p326 = scmp.ne.s32.totalorder %s315, %s316
      %p327 = scmp.eq.s32.totalorder %s29, 0
      %p328 = por %p326, %p327
      %p329 = scmp.ne.s32.totalorder %s315, %s316
      %p330 = scmp.eq.s32.totalorder %s30, 1
      %p331 = por %p329, %p330
      %p333 = scmp.ne.s32.totalorder %s316, %s332
      %p334 = scmp.eq.s32.totalorder %s30, 0
      %p335 = por %p333, %p334
      %p336 = scmp.le.s32.totalorder 1, %s24
      %p337 = scmp.lt.s32.totalorder %s24, 3
      %p338 = pnand %p336, %p337
      %p339 = pneg %p338
      // Predicated region
      $region9: #{amt_forward.9} parent=5 // pred_check
        _
      $region10: #{amt_forward.9} parent=5 // pred_check_branch
        %341 = sbr.rel (%p338) target = $region12
      $region11: #{amt_forward.9} parent=5 // pred_region
        %s342 = ssub.s32 %s24, 1
        // Predicated region
        $region13: #{amt_forward.9} parent=11 // pred_check
          %p343 = pneg %p71
        $region14: #{amt_forward.9} parent=11 // pred_check_branch
          %345 = sbr.rel (%p343) target = $region16
        $region15: #{amt_forward.9} parent=11 // pred_region
          %347 = vsyncadd [#allocation3], 0
          %s349 = sshll.u32 %s1, 4
          %s350 = int_to_ptr.hbm [resolvable:$true] %s349
          %s351 = sshll.u32 [#allocation2], 4
          %s352 = int_to_ptr.vmem [resolvable:$true] %s351
          %354 = dma.hbm_to_vmem [thread:$0]  %s350, 16, %s352, [#allocation3]
        $region16: #{amt_forward.9} parent=11 // pred_fallthru
          _
        // Predicated region
        $region17: #{amt_forward.9} parent=11 // pred_check
          %p355 = pneg %p92
        $region18: #{amt_forward.9} parent=11 // pred_check_branch
          %357 = sbr.rel (%p355) target = $region20
        $region19: #{amt_forward.9} parent=11 // pred_region
          %359 = vsyncadd [#allocation5], 0
          %s361 = sshll.u32 %s2, 4
          %s362 = int_to_ptr.hbm [resolvable:$true] %s361
          %s363 = sshll.u32 [#allocation4], 4
          %s364 = int_to_ptr.vmem [resolvable:$true] %s363
          %366 = dma.hbm_to_vmem [thread:$0]  %s362, 16, %s364, [#allocation5]
        $region20: #{amt_forward.9} parent=11 // pred_fallthru
          _
        // Predicated region
        $region21: #{amt_forward.9} parent=11 // pred_check
          %p367 = pneg %p113
        $region22: #{amt_forward.9} parent=11 // pred_check_branch
          %369 = sbr.rel (%p367) target = $region24
        $region23: #{amt_forward.9} parent=11 // pred_region
          _
        $region24: #{amt_forward.9} parent=11 // pred_fallthru
          _
        // Predicated region
        $region25: #{amt_forward.9} parent=11 // pred_check
          %p370 = pneg %p134
        $region26: #{amt_forward.9} parent=11 // pred_check_branch
          %372 = sbr.rel (%p370) target = $region28
        $region27: #{amt_forward.9} parent=11 // pred_region
          %374 = vsyncadd [#allocation5], 0
          %s376 = sshll.u32 %s4, 4
          %s377 = int_to_ptr.hbm [resolvable:$true] %s376
          %s378 = sshll.u32 [#allocation6], 4
          %s379 = int_to_ptr.vmem [resolvable:$true] %s378
          %381 = dma.hbm_to_vmem [thread:$0]  %s377, 32, %s379, [#allocation5]
        $region28: #{amt_forward.9} parent=11 // pred_fallthru
          _
        // Predicated region
        $region29: #{amt_forward.9} parent=11 // pred_check
          %p382 = pneg %p155
        $region30: #{amt_forward.9} parent=11 // pred_check_branch
          %384 = sbr.rel (%p382) target = $region32
        $region31: #{amt_forward.9} parent=11 // pred_region
          %386 = vsyncadd [#allocation8], 0
          %s387 = sshll.u32 %s5, 4
          %s388 = int_to_ptr.hbm [resolvable:$true] %s387
          %s389 = sshll.u32 [#allocation7], 4
          %s390 = int_to_ptr.vmem [resolvable:$true] %s389
          %395 = dma.hbm_to_vmem [thread:$0]  %s388, 512, %s390, [#allocation8], 64, 64, 4
        $region32: #{amt_forward.9} parent=11 // pred_fallthru
          _
        // Predicated region
        $region33: #{amt_forward.9} parent=11 // pred_check
          %p396 = pneg %p176
        $region34: #{amt_forward.9} parent=11 // pred_check_branch
          %398 = sbr.rel (%p396) target = $region36
        $region35: #{amt_forward.9} parent=11 // pred_region
          %400 = vsyncadd [#allocation8], 0
          %s402 = sshll.u32 %s6, 4
          %s403 = int_to_ptr.hbm [resolvable:$true] %s402
          %s404 = sshll.u32 [#allocation9], 4
          %s405 = int_to_ptr.vmem [resolvable:$true] %s404
          %407 = dma.hbm_to_vmem [thread:$0]  %s403, 16, %s405, [#allocation8]
        $region36: #{amt_forward.9} parent=11 // pred_fallthru
          _
        // Predicated region
        $region37: #{amt_forward.9} parent=11 // pred_check
          %p408 = pneg %p197
        $region38: #{amt_forward.9} parent=11 // pred_check_branch
          %410 = sbr.rel (%p408) target = $region40
        $region39: #{amt_forward.9} parent=11 // pred_region
          %412 = vsyncadd [#allocation11], 0
          %s414 = sshll.u32 %s7, 4
          %s415 = int_to_ptr.hbm [resolvable:$true] %s414
          %s416 = sshll.u32 [#allocation10], 4
          %s417 = int_to_ptr.vmem [resolvable:$true] %s416
          %419 = dma.hbm_to_vmem [thread:$0]  %s415, 16, %s417, [#allocation11]
        $region40: #{amt_forward.9} parent=11 // pred_fallthru
          _
        // Predicated region
        $region41: #{amt_forward.9} parent=11 // pred_check
          %p420 = pneg %p218
        $region42: #{amt_forward.9} parent=11 // pred_check_branch
          %422 = sbr.rel (%p420) target = $region44
        $region43: #{amt_forward.9} parent=11 // pred_region
          %424 = vsyncadd [#allocation11], 0
          %s426 = sshll.u32 %s8, 4
          %s427 = int_to_ptr.hbm [resolvable:$true] %s426
          %s428 = sshll.u32 [#allocation12], 4
          %s429 = int_to_ptr.vmem [resolvable:$true] %s428
          %431 = dma.hbm_to_vmem [thread:$0]  %s427, 16, %s429, [#allocation11]
        $region44: #{amt_forward.9} parent=11 // pred_fallthru
          _
        // Predicated region
        $region45: #{amt_forward.9} parent=11 // pred_check
          %p432 = pneg %p239
        $region46: #{amt_forward.9} parent=11 // pred_check_branch
          %434 = sbr.rel (%p432) target = $region48
        $region47: #{amt_forward.9} parent=11 // pred_region
          _
        $region48: #{amt_forward.9} parent=11 // pred_fallthru
          _
        // Predicated region
        $region49: #{amt_forward.9} parent=11 // pred_check
          %p435 = pneg %p260
        $region50: #{amt_forward.9} parent=11 // pred_check_branch
          %437 = sbr.rel (%p435) target = $region52
        $region51: #{amt_forward.9} parent=11 // pred_region
          %439 = vsyncadd [#allocation14], 0
          %s441 = sshll.u32 %s10, 4
          %s442 = int_to_ptr.hbm [resolvable:$true] %s441
          %s443 = sshll.u32 [#allocation13], 4
          %s444 = int_to_ptr.vmem [resolvable:$true] %s443
          %446 = dma.hbm_to_vmem [thread:$0]  %s442, 32, %s444, [#allocation14]
        $region52: #{amt_forward.9} parent=11 // pred_fallthru
          _
        // Predicated region
        $region53: #{amt_forward.9} parent=11 // pred_check
          %p447 = pneg %p281
        $region54: #{amt_forward.9} parent=11 // pred_check_branch
          %449 = sbr.rel (%p447) target = $region56
        $region55: #{amt_forward.9} parent=11 // pred_region
          _
        $region56: #{amt_forward.9} parent=11 // pred_fallthru
          _
        // Predicated region
        $region57: #{amt_forward.9} parent=11 // pred_check
          %p450 = pneg %p302
        $region58: #{amt_forward.9} parent=11 // pred_check_branch
          %452 = sbr.rel (%p450) target = $region60
        $region59: #{amt_forward.9} parent=11 // pred_region
          %454 = vsyncadd [#allocation14], 0
          %s456 = sshll.u32 %s12, 4
          %s457 = int_to_ptr.hbm [resolvable:$true] %s456
          %s458 = sshll.u32 [#allocation15], 4
          %s459 = int_to_ptr.vmem [resolvable:$true] %s458
          %461 = dma.hbm_to_vmem [thread:$0]  %s457, 16, %s459, [#allocation14]
        $region60: #{amt_forward.9} parent=11 // pred_fallthru
          _
      $region12: #{amt_forward.9} parent=5 // pred_fallthru
        _
      %p462 = scmp.lt.s32.totalorder %s24, 2
      // Predicated region
      $region61: #{amt_forward.9} parent=5 // pred_check
        %p463 = pneg %p462
      $region62: #{amt_forward.9} parent=5 // pred_check_branch
        %465 = sbr.rel (%p463) target = $region64
      $region63: #{amt_forward.9} parent=5 // pred_region
        // Predicated region
        $region65: #{amt_forward.9} parent=63 // pred_check
          %p466 = pneg %p44
        $region66: #{amt_forward.9} parent=63 // pred_check_branch
          %468 = sbr.rel (%p466) target = $region68
        $region67: #{amt_forward.9} parent=63 // pred_region
          %p469 = scmp.lt.s32.totalorder %s24, 1
          %s470 = scalar_select %p469, %s24, 1
          %s471 = smul.addr %s470, 2
          %s472 = smul.addr %s471, 4
          %s473 = scalar_lea.vmem %s0, %s472
        $region68: #{amt_forward.9} parent=63 // pred_fallthru
          _
      $region64: #{amt_forward.9} parent=5 // pred_fallthru
        _
      %p474 = scmp.le.s32.totalorder 1, %s24
      %p475 = scmp.lt.s32.totalorder %s24, 3
      %p476 = pnand %p474, %p475
      %p477 = pneg %p476
      // Predicated region
      $region69: #{amt_forward.9} parent=5 // pred_check
        _
      $region70: #{amt_forward.9} parent=5 // pred_check_branch
        %479 = sbr.rel (%p476) target = $region72
      $region71: #{amt_forward.9} parent=5 // pred_region
        %s480 = ssub.s32 %s24, 1
        // Predicated region
        $region73: #{amt_forward.9} parent=71 // pred_check
          %p481 = pneg %p71
        $region74: #{amt_forward.9} parent=71 // pred_check_branch
          %483 = sbr.rel (%p481) target = $region76
        $region75: #{amt_forward.9} parent=71 // pred_region
          %485 = dma.done [#allocation3], 16
        $region76: #{amt_forward.9} parent=71 // pred_fallthru
          _
        // Predicated region
        $region77: #{amt_forward.9} parent=71 // pred_check
          %p486 = pneg %p92
        $region78: #{amt_forward.9} parent=71 // pred_check_branch
          %488 = sbr.rel (%p486) target = $region80
        $region79: #{amt_forward.9} parent=71 // pred_region
          %490 = dma.done [#allocation5], 16
        $region80: #{amt_forward.9} parent=71 // pred_fallthru
          _
        // Predicated region
        $region81: #{amt_forward.9} parent=71 // pred_check
          %p491 = pneg %p134
        $region82: #{amt_forward.9} parent=71 // pred_check_branch
          %493 = sbr.rel (%p491) target = $region84
        $region83: #{amt_forward.9} parent=71 // pred_region
          %495 = dma.done [#allocation5], 32
        $region84: #{amt_forward.9} parent=71 // pred_fallthru
          _
        // Predicated region
        $region85: #{amt_forward.9} parent=71 // pred_check
          %p496 = pneg %p155
        $region86: #{amt_forward.9} parent=71 // pred_check_branch
          %498 = sbr.rel (%p496) target = $region88
        $region87: #{amt_forward.9} parent=71 // pred_region
          %500 = dma.done [#allocation8], 512
        $region88: #{amt_forward.9} parent=71 // pred_fallthru
          _
        // Predicated region
        $region89: #{amt_forward.9} parent=71 // pred_check
          %p501 = pneg %p176
        $region90: #{amt_forward.9} parent=71 // pred_check_branch
          %503 = sbr.rel (%p501) target = $region92
        $region91: #{amt_forward.9} parent=71 // pred_region
          %505 = dma.done [#allocation8], 16
        $region92: #{amt_forward.9} parent=71 // pred_fallthru
          _
        // Predicated region
        $region93: #{amt_forward.9} parent=71 // pred_check
          %p506 = pneg %p197
        $region94: #{amt_forward.9} parent=71 // pred_check_branch
          %508 = sbr.rel (%p506) target = $region96
        $region95: #{amt_forward.9} parent=71 // pred_region
          %510 = dma.done [#allocation11], 16
        $region96: #{amt_forward.9} parent=71 // pred_fallthru
          _
        // Predicated region
        $region97: #{amt_forward.9} parent=71 // pred_check
          %p511 = pneg %p218
        $region98: #{amt_forward.9} parent=71 // pred_check_branch
          %513 = sbr.rel (%p511) target = $region100
        $region99: #{amt_forward.9} parent=71 // pred_region
          %515 = dma.done [#allocation11], 16
        $region100: #{amt_forward.9} parent=71 // pred_fallthru
          _
        // Predicated region
        $region101: #{amt_forward.9} parent=71 // pred_check
          %p516 = pneg %p260
        $region102: #{amt_forward.9} parent=71 // pred_check_branch
          %518 = sbr.rel (%p516) target = $region104
        $region103: #{amt_forward.9} parent=71 // pred_region
          %520 = dma.done [#allocation14], 32
        $region104: #{amt_forward.9} parent=71 // pred_fallthru
          _
        // Predicated region
        $region105: #{amt_forward.9} parent=71 // pred_check
          %p521 = pneg %p302
        $region106: #{amt_forward.9} parent=71 // pred_check_branch
          %523 = sbr.rel (%p521) target = $region108
        $region107: #{amt_forward.9} parent=71 // pred_region
          %525 = dma.done [#allocation14], 16
        $region108: #{amt_forward.9} parent=71 // pred_fallthru
          _
        %p526 = scmp.lt.s32.totalorder %s29, 1
        %s527 = scalar_select %p526, %s29, 1
        %s528 = smul.addr %s527, 2
        %s529 = smul.addr %s528, 4
        %s530 = scalar_lea.vmem %s0, %s529
        %p531 = pneg %p50
        %p532 = pneg %p47
        %p533 = pneg %p71
        %p534 = pneg %p68
        %p535 = pneg %p92
        %p536 = pneg %p89
        %p537 = pneg %p113
        %p538 = pneg %p110
        %p539 = pneg %p134
        %p540 = pneg %p131
        %p541 = pneg %p155
        %p542 = pneg %p152
        %p543 = pneg %p176
        %p544 = pneg %p173
        %p545 = pneg %p197
        %p546 = pneg %p194
        %p547 = pneg %p218
        %p548 = pneg %p215
        %p549 = pneg %p239
        %p550 = pneg %p236
        %p551 = pneg %p260
        %p552 = pneg %p257
        %p553 = pneg %p281
        %p554 = pneg %p278
        %p555 = pneg %p302
        %p556 = pneg %p299
        %p557 = pneg %p328
        %p558 = pneg %p325
        %p559 = scmp.lt.s32.totalorder %s29, 1
        %s560 = scalar_select %p559, %s29, 1
        %s561 = smul.addr %s560, 2
        %s562 = smul.addr %s561, 4
        %s563 = scalar_lea.vmem %s13, %s562
        %p564 = scmp.lt.s32.totalorder %s29, 1
        %s565 = scalar_select %p564, %s29, 1
        %s566 = smul.addr %s565, 2
        %s567 = smul.addr %s566, 4
        %s568 = scalar_lea.vmem %s0, %s567
        %p569 = scmp.lt.s32.totalorder %s29, 1
        %s570 = scalar_select %p569, %s29, 1
        %s571 = smul.addr %s570, 2
        %s572 = smul.addr %s571, 4
        %s573 = scalar_lea.vmem %s13, %s572
        %v575 = vld [vmem:[%s568] sm:$0xf]
        %v576 = vld [vmem:[%s568 + $0x4] sm:$0xf]
        %v577 = vunpack.c.l.bf16 %v575
        %v578 = vunpack.c.l.bf16 %v576
        %vm579 = vcmask 523264
        %v580 = vsel %vm579, %v577, 0.0
        %581 = vadd.xlane.f32.xlu0 %v580
        %v582 = vpop.xlane.xlu0 %581
        %v583 = vsel %vm579, %v578, 0.0
        %584 = vadd.xlane.f32.xlu0 %v583
        %v585 = vpop.xlane.xlu0 %584
        %v586 = vrcp.pop 64.0
        %v587 = vmul.f32 64.0, %v586
        %v588 = vsub.f32 1.0, %v587
        %v589 = vmul.f32 %v586, %v588
        %v590 = vadd.f32 %v586, %v589
        %vm591 = vweird.f32 %v586
        %v592 = vsel %vm591, %v586, %v590
        %v593 = vmul.f32 %v582, %v592
        %v594 = vmul.f32 %v585, %v592
        %v595 = vsub.f32 %v577, %v593
        %v596 = vsub.f32 %v578, %v594
        %v597 = vmul.f32 %v595, %v595
        %v598 = vmul.f32 %v596, %v596
        %v599 = vsel %vm579, %v597, 0.0
        %600 = vadd.xlane.f32.xlu0 %v599
        %v601 = vpop.xlane.xlu0 %600
        %v602 = vsel %vm579, %v598, 0.0
        %603 = vadd.xlane.f32.xlu0 %v602
        %v604 = vpop.xlane.xlu0 %603
        %v605 = vmul.f32 %v601, %v592
        %v606 = vmul.f32 %v604, %v592
        %v607 = vadd.f32 %v605, 1e-05
        %v608 = vadd.f32 %v606, 1e-05
        %v609 = vrsqrt.pop %v607
        %v610 = vmul.f32 %v609, %v607
        %v611 = vmul.f32 %v610, %v609
        %v612 = vmul.f32 0.5, %v611
        %v613 = vsub.f32 1.5, %v612
        %v614 = vmul.f32 %v609, %v613
        %vm615 = vweird.f32 %v607
        %vm616 = vweird.f32 %v609
        %vm617 = vmor %vm615, %vm616
        %v618 = vsel %vm617, %v609, %v614
        %v619 = vrsqrt.pop %v608
        %v620 = vmul.f32 %v619, %v608
        %v621 = vmul.f32 %v620, %v619
        %v622 = vmul.f32 0.5, %v621
        %v623 = vsub.f32 1.5, %v622
        %v624 = vmul.f32 %v619, %v623
        %vm625 = vweird.f32 %v608
        %vm626 = vweird.f32 %v619
        %vm627 = vmor %vm625, %vm626
        %v628 = vsel %vm627, %v619, %v624
        %v629 = vmul.f32 %v595, %v618
        %v630 = vmul.f32 %v596, %v628
        %v631 = vld [vmem:[#allocation2] sm:$0x1]
        %v632 = vunpack.c.l.bf16 %v631
        %v633 = vperm.slane %v632, 0
        %v634 = vmul.f32 %v629, %v633
        %v635 = vmul.f32 %v630, %v633
        %v636 = vld [vmem:[#allocation4] sm:$0x1]
        %v637 = vunpack.c.l.bf16 %v636
        %v638 = vperm.slane %v637, 0
        %v639 = vadd.f32 %v634, %v638
        %v640 = vadd.f32 %v635, %v638
        %v641 = vpack.c.bf16 %v640, %v639
        %v642 = vld [vmem:[%s3] sm:$0xff]
        %v643 = vld [vmem:[%s3 + $0x8] sm:$0xff]
        %v644 = vld [vmem:[%s3 + $0x10] sm:$0xff]
        %v645 = vld [vmem:[%s3 + $0x18] sm:$0xff]
        %v646 = vld [vmem:[%s3 + $0x20] sm:$0xff]
        %v647 = vld [vmem:[%s3 + $0x28] sm:$0xff]
        %v648 = vld [vmem:[%s3 + $0x30] sm:$0xff]
        %v649 = vld [vmem:[%s3 + $0x38] sm:$0xff]
        %v650 = vld [vmem:[#allocation6] sm:$0x3]
        %v651 = vunpack.c.l.bf16 %v650
        %v653 = vperm.slane %v651, 0
        %v654 = vperm.slane %v651, 2
        %v657 = vperm.slane %v653, 0
        %v658 = vperm.slane %v654, 0
        %v667 = vunpack.c.l.b16 %v642
        %v668 = vunpack.c.h.b16 %v642
        %v669 = vunpack.c.l.b16 %v643
        %v670 = vunpack.c.h.b16 %v643
        %v671 = vunpack.c.l.b16 %v644
        %v672 = vunpack.c.h.b16 %v644
        %v673 = vunpack.c.l.b16 %v645
        %v674 = vunpack.c.h.b16 %v645
        %v675 = vunpack.c.l.b16 %v646
        %v676 = vunpack.c.h.b16 %v646
        %v677 = vunpack.c.l.b16 %v647
        %v678 = vunpack.c.h.b16 %v647
        %v679 = vunpack.c.l.b16 %v648
        %v680 = vunpack.c.h.b16 %v648
        %v681 = vunpack.c.l.b16 %v649
        %v682 = vunpack.c.h.b16 %v649
        %v683 = vpack.c.b16 %v669, %v667
        %v684 = vpack.c.b16 %v670, %v668
        %v685 = vpack.c.b16 %v673, %v671
        %v686 = vpack.c.b16 %v674, %v672
        %v687 = vpack.c.b16 %v677, %v675
        %v688 = vpack.c.b16 %v678, %v676
        %v689 = vpack.c.b16 %v681, %v679
        %v690 = vpack.c.b16 %v682, %v680
        %v700 = vsel %vm579, %v641, 0
        %702 = vmatpush.bf16.msra.mxu0 0
        %703 = vmatpush.bf16.msra.mxu0 0
        %704 = vmatpush.bf16.msra.mxu0 0
        %705 = vmatpush.bf16.msra.mxu0 0
        %706 = vmatpush.bf16.msra.mxu0 %v689
        %707 = vmatpush.bf16.msra.mxu0 %v687
        %708 = vmatpush.bf16.msra.mxu0 %v685
        %709 = vmatpush.bf16.msra.mxu0 %v683
        %710 = vmatmul.bf16.gmra.mxu0 %v700
        %v711 = vpop.f32.mrf.mxu0
        %v712 = vadd.f32 %v657, %v711
        %v713 = vpop.f32.mrf.mxu0
        %v714 = vadd.f32 %v657, %v713
        %715 = vdwg.mxu0
        %716 = vmatpush.bf16.msra.mxu0 0
        %717 = vmatpush.bf16.msra.mxu0 0
        %718 = vmatpush.bf16.msra.mxu0 0
        %719 = vmatpush.bf16.msra.mxu0 0
        %720 = vmatpush.bf16.msra.mxu0 %v690
        %721 = vmatpush.bf16.msra.mxu0 %v688
        %722 = vmatpush.bf16.msra.mxu0 %v686
        %723 = vmatpush.bf16.msra.mxu0 %v684
        %724 = vmatmul.bf16.gmra.mxu0 %v700
        %v725 = vpop.f32.mrf.mxu0
        %v726 = vadd.f32 %v658, %v725
        %v727 = vpop.f32.mrf.mxu0
        %v728 = vadd.f32 %v658, %v727
        %729 = vdwg.mxu0
        %v730 = vmul.f32 %v712, 0.35355338
        %v731 = vmul.f32 %v714, 0.35355338
        %v732 = vlaneseq
        %v733 = vshrl.u32 %v732, 7
        %v734 = vadd.s32 %v733, 8
        %v735 = vlaneseq
        %v736 = vand.u32 %v735, 127
        %vm737 = vcmp.le.s32.totalorder %v736, %v733
        %vm738 = vcmp.le.s32.totalorder %v736, %v734
        %741 = vrot.lane.b32.xlu0 %v712, 64
        %v742 = vpop.permute.xlu0 %741
        %743 = vrot.lane.b32.xlu0 %v714, 64
        %v744 = vpop.permute.xlu0 %743
        %vm745 = vcmask 64512
        %v747 = vsel %vm745, %v730, 0
        %v750 = vsel %vm745, %v731, 0
        %v752 = vsel %vm745, %v742, 0
        %v754 = vsel %vm745, %v744, 0
        %756 = vmatpush.xpose.msra.mxu0 0.0
        %757 = vmatpush.xpose.msra.mxu0 0.0
        %758 = vmatpush.xpose.msra.mxu0 0.0
        %759 = vmatpush.xpose.msra.mxu0 0.0
        %760 = vmatpush.xpose.msra.mxu0 0.0
        %761 = vmatpush.xpose.msra.mxu0 0.0
        %762 = vmatpush.xpose.msra.mxu0 0.0
        %763 = vmatpush.xpose.msra.mxu0 0.0
        %764 = vmatpush.xpose.msra.mxu0 0.0
        %765 = vmatpush.xpose.msra.mxu0 0.0
        %766 = vmatpush.xpose.msra.mxu0 0.0
        %767 = vmatpush.xpose.msra.mxu0 0.0
        %768 = vmatpush.xpose.msra.mxu0 0.0
        %769 = vmatpush.xpose.msra.mxu0 0.0
        %770 = vmatpush.xpose.msra.mxu0 %v754
        %771 = vmatpush.xpose.msra.mxu0 %v752
        %772 = vmatmul.f32.gmra.mxu0 %v747
        %v773 = vpop.f32.mrf.mxu0
        %v774 = vadd.f32 0.0, %v773
        %775 = vmatmul.f32.gmra.mxu0 %v750
        %v776 = vpop.f32.mrf.mxu0
        %v777 = vadd.f32 0.0, %v776
        %778 = vdwg.mxu0
        %v779 = vsel %vm737, %v774, -1e+30
        %v780 = vsel %vm738, %v777, -1e+30
        %vm781 = vcmask 130048
        %v782 = vsel %vm781, %v779, -inf
        %783 = vmax.xlane.f32.xlu0 %v782
        %v784 = vpop.xlane.xlu0 %783
        %v785 = vsel %vm781, %v780, -inf
        %786 = vmax.xlane.f32.xlu0 %v785
        %v787 = vpop.xlane.xlu0 %786
        %v788 = vsub.f32 %v779, %v784
        %v789 = vsub.f32 %v780, %v787
        %v790 = vmul.f32 %v788, 1.442695
        %v791 = vpow.pop %v790
        %v792 = vmul.f32 %v789, 1.442695
        %v793 = vpow.pop %v792
        %v794 = vsel %vm781, %v791, 0.0
        %795 = vadd.xlane.f32.xlu0 %v794
        %v796 = vpop.xlane.xlu0 %795
        %v797 = vsel %vm781, %v793, 0.0
        %798 = vadd.xlane.f32.xlu0 %v797
        %v799 = vpop.xlane.xlu0 %798
        %v800 = vrcp.pop %v796
        %v801 = vrcp.pop %v799
        %v802 = vmul.f32 %v791, %v800
        %v803 = vmul.f32 %v793, %v801
        %v805 = vsel %vm781, %v802, 0
        %v808 = vsel %vm781, %v803, 0
        %810 = vmatpush.msra.mxu0 0.0
        %811 = vmatpush.msra.mxu0 0.0
        %812 = vmatpush.msra.mxu0 0.0
        %813 = vmatpush.msra.mxu0 0.0
        %814 = vmatpush.msra.mxu0 0.0
        %815 = vmatpush.msra.mxu0 0.0
        %816 = vmatpush.msra.mxu0 0.0
        %817 = vmatpush.msra.mxu0 0.0
        %818 = vmatpush.msra.mxu0 0.0
        %819 = vmatpush.msra.mxu0 0.0
        %820 = vmatpush.msra.mxu0 0.0
        %821 = vmatpush.msra.mxu0 0.0
        %822 = vmatpush.msra.mxu0 0.0
        %823 = vmatpush.msra.mxu0 0.0
        %824 = vmatpush.msra.mxu0 %v728
        %825 = vmatpush.msra.mxu0 %v726
        %826 = vmatmul.f32.gmra.mxu0 %v805
        %v827 = vpop.f32.mrf.mxu0
        %v828 = vadd.f32 0.0, %v827
        %829 = vmatmul.f32.gmra.mxu0 %v808
        %v830 = vpop.f32.mrf.mxu0
        %v831 = vadd.f32 0.0, %v830
        %832 = vdwg.mxu0
        %833 = vrot.lane.b32.xlu0 %v730, 120
        %v834 = vpop.permute.xlu0 %833
        %835 = vrot.lane.b32.xlu0 %v731, 120
        %v836 = vpop.permute.xlu0 %835
        %837 = vrot.lane.b32.xlu0 %v712, 56
        %v838 = vpop.permute.xlu0 %837
        %839 = vrot.lane.b32.xlu0 %v714, 56
        %v840 = vpop.permute.xlu0 %839
        %v841 = vsel %vm745, %v834, 0
        %v843 = vsel %vm745, %v836, 0
        %v845 = vsel %vm745, %v838, 0
        %v847 = vsel %vm745, %v840, 0
        %849 = vmatpush.xpose.msra.mxu0 0.0
        %850 = vmatpush.xpose.msra.mxu0 0.0
        %851 = vmatpush.xpose.msra.mxu0 0.0
        %852 = vmatpush.xpose.msra.mxu0 0.0
        %853 = vmatpush.xpose.msra.mxu0 0.0
        %854 = vmatpush.xpose.msra.mxu0 0.0
        %855 = vmatpush.xpose.msra.mxu0 0.0
        %856 = vmatpush.xpose.msra.mxu0 0.0
        %857 = vmatpush.xpose.msra.mxu0 0.0
        %858 = vmatpush.xpose.msra.mxu0 0.0
        %859 = vmatpush.xpose.msra.mxu0 0.0
        %860 = vmatpush.xpose.msra.mxu0 0.0
        %861 = vmatpush.xpose.msra.mxu0 0.0
        %862 = vmatpush.xpose.msra.mxu0 0.0
        %863 = vmatpush.xpose.msra.mxu0 %v847
        %864 = vmatpush.xpose.msra.mxu0 %v845
        %865 = vmatmul.f32.gmra.mxu0 %v841
        %v866 = vpop.f32.mrf.mxu0
        %v867 = vadd.f32 0.0, %v866
        %868 = vmatmul.f32.gmra.mxu0 %v843
        %v869 = vpop.f32.mrf.mxu0
        %v870 = vadd.f32 0.0, %v869
        %871 = vdwg.mxu0
        %v872 = vsel %vm737, %v867, -1e+30
        %v873 = vsel %vm738, %v870, -1e+30
        %v874 = vsel %vm781, %v872, -inf
        %875 = vmax.xlane.f32.xlu0 %v874
        %v876 = vpop.xlane.xlu0 %875
        %v877 = vsel %vm781, %v873, -inf
        %878 = vmax.xlane.f32.xlu0 %v877
        %v879 = vpop.xlane.xlu0 %878
        %v880 = vsub.f32 %v872, %v876
        %v881 = vsub.f32 %v873, %v879
        %v882 = vmul.f32 %v880, 1.442695
        %v883 = vpow.pop %v882
        %v884 = vmul.f32 %v881, 1.442695
        %v885 = vpow.pop %v884
        %v886 = vsel %vm781, %v883, 0.0
        %887 = vadd.xlane.f32.xlu0 %v886
        %v888 = vpop.xlane.xlu0 %887
        %v889 = vsel %vm781, %v885, 0.0
        %890 = vadd.xlane.f32.xlu0 %v889
        %v891 = vpop.xlane.xlu0 %890
        %v892 = vrcp.pop %v888
        %v893 = vrcp.pop %v891
        %v894 = vmul.f32 %v883, %v892
        %v895 = vmul.f32 %v885, %v893
        %898 = vrot.lane.b32.xlu0 %v726, 120
        %v899 = vpop.permute.xlu0 %898
        %900 = vrot.lane.b32.xlu0 %v728, 120
        %v901 = vpop.permute.xlu0 %900
        %v905 = vsel %vm781, %v894, 0
        %v908 = vsel %vm781, %v895, 0
        %910 = vmatpush.msra.mxu0 0.0
        %911 = vmatpush.msra.mxu0 0.0
        %912 = vmatpush.msra.mxu0 0.0
        %913 = vmatpush.msra.mxu0 0.0
        %914 = vmatpush.msra.mxu0 0.0
        %915 = vmatpush.msra.mxu0 0.0
        %916 = vmatpush.msra.mxu0 0.0
        %917 = vmatpush.msra.mxu0 0.0
        %918 = vmatpush.msra.mxu0 0.0
        %919 = vmatpush.msra.mxu0 0.0
        %920 = vmatpush.msra.mxu0 0.0
        %921 = vmatpush.msra.mxu0 0.0
        %922 = vmatpush.msra.mxu0 0.0
        %923 = vmatpush.msra.mxu0 0.0
        %924 = vmatpush.msra.mxu0 %v901
        %925 = vmatpush.msra.mxu0 %v899
        %926 = vmatmul.f32.gmra.mxu0 %v905
        %v927 = vpop.f32.mrf.mxu0
        %v928 = vadd.f32 0.0, %v927
        %929 = vmatmul.f32.gmra.mxu0 %v908
        %v930 = vpop.f32.mrf.mxu0
        %v931 = vadd.f32 0.0, %v930
        %932 = vdwg.mxu0
        %933 = vrot.lane.b32.xlu0 %v730, 112
        %v934 = vpop.permute.xlu0 %933
        %935 = vrot.lane.b32.xlu0 %v731, 112
        %v936 = vpop.permute.xlu0 %935
        %937 = vrot.lane.b32.xlu0 %v712, 48
        %v938 = vpop.permute.xlu0 %937
        %939 = vrot.lane.b32.xlu0 %v714, 48
        %v940 = vpop.permute.xlu0 %939
        %v941 = vsel %vm745, %v934, 0
        %v943 = vsel %vm745, %v936, 0
        %v945 = vsel %vm745, %v938, 0
        %v947 = vsel %vm745, %v940, 0
        %949 = vmatpush.xpose.msra.mxu0 0.0
        %950 = vmatpush.xpose.msra.mxu0 0.0
        %951 = vmatpush.xpose.msra.mxu0 0.0
        %952 = vmatpush.xpose.msra.mxu0 0.0
        %953 = vmatpush.xpose.msra.mxu0 0.0
        %954 = vmatpush.xpose.msra.mxu0 0.0
        %955 = vmatpush.xpose.msra.mxu0 0.0
        %956 = vmatpush.xpose.msra.mxu0 0.0
        %957 = vmatpush.xpose.msra.mxu0 0.0
        %958 = vmatpush.xpose.msra.mxu0 0.0
        %959 = vmatpush.xpose.msra.mxu0 0.0
        %960 = vmatpush.xpose.msra.mxu0 0.0
        %961 = vmatpush.xpose.msra.mxu0 0.0
        %962 = vmatpush.xpose.msra.mxu0 0.0
        %963 = vmatpush.xpose.msra.mxu0 %v947
        %964 = vmatpush.xpose.msra.mxu0 %v945
        %965 = vmatmul.f32.gmra.mxu0 %v941
        %v966 = vpop.f32.mrf.mxu0
        %v967 = vadd.f32 0.0, %v966
        %968 = vmatmul.f32.gmra.mxu0 %v943
        %v969 = vpop.f32.mrf.mxu0
        %v970 = vadd.f32 0.0, %v969
        %971 = vdwg.mxu0
        %v972 = vsel %vm737, %v967, -1e+30
        %v973 = vsel %vm738, %v970, -1e+30
        %v974 = vsel %vm781, %v972, -inf
        %975 = vmax.xlane.f32.xlu0 %v974
        %v976 = vpop.xlane.xlu0 %975
        %v977 = vsel %vm781, %v973, -inf
        %978 = vmax.xlane.f32.xlu0 %v977
        %v979 = vpop.xlane.xlu0 %978
        %v980 = vsub.f32 %v972, %v976
        %v981 = vsub.f32 %v973, %v979
        %v982 = vmul.f32 %v980, 1.442695
        %v983 = vpow.pop %v982
        %v984 = vmul.f32 %v981, 1.442695
        %v985 = vpow.pop %v984
        %v986 = vsel %vm781, %v983, 0.0
        %987 = vadd.xlane.f32.xlu0 %v986
        %v988 = vpop.xlane.xlu0 %987
        %v989 = vsel %vm781, %v985, 0.0
        %990 = vadd.xlane.f32.xlu0 %v989
        %v991 = vpop.xlane.xlu0 %990
        %v992 = vrcp.pop %v988
        %v993 = vrcp.pop %v991
        %v994 = vmul.f32 %v983, %v992
        %v995 = vmul.f32 %v985, %v993
        %996 = vrot.lane.b32.xlu0 %v726, 112
        %v997 = vpop.permute.xlu0 %996
        %998 = vrot.lane.b32.xlu0 %v728, 112
        %v999 = vpop.permute.xlu0 %998
        %v1003 = vsel %vm781, %v994, 0
        %v1006 = vsel %vm781, %v995, 0
        %1008 = vmatpush.msra.mxu0 0.0
        %1009 = vmatpush.msra.mxu0 0.0
        %1010 = vmatpush.msra.mxu0 0.0
        %1011 = vmatpush.msra.mxu0 0.0
        %1012 = vmatpush.msra.mxu0 0.0
        %1013 = vmatpush.msra.mxu0 0.0
        %1014 = vmatpush.msra.mxu0 0.0
        %1015 = vmatpush.msra.mxu0 0.0
        %1016 = vmatpush.msra.mxu0 0.0
        %1017 = vmatpush.msra.mxu0 0.0
        %1018 = vmatpush.msra.mxu0 0.0
        %1019 = vmatpush.msra.mxu0 0.0
        %1020 = vmatpush.msra.mxu0 0.0
        %1021 = vmatpush.msra.mxu0 0.0
        %1022 = vmatpush.msra.mxu0 %v999
        %1023 = vmatpush.msra.mxu0 %v997
        %1024 = vmatmul.f32.gmra.mxu0 %v1003
        %v1025 = vpop.f32.mrf.mxu0
        %v1026 = vadd.f32 0.0, %v1025
        %1027 = vmatmul.f32.gmra.mxu0 %v1006
        %v1028 = vpop.f32.mrf.mxu0
        %v1029 = vadd.f32 0.0, %v1028
        %1030 = vdwg.mxu0
        %1031 = vrot.lane.b32.xlu0 %v730, 104
        %v1032 = vpop.permute.xlu0 %1031
        %1033 = vrot.lane.b32.xlu0 %v731, 104
        %v1034 = vpop.permute.xlu0 %1033
        %1035 = vrot.lane.b32.xlu0 %v712, 40
        %v1036 = vpop.permute.xlu0 %1035
        %1037 = vrot.lane.b32.xlu0 %v714, 40
        %v1038 = vpop.permute.xlu0 %1037
        %v1039 = vsel %vm745, %v1032, 0
        %v1041 = vsel %vm745, %v1034, 0
        %v1043 = vsel %vm745, %v1036, 0
        %v1045 = vsel %vm745, %v1038, 0
        %1047 = vmatpush.xpose.msra.mxu0 0.0
        %1048 = vmatpush.xpose.msra.mxu0 0.0
        %1049 = vmatpush.xpose.msra.mxu0 0.0
        %1050 = vmatpush.xpose.msra.mxu0 0.0
        %1051 = vmatpush.xpose.msra.mxu0 0.0
        %1052 = vmatpush.xpose.msra.mxu0 0.0
        %1053 = vmatpush.xpose.msra.mxu0 0.0
        %1054 = vmatpush.xpose.msra.mxu0 0.0
        %1055 = vmatpush.xpose.msra.mxu0 0.0
        %1056 = vmatpush.xpose.msra.mxu0 0.0
        %1057 = vmatpush.xpose.msra.mxu0 0.0
        %1058 = vmatpush.xpose.msra.mxu0 0.0
        %1059 = vmatpush.xpose.msra.mxu0 0.0
        %1060 = vmatpush.xpose.msra.mxu0 0.0
        %1061 = vmatpush.xpose.msra.mxu0 %v1045
        %1062 = vmatpush.xpose.msra.mxu0 %v1043
        %1063 = vmatmul.f32.gmra.mxu0 %v1039
        %v1064 = vpop.f32.mrf.mxu0
        %v1065 = vadd.f32 0.0, %v1064
        %1066 = vmatmul.f32.gmra.mxu0 %v1041
        %v1067 = vpop.f32.mrf.mxu0
        %v1068 = vadd.f32 0.0, %v1067
        %1069 = vdwg.mxu0
        %v1070 = vsel %vm737, %v1065, -1e+30
        %v1071 = vsel %vm738, %v1068, -1e+30
        %v1072 = vsel %vm781, %v1070, -inf
        %1073 = vmax.xlane.f32.xlu0 %v1072
        %v1074 = vpop.xlane.xlu0 %1073
        %v1075 = vsel %vm781, %v1071, -inf
        %1076 = vmax.xlane.f32.xlu0 %v1075
        %v1077 = vpop.xlane.xlu0 %1076
        %v1078 = vsub.f32 %v1070, %v1074
        %v1079 = vsub.f32 %v1071, %v1077
        %v1080 = vmul.f32 %v1078, 1.442695
        %v1081 = vpow.pop %v1080
        %v1082 = vmul.f32 %v1079, 1.442695
        %v1083 = vpow.pop %v1082
        %v1084 = vsel %vm781, %v1081, 0.0
        %1085 = vadd.xlane.f32.xlu0 %v1084
        %v1086 = vpop.xlane.xlu0 %1085
        %v1087 = vsel %vm781, %v1083, 0.0
        %1088 = vadd.xlane.f32.xlu0 %v1087
        %v1089 = vpop.xlane.xlu0 %1088
        %v1090 = vrcp.pop %v1086
        %v1091 = vrcp.pop %v1089
        %v1092 = vmul.f32 %v1081, %v1090
        %v1093 = vmul.f32 %v1083, %v1091
        %1094 = vrot.lane.b32.xlu0 %v726, 104
        %v1095 = vpop.permute.xlu0 %1094
        %1096 = vrot.lane.b32.xlu0 %v728, 104
        %v1097 = vpop.permute.xlu0 %1096
        %v1101 = vsel %vm781, %v1092, 0
        %v1104 = vsel %vm781, %v1093, 0
        %1106 = vmatpush.msra.mxu0 0.0
        %1107 = vmatpush.msra.mxu0 0.0
        %1108 = vmatpush.msra.mxu0 0.0
        %1109 = vmatpush.msra.mxu0 0.0
        %1110 = vmatpush.msra.mxu0 0.0
        %1111 = vmatpush.msra.mxu0 0.0
        %1112 = vmatpush.msra.mxu0 0.0
        %1113 = vmatpush.msra.mxu0 0.0
        %1114 = vmatpush.msra.mxu0 0.0
        %1115 = vmatpush.msra.mxu0 0.0
        %1116 = vmatpush.msra.mxu0 0.0
        %1117 = vmatpush.msra.mxu0 0.0
        %1118 = vmatpush.msra.mxu0 0.0
        %1119 = vmatpush.msra.mxu0 0.0
        %1120 = vmatpush.msra.mxu0 %v1097
        %1121 = vmatpush.msra.mxu0 %v1095
        %1122 = vmatmul.f32.gmra.mxu0 %v1101
        %v1123 = vpop.f32.mrf.mxu0
        %v1124 = vadd.f32 0.0, %v1123
        %1125 = vmatmul.f32.gmra.mxu0 %v1104
        %v1126 = vpop.f32.mrf.mxu0
        %v1127 = vadd.f32 0.0, %v1126
        %1128 = vdwg.mxu0
        %1129 = vrot.lane.b32.xlu0 %v730, 96
        %v1130 = vpop.permute.xlu0 %1129
        %1131 = vrot.lane.b32.xlu0 %v731, 96
        %v1132 = vpop.permute.xlu0 %1131
        %1133 = vrot.lane.b32.xlu0 %v712, 32
        %v1134 = vpop.permute.xlu0 %1133
        %1135 = vrot.lane.b32.xlu0 %v714, 32
        %v1136 = vpop.permute.xlu0 %1135
        %v1137 = vsel %vm745, %v1130, 0
        %v1139 = vsel %vm745, %v1132, 0
        %v1141 = vsel %vm745, %v1134, 0
        %v1143 = vsel %vm745, %v1136, 0
        %1145 = vmatpush.xpose.msra.mxu0 0.0
        %1146 = vmatpush.xpose.msra.mxu0 0.0
        %1147 = vmatpush.xpose.msra.mxu0 0.0
        %1148 = vmatpush.xpose.msra.mxu0 0.0
        %1149 = vmatpush.xpose.msra.mxu0 0.0
        %1150 = vmatpush.xpose.msra.mxu0 0.0
        %1151 = vmatpush.xpose.msra.mxu0 0.0
        %1152 = vmatpush.xpose.msra.mxu0 0.0
        %1153 = vmatpush.xpose.msra.mxu0 0.0
        %1154 = vmatpush.xpose.msra.mxu0 0.0
        %1155 = vmatpush.xpose.msra.mxu0 0.0
        %1156 = vmatpush.xpose.msra.mxu0 0.0
        %1157 = vmatpush.xpose.msra.mxu0 0.0
        %1158 = vmatpush.xpose.msra.mxu0 0.0
        %1159 = vmatpush.xpose.msra.mxu0 %v1143
        %1160 = vmatpush.xpose.msra.mxu0 %v1141
        %1161 = vmatmul.f32.gmra.mxu0 %v1137
        %v1162 = vpop.f32.mrf.mxu0
        %v1163 = vadd.f32 0.0, %v1162
        %1164 = vmatmul.f32.gmra.mxu0 %v1139
        %v1165 = vpop.f32.mrf.mxu0
        %v1166 = vadd.f32 0.0, %v1165
        %1167 = vdwg.mxu0
        %v1168 = vsel %vm737, %v1163, -1e+30
        %v1169 = vsel %vm738, %v1166, -1e+30
        %v1170 = vsel %vm781, %v1168, -inf
        %1171 = vmax.xlane.f32.xlu0 %v1170
        %v1172 = vpop.xlane.xlu0 %1171
        %v1173 = vsel %vm781, %v1169, -inf
        %1174 = vmax.xlane.f32.xlu0 %v1173
        %v1175 = vpop.xlane.xlu0 %1174
        %v1176 = vsub.f32 %v1168, %v1172
        %v1177 = vsub.f32 %v1169, %v1175
        %v1178 = vmul.f32 %v1176, 1.442695
        %v1179 = vpow.pop %v1178
        %v1180 = vmul.f32 %v1177, 1.442695
        %v1181 = vpow.pop %v1180
        %v1182 = vsel %vm781, %v1179, 0.0
        %1183 = vadd.xlane.f32.xlu0 %v1182
        %v1184 = vpop.xlane.xlu0 %1183
        %v1185 = vsel %vm781, %v1181, 0.0
        %1186 = vadd.xlane.f32.xlu0 %v1185
        %v1187 = vpop.xlane.xlu0 %1186
        %v1188 = vrcp.pop %v1184
        %v1189 = vrcp.pop %v1187
        %v1190 = vmul.f32 %v1179, %v1188
        %v1191 = vmul.f32 %v1181, %v1189
        %1192 = vrot.lane.b32.xlu0 %v726, 96
        %v1193 = vpop.permute.xlu0 %1192
        %1194 = vrot.lane.b32.xlu0 %v728, 96
        %v1195 = vpop.permute.xlu0 %1194
        %v1199 = vsel %vm781, %v1190, 0
        %v1202 = vsel %vm781, %v1191, 0
        %1204 = vmatpush.msra.mxu0 0.0
        %1205 = vmatpush.msra.mxu0 0.0
        %1206 = vmatpush.msra.mxu0 0.0
        %1207 = vmatpush.msra.mxu0 0.0
        %1208 = vmatpush.msra.mxu0 0.0
        %1209 = vmatpush.msra.mxu0 0.0
        %1210 = vmatpush.msra.mxu0 0.0
        %1211 = vmatpush.msra.mxu0 0.0
        %1212 = vmatpush.msra.mxu0 0.0
        %1213 = vmatpush.msra.mxu0 0.0
        %1214 = vmatpush.msra.mxu0 0.0
        %1215 = vmatpush.msra.mxu0 0.0
        %1216 = vmatpush.msra.mxu0 0.0
        %1217 = vmatpush.msra.mxu0 0.0
        %1218 = vmatpush.msra.mxu0 %v1195
        %1219 = vmatpush.msra.mxu0 %v1193
        %1220 = vmatmul.f32.gmra.mxu0 %v1199
        %v1221 = vpop.f32.mrf.mxu0
        %v1222 = vadd.f32 0.0, %v1221
        %1223 = vmatmul.f32.gmra.mxu0 %v1202
        %v1224 = vpop.f32.mrf.mxu0
        %v1225 = vadd.f32 0.0, %v1224
        %1226 = vdwg.mxu0
        %1227 = vrot.lane.b32.xlu0 %v730, 88
        %v1228 = vpop.permute.xlu0 %1227
        %1229 = vrot.lane.b32.xlu0 %v731, 88
        %v1230 = vpop.permute.xlu0 %1229
        %1231 = vrot.lane.b32.xlu0 %v712, 24
        %v1232 = vpop.permute.xlu0 %1231
        %1233 = vrot.lane.b32.xlu0 %v714, 24
        %v1234 = vpop.permute.xlu0 %1233
        %v1235 = vsel %vm745, %v1228, 0
        %v1237 = vsel %vm745, %v1230, 0
        %v1239 = vsel %vm745, %v1232, 0
        %v1241 = vsel %vm745, %v1234, 0
        %1243 = vmatpush.xpose.msra.mxu0 0.0
        %1244 = vmatpush.xpose.msra.mxu0 0.0
        %1245 = vmatpush.xpose.msra.mxu0 0.0
        %1246 = vmatpush.xpose.msra.mxu0 0.0
        %1247 = vmatpush.xpose.msra.mxu0 0.0
        %1248 = vmatpush.xpose.msra.mxu0 0.0
        %1249 = vmatpush.xpose.msra.mxu0 0.0
        %1250 = vmatpush.xpose.msra.mxu0 0.0
        %1251 = vmatpush.xpose.msra.mxu0 0.0
        %1252 = vmatpush.xpose.msra.mxu0 0.0
        %1253 = vmatpush.xpose.msra.mxu0 0.0
        %1254 = vmatpush.xpose.msra.mxu0 0.0
        %1255 = vmatpush.xpose.msra.mxu0 0.0
        %1256 = vmatpush.xpose.msra.mxu0 0.0
        %1257 = vmatpush.xpose.msra.mxu0 %v1241
        %1258 = vmatpush.xpose.msra.mxu0 %v1239
        %1259 = vmatmul.f32.gmra.mxu0 %v1235
        %v1260 = vpop.f32.mrf.mxu0
        %v1261 = vadd.f32 0.0, %v1260
        %1262 = vmatmul.f32.gmra.mxu0 %v1237
        %v1263 = vpop.f32.mrf.mxu0
        %v1264 = vadd.f32 0.0, %v1263
        %1265 = vdwg.mxu0
        %v1266 = vsel %vm737, %v1261, -1e+30
        %v1267 = vsel %vm738, %v1264, -1e+30
        %v1268 = vsel %vm781, %v1266, -inf
        %1269 = vmax.xlane.f32.xlu0 %v1268
        %v1270 = vpop.xlane.xlu0 %1269
        %v1271 = vsel %vm781, %v1267, -inf
        %1272 = vmax.xlane.f32.xlu0 %v1271
        %v1273 = vpop.xlane.xlu0 %1272
        %v1274 = vsub.f32 %v1266, %v1270
        %v1275 = vsub.f32 %v1267, %v1273
        %v1276 = vmul.f32 %v1274, 1.442695
        %v1277 = vpow.pop %v1276
        %v1278 = vmul.f32 %v1275, 1.442695
        %v1279 = vpow.pop %v1278
        %v1280 = vsel %vm781, %v1277, 0.0
        %1281 = vadd.xlane.f32.xlu0 %v1280
        %v1282 = vpop.xlane.xlu0 %1281
        %v1283 = vsel %vm781, %v1279, 0.0
        %1284 = vadd.xlane.f32.xlu0 %v1283
        %v1285 = vpop.xlane.xlu0 %1284
        %v1286 = vrcp.pop %v1282
        %v1287 = vrcp.pop %v1285
        %v1288 = vmul.f32 %v1277, %v1286
        %v1289 = vmul.f32 %v1279, %v1287
        %1290 = vrot.lane.b32.xlu0 %v726, 88
        %v1291 = vpop.permute.xlu0 %1290
        %1292 = vrot.lane.b32.xlu0 %v728, 88
        %v1293 = vpop.permute.xlu0 %1292
        %v1297 = vsel %vm781, %v1288, 0
        %v1300 = vsel %vm781, %v1289, 0
        %1302 = vmatpush.msra.mxu0 0.0
        %1303 = vmatpush.msra.mxu0 0.0
        %1304 = vmatpush.msra.mxu0 0.0
        %1305 = vmatpush.msra.mxu0 0.0
        %1306 = vmatpush.msra.mxu0 0.0
        %1307 = vmatpush.msra.mxu0 0.0
        %1308 = vmatpush.msra.mxu0 0.0
        %1309 = vmatpush.msra.mxu0 0.0
        %1310 = vmatpush.msra.mxu0 0.0
        %1311 = vmatpush.msra.mxu0 0.0
        %1312 = vmatpush.msra.mxu0 0.0
        %1313 = vmatpush.msra.mxu0 0.0
        %1314 = vmatpush.msra.mxu0 0.0
        %1315 = vmatpush.msra.mxu0 0.0
        %1316 = vmatpush.msra.mxu0 %v1293
        %1317 = vmatpush.msra.mxu0 %v1291
        %1318 = vmatmul.f32.gmra.mxu0 %v1297
        %v1319 = vpop.f32.mrf.mxu0
        %v1320 = vadd.f32 0.0, %v1319
        %1321 = vmatmul.f32.gmra.mxu0 %v1300
        %v1322 = vpop.f32.mrf.mxu0
        %v1323 = vadd.f32 0.0, %v1322
        %1324 = vdwg.mxu0
        %1325 = vrot.lane.b32.xlu0 %v730, 80
        %v1326 = vpop.permute.xlu0 %1325
        %1327 = vrot.lane.b32.xlu0 %v731, 80
        %v1328 = vpop.permute.xlu0 %1327
        %1329 = vrot.lane.b32.xlu0 %v712, 16
        %v1330 = vpop.permute.xlu0 %1329
        %1331 = vrot.lane.b32.xlu0 %v714, 16
        %v1332 = vpop.permute.xlu0 %1331
        %v1333 = vsel %vm745, %v1326, 0
        %v1335 = vsel %vm745, %v1328, 0
        %v1337 = vsel %vm745, %v1330, 0
        %v1339 = vsel %vm745, %v1332, 0
        %1341 = vmatpush.xpose.msra.mxu0 0.0
        %1342 = vmatpush.xpose.msra.mxu0 0.0
        %1343 = vmatpush.xpose.msra.mxu0 0.0
        %1344 = vmatpush.xpose.msra.mxu0 0.0
        %1345 = vmatpush.xpose.msra.mxu0 0.0
        %1346 = vmatpush.xpose.msra.mxu0 0.0
        %1347 = vmatpush.xpose.msra.mxu0 0.0
        %1348 = vmatpush.xpose.msra.mxu0 0.0
        %1349 = vmatpush.xpose.msra.mxu0 0.0
        %1350 = vmatpush.xpose.msra.mxu0 0.0
        %1351 = vmatpush.xpose.msra.mxu0 0.0
        %1352 = vmatpush.xpose.msra.mxu0 0.0
        %1353 = vmatpush.xpose.msra.mxu0 0.0
        %1354 = vmatpush.xpose.msra.mxu0 0.0
        %1355 = vmatpush.xpose.msra.mxu0 %v1339
        %1356 = vmatpush.xpose.msra.mxu0 %v1337
        %1357 = vmatmul.f32.gmra.mxu0 %v1333
        %v1358 = vpop.f32.mrf.mxu0
        %v1359 = vadd.f32 0.0, %v1358
        %1360 = vmatmul.f32.gmra.mxu0 %v1335
        %v1361 = vpop.f32.mrf.mxu0
        %v1362 = vadd.f32 0.0, %v1361
        %1363 = vdwg.mxu0
        %v1364 = vsel %vm737, %v1359, -1e+30
        %v1365 = vsel %vm738, %v1362, -1e+30
        %v1366 = vsel %vm781, %v1364, -inf
        %1367 = vmax.xlane.f32.xlu0 %v1366
        %v1368 = vpop.xlane.xlu0 %1367
        %v1369 = vsel %vm781, %v1365, -inf
        %1370 = vmax.xlane.f32.xlu0 %v1369
        %v1371 = vpop.xlane.xlu0 %1370
        %v1372 = vsub.f32 %v1364, %v1368
        %v1373 = vsub.f32 %v1365, %v1371
        %v1374 = vmul.f32 %v1372, 1.442695
        %v1375 = vpow.pop %v1374
        %v1376 = vmul.f32 %v1373, 1.442695
        %v1377 = vpow.pop %v1376
        %v1378 = vsel %vm781, %v1375, 0.0
        %1379 = vadd.xlane.f32.xlu0 %v1378
        %v1380 = vpop.xlane.xlu0 %1379
        %v1381 = vsel %vm781, %v1377, 0.0
        %1382 = vadd.xlane.f32.xlu0 %v1381
        %v1383 = vpop.xlane.xlu0 %1382
        %v1384 = vrcp.pop %v1380
        %v1385 = vrcp.pop %v1383
        %v1386 = vmul.f32 %v1375, %v1384
        %v1387 = vmul.f32 %v1377, %v1385
        %1388 = vrot.lane.b32.xlu0 %v726, 80
        %v1389 = vpop.permute.xlu0 %1388
        %1390 = vrot.lane.b32.xlu0 %v728, 80
        %v1391 = vpop.permute.xlu0 %1390
        %v1395 = vsel %vm781, %v1386, 0
        %v1398 = vsel %vm781, %v1387, 0
        %1400 = vmatpush.msra.mxu0 0.0
        %1401 = vmatpush.msra.mxu0 0.0
        %1402 = vmatpush.msra.mxu0 0.0
        %1403 = vmatpush.msra.mxu0 0.0
        %1404 = vmatpush.msra.mxu0 0.0
        %1405 = vmatpush.msra.mxu0 0.0
        %1406 = vmatpush.msra.mxu0 0.0
        %1407 = vmatpush.msra.mxu0 0.0
        %1408 = vmatpush.msra.mxu0 0.0
        %1409 = vmatpush.msra.mxu0 0.0
        %1410 = vmatpush.msra.mxu0 0.0
        %1411 = vmatpush.msra.mxu0 0.0
        %1412 = vmatpush.msra.mxu0 0.0
        %1413 = vmatpush.msra.mxu0 0.0
        %1414 = vmatpush.msra.mxu0 %v1391
        %1415 = vmatpush.msra.mxu0 %v1389
        %1416 = vmatmul.f32.gmra.mxu0 %v1395
        %v1417 = vpop.f32.mrf.mxu0
        %v1418 = vadd.f32 0.0, %v1417
        %1419 = vmatmul.f32.gmra.mxu0 %v1398
        %v1420 = vpop.f32.mrf.mxu0
        %v1421 = vadd.f32 0.0, %v1420
        %1422 = vdwg.mxu0
        %1423 = vrot.lane.b32.xlu0 %v730, 72
        %v1424 = vpop.permute.xlu0 %1423
        %1425 = vrot.lane.b32.xlu0 %v731, 72
        %v1426 = vpop.permute.xlu0 %1425
        %1427 = vrot.lane.b32.xlu0 %v712, 8
        %v1428 = vpop.permute.xlu0 %1427
        %1429 = vrot.lane.b32.xlu0 %v714, 8
        %v1430 = vpop.permute.xlu0 %1429
        %v1431 = vsel %vm745, %v1424, 0
        %v1433 = vsel %vm745, %v1426, 0
        %v1435 = vsel %vm745, %v1428, 0
        %v1437 = vsel %vm745, %v1430, 0
        %1439 = vmatpush.xpose.msra.mxu0 0.0
        %1440 = vmatpush.xpose.msra.mxu0 0.0
        %1441 = vmatpush.xpose.msra.mxu0 0.0
        %1442 = vmatpush.xpose.msra.mxu0 0.0
        %1443 = vmatpush.xpose.msra.mxu0 0.0
        %1444 = vmatpush.xpose.msra.mxu0 0.0
        %1445 = vmatpush.xpose.msra.mxu0 0.0
        %1446 = vmatpush.xpose.msra.mxu0 0.0
        %1447 = vmatpush.xpose.msra.mxu0 0.0
        %1448 = vmatpush.xpose.msra.mxu0 0.0
        %1449 = vmatpush.xpose.msra.mxu0 0.0
        %1450 = vmatpush.xpose.msra.mxu0 0.0
        %1451 = vmatpush.xpose.msra.mxu0 0.0
        %1452 = vmatpush.xpose.msra.mxu0 0.0
        %1453 = vmatpush.xpose.msra.mxu0 %v1437
        %1454 = vmatpush.xpose.msra.mxu0 %v1435
        %1455 = vmatmul.f32.gmra.mxu0 %v1431
        %v1456 = vpop.f32.mrf.mxu0
        %v1457 = vadd.f32 0.0, %v1456
        %1458 = vmatmul.f32.gmra.mxu0 %v1433
        %v1459 = vpop.f32.mrf.mxu0
        %v1460 = vadd.f32 0.0, %v1459
        %1461 = vdwg.mxu0
        %v1462 = vsel %vm737, %v1457, -1e+30
        %v1463 = vsel %vm738, %v1460, -1e+30
        %v1464 = vsel %vm781, %v1462, -inf
        %1465 = vmax.xlane.f32.xlu0 %v1464
        %v1466 = vpop.xlane.xlu0 %1465
        %v1467 = vsel %vm781, %v1463, -inf
        %1468 = vmax.xlane.f32.xlu0 %v1467
        %v1469 = vpop.xlane.xlu0 %1468
        %v1470 = vsub.f32 %v1462, %v1466
        %v1471 = vsub.f32 %v1463, %v1469
        %v1472 = vmul.f32 %v1470, 1.442695
        %v1473 = vpow.pop %v1472
        %v1474 = vmul.f32 %v1471, 1.442695
        %v1475 = vpow.pop %v1474
        %v1476 = vsel %vm781, %v1473, 0.0
        %1477 = vadd.xlane.f32.xlu0 %v1476
        %v1478 = vpop.xlane.xlu0 %1477
        %v1479 = vsel %vm781, %v1475, 0.0
        %1480 = vadd.xlane.f32.xlu0 %v1479
        %v1481 = vpop.xlane.xlu0 %1480
        %v1482 = vrcp.pop %v1478
        %v1483 = vrcp.pop %v1481
        %v1484 = vmul.f32 %v1473, %v1482
        %v1485 = vmul.f32 %v1475, %v1483
        %1486 = vrot.lane.b32.xlu0 %v726, 72
        %v1487 = vpop.permute.xlu0 %1486
        %1488 = vrot.lane.b32.xlu0 %v728, 72
        %v1489 = vpop.permute.xlu0 %1488
        %v1493 = vsel %vm781, %v1484, 0
        %v1496 = vsel %vm781, %v1485, 0
        %1498 = vmatpush.msra.mxu0 0.0
        %1499 = vmatpush.msra.mxu0 0.0
        %1500 = vmatpush.msra.mxu0 0.0
        %1501 = vmatpush.msra.mxu0 0.0
        %1502 = vmatpush.msra.mxu0 0.0
        %1503 = vmatpush.msra.mxu0 0.0
        %1504 = vmatpush.msra.mxu0 0.0
        %1505 = vmatpush.msra.mxu0 0.0
        %1506 = vmatpush.msra.mxu0 0.0
        %1507 = vmatpush.msra.mxu0 0.0
        %1508 = vmatpush.msra.mxu0 0.0
        %1509 = vmatpush.msra.mxu0 0.0
        %1510 = vmatpush.msra.mxu0 0.0
        %1511 = vmatpush.msra.mxu0 0.0
        %1512 = vmatpush.msra.mxu0 %v1489
        %1513 = vmatpush.msra.mxu0 %v1487
        %1514 = vmatmul.f32.gmra.mxu0 %v1493
        %v1515 = vpop.f32.mrf.mxu0
        %v1516 = vadd.f32 0.0, %v1515
        %1517 = vmatmul.f32.gmra.mxu0 %v1496
        %v1518 = vpop.f32.mrf.mxu0
        %v1519 = vadd.f32 0.0, %v1518
        %1520 = vdwg.mxu0
        %1523 = vrot.lane.b32.xlu0 %v928, 8
        %v1524 = vpop.permute.xlu0 %1523
        %1525 = vrot.lane.b32.xlu0 %v931, 8
        %v1526 = vpop.permute.xlu0 %1525
        %1531 = vrot.lane.b32.xlu0 %v1026, 16
        %v1532 = vpop.permute.xlu0 %1531
        %1533 = vrot.lane.b32.xlu0 %v1029, 16
        %v1534 = vpop.permute.xlu0 %1533
        %1539 = vrot.lane.b32.xlu0 %v1124, 24
        %v1540 = vpop.permute.xlu0 %1539
        %1541 = vrot.lane.b32.xlu0 %v1127, 24
        %v1542 = vpop.permute.xlu0 %1541
        %1547 = vrot.lane.b32.xlu0 %v1222, 32
        %v1548 = vpop.permute.xlu0 %1547
        %1549 = vrot.lane.b32.xlu0 %v1225, 32
        %v1550 = vpop.permute.xlu0 %1549
        %1555 = vrot.lane.b32.xlu0 %v1320, 40
        %v1556 = vpop.permute.xlu0 %1555
        %1557 = vrot.lane.b32.xlu0 %v1323, 40
        %v1558 = vpop.permute.xlu0 %1557
        %1563 = vrot.lane.b32.xlu0 %v1418, 48
        %v1564 = vpop.permute.xlu0 %1563
        %1565 = vrot.lane.b32.xlu0 %v1421, 48
        %v1566 = vpop.permute.xlu0 %1565
        %1571 = vrot.lane.b32.xlu0 %v1516, 56
        %v1572 = vpop.permute.xlu0 %1571
        %1573 = vrot.lane.b32.xlu0 %v1519, 56
        %v1574 = vpop.permute.xlu0 %1573
        %v1577 = vsel %vm745, %v828, %v1524
        %v1578 = vsel %vm745, %v831, %v1526
        %v1579 = vsel %vm781, %v1577, %v1532
        %v1580 = vsel %vm781, %v1578, %v1534
        %vm1581 = vcmask 195584
        %v1582 = vsel %vm1581, %v1579, %v1540
        %v1583 = vsel %vm1581, %v1580, %v1542
        %vm1584 = vcmask 261120
        %v1585 = vsel %vm1584, %v1582, %v1548
        %v1586 = vsel %vm1584, %v1583, %v1550
        %vm1587 = vcmask 326656
        %v1588 = vsel %vm1587, %v1585, %v1556
        %v1589 = vsel %vm1587, %v1586, %v1558
        %vm1590 = vcmask 392192
        %v1591 = vsel %vm1590, %v1588, %v1564
        %v1592 = vsel %vm1590, %v1589, %v1566
        %vm1593 = vcmask 457728
        %v1594 = vsel %vm1593, %v1591, %v1572
        %v1595 = vsel %vm1593, %v1592, %v1574
        %v1596 = vpack.c.bf16 %v1595, %v1594
        %v1597 = vld [vmem:[#allocation7] sm:$0xf]
        %v1598 = vld [vmem:[#allocation7 + $0x4] sm:$0xf]
        %v1599 = vld [vmem:[#allocation7 + $0x8] sm:$0xf]
        %v1600 = vld [vmem:[#allocation7 + $0xc] sm:$0xf]
        %v1601 = vld [vmem:[#allocation7 + $0x10] sm:$0xf]
        %v1602 = vld [vmem:[#allocation7 + $0x14] sm:$0xf]
        %v1603 = vld [vmem:[#allocation7 + $0x18] sm:$0xf]
        %v1604 = vld [vmem:[#allocation7 + $0x1c] sm:$0xf]
        %v1605 = vld [vmem:[#allocation9] sm:$0x1]
        %v1606 = vunpack.c.l.bf16 %v1605
        %v1607 = vperm.slane %v1606, 0
        %v1616 = vunpack.c.l.b16 %v1597
        %v1617 = vunpack.c.l.b16 %v1598
        %v1618 = vunpack.c.l.b16 %v1599
        %v1619 = vunpack.c.l.b16 %v1600
        %v1620 = vunpack.c.l.b16 %v1601
        %v1621 = vunpack.c.l.b16 %v1602
        %v1622 = vunpack.c.l.b16 %v1603
        %v1623 = vunpack.c.l.b16 %v1604
        %v1624 = vpack.c.b16 %v1617, %v1616
        %v1625 = vpack.c.b16 %v1619, %v1618
        %v1626 = vpack.c.b16 %v1621, %v1620
        %v1627 = vpack.c.b16 %v1623, %v1622
        %v1633 = vsel %vm579, %v1596, 0
        %1635 = vmatpush.bf16.msra.mxu0 0
        %1636 = vmatpush.bf16.msra.mxu0 0
        %1637 = vmatpush.bf16.msra.mxu0 0
        %1638 = vmatpush.bf16.msra.mxu0 0
        %1639 = vmatpush.bf16.msra.mxu0 %v1627
        %1640 = vmatpush.bf16.msra.mxu0 %v1626
        %1641 = vmatpush.bf16.msra.mxu0 %v1625
        %1642 = vmatpush.bf16.msra.mxu0 %v1624
        %1643 = vmatmul.bf16.gmra.mxu0 %v1633
        %v1644 = vpop.f32.mrf.mxu0
        %v1645 = vadd.f32 %v1607, %v1644
        %v1646 = vpop.f32.mrf.mxu0
        %v1647 = vadd.f32 %v1607, %v1646
        %1648 = vdwg.mxu0
        %v1649 = vadd.f32 %v577, %v1645
        %v1650 = vadd.f32 %v578, %v1647
        %v1651 = vsel %vm579, %v1649, 0.0
        %1652 = vadd.xlane.f32.xlu0 %v1651
        %v1653 = vpop.xlane.xlu0 %1652
        %v1654 = vsel %vm579, %v1650, 0.0
        %1655 = vadd.xlane.f32.xlu0 %v1654
        %v1656 = vpop.xlane.xlu0 %1655
        %v1657 = vmul.f32 %v1653, %v592
        %v1658 = vmul.f32 %v1656, %v592
        %v1659 = vsub.f32 %v1649, %v1657
        %v1660 = vsub.f32 %v1650, %v1658
        %v1661 = vmul.f32 %v1659, %v1659
        %v1662 = vmul.f32 %v1660, %v1660
        %v1663 = vsel %vm579, %v1661, 0.0
        %1664 = vadd.xlane.f32.xlu0 %v1663
        %v1665 = vpop.xlane.xlu0 %1664
        %v1666 = vsel %vm579, %v1662, 0.0
        %1667 = vadd.xlane.f32.xlu0 %v1666
        %v1668 = vpop.xlane.xlu0 %1667
        %v1669 = vmul.f32 %v1665, %v592
        %v1670 = vmul.f32 %v1668, %v592
        %v1671 = vadd.f32 %v1669, 1e-05
        %v1672 = vadd.f32 %v1670, 1e-05
        %v1673 = vrsqrt.pop %v1671
        %v1674 = vmul.f32 %v1673, %v1671
        %v1675 = vmul.f32 %v1674, %v1673
        %v1676 = vmul.f32 0.5, %v1675
        %v1677 = vsub.f32 1.5, %v1676
        %v1678 = vmul.f32 %v1673, %v1677
        %vm1679 = vweird.f32 %v1671
        %vm1680 = vweird.f32 %v1673
        %vm1681 = vmor %vm1679, %vm1680
        %v1682 = vsel %vm1681, %v1673, %v1678
        %v1683 = vrsqrt.pop %v1672
        %v1684 = vmul.f32 %v1683, %v1672
        %v1685 = vmul.f32 %v1684, %v1683
        %v1686 = vmul.f32 0.5, %v1685
        %v1687 = vsub.f32 1.5, %v1686
        %v1688 = vmul.f32 %v1683, %v1687
        %vm1689 = vweird.f32 %v1672
        %vm1690 = vweird.f32 %v1683
        %vm1691 = vmor %vm1689, %vm1690
        %v1692 = vsel %vm1691, %v1683, %v1688
        %v1693 = vmul.f32 %v1659, %v1682
        %v1694 = vmul.f32 %v1660, %v1692
        %v1695 = vld [vmem:[#allocation10] sm:$0x1]
        %v1696 = vunpack.c.l.bf16 %v1695
        %v1697 = vperm.slane %v1696, 0
        %v1698 = vmul.f32 %v1693, %v1697
        %v1699 = vmul.f32 %v1694, %v1697
        %v1700 = vld [vmem:[#allocation12] sm:$0x1]
        %v1701 = vunpack.c.l.bf16 %v1700
        %v1702 = vperm.slane %v1701, 0
        %v1703 = vadd.f32 %v1698, %v1702
        %v1704 = vadd.f32 %v1699, %v1702
        %v1705 = vpack.c.bf16 %v1704, %v1703
        %v1706 = vld [vmem:[%s9] sm:$0xff]
        %v1707 = vld [vmem:[%s9 + $0x8] sm:$0xff]
        %v1708 = vld [vmem:[%s9 + $0x10] sm:$0xff]
        %v1709 = vld [vmem:[%s9 + $0x18] sm:$0xff]
        %v1710 = vld [vmem:[%s9 + $0x20] sm:$0xff]
        %v1711 = vld [vmem:[%s9 + $0x28] sm:$0xff]
        %v1712 = vld [vmem:[%s9 + $0x30] sm:$0xff]
        %v1713 = vld [vmem:[%s9 + $0x38] sm:$0xff]
        %v1714 = vld [vmem:[#allocation13] sm:$0x3]
        %v1715 = vunpack.c.l.bf16 %v1714
        %v1717 = vperm.slane %v1715, 0
        %v1718 = vperm.slane %v1715, 2
        %v1721 = vperm.slane %v1717, 0
        %v1722 = vperm.slane %v1718, 0
        %v1731 = vunpack.c.l.b16 %v1706
        %v1732 = vunpack.c.h.b16 %v1706
        %v1733 = vunpack.c.l.b16 %v1707
        %v1734 = vunpack.c.h.b16 %v1707
        %v1735 = vunpack.c.l.b16 %v1708
        %v1736 = vunpack.c.h.b16 %v1708
        %v1737 = vunpack.c.l.b16 %v1709
        %v1738 = vunpack.c.h.b16 %v1709
        %v1739 = vunpack.c.l.b16 %v1710
        %v1740 = vunpack.c.h.b16 %v1710
        %v1741 = vunpack.c.l.b16 %v1711
        %v1742 = vunpack.c.h.b16 %v1711
        %v1743 = vunpack.c.l.b16 %v1712
        %v1744 = vunpack.c.h.b16 %v1712
        %v1745 = vunpack.c.l.b16 %v1713
        %v1746 = vunpack.c.h.b16 %v1713
        %v1747 = vpack.c.b16 %v1733, %v1731
        %v1748 = vpack.c.b16 %v1734, %v1732
        %v1749 = vpack.c.b16 %v1737, %v1735
        %v1750 = vpack.c.b16 %v1738, %v1736
        %v1751 = vpack.c.b16 %v1741, %v1739
        %v1752 = vpack.c.b16 %v1742, %v1740
        %v1753 = vpack.c.b16 %v1745, %v1743
        %v1754 = vpack.c.b16 %v1746, %v1744
        %v1764 = vsel %vm579, %v1705, 0
        %1766 = vmatpush.bf16.msra.mxu0 0
        %1767 = vmatpush.bf16.msra.mxu0 0
        %1768 = vmatpush.bf16.msra.mxu0 0
        %1769 = vmatpush.bf16.msra.mxu0 0
        %1770 = vmatpush.bf16.msra.mxu0 %v1753
        %1771 = vmatpush.bf16.msra.mxu0 %v1751
        %1772 = vmatpush.bf16.msra.mxu0 %v1749
        %1773 = vmatpush.bf16.msra.mxu0 %v1747
        %1774 = vmatmul.bf16.gmra.mxu0 %v1764
        %v1775 = vpop.f32.mrf.mxu0
        %v1776 = vadd.f32 %v1721, %v1775
        %v1777 = vpop.f32.mrf.mxu0
        %v1778 = vadd.f32 %v1721, %v1777
        %1779 = vdwg.mxu0
        %1780 = vmatpush.bf16.msra.mxu0 0
        %1781 = vmatpush.bf16.msra.mxu0 0
        %1782 = vmatpush.bf16.msra.mxu0 0
        %1783 = vmatpush.bf16.msra.mxu0 0
        %1784 = vmatpush.bf16.msra.mxu0 %v1754
        %1785 = vmatpush.bf16.msra.mxu0 %v1752
        %1786 = vmatpush.bf16.msra.mxu0 %v1750
        %1787 = vmatpush.bf16.msra.mxu0 %v1748
        %1788 = vmatmul.bf16.gmra.mxu0 %v1764
        %v1789 = vpop.f32.mrf.mxu0
        %v1790 = vadd.f32 %v1722, %v1789
        %v1791 = vpop.f32.mrf.mxu0
        %v1792 = vadd.f32 %v1722, %v1791
        %1793 = vdwg.mxu0
        %v1794 = vmul.f32 %v1776, 0.5
        %v1795 = vmul.f32 %v1790, 0.5
        %v1796 = vmul.f32 %v1778, 0.5
        %v1797 = vmul.f32 %v1792, 0.5
        %v1798 = vmul.f32 %v1776, 0.044715
        %v1799 = vmul.f32 %v1790, 0.044715
        %v1800 = vmul.f32 %v1778, 0.044715
        %v1801 = vmul.f32 %v1792, 0.044715
        %v1802 = vmul.f32 %v1798, %v1776
        %v1803 = vmul.f32 %v1799, %v1790
        %v1804 = vmul.f32 %v1800, %v1778
        %v1805 = vmul.f32 %v1801, %v1792
        %v1806 = vmul.f32 %v1802, %v1776
        %v1807 = vmul.f32 %v1803, %v1790
        %v1808 = vmul.f32 %v1804, %v1778
        %v1809 = vmul.f32 %v1805, %v1792
        %v1810 = vadd.f32 %v1776, %v1806
        %v1811 = vadd.f32 %v1790, %v1807
        %v1812 = vadd.f32 %v1778, %v1808
        %v1813 = vadd.f32 %v1792, %v1809
        %v1814 = vmul.f32 %v1810, 0.7978846
        %v1815 = vmul.f32 %v1811, 0.7978846
        %v1816 = vmul.f32 %v1812, 0.7978846
        %v1817 = vmul.f32 %v1813, 0.7978846
        %v1818 = vtanh.pop %v1814
        %v1819 = vtanh.pop %v1815
        %v1820 = vtanh.pop %v1816
        %v1821 = vtanh.pop %v1817
        %v1822 = vadd.f32 %v1818, 1.0
        %v1823 = vadd.f32 %v1819, 1.0
        %v1824 = vadd.f32 %v1820, 1.0
        %v1825 = vadd.f32 %v1821, 1.0
        %v1826 = vmul.f32 %v1794, %v1822
        %v1827 = vmul.f32 %v1795, %v1823
        %v1828 = vmul.f32 %v1796, %v1824
        %v1829 = vmul.f32 %v1797, %v1825
        %v1830 = vpack.c.bf16 %v1828, %v1826
        %v1831 = vpack.c.bf16 %v1829, %v1827
        %v1832 = vld [vmem:[%s11] sm:$0xf]
        %v1833 = vld [vmem:[%s11 + $0x4] sm:$0xf]
        %v1834 = vld [vmem:[%s11 + $0x8] sm:$0xf]
        %v1835 = vld [vmem:[%s11 + $0xc] sm:$0xf]
        %v1836 = vld [vmem:[%s11 + $0x10] sm:$0xf]
        %v1837 = vld [vmem:[%s11 + $0x14] sm:$0xf]
        %v1838 = vld [vmem:[%s11 + $0x18] sm:$0xf]
        %v1839 = vld [vmem:[%s11 + $0x1c] sm:$0xf]
        %v1840 = vld [vmem:[%s11 + $0x20] sm:$0xf]
        %v1841 = vld [vmem:[%s11 + $0x24] sm:$0xf]
        %v1842 = vld [vmem:[%s11 + $0x28] sm:$0xf]
        %v1843 = vld [vmem:[%s11 + $0x2c] sm:$0xf]
        %v1844 = vld [vmem:[%s11 + $0x30] sm:$0xf]
        %v1845 = vld [vmem:[%s11 + $0x34] sm:$0xf]
        %v1846 = vld [vmem:[%s11 + $0x38] sm:$0xf]
        %v1847 = vld [vmem:[%s11 + $0x3c] sm:$0xf]
        %v1848 = vld [vmem:[%s11 + $0x40] sm:$0xf]
        %v1849 = vld [vmem:[%s11 + $0x44] sm:$0xf]
        %v1850 = vld [vmem:[%s11 + $0x48] sm:$0xf]
        %v1851 = vld [vmem:[%s11 + $0x4c] sm:$0xf]
        %v1852 = vld [vmem:[%s11 + $0x50] sm:$0xf]
        %v1853 = vld [vmem:[%s11 + $0x54] sm:$0xf]
        %v1854 = vld [vmem:[%s11 + $0x58] sm:$0xf]
        %v1855 = vld [vmem:[%s11 + $0x5c] sm:$0xf]
        %v1856 = vld [vmem:[%s11 + $0x60] sm:$0xf]
        %v1857 = vld [vmem:[%s11 + $0x64] sm:$0xf]
        %v1858 = vld [vmem:[%s11 + $0x68] sm:$0xf]
        %v1859 = vld [vmem:[%s11 + $0x6c] sm:$0xf]
        %v1860 = vld [vmem:[%s11 + $0x70] sm:$0xf]
        %v1861 = vld [vmem:[%s11 + $0x74] sm:$0xf]
        %v1862 = vld [vmem:[%s11 + $0x78] sm:$0xf]
        %v1863 = vld [vmem:[%s11 + $0x7c] sm:$0xf]
        %v1864 = vld [vmem:[#allocation15] sm:$0x1]
        %v1865 = vunpack.c.l.bf16 %v1864
        %v1866 = vperm.slane %v1865, 0
        %v1899 = vunpack.c.l.b16 %v1832
        %v1900 = vunpack.c.l.b16 %v1833
        %v1901 = vunpack.c.l.b16 %v1834
        %v1902 = vunpack.c.l.b16 %v1835
        %v1903 = vunpack.c.l.b16 %v1836
        %v1904 = vunpack.c.l.b16 %v1837
        %v1905 = vunpack.c.l.b16 %v1838
        %v1906 = vunpack.c.l.b16 %v1839
        %v1907 = vunpack.c.l.b16 %v1840
        %v1908 = vunpack.c.l.b16 %v1841
        %v1909 = vunpack.c.l.b16 %v1842
        %v1910 = vunpack.c.l.b16 %v1843
        %v1911 = vunpack.c.l.b16 %v1844
        %v1912 = vunpack.c.l.b16 %v1845
        %v1913 = vunpack.c.l.b16 %v1846
        %v1914 = vunpack.c.l.b16 %v1847
        %v1915 = vunpack.c.l.b16 %v1848
        %v1916 = vunpack.c.l.b16 %v1849
        %v1917 = vunpack.c.l.b16 %v1850
        %v1918 = vunpack.c.l.b16 %v1851
        %v1919 = vunpack.c.l.b16 %v1852
        %v1920 = vunpack.c.l.b16 %v1853
        %v1921 = vunpack.c.l.b16 %v1854
        %v1922 = vunpack.c.l.b16 %v1855
        %v1923 = vunpack.c.l.b16 %v1856
        %v1924 = vunpack.c.l.b16 %v1857
        %v1925 = vunpack.c.l.b16 %v1858
        %v1926 = vunpack.c.l.b16 %v1859
        %v1927 = vunpack.c.l.b16 %v1860
        %v1928 = vunpack.c.l.b16 %v1861
        %v1929 = vunpack.c.l.b16 %v1862
        %v1930 = vunpack.c.l.b16 %v1863
        %v1931 = vpack.c.b16 %v1900, %v1899
        %v1932 = vpack.c.b16 %v1902, %v1901
        %v1933 = vpack.c.b16 %v1904, %v1903
        %v1934 = vpack.c.b16 %v1906, %v1905
        %v1935 = vpack.c.b16 %v1908, %v1907
        %v1936 = vpack.c.b16 %v1910, %v1909
        %v1937 = vpack.c.b16 %v1912, %v1911
        %v1938 = vpack.c.b16 %v1914, %v1913
        %v1939 = vpack.c.b16 %v1916, %v1915
        %v1940 = vpack.c.b16 %v1918, %v1917
        %v1941 = vpack.c.b16 %v1920, %v1919
        %v1942 = vpack.c.b16 %v1922, %v1921
        %v1943 = vpack.c.b16 %v1924, %v1923
        %v1944 = vpack.c.b16 %v1926, %v1925
        %v1945 = vpack.c.b16 %v1928, %v1927
        %v1946 = vpack.c.b16 %v1930, %v1929
        %1963 = vmatpush.bf16.msra.mxu0 %v1938
        %1964 = vmatpush.bf16.msra.mxu0 %v1937
        %1965 = vmatpush.bf16.msra.mxu0 %v1936
        %1966 = vmatpush.bf16.msra.mxu0 %v1935
        %1967 = vmatpush.bf16.msra.mxu0 %v1934
        %1968 = vmatpush.bf16.msra.mxu0 %v1933
        %1969 = vmatpush.bf16.msra.mxu0 %v1932
        %1970 = vmatpush.bf16.msra.mxu0 %v1931
        %1971 = vmatmul.bf16.gmra.mxu0 %v1830
        %v1972 = vpop.f32.mrf.mxu0
        %v1973 = vadd.f32 %v1866, %v1972
        %v1974 = vpop.f32.mrf.mxu0
        %v1975 = vadd.f32 %v1866, %v1974
        %1976 = vdwg.mxu0
        %1977 = vmatpush.bf16.msra.mxu0 %v1946
        %1978 = vmatpush.bf16.msra.mxu0 %v1945
        %1979 = vmatpush.bf16.msra.mxu0 %v1944
        %1980 = vmatpush.bf16.msra.mxu0 %v1943
        %1981 = vmatpush.bf16.msra.mxu0 %v1942
        %1982 = vmatpush.bf16.msra.mxu0 %v1941
        %1983 = vmatpush.bf16.msra.mxu0 %v1940
        %1984 = vmatpush.bf16.msra.mxu0 %v1939
        %1985 = vmatmul.bf16.gmra.mxu0 %v1831
        %v1986 = vpop.f32.mrf.mxu0
        %v1987 = vadd.f32 %v1973, %v1986
        %v1988 = vpop.f32.mrf.mxu0
        %v1989 = vadd.f32 %v1975, %v1988
        %1990 = vdwg.mxu0
        %v1991 = vadd.f32 %v1649, %v1987
        %v1992 = vadd.f32 %v1650, %v1989
        %v1993 = vpack.c.bf16 %v1991, %v1991
        %v1994 = vpack.c.bf16 %v1992, %v1992
        %vm1995 = vcmask 519168
        %1996 = vst.msk [vmem:[%s573] sm:$0xf] %vm1995, %v1993
        %1997 = vst.msk [vmem:[%s573 + $0x4] sm:$0xf] %vm1995, %v1994
        %p1998 = scmp.lt.s32.totalorder %s29, 1
        %s1999 = scalar_select %p1998, %s29, 1
        %s2000 = smul.addr %s1999, 2
        %s2001 = smul.addr %s2000, 4
        %s2002 = scalar_lea.vmem %s13, %s2001
        // Predicated region
        $region109: #{amt_forward.9} parent=71 // pred_check
          %p2003 = pneg %p325
        $region110: #{amt_forward.9} parent=71 // pred_check_branch
          %2005 = sbr.rel (%p2003) target = $region112
        $region111: #{amt_forward.9} parent=71 // pred_region
          _
        $region112: #{amt_forward.9} parent=71 // pred_fallthru
          _
      $region72: #{amt_forward.9} parent=5 // pred_fallthru
        _
      %p2006 = scmp.le.s32.totalorder 2, %s24
      // Predicated region
      $region113: #{amt_forward.9} parent=5 // pred_check
        %p2007 = pneg %p2006
      $region114: #{amt_forward.9} parent=5 // pred_check_branch
        %2009 = sbr.rel (%p2007) target = $region116
      $region115: #{amt_forward.9} parent=5 // pred_region
        %s2010 = ssub.s32 %s24, 2
        // Predicated region
        $region117: #{amt_forward.9} parent=115 // pred_check
          %p2011 = pneg %p331
        $region118: #{amt_forward.9} parent=115 // pred_check_branch
          %2013 = sbr.rel (%p2011) target = $region120
        $region119: #{amt_forward.9} parent=115 // pred_region
          %p2014 = scmp.lt.s32.totalorder %s30, 1
          %s2015 = scalar_select %p2014, %s30, 1
          %s2016 = smul.addr %s2015, 2
          %s2017 = smul.addr %s2016, 4
          %s2018 = scalar_lea.vmem %s13, %s2017
        $region120: #{amt_forward.9} parent=115 // pred_fallthru
          _
      $region116: #{amt_forward.9} parent=5 // pred_fallthru
        _
    $region6: #{amt_forward.9} parent=1 // loop_footer
      %s28 = sadd.s32 1, %s24
    $region7: #{amt_forward.9} parent=1 // loop_footer_branch
      %23 = sbr.rel target = $region3
    $region8: #{amt_forward.9} parent=1 // loop_exit
      _
    %2019 = vsyncpa [#allocation3], 1
    %s2020 = scalar_lea.sflag [#allocation3], 1
    %2021 = vsyncpa %s2020, 1
    %2022 = vsyncpa [#allocation5], 1
    %2023 = vsyncpa [#allocation8], 1
    %2024 = vsyncpa [#allocation11], 1
    %2025 = vsyncpa [#allocation14], 1

</llo_original>
